<compile_context>
chip_gen: v6e
topology: v6e:2x2x1
jax: 0.10.0
libtpu: 0.0.40
codegen_flags: <defaults>
</compile_context>

<pallas_src>
import numpy as np
import jax
import jax.numpy as jnp
from jax import lax
from jax.experimental import pallas as pl
from jax.experimental.pallas import tpu as pltpu

# ---- hyperparameters consistent with the module's hard-coded sizes -------
# Conv1 in_channels is hard-coded to 1000 and the FC layer to 96*107 inputs,
# which forces Num_Filters = 32 and Embed_dim - 3*(K_size-1) = 107.
PROTEIN_FEATURES = 25
NUM_FILTERS = 32
EMBED_DIM = 128
FINAL_DIM = 128
K_SIZE = 8
SEQ_LEN = 1000
BATCH = 2

L1 = EMBED_DIM - (K_SIZE - 1)   # 121
L2 = L1 - (K_SIZE - 1)          # 114
L3 = L2 - (K_SIZE - 1)          # 107
C1, C2, C3 = NUM_FILTERS, NUM_FILTERS * 2, NUM_FILTERS * 3   # 32, 64, 96
assert C3 * L3 == 96 * 107

TAPS_PER_GROUP = 4                      # keep f32 tap-group result <= (256,128)
N_TAP_GROUPS = K_SIZE // TAPS_PER_GROUP  # 2


# --------------------------- Pallas kernels --------------------------------
def _gate_act(y, b, c_out):
    """y: (2*c_out, L) f32 fused [conv;gate]; b: (2*c_out, 1) f32."""
    conv = y[:c_out] + b[:c_out]
    gate = y[c_out:] + b[c_out:]
    sig = 0.5 * (jnp.tanh(0.5 * gate) + 1.0)     # single EUP tanh == sigmoid
    return jnp.maximum(conv * sig, 0.0)


def gated_stack_kernel(emb_ref, w1_ref, b1_ref, w2_ref, b2_ref, w3_ref, b3_ref,
                       out_ref):
    x = emb_ref[0]                                        # (1000, 128) bf16

    # ---- layer 1: fused conv+gate, 2 MXU matmuls of 4 stacked taps each ----
    # w1_ref[g] is (4*64, 1000); rows j*64:(j+1)*64 hold tap k = 4*g + j.
    acc = jnp.zeros((2 * C1, L1), jnp.float32)            # (64, 121)
    for g in range(N_TAP_GROUPS):                         # static, unrolled
        t = jnp.dot(w1_ref[g], x, preferred_element_type=jnp.float32)  # (256,128)
        for j in range(TAPS_PER_GROUP):
            k = g * TAPS_PER_GROUP + j
            acc = acc + t[j * 2 * C1:(j + 1) * 2 * C1, k:k + L1]
    h1 = _gate_act(acc, b1_ref[...], C1).astype(jnp.bfloat16)   # (32, 121) bf16

    # ---- layer 2: fold taps into the contraction (im2col, K = 256) --------
    x2 = jnp.concatenate([h1[:, k:k + L2] for k in range(K_SIZE)], axis=0)
    y2 = jnp.dot(w2_ref[...], x2, preferred_element_type=jnp.float32)  # (128,114)
    h2 = _gate_act(y2, b2_ref[...], C2).astype(jnp.bfloat16)    # (64, 114) bf16

    # ---- layer 3: im2col, K = 512 ------------------------------------------
    x3 = jnp.concatenate([h2[:, k:k + L3] for k in range(K_SIZE)], axis=0)
    y3 = jnp.dot(w3_ref[...], x3, preferred_element_type=jnp.float32)  # (192,107)
    h3 = _gate_act(y3, b3_ref[...], C3)                   # (96, 107) f32

    out_ref[0] = h3


def fc_kernel(x_ref, w_ref, b_ref, o_ref):
    # bf16 weight is already pre-transposed to (K, N=128): lane-dense output.
    o_ref[...] = jnp.dot(x_ref[...].astype(jnp.bfloat16), w_ref[...],
                         preferred_element_type=jnp.float32) + b_ref[...]


# -------------------- one-time parameter packing (host) ---------------------
def prepare_params(params):
    """Fuse conv/gate branches, stack layer-1 taps into 2 MXU groups, fold taps
    for layers 2/3, cast matmul operands to bf16, pre-transpose the FC weight.
    Called ONCE, outside the jitted forward."""
    bf = lambda a: jnp.asarray(a, jnp.bfloat16)

    # layer 1: torch (C_out, C_in, K) -> per-tap fused (K, 2*C_out, C_in)
    #          -> tap groups (N_TAP_GROUPS, TAPS_PER_GROUP*2*C_out, C_in)
    w1 = jnp.concatenate([params["wc1"], params["wg1"]], axis=0)      # (64,1000,8)
    w1 = jnp.transpose(w1, (2, 0, 1))                                 # (8,64,1000)
    w1 = w1.reshape(N_TAP_GROUPS, TAPS_PER_GROUP * 2 * C1, SEQ_LEN)   # (2,256,1000)
    b1 = jnp.concatenate([params["bc1"], params["bg1"]])[:, None]     # (64,1)

    # layers 2/3: im2col-folded fused weight (2*C_out, K*C_in), col = k*C_in+c
    def fold(wc, wg):
        w = jnp.concatenate([wc, wg], axis=0)                         # (2C_out,C_in,K)
        w = jnp.transpose(w, (0, 2, 1))                               # (2C_out,K,C_in)
        return w.reshape(w.shape[0], -1)                              # (2C_out,K*C_in)

    w2 = fold(params["wc2"], params["wg2"])                           # (128, 256)
    b2 = jnp.concatenate([params["bc2"], params["bg2"]])[:, None]
    w3 = fold(params["wc3"], params["wg3"])                           # (192, 512)
    b3 = jnp.concatenate([params["bc3"], params["bg3"]])[:, None]

    return dict(
        emb=bf(params["emb"]),
        w1=bf(w1), b1=b1.astype(jnp.float32),
        w2=bf(w2), b2=b2.astype(jnp.float32),
        w3=bf(w3), b3=b3.astype(jnp.float32),
        wfc_t=bf(params["wfc"].T),                     # (10272, 128), transposed once
        bfc=params["bfc"].astype(jnp.float32)[None, :],
    )


# ------------------------------ forward -------------------------------------
def gated_cnn_forward(target, pp):
    # TODO(synk): embedding gather stays in plain JAX (a scalar-prefetch row
    # gather inside the kernel adds nothing at this size).
    emb = jnp.take(pp["emb"], target, axis=0)          # (B, 1000, 128) bf16
    B = emb.shape[0]

    weights = (pp["w1"], pp["b1"], pp["w2"], pp["b2"], pp["w3"], pp["b3"])

    def full_spec(a):
        n = a.ndim
        return pl.BlockSpec(a.shape, lambda b, n=n: (0,) * n)

    h3 = pl.pallas_call(
        gated_stack_kernel,
        out_shape=jax.ShapeDtypeStruct((B, C3, L3), jnp.float32),
        grid=(B,),
        in_specs=[pl.BlockSpec((1, SEQ_LEN, EMBED_DIM), lambda b: (b, 0, 0))]
                + [full_spec(w) for w in weights],
        out_specs=pl.BlockSpec((1, C3, L3), lambda b: (b, 0, 0)),
        compiler_params=pltpu.CompilerParams(
            dimension_semantics=("parallel",)),        # v7x: 2 TCs split the batch
    )(emb, *weights)

    # Flatten exactly like torch .view(-1, 96*107) (channel-major, row-major);
    # h3 is contiguous so this reshape is a free bitcast in XLA.
    x_flat = h3.reshape(B, C3 * L3)
    xt = pl.pallas_call(
        fc_kernel,
        out_shape=jax.ShapeDtypeStruct((B, FINAL_DIM), jnp.float32),
    )(x_flat, pp["wfc_t"], pp["bfc"])
    return xt, h3


# --------------------------- parameter init ---------------------------------
def init_params(key):
    ks = jax.random.split(key, 16)

    def conv_init(kw, kb, c_out, c_in, ksz):
        bound = 1.0 / np.sqrt(c_in * ksz)
        w = jax.random.uniform(kw, (c_out, c_in, ksz), jnp.float32, -bound, bound)
        b = jax.random.uniform(kb, (c_out,), jnp.float32, -bound, bound)
        return w, b

    emb = jax.random.normal(ks[0], (PROTEIN_FEATURES + 1, EMBED_DIM), jnp.float32)
    wc1, bc1 = conv_init(ks[1], ks[2], C1, SEQ_LEN, K_SIZE)
    wg1, bg1 = conv_init(ks[3], ks[4], C1, SEQ_LEN, K_SIZE)
    wc2, bc2 = conv_init(ks[5], ks[6], C2, C1, K_SIZE)
    wg2, bg2 = conv_init(ks[7], ks[8], C2, C1, K_SIZE)
    wc3, bc3 = conv_init(ks[9], ks[10], C3, C2, K_SIZE)
    wg3, bg3 = conv_init(ks[11], ks[12], C3, C2, K_SIZE)
    fb = 1.0 / np.sqrt(C3 * L3)
    wfc = jax.random.uniform(ks[13], (FINAL_DIM, C3 * L3), jnp.float32, -fb, fb)
    bfc = jax.random.uniform(ks[14], (FINAL_DIM,), jnp.float32, -fb, fb)
    return dict(emb=emb,
                wc1=wc1, bc1=bc1, wg1=wg1, bg1=bg1,
                wc2=wc2, bc2=bc2, wg2=wg2, bg2=bg2,
                wc3=wc3, bc3=bc3, wg3=wg3, bg3=bg3,
                wfc=wfc, bfc=bfc)


# ------------------------- plain-JAX reference ------------------------------
def ref_forward(target, params):
    emb = params["emb"][target]

    def conv1d(x, w, b):
        y = lax.conv_general_dilated(x, w, (1,), "VALID",
                                     dimension_numbers=("NCH", "OIH", "NCH"),
                                     precision=lax.Precision.HIGHEST)
        return y + b[None, :, None]

    def gated(x, wc, bc, wg, bg):
        return jax.nn.relu(conv1d(x, wc, bc) * jax.nn.sigmoid(conv1d(x, wg, bg)))

    h = gated(emb, params["wc1"], params["bc1"], params["wg1"], params["bg1"])
    h = gated(h, params["wc2"], params["bc2"], params["wg2"], params["bg2"])
    h = gated(h, params["wc3"], params["bc3"], params["wg3"], params["bg3"])
    flat = h.reshape(h.shape[0], -1)
    xt = jnp.dot(flat, params["wfc"].T,
                 precision=lax.Precision.HIGHEST) + params["bfc"]
    return xt, h


# --------------------------------- main --------------------------------------
if __name__ == "__main__":
    key = jax.random.PRNGKey(0)
    pkey, tkey = jax.random.split(key)
    params = init_params(pkey)
    packed = prepare_params(params)      # one-time fuse / stack / fold / bf16 / transpose
    # data.target: integer protein token sequence, shape (B, 1000)
    target = jax.random.randint(tkey, (BATCH, SEQ_LEN), 0,
                                PROTEIN_FEATURES + 1, dtype=jnp.int32)

    fwd = jax.jit(gated_cnn_forward)
    xt, h3 = fwd(target, packed)
    jax.block_until_ready((xt, h3))

    xt_ref, h3_ref = ref_forward(target, params)
    np.testing.assert_allclose(np.asarray(h3), np.asarray(h3_ref),
                               rtol=2e-2, atol=2e-2)
    np.testing.assert_allclose(np.asarray(xt), np.asarray(xt_ref),
                               rtol=2e-2, atol=2e-2)
    print("KERNEL_OK")
</pallas_src>

<mosaic_0001>
module attributes {stable_mosaic.version = 11 : i64} {
  func.func @gated_stack_kernel(%arg0: i32, %arg1: memref<1x1000x128xbf16, #tpu.memory_space<vmem>>, %arg2: memref<2x256x1000xbf16, #tpu.memory_space<vmem>>, %arg3: memref<64x1xf32, #tpu.memory_space<vmem>>, %arg4: memref<128x256xbf16, #tpu.memory_space<vmem>>, %arg5: memref<128x1xf32, #tpu.memory_space<vmem>>, %arg6: memref<192x512xbf16, #tpu.memory_space<vmem>>, %arg7: memref<192x1xf32, #tpu.memory_space<vmem>>, %arg8: memref<1x96x107xf32, #tpu.memory_space<vmem>>) attributes {dimension_semantics = [#tpu.dimension_semantics<parallel>], iteration_bounds = array<i64: 2>, scalar_prefetch = 0 : i64, scratch_operands = 0 : i64, tpu.core_type = #tpu.core_type<tc>, window_params = [{transform_indices = @transform_0, window_bounds = array<i64: 1, 1000, 128>}, {pipeline_mode = #tpu.pipeline_mode<synchronous>, transform_indices = @transform_1, window_bounds = array<i64: 2, 256, 1000>}, {pipeline_mode = #tpu.pipeline_mode<synchronous>, transform_indices = @transform_2, window_bounds = array<i64: 64, 1>}, {pipeline_mode = #tpu.pipeline_mode<synchronous>, transform_indices = @transform_3, window_bounds = array<i64: 128, 256>}, {pipeline_mode = #tpu.pipeline_mode<synchronous>, transform_indices = @transform_4, window_bounds = array<i64: 128, 1>}, {pipeline_mode = #tpu.pipeline_mode<synchronous>, transform_indices = @transform_5, window_bounds = array<i64: 192, 512>}, {pipeline_mode = #tpu.pipeline_mode<synchronous>, transform_indices = @transform_6, window_bounds = array<i64: 192, 1>}, {transform_indices = @transform_7, window_bounds = array<i64: 1, 96, 107>}]} {
    %c0 = arith.constant 0 : index
    %c0_0 = arith.constant 0 : index
    %c0_1 = arith.constant 0 : index
    %0 = vector.load %arg1[%c0, %c0_0, %c0_1] : memref<1x1000x128xbf16, #tpu.memory_space<vmem>>, vector<1x1000x128xbf16>
    %1 = vector.shape_cast %0 : vector<1x1000x128xbf16> to vector<1000x128xbf16>
    %cst = arith.constant 0.000000e+00 : f32
    %2 = vector.broadcast %cst : f32 to vector<64x121xf32>
    %c0_2 = arith.constant 0 : index
    %c0_3 = arith.constant 0 : index
    %c0_4 = arith.constant 0 : index
    %3 = vector.load %arg2[%c0_2, %c0_3, %c0_4] : memref<2x256x1000xbf16, #tpu.memory_space<vmem>>, vector<1x256x1000xbf16>
    %4 = vector.shape_cast %3 : vector<1x256x1000xbf16> to vector<256x1000xbf16>
    %cst_5 = arith.constant dense<0.000000e+00> : vector<256x128xf32>
    %5 = tpu.matmul %4, %1, %cst_5 {dimension_numbers = #tpu.dot_dimension_numbers<[1], [0], [0], [1], [0, 0, 1, 1], [], []>} : vector<256x1000xbf16>, vector<1000x128xbf16>, vector<256x128xf32> -> vector<256x128xf32>
    %6 = vector.extract_strided_slice %5 {offsets = [0, 0], sizes = [64, 121], strides = [1, 1]} : vector<256x128xf32> to vector<64x121xf32>
    %7 = arith.addf %2, %6 : vector<64x121xf32>
    %8 = vector.extract_strided_slice %5 {offsets = [64, 1], sizes = [64, 121], strides = [1, 1]} : vector<256x128xf32> to vector<64x121xf32>
    %9 = arith.addf %7, %8 : vector<64x121xf32>
    %10 = vector.extract_strided_slice %5 {offsets = [128, 2], sizes = [64, 121], strides = [1, 1]} : vector<256x128xf32> to vector<64x121xf32>
    %11 = arith.addf %9, %10 : vector<64x121xf32>
    %12 = vector.extract_strided_slice %5 {offsets = [192, 3], sizes = [64, 121], strides = [1, 1]} : vector<256x128xf32> to vector<64x121xf32>
    %13 = arith.addf %11, %12 : vector<64x121xf32>
    %c1 = arith.constant 1 : index
    %c0_6 = arith.constant 0 : index
    %c0_7 = arith.constant 0 : index
    %14 = vector.load %arg2[%c1, %c0_6, %c0_7] : memref<2x256x1000xbf16, #tpu.memory_space<vmem>>, vector<1x256x1000xbf16>
    %15 = vector.shape_cast %14 : vector<1x256x1000xbf16> to vector<256x1000xbf16>
    %cst_8 = arith.constant dense<0.000000e+00> : vector<256x128xf32>
    %16 = tpu.matmul %15, %1, %cst_8 {dimension_numbers = #tpu.dot_dimension_numbers<[1], [0], [0], [1], [0, 0, 1, 1], [], []>} : vector<256x1000xbf16>, vector<1000x128xbf16>, vector<256x128xf32> -> vector<256x128xf32>
    %17 = vector.extract_strided_slice %16 {offsets = [0, 4], sizes = [64, 121], strides = [1, 1]} : vector<256x128xf32> to vector<64x121xf32>
    %18 = arith.addf %13, %17 : vector<64x121xf32>
    %19 = vector.extract_strided_slice %16 {offsets = [64, 5], sizes = [64, 121], strides = [1, 1]} : vector<256x128xf32> to vector<64x121xf32>
    %20 = arith.addf %18, %19 : vector<64x121xf32>
    %21 = vector.extract_strided_slice %16 {offsets = [128, 6], sizes = [64, 121], strides = [1, 1]} : vector<256x128xf32> to vector<64x121xf32>
    %22 = arith.addf %20, %21 : vector<64x121xf32>
    %23 = vector.extract_strided_slice %16 {offsets = [192, 7], sizes = [64, 121], strides = [1, 1]} : vector<256x128xf32> to vector<64x121xf32>
    %24 = arith.addf %22, %23 : vector<64x121xf32>
    %c0_9 = arith.constant 0 : index
    %c0_10 = arith.constant 0 : index
    %25 = vector.load %arg3[%c0_9, %c0_10] : memref<64x1xf32, #tpu.memory_space<vmem>>, vector<64x1xf32>
    %26 = vector.extract_strided_slice %24 {offsets = [0, 0], sizes = [32, 121], strides = [1, 1]} : vector<64x121xf32> to vector<32x121xf32>
    %27 = vector.extract_strided_slice %25 {offsets = [0, 0], sizes = [32, 1], strides = [1, 1]} : vector<64x1xf32> to vector<32x1xf32>
    %28 = vector.broadcast %27 : vector<32x1xf32> to vector<32x121xf32>
    %29 = arith.addf %26, %28 : vector<32x121xf32>
    %30 = vector.extract_strided_slice %24 {offsets = [32, 0], sizes = [32, 121], strides = [1, 1]} : vector<64x121xf32> to vector<32x121xf32>
    %31 = vector.extract_strided_slice %25 {offsets = [32, 0], sizes = [32, 1], strides = [1, 1]} : vector<64x1xf32> to vector<32x1xf32>
    %32 = vector.broadcast %31 : vector<32x1xf32> to vector<32x121xf32>
    %33 = arith.addf %30, %32 : vector<32x121xf32>
    %cst_11 = arith.constant 5.000000e-01 : f32
    %34 = vector.broadcast %cst_11 : f32 to vector<32x121xf32>
    %35 = arith.mulf %34, %33 : vector<32x121xf32>
    %36 = math.tanh %35 : vector<32x121xf32>
    %cst_12 = arith.constant 1.000000e+00 : f32
    %37 = vector.broadcast %cst_12 : f32 to vector<32x121xf32>
    %38 = arith.addf %36, %37 : vector<32x121xf32>
    %cst_13 = arith.constant 5.000000e-01 : f32
    %39 = vector.broadcast %cst_13 : f32 to vector<32x121xf32>
    %40 = arith.mulf %39, %38 : vector<32x121xf32>
    %41 = arith.mulf %29, %40 : vector<32x121xf32>
    %cst_14 = arith.constant 0.000000e+00 : f32
    %42 = vector.broadcast %cst_14 : f32 to vector<32x121xf32>
    %43 = arith.maximumf %41, %42 : vector<32x121xf32>
    %44 = arith.truncf %43 : vector<32x121xf32> to vector<32x121xbf16>
    %45 = vector.extract_strided_slice %44 {offsets = [0, 0], sizes = [32, 114], strides = [1, 1]} : vector<32x121xbf16> to vector<32x114xbf16>
    %46 = vector.extract_strided_slice %44 {offsets = [0, 1], sizes = [32, 114], strides = [1, 1]} : vector<32x121xbf16> to vector<32x114xbf16>
    %47 = vector.extract_strided_slice %44 {offsets = [0, 2], sizes = [32, 114], strides = [1, 1]} : vector<32x121xbf16> to vector<32x114xbf16>
    %48 = vector.extract_strided_slice %44 {offsets = [0, 3], sizes = [32, 114], strides = [1, 1]} : vector<32x121xbf16> to vector<32x114xbf16>
    %49 = vector.extract_strided_slice %44 {offsets = [0, 4], sizes = [32, 114], strides = [1, 1]} : vector<32x121xbf16> to vector<32x114xbf16>
    %50 = vector.extract_strided_slice %44 {offsets = [0, 5], sizes = [32, 114], strides = [1, 1]} : vector<32x121xbf16> to vector<32x114xbf16>
    %51 = vector.extract_strided_slice %44 {offsets = [0, 6], sizes = [32, 114], strides = [1, 1]} : vector<32x121xbf16> to vector<32x114xbf16>
    %52 = vector.extract_strided_slice %44 {offsets = [0, 7], sizes = [32, 114], strides = [1, 1]} : vector<32x121xbf16> to vector<32x114xbf16>
    %53 = tpu.concatenate %45, %46, %47, %48, %49, %50, %51, %52 in 0 : vector<32x114xbf16>, vector<32x114xbf16>, vector<32x114xbf16>, vector<32x114xbf16>, vector<32x114xbf16>, vector<32x114xbf16>, vector<32x114xbf16>, vector<32x114xbf16> -> vector<256x114xbf16>
    %c0_15 = arith.constant 0 : index
    %c0_16 = arith.constant 0 : index
    %54 = vector.load %arg4[%c0_15, %c0_16] : memref<128x256xbf16, #tpu.memory_space<vmem>>, vector<128x256xbf16>
    %cst_17 = arith.constant dense<0.000000e+00> : vector<128x114xf32>
    %55 = tpu.matmul %54, %53, %cst_17 {dimension_numbers = #tpu.dot_dimension_numbers<[1], [0], [0], [1], [0, 0, 1, 1], [], []>} : vector<128x256xbf16>, vector<256x114xbf16>, vector<128x114xf32> -> vector<128x114xf32>
    %c0_18 = arith.constant 0 : index
    %c0_19 = arith.constant 0 : index
    %56 = vector.load %arg5[%c0_18, %c0_19] : memref<128x1xf32, #tpu.memory_space<vmem>>, vector<128x1xf32>
    %57 = vector.extract_strided_slice %55 {offsets = [0, 0], sizes = [64, 114], strides = [1, 1]} : vector<128x114xf32> to vector<64x114xf32>
    %58 = vector.extract_strided_slice %56 {offsets = [0, 0], sizes = [64, 1], strides = [1, 1]} : vector<128x1xf32> to vector<64x1xf32>
    %59 = vector.broadcast %58 : vector<64x1xf32> to vector<64x114xf32>
    %60 = arith.addf %57, %59 : vector<64x114xf32>
    %61 = vector.extract_strided_slice %55 {offsets = [64, 0], sizes = [64, 114], strides = [1, 1]} : vector<128x114xf32> to vector<64x114xf32>
    %62 = vector.extract_strided_slice %56 {offsets = [64, 0], sizes = [64, 1], strides = [1, 1]} : vector<128x1xf32> to vector<64x1xf32>
    %63 = vector.broadcast %62 : vector<64x1xf32> to vector<64x114xf32>
    %64 = arith.addf %61, %63 : vector<64x114xf32>
    %cst_20 = arith.constant 5.000000e-01 : f32
    %65 = vector.broadcast %cst_20 : f32 to vector<64x114xf32>
    %66 = arith.mulf %65, %64 : vector<64x114xf32>
    %67 = math.tanh %66 : vector<64x114xf32>
    %cst_21 = arith.constant 1.000000e+00 : f32
    %68 = vector.broadcast %cst_21 : f32 to vector<64x114xf32>
    %69 = arith.addf %67, %68 : vector<64x114xf32>
    %cst_22 = arith.constant 5.000000e-01 : f32
    %70 = vector.broadcast %cst_22 : f32 to vector<64x114xf32>
    %71 = arith.mulf %70, %69 : vector<64x114xf32>
    %72 = arith.mulf %60, %71 : vector<64x114xf32>
    %cst_23 = arith.constant 0.000000e+00 : f32
    %73 = vector.broadcast %cst_23 : f32 to vector<64x114xf32>
    %74 = arith.maximumf %72, %73 : vector<64x114xf32>
    %75 = arith.truncf %74 : vector<64x114xf32> to vector<64x114xbf16>
    %76 = vector.extract_strided_slice %75 {offsets = [0, 0], sizes = [64, 107], strides = [1, 1]} : vector<64x114xbf16> to vector<64x107xbf16>
    %77 = vector.extract_strided_slice %75 {offsets = [0, 1], sizes = [64, 107], strides = [1, 1]} : vector<64x114xbf16> to vector<64x107xbf16>
    %78 = vector.extract_strided_slice %75 {offsets = [0, 2], sizes = [64, 107], strides = [1, 1]} : vector<64x114xbf16> to vector<64x107xbf16>
    %79 = vector.extract_strided_slice %75 {offsets = [0, 3], sizes = [64, 107], strides = [1, 1]} : vector<64x114xbf16> to vector<64x107xbf16>
    %80 = vector.extract_strided_slice %75 {offsets = [0, 4], sizes = [64, 107], strides = [1, 1]} : vector<64x114xbf16> to vector<64x107xbf16>
    %81 = vector.extract_strided_slice %75 {offsets = [0, 5], sizes = [64, 107], strides = [1, 1]} : vector<64x114xbf16> to vector<64x107xbf16>
    %82 = vector.extract_strided_slice %75 {offsets = [0, 6], sizes = [64, 107], strides = [1, 1]} : vector<64x114xbf16> to vector<64x107xbf16>
    %83 = vector.extract_strided_slice %75 {offsets = [0, 7], sizes = [64, 107], strides = [1, 1]} : vector<64x114xbf16> to vector<64x107xbf16>
    %84 = tpu.concatenate %76, %77, %78, %79, %80, %81, %82, %83 in 0 : vector<64x107xbf16>, vector<64x107xbf16>, vector<64x107xbf16>, vector<64x107xbf16>, vector<64x107xbf16>, vector<64x107xbf16>, vector<64x107xbf16>, vector<64x107xbf16> -> vector<512x107xbf16>
    %c0_24 = arith.constant 0 : index
    %c0_25 = arith.constant 0 : index
    %85 = vector.load %arg6[%c0_24, %c0_25] : memref<192x512xbf16, #tpu.memory_space<vmem>>, vector<192x512xbf16>
    %cst_26 = arith.constant dense<0.000000e+00> : vector<192x107xf32>
    %86 = tpu.matmul %85, %84, %cst_26 {dimension_numbers = #tpu.dot_dimension_numbers<[1], [0], [0], [1], [0, 0, 1, 1], [], []>} : vector<192x512xbf16>, vector<512x107xbf16>, vector<192x107xf32> -> vector<192x107xf32>
    %c0_27 = arith.constant 0 : index
    %c0_28 = arith.constant 0 : index
    %87 = vector.load %arg7[%c0_27, %c0_28] : memref<192x1xf32, #tpu.memory_space<vmem>>, vector<192x1xf32>
    %88 = vector.extract_strided_slice %86 {offsets = [0, 0], sizes = [96, 107], strides = [1, 1]} : vector<192x107xf32> to vector<96x107xf32>
    %89 = vector.extract_strided_slice %87 {offsets = [0, 0], sizes = [96, 1], strides = [1, 1]} : vector<192x1xf32> to vector<96x1xf32>
    %90 = vector.broadcast %89 : vector<96x1xf32> to vector<96x107xf32>
    %91 = arith.addf %88, %90 : vector<96x107xf32>
    %92 = vector.extract_strided_slice %86 {offsets = [96, 0], sizes = [96, 107], strides = [1, 1]} : vector<192x107xf32> to vector<96x107xf32>
    %93 = vector.extract_strided_slice %87 {offsets = [96, 0], sizes = [96, 1], strides = [1, 1]} : vector<192x1xf32> to vector<96x1xf32>
    %94 = vector.broadcast %93 : vector<96x1xf32> to vector<96x107xf32>
    %95 = arith.addf %92, %94 : vector<96x107xf32>
    %cst_29 = arith.constant 5.000000e-01 : f32
    %96 = vector.broadcast %cst_29 : f32 to vector<96x107xf32>
    %97 = arith.mulf %96, %95 : vector<96x107xf32>
    %98 = math.tanh %97 : vector<96x107xf32>
    %cst_30 = arith.constant 1.000000e+00 : f32
    %99 = vector.broadcast %cst_30 : f32 to vector<96x107xf32>
    %100 = arith.addf %98, %99 : vector<96x107xf32>
    %cst_31 = arith.constant 5.000000e-01 : f32
    %101 = vector.broadcast %cst_31 : f32 to vector<96x107xf32>
    %102 = arith.mulf %101, %100 : vector<96x107xf32>
    %103 = arith.mulf %91, %102 : vector<96x107xf32>
    %cst_32 = arith.constant 0.000000e+00 : f32
    %104 = vector.broadcast %cst_32 : f32 to vector<96x107xf32>
    %105 = arith.maximumf %103, %104 : vector<96x107xf32>
    %c0_33 = arith.constant 0 : index
    %c0_34 = arith.constant 0 : index
    %c0_35 = arith.constant 0 : index
    %106 = vector.load %arg8[%c0_33, %c0_34, %c0_35] : memref<1x96x107xf32, #tpu.memory_space<vmem>>, vector<1x96x107xf32>
    %107 = vector.shape_cast %106 : vector<1x96x107xf32> to vector<96x107xf32>
    %108 = vector.shape_cast %105 : vector<96x107xf32> to vector<1x96x107xf32>
    tpu.vector_store %arg8[%c0_33, %c0_34, %c0_35], %108 {strides = array<i32>} : memref<1x96x107xf32, #tpu.memory_space<vmem>>, vector<1x96x107xf32>,
    return
  }
  func.func @transform_0(%arg0: i32) -> (i32, i32, i32) {
    %c0_i32 = arith.constant 0 : i32
    %c0_i32_0 = arith.constant 0 : i32
    %c0_i32_1 = arith.constant 0 : i32
    return %arg0, %c0_i32, %c0_i32_0 : i32, i32, i32
  }
  func.func @transform_1(%arg0: i32) -> (i32, i32, i32) {
    %c0_i32 = arith.constant 0 : i32
    %c0_i32_0 = arith.constant 0 : i32
    %c0_i32_1 = arith.constant 0 : i32
    %c0_i32_2 = arith.constant 0 : i32
    return %c0_i32, %c0_i32_0, %c0_i32_1 : i32, i32, i32
  }
  func.func @transform_2(%arg0: i32) -> (i32, i32) {
    %c0_i32 = arith.constant 0 : i32
    %c0_i32_0 = arith.constant 0 : i32
    %c0_i32_1 = arith.constant 0 : i32
    return %c0_i32, %c0_i32_0 : i32, i32
  }
  func.func @transform_3(%arg0: i32) -> (i32, i32) {
    %c0_i32 = arith.constant 0 : i32
    %c0_i32_0 = arith.constant 0 : i32
    %c0_i32_1 = arith.constant 0 : i32
    return %c0_i32, %c0_i32_0 : i32, i32
  }
  func.func @transform_4(%arg0: i32) -> (i32, i32) {
    %c0_i32 = arith.constant 0 : i32
    %c0_i32_0 = arith.constant 0 : i32
    %c0_i32_1 = arith.constant 0 : i32
    return %c0_i32, %c0_i32_0 : i32, i32
  }
  func.func @transform_5(%arg0: i32) -> (i32, i32) {
    %c0_i32 = arith.constant 0 : i32
    %c0_i32_0 = arith.constant 0 : i32
    %c0_i32_1 = arith.constant 0 : i32
    return %c0_i32, %c0_i32_0 : i32, i32
  }
  func.func @transform_6(%arg0: i32) -> (i32, i32) {
    %c0_i32 = arith.constant 0 : i32
    %c0_i32_0 = arith.constant 0 : i32
    %c0_i32_1 = arith.constant 0 : i32
    return %c0_i32, %c0_i32_0 : i32, i32
  }
  func.func @transform_7(%arg0: i32) -> (i32, i32, i32) {
    %c0_i32 = arith.constant 0 : i32
    %c0_i32_0 = arith.constant 0 : i32
    %c0_i32_1 = arith.constant 0 : i32
    return %arg0, %c0_i32, %c0_i32_0 : i32, i32, i32
  }
}

module attributes {stable_mosaic.version = 11 : i64} {
  func.func @fc_kernel(%arg0: memref<2x10272xf32, #tpu.memory_space<vmem>>, %arg1: memref<10272x128xbf16, #tpu.memory_space<vmem>>, %arg2: memref<1x128xf32, #tpu.memory_space<vmem>>, %arg3: memref<2x128xf32, #tpu.memory_space<vmem>>) attributes {dimension_semantics = [], scalar_prefetch = 0 : i64, scratch_operands = 0 : i64, tpu.core_type = #tpu.core_type<tc>} {
    %c0 = arith.constant 0 : index
    %c0_0 = arith.constant 0 : index
    %0 = vector.load %arg0[%c0, %c0_0] : memref<2x10272xf32, #tpu.memory_space<vmem>>, vector<2x10272xf32>
    %1 = arith.truncf %0 : vector<2x10272xf32> to vector<2x10272xbf16>
    %c0_1 = arith.constant 0 : index
    %c0_2 = arith.constant 0 : index
    %2 = vector.load %arg1[%c0_1, %c0_2] : memref<10272x128xbf16, #tpu.memory_space<vmem>>, vector<10272x128xbf16>
    %cst = arith.constant dense<0.000000e+00> : vector<2x128xf32>
    %3 = tpu.matmul %1, %2, %cst {dimension_numbers = #tpu.dot_dimension_numbers<[1], [0], [0], [1], [0, 0, 1, 1], [], []>} : vector<2x10272xbf16>, vector<10272x128xbf16>, vector<2x128xf32> -> vector<2x128xf32>
    %c0_3 = arith.constant 0 : index
    %c0_4 = arith.constant 0 : index
    %4 = vector.load %arg2[%c0_3, %c0_4] : memref<1x128xf32, #tpu.memory_space<vmem>>, vector<1x128xf32>
    %5 = vector.broadcast %4 : vector<1x128xf32> to vector<2x128xf32>
    %6 = arith.addf %3, %5 : vector<2x128xf32>
    %c0_5 = arith.constant 0 : index
    %c0_6 = arith.constant 0 : index
    %7 = vector.load %arg3[%c0_5, %c0_6] : memref<2x128xf32, #tpu.memory_space<vmem>>, vector<2x128xf32>
    tpu.vector_store %arg3[%c0_5, %c0_6], %6 {strides = array<i32>} : memref<2x128xf32, #tpu.memory_space<vmem>>, vector<2x128xf32>,
    return
  }
}

</mosaic_0001>

<llo_original>
// kernel: gated_cnn_forward.2
$region0: #{gated_cnn_forward.2}
  #allocation0 [shape = 'u32[]', space=smem, size = 0x4, offset = 0x4, fixed_abs, tag = 'smem constant byte address 0x4 - core index']
  #allocation1 [shape = 'u32[144,128]{1,0:T(1,128)}', space=vmem, size = 0x12000, scoped, tag = 'internal scratch']
  %s0 = inlined_call_operand.vmem [shape: bf16[2,1000,128], index: 0, kind: input, shape index: {}]
  %s1 = inlined_call_operand.vmem [shape: bf16[2,256,1000], index: 1, kind: input, shape index: {}]
  %s2 = inlined_call_operand.vmem [shape: f32[64,1], index: 2, kind: input, shape index: {}]
  %s3 = inlined_call_operand.vmem [shape: bf16[128,256], index: 3, kind: input, shape index: {}]
  %s4 = inlined_call_operand.vmem [shape: f32[128,1], index: 4, kind: input, shape index: {}]
  %s5 = inlined_call_operand.vmem [shape: bf16[192,512], index: 5, kind: input, shape index: {}]
  %s6 = inlined_call_operand.vmem [shape: f32[192,1], index: 6, kind: input, shape index: {}]
  %s7 = inlined_call_operand.vmem [shape: f32[2,96,107], index: 7, kind: output, shape index: {}]
  %s8 = sld [smem:[#allocation0]]
  $region61: #{gated_cnn_forward.2} parent=0
    _
  %s10 = ssub.s32 1, %s8
  %s11 = scalar_select 0, %s10, %s8
  loop: start=0, step=1, limit=4
  $region2: #{gated_cnn_forward.2} parent=0 // loop_pre_header
    _
  $region3: #{gated_cnn_forward.2} parent=0 // loop_header
    %s13 = sphi 0, %s17
    %p14 = scmp.ge.s32.totalorder %s13, 4
    %s23 = sphi 0, %s25
    %s26 = sphi 0, %s23
    %s27 = sphi 0, %s26
    %s43 = sphi 0, %s27
    %s47 = sphi 0, %s47
    %s49 = sphi 0, %s47
    %s50 = sphi 0, %s49
    %s64 = sphi 0, %s50
    %s68 = sphi 0, %s68
    %s70 = sphi 0, %s68
    %s71 = sphi 0, %s70
    %s85 = sphi 0, %s71
    %s89 = sphi 0, %s89
    %s91 = sphi 0, %s89
    %s92 = sphi 0, %s91
    %s106 = sphi 0, %s92
    %s110 = sphi 0, %s110
    %s112 = sphi 0, %s110
    %s113 = sphi 0, %s112
    %s127 = sphi 0, %s113
    %s131 = sphi 0, %s131
    %s133 = sphi 0, %s131
    %s134 = sphi 0, %s133
    %s148 = sphi 0, %s134
    %s152 = sphi 0, %s152
    %s154 = sphi 0, %s152
    %s155 = sphi 0, %s154
    %s169 = sphi 0, %s155
    %s175 = sphi 0, %s177
    %s178 = sphi 0, %s175
    %s179 = sphi 0, %s178
    %s195 = sphi 0, %s179
  $region4: #{gated_cnn_forward.2} parent=0 // loop_header_branch
    %16 = sbr.rel (%p14) target = $region8
  $region5: #{gated_cnn_forward.2} parent=0 // loop_body
    %s18 = ssub.s32 %s13, 1
    %s19 = ssub.s32 %s13, 2
    %s20 = sadd.s32 %s13, 1
    %s21 = ssub.s32 %s13, %s20
    %p22 = scmp.eq.s32.totalorder %s21, 0
    %s24 = sadd.s32 %s23, 1
    %s25 = scalar_select %p22, %s23, %s24
    %p28 = pneg %p22
    %p29 = scmp.eq.s32.totalorder %s13, 1
    %p30 = por %p28, %p29
    %p31 = scmp.ne.s32.totalorder %s23, %s26
    %p32 = scmp.eq.s32.totalorder %s13, 0
    %p33 = por %p31, %p32
    %p34 = scmp.ne.s32.totalorder %s23, %s26
    %p35 = scmp.eq.s32.totalorder %s18, 1
    %p36 = por %p34, %p35
    %p37 = scmp.ne.s32.totalorder %s26, %s27
    %p38 = scmp.eq.s32.totalorder %s18, 0
    %p39 = por %p37, %p38
    %p40 = scmp.ne.s32.totalorder %s26, %s27
    %p41 = scmp.eq.s32.totalorder %s19, 1
    %p42 = por %p40, %p41
    %p44 = scmp.ne.s32.totalorder %s27, %s43
    %p45 = scmp.eq.s32.totalorder %s19, 0
    %p46 = por %p44, %p45
    %s48 = sadd.s32 %s47, 1
    %p51 = scmp.eq.s32.totalorder %s13, 1
    %p52 = scmp.ne.s32.totalorder %s47, %s49
    %p53 = scmp.eq.s32.totalorder %s13, 0
    %p54 = por %p52, %p53
    %p55 = scmp.ne.s32.totalorder %s47, %s49
    %p56 = scmp.eq.s32.totalorder %s18, 1
    %p57 = por %p55, %p56
    %p58 = scmp.ne.s32.totalorder %s49, %s50
    %p59 = scmp.eq.s32.totalorder %s18, 0
    %p60 = por %p58, %p59
    %p61 = scmp.ne.s32.totalorder %s49, %s50
    %p62 = scmp.eq.s32.totalorder %s19, 1
    %p63 = por %p61, %p62
    %p65 = scmp.ne.s32.totalorder %s50, %s64
    %p66 = scmp.eq.s32.totalorder %s19, 0
    %p67 = por %p65, %p66
    %s69 = sadd.s32 %s68, 1
    %p72 = scmp.eq.s32.totalorder %s13, 1
    %p73 = scmp.ne.s32.totalorder %s68, %s70
    %p74 = scmp.eq.s32.totalorder %s13, 0
    %p75 = por %p73, %p74
    %p76 = scmp.ne.s32.totalorder %s68, %s70
    %p77 = scmp.eq.s32.totalorder %s18, 1
    %p78 = por %p76, %p77
    %p79 = scmp.ne.s32.totalorder %s70, %s71
    %p80 = scmp.eq.s32.totalorder %s18, 0
    %p81 = por %p79, %p80
    %p82 = scmp.ne.s32.totalorder %s70, %s71
    %p83 = scmp.eq.s32.totalorder %s19, 1
    %p84 = por %p82, %p83
    %p86 = scmp.ne.s32.totalorder %s71, %s85
    %p87 = scmp.eq.s32.totalorder %s19, 0
    %p88 = por %p86, %p87
    %s90 = sadd.s32 %s89, 1
    %p93 = scmp.eq.s32.totalorder %s13, 1
    %p94 = scmp.ne.s32.totalorder %s89, %s91
    %p95 = scmp.eq.s32.totalorder %s13, 0
    %p96 = por %p94, %p95
    %p97 = scmp.ne.s32.totalorder %s89, %s91
    %p98 = scmp.eq.s32.totalorder %s18, 1
    %p99 = por %p97, %p98
    %p100 = scmp.ne.s32.totalorder %s91, %s92
    %p101 = scmp.eq.s32.totalorder %s18, 0
    %p102 = por %p100, %p101
    %p103 = scmp.ne.s32.totalorder %s91, %s92
    %p104 = scmp.eq.s32.totalorder %s19, 1
    %p105 = por %p103, %p104
    %p107 = scmp.ne.s32.totalorder %s92, %s106
    %p108 = scmp.eq.s32.totalorder %s19, 0
    %p109 = por %p107, %p108
    %s111 = sadd.s32 %s110, 1
    %p114 = scmp.eq.s32.totalorder %s13, 1
    %p115 = scmp.ne.s32.totalorder %s110, %s112
    %p116 = scmp.eq.s32.totalorder %s13, 0
    %p117 = por %p115, %p116
    %p118 = scmp.ne.s32.totalorder %s110, %s112
    %p119 = scmp.eq.s32.totalorder %s18, 1
    %p120 = por %p118, %p119
    %p121 = scmp.ne.s32.totalorder %s112, %s113
    %p122 = scmp.eq.s32.totalorder %s18, 0
    %p123 = por %p121, %p122
    %p124 = scmp.ne.s32.totalorder %s112, %s113
    %p125 = scmp.eq.s32.totalorder %s19, 1
    %p126 = por %p124, %p125
    %p128 = scmp.ne.s32.totalorder %s113, %s127
    %p129 = scmp.eq.s32.totalorder %s19, 0
    %p130 = por %p128, %p129
    %s132 = sadd.s32 %s131, 1
    %p135 = scmp.eq.s32.totalorder %s13, 1
    %p136 = scmp.ne.s32.totalorder %s131, %s133
    %p137 = scmp.eq.s32.totalorder %s13, 0
    %p138 = por %p136, %p137
    %p139 = scmp.ne.s32.totalorder %s131, %s133
    %p140 = scmp.eq.s32.totalorder %s18, 1
    %p141 = por %p139, %p140
    %p142 = scmp.ne.s32.totalorder %s133, %s134
    %p143 = scmp.eq.s32.totalorder %s18, 0
    %p144 = por %p142, %p143
    %p145 = scmp.ne.s32.totalorder %s133, %s134
    %p146 = scmp.eq.s32.totalorder %s19, 1
    %p147 = por %p145, %p146
    %p149 = scmp.ne.s32.totalorder %s134, %s148
    %p150 = scmp.eq.s32.totalorder %s19, 0
    %p151 = por %p149, %p150
    %s153 = sadd.s32 %s152, 1
    %p156 = scmp.eq.s32.totalorder %s13, 1
    %p157 = scmp.ne.s32.totalorder %s152, %s154
    %p158 = scmp.eq.s32.totalorder %s13, 0
    %p159 = por %p157, %p158
    %p160 = scmp.ne.s32.totalorder %s152, %s154
    %p161 = scmp.eq.s32.totalorder %s18, 1
    %p162 = por %p160, %p161
    %p163 = scmp.ne.s32.totalorder %s154, %s155
    %p164 = scmp.eq.s32.totalorder %s18, 0
    %p165 = por %p163, %p164
    %p166 = scmp.ne.s32.totalorder %s154, %s155
    %p167 = scmp.eq.s32.totalorder %s19, 1
    %p168 = por %p166, %p167
    %p170 = scmp.ne.s32.totalorder %s155, %s169
    %p171 = scmp.eq.s32.totalorder %s19, 0
    %p172 = por %p170, %p171
    %s173 = ssub.s32 %s13, %s20
    %p174 = scmp.eq.s32.totalorder %s173, 0
    %s176 = sadd.s32 %s175, 1
    %s177 = scalar_select %p174, %s175, %s176
    %p180 = pneg %p174
    %p181 = scmp.eq.s32.totalorder %s13, 1
    %p182 = por %p180, %p181
    %p183 = scmp.ne.s32.totalorder %s175, %s178
    %p184 = scmp.eq.s32.totalorder %s13, 0
    %p185 = por %p183, %p184
    %p186 = scmp.ne.s32.totalorder %s175, %s178
    %p187 = scmp.eq.s32.totalorder %s18, 1
    %p188 = por %p186, %p187
    %p189 = scmp.ne.s32.totalorder %s178, %s179
    %p190 = scmp.eq.s32.totalorder %s18, 0
    %p191 = por %p189, %p190
    %p192 = scmp.ne.s32.totalorder %s178, %s179
    %p193 = scmp.eq.s32.totalorder %s19, 1
    %p194 = por %p192, %p193
    %p196 = scmp.ne.s32.totalorder %s179, %s195
    %p197 = scmp.eq.s32.totalorder %s19, 0
    %p198 = por %p196, %p197
    %p199 = scmp.le.s32.totalorder 1, %s13
    %p200 = scmp.lt.s32.totalorder %s13, 3
    %p201 = pnand %p199, %p200
    %p202 = pneg %p201
    // Predicated region
    $region9: #{gated_cnn_forward.2} parent=5 // pred_check
      _
    $region10: #{gated_cnn_forward.2} parent=5 // pred_check_branch
      %204 = sbr.rel (%p201) target = $region12
    $region11: #{gated_cnn_forward.2} parent=5 // pred_region
      %s205 = ssub.s32 %s13, 1
      // Predicated region
      $region13: #{gated_cnn_forward.2} parent=11 // pred_check
        %p206 = pneg %p60
      $region14: #{gated_cnn_forward.2} parent=11 // pred_check_branch
        %208 = sbr.rel (%p206) target = $region16
      $region15: #{gated_cnn_forward.2} parent=11 // pred_region
        _
      $region16: #{gated_cnn_forward.2} parent=11 // pred_fallthru
        _
      // Predicated region
      $region17: #{gated_cnn_forward.2} parent=11 // pred_check
        %p209 = pneg %p81
      $region18: #{gated_cnn_forward.2} parent=11 // pred_check_branch
        %211 = sbr.rel (%p209) target = $region20
      $region19: #{gated_cnn_forward.2} parent=11 // pred_region
        _
      $region20: #{gated_cnn_forward.2} parent=11 // pred_fallthru
        _
      // Predicated region
      $region21: #{gated_cnn_forward.2} parent=11 // pred_check
        %p212 = pneg %p102
      $region22: #{gated_cnn_forward.2} parent=11 // pred_check_branch
        %214 = sbr.rel (%p212) target = $region24
      $region23: #{gated_cnn_forward.2} parent=11 // pred_region
        _
      $region24: #{gated_cnn_forward.2} parent=11 // pred_fallthru
        _
      // Predicated region
      $region25: #{gated_cnn_forward.2} parent=11 // pred_check
        %p215 = pneg %p123
      $region26: #{gated_cnn_forward.2} parent=11 // pred_check_branch
        %217 = sbr.rel (%p215) target = $region28
      $region27: #{gated_cnn_forward.2} parent=11 // pred_region
        _
      $region28: #{gated_cnn_forward.2} parent=11 // pred_fallthru
        _
      // Predicated region
      $region29: #{gated_cnn_forward.2} parent=11 // pred_check
        %p218 = pneg %p144
      $region30: #{gated_cnn_forward.2} parent=11 // pred_check_branch
        %220 = sbr.rel (%p218) target = $region32
      $region31: #{gated_cnn_forward.2} parent=11 // pred_region
        _
      $region32: #{gated_cnn_forward.2} parent=11 // pred_fallthru
        _
      // Predicated region
      $region33: #{gated_cnn_forward.2} parent=11 // pred_check
        %p221 = pneg %p165
      $region34: #{gated_cnn_forward.2} parent=11 // pred_check_branch
        %223 = sbr.rel (%p221) target = $region36
      $region35: #{gated_cnn_forward.2} parent=11 // pred_region
        _
      $region36: #{gated_cnn_forward.2} parent=11 // pred_fallthru
        _
    $region12: #{gated_cnn_forward.2} parent=5 // pred_fallthru
      _
    %p224 = scmp.lt.s32.totalorder %s13, 2
    // Predicated region
    $region37: #{gated_cnn_forward.2} parent=5 // pred_check
      %p225 = pneg %p224
    $region38: #{gated_cnn_forward.2} parent=5 // pred_check_branch
      %227 = sbr.rel (%p225) target = $region40
    $region39: #{gated_cnn_forward.2} parent=5 // pred_region
      // Predicated region
      $region41: #{gated_cnn_forward.2} parent=39 // pred_check
        %p228 = pneg %p33
      $region42: #{gated_cnn_forward.2} parent=39 // pred_check_branch
        %230 = sbr.rel (%p228) target = $region44
      $region43: #{gated_cnn_forward.2} parent=39 // pred_region
        %p231 = scmp.lt.s32.totalorder %s13, 1
        %s232 = scalar_select %p231, %s13, 1
        %s233 = smul.addr %s232, 125
        %s234 = smul.addr %s233, 4
        %s235 = scalar_lea.vmem %s0, %s234
      $region44: #{gated_cnn_forward.2} parent=39 // pred_fallthru
        _
    $region40: #{gated_cnn_forward.2} parent=5 // pred_fallthru
      _
    %p236 = scmp.le.s32.totalorder 1, %s13
    %p237 = scmp.lt.s32.totalorder %s13, 3
    %p238 = pnand %p236, %p237
    %p239 = pneg %p238
    // Predicated region
    $region45: #{gated_cnn_forward.2} parent=5 // pred_check
      _
    $region46: #{gated_cnn_forward.2} parent=5 // pred_check_branch
      %241 = sbr.rel (%p238) target = $region48
    $region47: #{gated_cnn_forward.2} parent=5 // pred_region
      %s242 = ssub.s32 %s13, 1
      %p243 = scmp.lt.s32.totalorder %s18, 1
      %s244 = scalar_select %p243, %s18, 1
      %s245 = smul.addr %s244, 125
      %s246 = smul.addr %s245, 4
      %s247 = scalar_lea.vmem %s0, %s246
      %p248 = pneg %p39
      %p249 = pneg %p36
      %p250 = pneg %p60
      %p251 = pneg %p57
      %p252 = pneg %p81
      %p253 = pneg %p78
      %p254 = pneg %p102
      %p255 = pneg %p99
      %p256 = pneg %p123
      %p257 = pneg %p120
      %p258 = pneg %p144
      %p259 = pneg %p141
      %p260 = pneg %p165
      %p261 = pneg %p162
      %p262 = pneg %p191
      %p263 = pneg %p188
      %p264 = scmp.lt.s32.totalorder %s18, 1
      %s265 = scalar_select %p264, %s18, 1
      %s266 = smul.addr %s265, 12
      %s267 = smul.addr %s266, 8
      %s268 = scalar_lea.vmem %s7, %s267
      %p269 = scmp.lt.s32.totalorder %s18, 1
      %s270 = scalar_select %p269, %s18, 1
      %s271 = smul.addr %s270, 125
      %s272 = smul.addr %s271, 4
      %s273 = scalar_lea.vmem %s0, %s272
      %p274 = scmp.lt.s32.totalorder %s18, 1
      %s275 = scalar_select %p274, %s18, 1
      %s276 = smul.addr %s275, 12
      %s277 = smul.addr %s276, 8
      %s278 = scalar_lea.vmem %s7, %s277
      %v280 = vld [vmem:[%s273] sm:$0xf]
      %v281 = vld [vmem:[%s273 + $0x4] sm:$0xf]
      %v282 = vld [vmem:[%s273 + $0x8] sm:$0xf]
      %v283 = vld [vmem:[%s273 + $0xc] sm:$0xf]
      %v284 = vld [vmem:[%s273 + $0x10] sm:$0xf]
      %v285 = vld [vmem:[%s273 + $0x14] sm:$0xf]
      %v286 = vld [vmem:[%s273 + $0x18] sm:$0xf]
      %v287 = vld [vmem:[%s273 + $0x1c] sm:$0xf]
      %v288 = vld [vmem:[%s273 + $0x20] sm:$0xf]
      %v289 = vld [vmem:[%s273 + $0x24] sm:$0xf]
      %v290 = vld [vmem:[%s273 + $0x28] sm:$0xf]
      %v291 = vld [vmem:[%s273 + $0x2c] sm:$0xf]
      %v292 = vld [vmem:[%s273 + $0x30] sm:$0xf]
      %v293 = vld [vmem:[%s273 + $0x34] sm:$0xf]
      %v294 = vld [vmem:[%s273 + $0x38] sm:$0xf]
      %v295 = vld [vmem:[%s273 + $0x3c] sm:$0xf]
      %v296 = vld [vmem:[%s273 + $0x40] sm:$0xf]
      %v297 = vld [vmem:[%s273 + $0x44] sm:$0xf]
      %v298 = vld [vmem:[%s273 + $0x48] sm:$0xf]
      %v299 = vld [vmem:[%s273 + $0x4c] sm:$0xf]
      %v300 = vld [vmem:[%s273 + $0x50] sm:$0xf]
      %v301 = vld [vmem:[%s273 + $0x54] sm:$0xf]
      %v302 = vld [vmem:[%s273 + $0x58] sm:$0xf]
      %v303 = vld [vmem:[%s273 + $0x5c] sm:$0xf]
      %v304 = vld [vmem:[%s273 + $0x60] sm:$0xf]
      %v305 = vld [vmem:[%s273 + $0x64] sm:$0xf]
      %v306 = vld [vmem:[%s273 + $0x68] sm:$0xf]
      %v307 = vld [vmem:[%s273 + $0x6c] sm:$0xf]
      %v308 = vld [vmem:[%s273 + $0x70] sm:$0xf]
      %v309 = vld [vmem:[%s273 + $0x74] sm:$0xf]
      %v310 = vld [vmem:[%s273 + $0x78] sm:$0xf]
      %v311 = vld [vmem:[%s273 + $0x7c] sm:$0xf]
      %v312 = vld [vmem:[%s273 + $0x80] sm:$0xf]
      %v313 = vld [vmem:[%s273 + $0x84] sm:$0xf]
      %v314 = vld [vmem:[%s273 + $0x88] sm:$0xf]
      %v315 = vld [vmem:[%s273 + $0x8c] sm:$0xf]
      %v316 = vld [vmem:[%s273 + $0x90] sm:$0xf]
      %v317 = vld [vmem:[%s273 + $0x94] sm:$0xf]
      %v318 = vld [vmem:[%s273 + $0x98] sm:$0xf]
      %v319 = vld [vmem:[%s273 + $0x9c] sm:$0xf]
      %v320 = vld [vmem:[%s273 + $0xa0] sm:$0xf]
      %v321 = vld [vmem:[%s273 + $0xa4] sm:$0xf]
      %v322 = vld [vmem:[%s273 + $0xa8] sm:$0xf]
      %v323 = vld [vmem:[%s273 + $0xac] sm:$0xf]
      %v324 = vld [vmem:[%s273 + $0xb0] sm:$0xf]
      %v325 = vld [vmem:[%s273 + $0xb4] sm:$0xf]
      %v326 = vld [vmem:[%s273 + $0xb8] sm:$0xf]
      %v327 = vld [vmem:[%s273 + $0xbc] sm:$0xf]
      %v328 = vld [vmem:[%s273 + $0xc0] sm:$0xf]
      %v329 = vld [vmem:[%s273 + $0xc4] sm:$0xf]
      %v330 = vld [vmem:[%s273 + $0xc8] sm:$0xf]
      %v331 = vld [vmem:[%s273 + $0xcc] sm:$0xf]
      %v332 = vld [vmem:[%s273 + $0xd0] sm:$0xf]
      %v333 = vld [vmem:[%s273 + $0xd4] sm:$0xf]
      %v334 = vld [vmem:[%s273 + $0xd8] sm:$0xf]
      %v335 = vld [vmem:[%s273 + $0xdc] sm:$0xf]
      %v336 = vld [vmem:[%s273 + $0xe0] sm:$0xf]
      %v337 = vld [vmem:[%s273 + $0xe4] sm:$0xf]
      %v338 = vld [vmem:[%s273 + $0xe8] sm:$0xf]
      %v339 = vld [vmem:[%s273 + $0xec] sm:$0xf]
      %v340 = vld [vmem:[%s273 + $0xf0] sm:$0xf]
      %v341 = vld [vmem:[%s273 + $0xf4] sm:$0xf]
      %v342 = vld [vmem:[%s273 + $0xf8] sm:$0xf]
      %v343 = vld [vmem:[%s273 + $0xfc] sm:$0xf]
      %v344 = vld [vmem:[%s273 + $0x100] sm:$0xf]
      %v345 = vld [vmem:[%s273 + $0x104] sm:$0xf]
      %v346 = vld [vmem:[%s273 + $0x108] sm:$0xf]
      %v347 = vld [vmem:[%s273 + $0x10c] sm:$0xf]
      %v348 = vld [vmem:[%s273 + $0x110] sm:$0xf]
      %v349 = vld [vmem:[%s273 + $0x114] sm:$0xf]
      %v350 = vld [vmem:[%s273 + $0x118] sm:$0xf]
      %v351 = vld [vmem:[%s273 + $0x11c] sm:$0xf]
      %v352 = vld [vmem:[%s273 + $0x120] sm:$0xf]
      %v353 = vld [vmem:[%s273 + $0x124] sm:$0xf]
      %v354 = vld [vmem:[%s273 + $0x128] sm:$0xf]
      %v355 = vld [vmem:[%s273 + $0x12c] sm:$0xf]
      %v356 = vld [vmem:[%s273 + $0x130] sm:$0xf]
      %v357 = vld [vmem:[%s273 + $0x134] sm:$0xf]
      %v358 = vld [vmem:[%s273 + $0x138] sm:$0xf]
      %v359 = vld [vmem:[%s273 + $0x13c] sm:$0xf]
      %v360 = vld [vmem:[%s273 + $0x140] sm:$0xf]
      %v361 = vld [vmem:[%s273 + $0x144] sm:$0xf]
      %v362 = vld [vmem:[%s273 + $0x148] sm:$0xf]
      %v363 = vld [vmem:[%s273 + $0x14c] sm:$0xf]
      %v364 = vld [vmem:[%s273 + $0x150] sm:$0xf]
      %v365 = vld [vmem:[%s273 + $0x154] sm:$0xf]
      %v366 = vld [vmem:[%s273 + $0x158] sm:$0xf]
      %v367 = vld [vmem:[%s273 + $0x15c] sm:$0xf]
      %v368 = vld [vmem:[%s273 + $0x160] sm:$0xf]
      %v369 = vld [vmem:[%s273 + $0x164] sm:$0xf]
      %v370 = vld [vmem:[%s273 + $0x168] sm:$0xf]
      %v371 = vld [vmem:[%s273 + $0x16c] sm:$0xf]
      %v372 = vld [vmem:[%s273 + $0x170] sm:$0xf]
      %v373 = vld [vmem:[%s273 + $0x174] sm:$0xf]
      %v374 = vld [vmem:[%s273 + $0x178] sm:$0xf]
      %v375 = vld [vmem:[%s273 + $0x17c] sm:$0xf]
      %v376 = vld [vmem:[%s273 + $0x180] sm:$0xf]
      %v377 = vld [vmem:[%s273 + $0x184] sm:$0xf]
      %v378 = vld [vmem:[%s273 + $0x188] sm:$0xf]
      %v379 = vld [vmem:[%s273 + $0x18c] sm:$0xf]
      %v380 = vld [vmem:[%s273 + $0x190] sm:$0xf]
      %v381 = vld [vmem:[%s273 + $0x194] sm:$0xf]
      %v382 = vld [vmem:[%s273 + $0x198] sm:$0xf]
      %v383 = vld [vmem:[%s273 + $0x19c] sm:$0xf]
      %v384 = vld [vmem:[%s273 + $0x1a0] sm:$0xf]
      %v385 = vld [vmem:[%s273 + $0x1a4] sm:$0xf]
      %v386 = vld [vmem:[%s273 + $0x1a8] sm:$0xf]
      %v387 = vld [vmem:[%s273 + $0x1ac] sm:$0xf]
      %v388 = vld [vmem:[%s273 + $0x1b0] sm:$0xf]
      %v389 = vld [vmem:[%s273 + $0x1b4] sm:$0xf]
      %v390 = vld [vmem:[%s273 + $0x1b8] sm:$0xf]
      %v391 = vld [vmem:[%s273 + $0x1bc] sm:$0xf]
      %v392 = vld [vmem:[%s273 + $0x1c0] sm:$0xf]
      %v393 = vld [vmem:[%s273 + $0x1c4] sm:$0xf]
      %v394 = vld [vmem:[%s273 + $0x1c8] sm:$0xf]
      %v395 = vld [vmem:[%s273 + $0x1cc] sm:$0xf]
      %v396 = vld [vmem:[%s273 + $0x1d0] sm:$0xf]
      %v397 = vld [vmem:[%s273 + $0x1d4] sm:$0xf]
      %v398 = vld [vmem:[%s273 + $0x1d8] sm:$0xf]
      %v399 = vld [vmem:[%s273 + $0x1dc] sm:$0xf]
      %v400 = vld [vmem:[%s273 + $0x1e0] sm:$0xf]
      %v401 = vld [vmem:[%s273 + $0x1e4] sm:$0xf]
      %v402 = vld [vmem:[%s273 + $0x1e8] sm:$0xf]
      %v403 = vld [vmem:[%s273 + $0x1ec] sm:$0xf]
      %v404 = vld [vmem:[%s273 + $0x1f0] sm:$0xf]
      %v405 = vld [vmem:[%s1] sm:$0xff]
      %v406 = vld [vmem:[%s1 + $0x8] sm:$0xff]
      %v407 = vld [vmem:[%s1 + $0x10] sm:$0xff]
      %v408 = vld [vmem:[%s1 + $0x18] sm:$0xff]
      %v409 = vld [vmem:[%s1 + $0x20] sm:$0xff]
      %v410 = vld [vmem:[%s1 + $0x28] sm:$0xff]
      %v411 = vld [vmem:[%s1 + $0x30] sm:$0xff]
      %v412 = vld [vmem:[%s1 + $0x38] sm:$0xff]
      %v413 = vld [vmem:[%s1 + $0x40] sm:$0xff]
      %v414 = vld [vmem:[%s1 + $0x48] sm:$0xff]
      %v415 = vld [vmem:[%s1 + $0x50] sm:$0xff]
      %v416 = vld [vmem:[%s1 + $0x58] sm:$0xff]
      %v417 = vld [vmem:[%s1 + $0x60] sm:$0xff]
      %v418 = vld [vmem:[%s1 + $0x68] sm:$0xff]
      %v419 = vld [vmem:[%s1 + $0x70] sm:$0xff]
      %v420 = vld [vmem:[%s1 + $0x78] sm:$0xff]
      %v421 = vld [vmem:[%s1 + $0x80] sm:$0xff]
      %v422 = vld [vmem:[%s1 + $0x88] sm:$0xff]
      %v423 = vld [vmem:[%s1 + $0x90] sm:$0xff]
      %v424 = vld [vmem:[%s1 + $0x98] sm:$0xff]
      %v425 = vld [vmem:[%s1 + $0xa0] sm:$0xff]
      %v426 = vld [vmem:[%s1 + $0xa8] sm:$0xff]
      %v427 = vld [vmem:[%s1 + $0xb0] sm:$0xff]
      %v428 = vld [vmem:[%s1 + $0xb8] sm:$0xff]
      %v429 = vld [vmem:[%s1 + $0xc0] sm:$0xff]
      %v430 = vld [vmem:[%s1 + $0xc8] sm:$0xff]
      %v431 = vld [vmem:[%s1 + $0xd0] sm:$0xff]
      %v432 = vld [vmem:[%s1 + $0xd8] sm:$0xff]
      %v433 = vld [vmem:[%s1 + $0xe0] sm:$0xff]
      %v434 = vld [vmem:[%s1 + $0xe8] sm:$0xff]
      %v435 = vld [vmem:[%s1 + $0xf0] sm:$0xff]
      %v436 = vld [vmem:[%s1 + $0xf8] sm:$0xff]
      %v437 = vld [vmem:[%s1 + $0x100] sm:$0xff]
      %v438 = vld [vmem:[%s1 + $0x108] sm:$0xff]
      %v439 = vld [vmem:[%s1 + $0x110] sm:$0xff]
      %v440 = vld [vmem:[%s1 + $0x118] sm:$0xff]
      %v441 = vld [vmem:[%s1 + $0x120] sm:$0xff]
      %v442 = vld [vmem:[%s1 + $0x128] sm:$0xff]
      %v443 = vld [vmem:[%s1 + $0x130] sm:$0xff]
      %v444 = vld [vmem:[%s1 + $0x138] sm:$0xff]
      %v445 = vld [vmem:[%s1 + $0x140] sm:$0xff]
      %v446 = vld [vmem:[%s1 + $0x148] sm:$0xff]
      %v447 = vld [vmem:[%s1 + $0x150] sm:$0xff]
      %v448 = vld [vmem:[%s1 + $0x158] sm:$0xff]
      %v449 = vld [vmem:[%s1 + $0x160] sm:$0xff]
      %v450 = vld [vmem:[%s1 + $0x168] sm:$0xff]
      %v451 = vld [vmem:[%s1 + $0x170] sm:$0xff]
      %v452 = vld [vmem:[%s1 + $0x178] sm:$0xff]
      %v453 = vld [vmem:[%s1 + $0x180] sm:$0xff]
      %v454 = vld [vmem:[%s1 + $0x188] sm:$0xff]
      %v455 = vld [vmem:[%s1 + $0x190] sm:$0xff]
      %v456 = vld [vmem:[%s1 + $0x198] sm:$0xff]
      %v457 = vld [vmem:[%s1 + $0x1a0] sm:$0xff]
      %v458 = vld [vmem:[%s1 + $0x1a8] sm:$0xff]
      %v459 = vld [vmem:[%s1 + $0x1b0] sm:$0xff]
      %v460 = vld [vmem:[%s1 + $0x1b8] sm:$0xff]
      %v461 = vld [vmem:[%s1 + $0x1c0] sm:$0xff]
      %v462 = vld [vmem:[%s1 + $0x1c8] sm:$0xff]
      %v463 = vld [vmem:[%s1 + $0x1d0] sm:$0xff]
      %v464 = vld [vmem:[%s1 + $0x1d8] sm:$0xff]
      %v465 = vld [vmem:[%s1 + $0x1e0] sm:$0xff]
      %v466 = vld [vmem:[%s1 + $0x1e8] sm:$0xff]
      %v467 = vld [vmem:[%s1 + $0x1f0] sm:$0xff]
      %v468 = vld [vmem:[%s1 + $0x1f8] sm:$0xff]
      %v469 = vld [vmem:[%s1 + $0x200] sm:$0xff]
      %v470 = vld [vmem:[%s1 + $0x208] sm:$0xff]
      %v471 = vld [vmem:[%s1 + $0x210] sm:$0xff]
      %v472 = vld [vmem:[%s1 + $0x218] sm:$0xff]
      %v473 = vld [vmem:[%s1 + $0x220] sm:$0xff]
      %v474 = vld [vmem:[%s1 + $0x228] sm:$0xff]
      %v475 = vld [vmem:[%s1 + $0x230] sm:$0xff]
      %v476 = vld [vmem:[%s1 + $0x238] sm:$0xff]
      %v477 = vld [vmem:[%s1 + $0x240] sm:$0xff]
      %v478 = vld [vmem:[%s1 + $0x248] sm:$0xff]
      %v479 = vld [vmem:[%s1 + $0x250] sm:$0xff]
      %v480 = vld [vmem:[%s1 + $0x258] sm:$0xff]
      %v481 = vld [vmem:[%s1 + $0x260] sm:$0xff]
      %v482 = vld [vmem:[%s1 + $0x268] sm:$0xff]
      %v483 = vld [vmem:[%s1 + $0x270] sm:$0xff]
      %v484 = vld [vmem:[%s1 + $0x278] sm:$0xff]
      %v485 = vld [vmem:[%s1 + $0x280] sm:$0xff]
      %v486 = vld [vmem:[%s1 + $0x288] sm:$0xff]
      %v487 = vld [vmem:[%s1 + $0x290] sm:$0xff]
      %v488 = vld [vmem:[%s1 + $0x298] sm:$0xff]
      %v489 = vld [vmem:[%s1 + $0x2a0] sm:$0xff]
      %v490 = vld [vmem:[%s1 + $0x2a8] sm:$0xff]
      %v491 = vld [vmem:[%s1 + $0x2b0] sm:$0xff]
      %v492 = vld [vmem:[%s1 + $0x2b8] sm:$0xff]
      %v493 = vld [vmem:[%s1 + $0x2c0] sm:$0xff]
      %v494 = vld [vmem:[%s1 + $0x2c8] sm:$0xff]
      %v495 = vld [vmem:[%s1 + $0x2d0] sm:$0xff]
      %v496 = vld [vmem:[%s1 + $0x2d8] sm:$0xff]
      %v497 = vld [vmem:[%s1 + $0x2e0] sm:$0xff]
      %v498 = vld [vmem:[%s1 + $0x2e8] sm:$0xff]
      %v499 = vld [vmem:[%s1 + $0x2f0] sm:$0xff]
      %v500 = vld [vmem:[%s1 + $0x2f8] sm:$0xff]
      %v501 = vld [vmem:[%s1 + $0x300] sm:$0xff]
      %v502 = vld [vmem:[%s1 + $0x308] sm:$0xff]
      %v503 = vld [vmem:[%s1 + $0x310] sm:$0xff]
      %v504 = vld [vmem:[%s1 + $0x318] sm:$0xff]
      %v505 = vld [vmem:[%s1 + $0x320] sm:$0xff]
      %v506 = vld [vmem:[%s1 + $0x328] sm:$0xff]
      %v507 = vld [vmem:[%s1 + $0x330] sm:$0xff]
      %v508 = vld [vmem:[%s1 + $0x338] sm:$0xff]
      %v509 = vld [vmem:[%s1 + $0x340] sm:$0xff]
      %v510 = vld [vmem:[%s1 + $0x348] sm:$0xff]
      %v511 = vld [vmem:[%s1 + $0x350] sm:$0xff]
      %v512 = vld [vmem:[%s1 + $0x358] sm:$0xff]
      %v513 = vld [vmem:[%s1 + $0x360] sm:$0xff]
      %v514 = vld [vmem:[%s1 + $0x368] sm:$0xff]
      %v515 = vld [vmem:[%s1 + $0x370] sm:$0xff]
      %v516 = vld [vmem:[%s1 + $0x378] sm:$0xff]
      %v517 = vld [vmem:[%s1 + $0x380] sm:$0xff]
      %v518 = vld [vmem:[%s1 + $0x388] sm:$0xff]
      %v519 = vld [vmem:[%s1 + $0x390] sm:$0xff]
      %v520 = vld [vmem:[%s1 + $0x398] sm:$0xff]
      %v521 = vld [vmem:[%s1 + $0x3a0] sm:$0xff]
      %v522 = vld [vmem:[%s1 + $0x3a8] sm:$0xff]
      %v523 = vld [vmem:[%s1 + $0x3b0] sm:$0xff]
      %v524 = vld [vmem:[%s1 + $0x3b8] sm:$0xff]
      %v525 = vld [vmem:[%s1 + $0x3c0] sm:$0xff]
      %v526 = vld [vmem:[%s1 + $0x3c8] sm:$0xff]
      %v527 = vld [vmem:[%s1 + $0x3d0] sm:$0xff]
      %v528 = vld [vmem:[%s1 + $0x3d8] sm:$0xff]
      %v529 = vld [vmem:[%s1 + $0x3e0] sm:$0xff]
      %v530 = vld [vmem:[%s1 + $0x3e8] sm:$0xff]
      %v531 = vld [vmem:[%s1 + $0x3f0] sm:$0xff]
      %v532 = vld [vmem:[%s1 + $0x3f8] sm:$0xff]
      %v661 = vunpack.c.l.b16 %v405
      %v662 = vunpack.c.h.b16 %v405
      %v663 = vunpack.c.l.b16 %v406
      %v664 = vunpack.c.h.b16 %v406
      %v665 = vunpack.c.l.b16 %v407
      %v666 = vunpack.c.h.b16 %v407
      %v667 = vunpack.c.l.b16 %v408
      %v668 = vunpack.c.h.b16 %v408
      %v669 = vunpack.c.l.b16 %v409
      %v670 = vunpack.c.h.b16 %v409
      %v671 = vunpack.c.l.b16 %v410
      %v672 = vunpack.c.h.b16 %v410
      %v673 = vunpack.c.l.b16 %v411
      %v674 = vunpack.c.h.b16 %v411
      %v675 = vunpack.c.l.b16 %v412
      %v676 = vunpack.c.h.b16 %v412
      %v677 = vunpack.c.l.b16 %v413
      %v678 = vunpack.c.h.b16 %v413
      %v679 = vunpack.c.l.b16 %v414
      %v680 = vunpack.c.h.b16 %v414
      %v681 = vunpack.c.l.b16 %v415
      %v682 = vunpack.c.h.b16 %v415
      %v683 = vunpack.c.l.b16 %v416
      %v684 = vunpack.c.h.b16 %v416
      %v685 = vunpack.c.l.b16 %v417
      %v686 = vunpack.c.h.b16 %v417
      %v687 = vunpack.c.l.b16 %v418
      %v688 = vunpack.c.h.b16 %v418
      %v689 = vunpack.c.l.b16 %v419
      %v690 = vunpack.c.h.b16 %v419
      %v691 = vunpack.c.l.b16 %v420
      %v692 = vunpack.c.h.b16 %v420
      %v693 = vunpack.c.l.b16 %v421
      %v694 = vunpack.c.h.b16 %v421
      %v695 = vunpack.c.l.b16 %v422
      %v696 = vunpack.c.h.b16 %v422
      %v697 = vunpack.c.l.b16 %v423
      %v698 = vunpack.c.h.b16 %v423
      %v699 = vunpack.c.l.b16 %v424
      %v700 = vunpack.c.h.b16 %v424
      %v701 = vunpack.c.l.b16 %v425
      %v702 = vunpack.c.h.b16 %v425
      %v703 = vunpack.c.l.b16 %v426
      %v704 = vunpack.c.h.b16 %v426
      %v705 = vunpack.c.l.b16 %v427
      %v706 = vunpack.c.h.b16 %v427
      %v707 = vunpack.c.l.b16 %v428
      %v708 = vunpack.c.h.b16 %v428
      %v709 = vunpack.c.l.b16 %v429
      %v710 = vunpack.c.h.b16 %v429
      %v711 = vunpack.c.l.b16 %v430
      %v712 = vunpack.c.h.b16 %v430
      %v713 = vunpack.c.l.b16 %v431
      %v714 = vunpack.c.h.b16 %v431
      %v715 = vunpack.c.l.b16 %v432
      %v716 = vunpack.c.h.b16 %v432
      %v717 = vunpack.c.l.b16 %v433
      %v718 = vunpack.c.h.b16 %v433
      %v719 = vunpack.c.l.b16 %v434
      %v720 = vunpack.c.h.b16 %v434
      %v721 = vunpack.c.l.b16 %v435
      %v722 = vunpack.c.h.b16 %v435
      %v723 = vunpack.c.l.b16 %v436
      %v724 = vunpack.c.h.b16 %v436
      %v725 = vunpack.c.l.b16 %v437
      %v726 = vunpack.c.h.b16 %v437
      %v727 = vunpack.c.l.b16 %v438
      %v728 = vunpack.c.h.b16 %v438
      %v729 = vunpack.c.l.b16 %v439
      %v730 = vunpack.c.h.b16 %v439
      %v731 = vunpack.c.l.b16 %v440
      %v732 = vunpack.c.h.b16 %v440
      %v733 = vunpack.c.l.b16 %v441
      %v734 = vunpack.c.h.b16 %v441
      %v735 = vunpack.c.l.b16 %v442
      %v736 = vunpack.c.h.b16 %v442
      %v737 = vunpack.c.l.b16 %v443
      %v738 = vunpack.c.h.b16 %v443
      %v739 = vunpack.c.l.b16 %v444
      %v740 = vunpack.c.h.b16 %v444
      %v741 = vunpack.c.l.b16 %v445
      %v742 = vunpack.c.h.b16 %v445
      %v743 = vunpack.c.l.b16 %v446
      %v744 = vunpack.c.h.b16 %v446
      %v745 = vunpack.c.l.b16 %v447
      %v746 = vunpack.c.h.b16 %v447
      %v747 = vunpack.c.l.b16 %v448
      %v748 = vunpack.c.h.b16 %v448
      %v749 = vunpack.c.l.b16 %v449
      %v750 = vunpack.c.h.b16 %v449
      %v751 = vunpack.c.l.b16 %v450
      %v752 = vunpack.c.h.b16 %v450
      %v753 = vunpack.c.l.b16 %v451
      %v754 = vunpack.c.h.b16 %v451
      %v755 = vunpack.c.l.b16 %v452
      %v756 = vunpack.c.h.b16 %v452
      %v757 = vunpack.c.l.b16 %v453
      %v758 = vunpack.c.h.b16 %v453
      %v759 = vunpack.c.l.b16 %v454
      %v760 = vunpack.c.h.b16 %v454
      %v761 = vunpack.c.l.b16 %v455
      %v762 = vunpack.c.h.b16 %v455
      %v763 = vunpack.c.l.b16 %v456
      %v764 = vunpack.c.h.b16 %v456
      %v765 = vunpack.c.l.b16 %v457
      %v766 = vunpack.c.h.b16 %v457
      %v767 = vunpack.c.l.b16 %v458
      %v768 = vunpack.c.h.b16 %v458
      %v769 = vunpack.c.l.b16 %v459
      %v770 = vunpack.c.h.b16 %v459
      %v771 = vunpack.c.l.b16 %v460
      %v772 = vunpack.c.h.b16 %v460
      %v773 = vunpack.c.l.b16 %v461
      %v774 = vunpack.c.h.b16 %v461
      %v775 = vunpack.c.l.b16 %v462
      %v776 = vunpack.c.h.b16 %v462
      %v777 = vunpack.c.l.b16 %v463
      %v778 = vunpack.c.h.b16 %v463
      %v779 = vunpack.c.l.b16 %v464
      %v780 = vunpack.c.h.b16 %v464
      %v781 = vunpack.c.l.b16 %v465
      %v782 = vunpack.c.h.b16 %v465
      %v783 = vunpack.c.l.b16 %v466
      %v784 = vunpack.c.h.b16 %v466
      %v785 = vunpack.c.l.b16 %v467
      %v786 = vunpack.c.h.b16 %v467
      %v787 = vunpack.c.l.b16 %v468
      %v788 = vunpack.c.h.b16 %v468
      %v789 = vunpack.c.l.b16 %v469
      %v790 = vunpack.c.h.b16 %v469
      %v791 = vunpack.c.l.b16 %v470
      %v792 = vunpack.c.h.b16 %v470
      %v793 = vunpack.c.l.b16 %v471
      %v794 = vunpack.c.h.b16 %v471
      %v795 = vunpack.c.l.b16 %v472
      %v796 = vunpack.c.h.b16 %v472
      %v797 = vunpack.c.l.b16 %v473
      %v798 = vunpack.c.h.b16 %v473
      %v799 = vunpack.c.l.b16 %v474
      %v800 = vunpack.c.h.b16 %v474
      %v801 = vunpack.c.l.b16 %v475
      %v802 = vunpack.c.h.b16 %v475
      %v803 = vunpack.c.l.b16 %v476
      %v804 = vunpack.c.h.b16 %v476
      %v805 = vunpack.c.l.b16 %v477
      %v806 = vunpack.c.h.b16 %v477
      %v807 = vunpack.c.l.b16 %v478
      %v808 = vunpack.c.h.b16 %v478
      %v809 = vunpack.c.l.b16 %v479
      %v810 = vunpack.c.h.b16 %v479
      %v811 = vunpack.c.l.b16 %v480
      %v812 = vunpack.c.h.b16 %v480
      %v813 = vunpack.c.l.b16 %v481
      %v814 = vunpack.c.h.b16 %v481
      %v815 = vunpack.c.l.b16 %v482
      %v816 = vunpack.c.h.b16 %v482
      %v817 = vunpack.c.l.b16 %v483
      %v818 = vunpack.c.h.b16 %v483
      %v819 = vunpack.c.l.b16 %v484
      %v820 = vunpack.c.h.b16 %v484
      %v821 = vunpack.c.l.b16 %v485
      %v822 = vunpack.c.h.b16 %v485
      %v823 = vunpack.c.l.b16 %v486
      %v824 = vunpack.c.h.b16 %v486
      %v825 = vunpack.c.l.b16 %v487
      %v826 = vunpack.c.h.b16 %v487
      %v827 = vunpack.c.l.b16 %v488
      %v828 = vunpack.c.h.b16 %v488
      %v829 = vunpack.c.l.b16 %v489
      %v830 = vunpack.c.h.b16 %v489
      %v831 = vunpack.c.l.b16 %v490
      %v832 = vunpack.c.h.b16 %v490
      %v833 = vunpack.c.l.b16 %v491
      %v834 = vunpack.c.h.b16 %v491
      %v835 = vunpack.c.l.b16 %v492
      %v836 = vunpack.c.h.b16 %v492
      %v837 = vunpack.c.l.b16 %v493
      %v838 = vunpack.c.h.b16 %v493
      %v839 = vunpack.c.l.b16 %v494
      %v840 = vunpack.c.h.b16 %v494
      %v841 = vunpack.c.l.b16 %v495
      %v842 = vunpack.c.h.b16 %v495
      %v843 = vunpack.c.l.b16 %v496
      %v844 = vunpack.c.h.b16 %v496
      %v845 = vunpack.c.l.b16 %v497
      %v846 = vunpack.c.h.b16 %v497
      %v847 = vunpack.c.l.b16 %v498
      %v848 = vunpack.c.h.b16 %v498
      %v849 = vunpack.c.l.b16 %v499
      %v850 = vunpack.c.h.b16 %v499
      %v851 = vunpack.c.l.b16 %v500
      %v852 = vunpack.c.h.b16 %v500
      %v853 = vunpack.c.l.b16 %v501
      %v854 = vunpack.c.h.b16 %v501
      %v855 = vunpack.c.l.b16 %v502
      %v856 = vunpack.c.h.b16 %v502
      %v857 = vunpack.c.l.b16 %v503
      %v858 = vunpack.c.h.b16 %v503
      %v859 = vunpack.c.l.b16 %v504
      %v860 = vunpack.c.h.b16 %v504
      %v861 = vunpack.c.l.b16 %v505
      %v862 = vunpack.c.h.b16 %v505
      %v863 = vunpack.c.l.b16 %v506
      %v864 = vunpack.c.h.b16 %v506
      %v865 = vunpack.c.l.b16 %v507
      %v866 = vunpack.c.h.b16 %v507
      %v867 = vunpack.c.l.b16 %v508
      %v868 = vunpack.c.h.b16 %v508
      %v869 = vunpack.c.l.b16 %v509
      %v870 = vunpack.c.h.b16 %v509
      %v871 = vunpack.c.l.b16 %v510
      %v872 = vunpack.c.h.b16 %v510
      %v873 = vunpack.c.l.b16 %v511
      %v874 = vunpack.c.h.b16 %v511
      %v875 = vunpack.c.l.b16 %v512
      %v876 = vunpack.c.h.b16 %v512
      %v877 = vunpack.c.l.b16 %v513
      %v878 = vunpack.c.h.b16 %v513
      %v879 = vunpack.c.l.b16 %v514
      %v880 = vunpack.c.h.b16 %v514
      %v881 = vunpack.c.l.b16 %v515
      %v882 = vunpack.c.h.b16 %v515
      %v883 = vunpack.c.l.b16 %v516
      %v884 = vunpack.c.h.b16 %v516
      %v885 = vunpack.c.l.b16 %v517
      %v886 = vunpack.c.h.b16 %v517
      %v887 = vunpack.c.l.b16 %v518
      %v888 = vunpack.c.h.b16 %v518
      %v889 = vunpack.c.l.b16 %v519
      %v890 = vunpack.c.h.b16 %v519
      %v891 = vunpack.c.l.b16 %v520
      %v892 = vunpack.c.h.b16 %v520
      %v893 = vunpack.c.l.b16 %v521
      %v894 = vunpack.c.h.b16 %v521
      %v895 = vunpack.c.l.b16 %v522
      %v896 = vunpack.c.h.b16 %v522
      %v897 = vunpack.c.l.b16 %v523
      %v898 = vunpack.c.h.b16 %v523
      %v899 = vunpack.c.l.b16 %v524
      %v900 = vunpack.c.h.b16 %v524
      %v901 = vunpack.c.l.b16 %v525
      %v902 = vunpack.c.h.b16 %v525
      %v903 = vunpack.c.l.b16 %v526
      %v904 = vunpack.c.h.b16 %v526
      %v905 = vunpack.c.l.b16 %v527
      %v906 = vunpack.c.h.b16 %v527
      %v907 = vunpack.c.l.b16 %v528
      %v908 = vunpack.c.h.b16 %v528
      %v909 = vunpack.c.l.b16 %v529
      %v910 = vunpack.c.h.b16 %v529
      %v911 = vunpack.c.l.b16 %v530
      %v912 = vunpack.c.h.b16 %v530
      %v913 = vunpack.c.l.b16 %v531
      %v914 = vunpack.c.h.b16 %v531
      %v915 = vunpack.c.l.b16 %v532
      %v916 = vunpack.c.h.b16 %v532
      %v917 = vpack.c.b16 %v669, %v661
      %v918 = vpack.c.b16 %v670, %v662
      %v919 = vpack.c.b16 %v671, %v663
      %v920 = vpack.c.b16 %v672, %v664
      %v921 = vpack.c.b16 %v673, %v665
      %v922 = vpack.c.b16 %v674, %v666
      %v923 = vpack.c.b16 %v675, %v667
      %v924 = vpack.c.b16 %v676, %v668
      %v925 = vpack.c.b16 %v685, %v677
      %v926 = vpack.c.b16 %v686, %v678
      %v927 = vpack.c.b16 %v687, %v679
      %v928 = vpack.c.b16 %v688, %v680
      %v929 = vpack.c.b16 %v689, %v681
      %v930 = vpack.c.b16 %v690, %v682
      %v931 = vpack.c.b16 %v691, %v683
      %v932 = vpack.c.b16 %v692, %v684
      %v933 = vpack.c.b16 %v701, %v693
      %v934 = vpack.c.b16 %v702, %v694
      %v935 = vpack.c.b16 %v703, %v695
      %v936 = vpack.c.b16 %v704, %v696
      %v937 = vpack.c.b16 %v705, %v697
      %v938 = vpack.c.b16 %v706, %v698
      %v939 = vpack.c.b16 %v707, %v699
      %v940 = vpack.c.b16 %v708, %v700
      %v941 = vpack.c.b16 %v717, %v709
      %v942 = vpack.c.b16 %v718, %v710
      %v943 = vpack.c.b16 %v719, %v711
      %v944 = vpack.c.b16 %v720, %v712
      %v945 = vpack.c.b16 %v721, %v713
      %v946 = vpack.c.b16 %v722, %v714
      %v947 = vpack.c.b16 %v723, %v715
      %v948 = vpack.c.b16 %v724, %v716
      %v949 = vpack.c.b16 %v733, %v725
      %v950 = vpack.c.b16 %v734, %v726
      %v951 = vpack.c.b16 %v735, %v727
      %v952 = vpack.c.b16 %v736, %v728
      %v953 = vpack.c.b16 %v737, %v729
      %v954 = vpack.c.b16 %v738, %v730
      %v955 = vpack.c.b16 %v739, %v731
      %v956 = vpack.c.b16 %v740, %v732
      %v957 = vpack.c.b16 %v749, %v741
      %v958 = vpack.c.b16 %v750, %v742
      %v959 = vpack.c.b16 %v751, %v743
      %v960 = vpack.c.b16 %v752, %v744
      %v961 = vpack.c.b16 %v753, %v745
      %v962 = vpack.c.b16 %v754, %v746
      %v963 = vpack.c.b16 %v755, %v747
      %v964 = vpack.c.b16 %v756, %v748
      %v965 = vpack.c.b16 %v765, %v757
      %v966 = vpack.c.b16 %v766, %v758
      %v967 = vpack.c.b16 %v767, %v759
      %v968 = vpack.c.b16 %v768, %v760
      %v969 = vpack.c.b16 %v769, %v761
      %v970 = vpack.c.b16 %v770, %v762
      %v971 = vpack.c.b16 %v771, %v763
      %v972 = vpack.c.b16 %v772, %v764
      %v973 = vpack.c.b16 %v781, %v773
      %v974 = vpack.c.b16 %v782, %v774
      %v975 = vpack.c.b16 %v783, %v775
      %v976 = vpack.c.b16 %v784, %v776
      %v977 = vpack.c.b16 %v785, %v777
      %v978 = vpack.c.b16 %v786, %v778
      %v979 = vpack.c.b16 %v787, %v779
      %v980 = vpack.c.b16 %v788, %v780
      %v981 = vpack.c.b16 %v797, %v789
      %v982 = vpack.c.b16 %v798, %v790
      %v983 = vpack.c.b16 %v799, %v791
      %v984 = vpack.c.b16 %v800, %v792
      %v985 = vpack.c.b16 %v801, %v793
      %v986 = vpack.c.b16 %v802, %v794
      %v987 = vpack.c.b16 %v803, %v795
      %v988 = vpack.c.b16 %v804, %v796
      %v989 = vpack.c.b16 %v813, %v805
      %v990 = vpack.c.b16 %v814, %v806
      %v991 = vpack.c.b16 %v815, %v807
      %v992 = vpack.c.b16 %v816, %v808
      %v993 = vpack.c.b16 %v817, %v809
      %v994 = vpack.c.b16 %v818, %v810
      %v995 = vpack.c.b16 %v819, %v811
      %v996 = vpack.c.b16 %v820, %v812
      %v997 = vpack.c.b16 %v829, %v821
      %v998 = vpack.c.b16 %v830, %v822
      %v999 = vpack.c.b16 %v831, %v823
      %v1000 = vpack.c.b16 %v832, %v824
      %v1001 = vpack.c.b16 %v833, %v825
      %v1002 = vpack.c.b16 %v834, %v826
      %v1003 = vpack.c.b16 %v835, %v827
      %v1004 = vpack.c.b16 %v836, %v828
      %v1005 = vpack.c.b16 %v845, %v837
      %v1006 = vpack.c.b16 %v846, %v838
      %v1007 = vpack.c.b16 %v847, %v839
      %v1008 = vpack.c.b16 %v848, %v840
      %v1009 = vpack.c.b16 %v849, %v841
      %v1010 = vpack.c.b16 %v850, %v842
      %v1011 = vpack.c.b16 %v851, %v843
      %v1012 = vpack.c.b16 %v852, %v844
      %v1013 = vpack.c.b16 %v861, %v853
      %v1014 = vpack.c.b16 %v862, %v854
      %v1015 = vpack.c.b16 %v863, %v855
      %v1016 = vpack.c.b16 %v864, %v856
      %v1017 = vpack.c.b16 %v865, %v857
      %v1018 = vpack.c.b16 %v866, %v858
      %v1019 = vpack.c.b16 %v867, %v859
      %v1020 = vpack.c.b16 %v868, %v860
      %v1021 = vpack.c.b16 %v877, %v869
      %v1022 = vpack.c.b16 %v878, %v870
      %v1023 = vpack.c.b16 %v879, %v871
      %v1024 = vpack.c.b16 %v880, %v872
      %v1025 = vpack.c.b16 %v881, %v873
      %v1026 = vpack.c.b16 %v882, %v874
      %v1027 = vpack.c.b16 %v883, %v875
      %v1028 = vpack.c.b16 %v884, %v876
      %v1029 = vpack.c.b16 %v893, %v885
      %v1030 = vpack.c.b16 %v894, %v886
      %v1031 = vpack.c.b16 %v895, %v887
      %v1032 = vpack.c.b16 %v896, %v888
      %v1033 = vpack.c.b16 %v897, %v889
      %v1034 = vpack.c.b16 %v898, %v890
      %v1035 = vpack.c.b16 %v899, %v891
      %v1036 = vpack.c.b16 %v900, %v892
      %v1037 = vpack.c.b16 %v909, %v901
      %v1038 = vpack.c.b16 %v910, %v902
      %v1039 = vpack.c.b16 %v911, %v903
      %v1040 = vpack.c.b16 %v912, %v904
      %v1041 = vpack.c.b16 %v913, %v905
      %v1042 = vpack.c.b16 %v914, %v906
      %v1043 = vpack.c.b16 %v915, %v907
      %v1044 = vpack.c.b16 %v916, %v908
      %v1282 = vunpack.c.l.b16 %v280
      %v1283 = vunpack.c.l.b16 %v281
      %v1284 = vunpack.c.l.b16 %v282
      %v1285 = vunpack.c.l.b16 %v283
      %v1286 = vunpack.c.l.b16 %v284
      %v1287 = vunpack.c.l.b16 %v285
      %v1288 = vunpack.c.l.b16 %v286
      %v1289 = vunpack.c.l.b16 %v287
      %v1290 = vunpack.c.l.b16 %v288
      %v1291 = vunpack.c.l.b16 %v289
      %v1292 = vunpack.c.l.b16 %v290
      %v1293 = vunpack.c.l.b16 %v291
      %v1294 = vunpack.c.l.b16 %v292
      %v1295 = vunpack.c.l.b16 %v293
      %v1296 = vunpack.c.l.b16 %v294
      %v1297 = vunpack.c.l.b16 %v295
      %v1298 = vunpack.c.l.b16 %v296
      %v1299 = vunpack.c.l.b16 %v297
      %v1300 = vunpack.c.l.b16 %v298
      %v1301 = vunpack.c.l.b16 %v299
      %v1302 = vunpack.c.l.b16 %v300
      %v1303 = vunpack.c.l.b16 %v301
      %v1304 = vunpack.c.l.b16 %v302
      %v1305 = vunpack.c.l.b16 %v303
      %v1306 = vunpack.c.l.b16 %v304
      %v1307 = vunpack.c.l.b16 %v305
      %v1308 = vunpack.c.l.b16 %v306
      %v1309 = vunpack.c.l.b16 %v307
      %v1310 = vunpack.c.l.b16 %v308
      %v1311 = vunpack.c.l.b16 %v309
      %v1312 = vunpack.c.l.b16 %v310
      %v1313 = vunpack.c.l.b16 %v311
      %v1314 = vunpack.c.l.b16 %v312
      %v1315 = vunpack.c.l.b16 %v313
      %v1316 = vunpack.c.l.b16 %v314
      %v1317 = vunpack.c.l.b16 %v315
      %v1318 = vunpack.c.l.b16 %v316
      %v1319 = vunpack.c.l.b16 %v317
      %v1320 = vunpack.c.l.b16 %v318
      %v1321 = vunpack.c.l.b16 %v319
      %v1322 = vunpack.c.l.b16 %v320
      %v1323 = vunpack.c.l.b16 %v321
      %v1324 = vunpack.c.l.b16 %v322
      %v1325 = vunpack.c.l.b16 %v323
      %v1326 = vunpack.c.l.b16 %v324
      %v1327 = vunpack.c.l.b16 %v325
      %v1328 = vunpack.c.l.b16 %v326
      %v1329 = vunpack.c.l.b16 %v327
      %v1330 = vunpack.c.l.b16 %v328
      %v1331 = vunpack.c.l.b16 %v329
      %v1332 = vunpack.c.l.b16 %v330
      %v1333 = vunpack.c.l.b16 %v331
      %v1334 = vunpack.c.l.b16 %v332
      %v1335 = vunpack.c.l.b16 %v333
      %v1336 = vunpack.c.l.b16 %v334
      %v1337 = vunpack.c.l.b16 %v335
      %v1338 = vunpack.c.l.b16 %v336
      %v1339 = vunpack.c.l.b16 %v337
      %v1340 = vunpack.c.l.b16 %v338
      %v1341 = vunpack.c.l.b16 %v339
      %v1342 = vunpack.c.l.b16 %v340
      %v1343 = vunpack.c.l.b16 %v341
      %v1344 = vunpack.c.l.b16 %v342
      %v1345 = vunpack.c.l.b16 %v343
      %v1346 = vunpack.c.l.b16 %v344
      %v1347 = vunpack.c.l.b16 %v345
      %v1348 = vunpack.c.l.b16 %v346
      %v1349 = vunpack.c.l.b16 %v347
      %v1350 = vunpack.c.l.b16 %v348
      %v1351 = vunpack.c.l.b16 %v349
      %v1352 = vunpack.c.l.b16 %v350
      %v1353 = vunpack.c.l.b16 %v351
      %v1354 = vunpack.c.l.b16 %v352
      %v1355 = vunpack.c.l.b16 %v353
      %v1356 = vunpack.c.l.b16 %v354
      %v1357 = vunpack.c.l.b16 %v355
      %v1358 = vunpack.c.l.b16 %v356
      %v1359 = vunpack.c.l.b16 %v357
      %v1360 = vunpack.c.l.b16 %v358
      %v1361 = vunpack.c.l.b16 %v359
      %v1362 = vunpack.c.l.b16 %v360
      %v1363 = vunpack.c.l.b16 %v361
      %v1364 = vunpack.c.l.b16 %v362
      %v1365 = vunpack.c.l.b16 %v363
      %v1366 = vunpack.c.l.b16 %v364
      %v1367 = vunpack.c.l.b16 %v365
      %v1368 = vunpack.c.l.b16 %v366
      %v1369 = vunpack.c.l.b16 %v367
      %v1370 = vunpack.c.l.b16 %v368
      %v1371 = vunpack.c.l.b16 %v369
      %v1372 = vunpack.c.l.b16 %v370
      %v1373 = vunpack.c.l.b16 %v371
      %v1374 = vunpack.c.l.b16 %v372
      %v1375 = vunpack.c.l.b16 %v373
      %v1376 = vunpack.c.l.b16 %v374
      %v1377 = vunpack.c.l.b16 %v375
      %v1378 = vunpack.c.l.b16 %v376
      %v1379 = vunpack.c.l.b16 %v377
      %v1380 = vunpack.c.l.b16 %v378
      %v1381 = vunpack.c.l.b16 %v379
      %v1382 = vunpack.c.l.b16 %v380
      %v1383 = vunpack.c.l.b16 %v381
      %v1384 = vunpack.c.l.b16 %v382
      %v1385 = vunpack.c.l.b16 %v383
      %v1386 = vunpack.c.l.b16 %v384
      %v1387 = vunpack.c.l.b16 %v385
      %v1388 = vunpack.c.l.b16 %v386
      %v1389 = vunpack.c.l.b16 %v387
      %v1390 = vunpack.c.l.b16 %v388
      %v1391 = vunpack.c.l.b16 %v389
      %v1392 = vunpack.c.l.b16 %v390
      %v1393 = vunpack.c.l.b16 %v391
      %v1394 = vunpack.c.l.b16 %v392
      %v1395 = vunpack.c.l.b16 %v393
      %v1396 = vunpack.c.l.b16 %v394
      %v1397 = vunpack.c.l.b16 %v395
      %v1398 = vunpack.c.l.b16 %v396
      %v1399 = vunpack.c.l.b16 %v397
      %v1400 = vunpack.c.l.b16 %v398
      %v1401 = vunpack.c.l.b16 %v399
      %v1402 = vunpack.c.l.b16 %v400
      %v1403 = vunpack.c.l.b16 %v401
      %v1404 = vunpack.c.l.b16 %v402
      %v1405 = vunpack.c.l.b16 %v403
      %v1406 = vunpack.c.l.b16 %v404
      %v1407 = vpack.c.b16 %v1283, %v1282
      %v1408 = vpack.c.b16 %v1285, %v1284
      %v1409 = vpack.c.b16 %v1287, %v1286
      %v1410 = vpack.c.b16 %v1289, %v1288
      %v1411 = vpack.c.b16 %v1291, %v1290
      %v1412 = vpack.c.b16 %v1293, %v1292
      %v1413 = vpack.c.b16 %v1295, %v1294
      %v1414 = vpack.c.b16 %v1297, %v1296
      %v1415 = vpack.c.b16 %v1299, %v1298
      %v1416 = vpack.c.b16 %v1301, %v1300
      %v1417 = vpack.c.b16 %v1303, %v1302
      %v1418 = vpack.c.b16 %v1305, %v1304
      %v1419 = vpack.c.b16 %v1307, %v1306
      %v1420 = vpack.c.b16 %v1309, %v1308
      %v1421 = vpack.c.b16 %v1311, %v1310
      %v1422 = vpack.c.b16 %v1313, %v1312
      %v1423 = vpack.c.b16 %v1315, %v1314
      %v1424 = vpack.c.b16 %v1317, %v1316
      %v1425 = vpack.c.b16 %v1319, %v1318
      %v1426 = vpack.c.b16 %v1321, %v1320
      %v1427 = vpack.c.b16 %v1323, %v1322
      %v1428 = vpack.c.b16 %v1325, %v1324
      %v1429 = vpack.c.b16 %v1327, %v1326
      %v1430 = vpack.c.b16 %v1329, %v1328
      %v1431 = vpack.c.b16 %v1331, %v1330
      %v1432 = vpack.c.b16 %v1333, %v1332
      %v1433 = vpack.c.b16 %v1335, %v1334
      %v1434 = vpack.c.b16 %v1337, %v1336
      %v1435 = vpack.c.b16 %v1339, %v1338
      %v1436 = vpack.c.b16 %v1341, %v1340
      %v1437 = vpack.c.b16 %v1343, %v1342
      %v1438 = vpack.c.b16 %v1345, %v1344
      %v1439 = vpack.c.b16 %v1347, %v1346
      %v1440 = vpack.c.b16 %v1349, %v1348
      %v1441 = vpack.c.b16 %v1351, %v1350
      %v1442 = vpack.c.b16 %v1353, %v1352
      %v1443 = vpack.c.b16 %v1355, %v1354
      %v1444 = vpack.c.b16 %v1357, %v1356
      %v1445 = vpack.c.b16 %v1359, %v1358
      %v1446 = vpack.c.b16 %v1361, %v1360
      %v1447 = vpack.c.b16 %v1363, %v1362
      %v1448 = vpack.c.b16 %v1365, %v1364
      %v1449 = vpack.c.b16 %v1367, %v1366
      %v1450 = vpack.c.b16 %v1369, %v1368
      %v1451 = vpack.c.b16 %v1371, %v1370
      %v1452 = vpack.c.b16 %v1373, %v1372
      %v1453 = vpack.c.b16 %v1375, %v1374
      %v1454 = vpack.c.b16 %v1377, %v1376
      %v1455 = vpack.c.b16 %v1379, %v1378
      %v1456 = vpack.c.b16 %v1381, %v1380
      %v1457 = vpack.c.b16 %v1383, %v1382
      %v1458 = vpack.c.b16 %v1385, %v1384
      %v1459 = vpack.c.b16 %v1387, %v1386
      %v1460 = vpack.c.b16 %v1389, %v1388
      %v1461 = vpack.c.b16 %v1391, %v1390
      %v1462 = vpack.c.b16 %v1393, %v1392
      %v1463 = vpack.c.b16 %v1395, %v1394
      %v1464 = vpack.c.b16 %v1397, %v1396
      %v1465 = vpack.c.b16 %v1399, %v1398
      %v1466 = vpack.c.b16 %v1401, %v1400
      %v1467 = vpack.c.b16 %v1403, %v1402
      %v1468 = vpack.c.b16 %v1405, %v1404
      %v1469 = vpack.c.b16 %v1406, %v1406
      %vm1532 = vcmask 850944
      %v1534 = vsel %vm1532, %v924, 0
      %v1537 = vsel %vm1532, %v932, 0
      %v1540 = vsel %vm1532, %v940, 0
      %v1543 = vsel %vm1532, %v948, 0
      %v1546 = vsel %vm1532, %v956, 0
      %v1549 = vsel %vm1532, %v964, 0
      %v1552 = vsel %vm1532, %v972, 0
      %v1555 = vsel %vm1532, %v980, 0
      %v1558 = vsel %vm1532, %v988, 0
      %v1561 = vsel %vm1532, %v996, 0
      %v1564 = vsel %vm1532, %v1004, 0
      %v1567 = vsel %vm1532, %v1012, 0
      %v1570 = vsel %vm1532, %v1020, 0
      %v1573 = vsel %vm1532, %v1028, 0
      %v1576 = vsel %vm1532, %v1036, 0
      %v1579 = vsel %vm1532, %v1044, 0
      %vm1581 = vcmask 1043456
      %v1583 = vsel %vm1581, %v1469, 0
      %1585 = vmatprep.subr.bf16.mxu0 0
      %1586 = vmatpush1.bf16.msra.mxu0 %v1414
      %1587 = vmatprep.subr.bf16.mxu0 0
      %1588 = vmatpush1.bf16.msra.mxu0 %v1413
      %1589 = vmatprep.subr.bf16.mxu0 0
      %1590 = vmatpush1.bf16.msra.mxu0 %v1412
      %1591 = vmatprep.subr.bf16.mxu0 0
      %1592 = vmatpush1.bf16.msra.mxu0 %v1411
      %1593 = vmatprep.subr.bf16.mxu0 0
      %1594 = vmatpush1.bf16.msra.mxu0 %v1410
      %1595 = vmatprep.subr.bf16.mxu0 0
      %1596 = vmatpush1.bf16.msra.mxu0 %v1409
      %1597 = vmatprep.subr.bf16.mxu0 0
      %1598 = vmatpush1.bf16.msra.mxu0 %v1408
      %1599 = vmatprep.subr.bf16.mxu0 0
      %1600 = vmatpush1.bf16.msra.mxu0 %v1407
      %1601 = vmatprep.subr.bf16.mxu0 0
      %1602 = vmatpush2.bf16.msra.mxu0 %v1422
      %1603 = vmatprep.subr.bf16.mxu0 0
      %1604 = vmatpush2.bf16.msra.mxu0 %v1421
      %1605 = vmatprep.subr.bf16.mxu0 0
      %1606 = vmatpush2.bf16.msra.mxu0 %v1420
      %1607 = vmatprep.subr.bf16.mxu0 0
      %1608 = vmatpush2.bf16.msra.mxu0 %v1419
      %1609 = vmatprep.subr.bf16.mxu0 0
      %1610 = vmatpush2.bf16.msra.mxu0 %v1418
      %1611 = vmatprep.subr.bf16.mxu0 0
      %1612 = vmatpush2.bf16.msra.mxu0 %v1417
      %1613 = vmatprep.subr.bf16.mxu0 0
      %1614 = vmatpush2.bf16.msra.mxu0 %v1416
      %1615 = vmatprep.subr.bf16.mxu0 0
      %1616 = vmatpush2.bf16.msra.mxu0 %v1415
      %1617 = vmatprep.mubr.bf16.mxu0 %v918
      %1618 = vmatmul.mubr.bf16.gmra.mxu0 %v917
      %v1619 = vpop.f32.mrf.mxu0
      %v1620 = vadd.f32 0.0, %v1619
      %v1621 = vpop.f32.mrf.mxu0
      %v1622 = vpop.f32.mrf.mxu0
      %v1623 = vadd.f32 0.0, %v1622
      %v1624 = vpop.f32.mrf.mxu0
      %1625 = vmatprep.mubr.bf16.mxu0 %v926
      %1626 = vmatmul.mubr.bf16.gmra.mxu0 %v925
      %v1627 = vpop.f32.mrf.mxu0
      %v1628 = vadd.f32 0.0, %v1627
      %v1629 = vpop.f32.mrf.mxu0
      %v1630 = vpop.f32.mrf.mxu0
      %v1631 = vadd.f32 0.0, %v1630
      %v1632 = vpop.f32.mrf.mxu0
      %1633 = vmatprep.mubr.bf16.mxu0 %v934
      %1634 = vmatmul.mubr.bf16.gmra.mxu0 %v933
      %v1635 = vpop.f32.mrf.mxu0
      %v1636 = vadd.f32 0.0, %v1635
      %v1637 = vpop.f32.mrf.mxu0
      %v1638 = vpop.f32.mrf.mxu0
      %v1639 = vadd.f32 0.0, %v1638
      %v1640 = vpop.f32.mrf.mxu0
      %1641 = vmatprep.mubr.bf16.mxu0 %v942
      %1642 = vmatmul.mubr.bf16.gmra.mxu0 %v941
      %v1643 = vpop.f32.mrf.mxu0
      %v1644 = vadd.f32 0.0, %v1643
      %v1645 = vpop.f32.mrf.mxu0
      %v1646 = vpop.f32.mrf.mxu0
      %v1647 = vadd.f32 0.0, %v1646
      %v1648 = vpop.f32.mrf.mxu0
      %1649 = vmatprep.mubr.bf16.mxu0 %v950
      %1650 = vmatmul.mubr.bf16.gmra.mxu0 %v949
      %v1651 = vpop.f32.mrf.mxu0
      %v1652 = vadd.f32 0.0, %v1651
      %v1653 = vpop.f32.mrf.mxu0
      %v1654 = vpop.f32.mrf.mxu0
      %v1655 = vadd.f32 0.0, %v1654
      %v1656 = vpop.f32.mrf.mxu0
      %1657 = vmatprep.mubr.bf16.mxu0 %v958
      %1658 = vmatmul.mubr.bf16.gmra.mxu0 %v957
      %v1659 = vpop.f32.mrf.mxu0
      %v1660 = vadd.f32 0.0, %v1659
      %v1661 = vpop.f32.mrf.mxu0
      %v1662 = vpop.f32.mrf.mxu0
      %v1663 = vadd.f32 0.0, %v1662
      %v1664 = vpop.f32.mrf.mxu0
      %1665 = vmatprep.mubr.bf16.mxu0 %v966
      %1666 = vmatmul.mubr.bf16.gmra.mxu0 %v965
      %v1667 = vpop.f32.mrf.mxu0
      %v1668 = vadd.f32 0.0, %v1667
      %v1669 = vpop.f32.mrf.mxu0
      %v1670 = vpop.f32.mrf.mxu0
      %v1671 = vadd.f32 0.0, %v1670
      %v1672 = vpop.f32.mrf.mxu0
      %1673 = vmatprep.mubr.bf16.mxu0 %v974
      %1674 = vmatmul.mubr.bf16.gmra.mxu0 %v973
      %v1675 = vpop.f32.mrf.mxu0
      %v1676 = vadd.f32 0.0, %v1675
      %v1677 = vpop.f32.mrf.mxu0
      %v1678 = vpop.f32.mrf.mxu0
      %v1679 = vadd.f32 0.0, %v1678
      %v1680 = vpop.f32.mrf.mxu0
      %1681 = vmatprep.mubr.bf16.mxu0 %v982
      %1682 = vmatmul.mubr.bf16.gmra.mxu0 %v981
      %v1683 = vpop.f32.mrf.mxu0
      %v1684 = vadd.f32 0.0, %v1683
      %v1685 = vpop.f32.mrf.mxu0
      %v1686 = vpop.f32.mrf.mxu0
      %v1687 = vadd.f32 0.0, %v1686
      %v1688 = vpop.f32.mrf.mxu0
      %1689 = vmatprep.mubr.bf16.mxu0 %v990
      %1690 = vmatmul.mubr.bf16.gmra.mxu0 %v989
      %v1691 = vpop.f32.mrf.mxu0
      %v1692 = vadd.f32 0.0, %v1691
      %v1693 = vpop.f32.mrf.mxu0
      %v1694 = vpop.f32.mrf.mxu0
      %v1695 = vadd.f32 0.0, %v1694
      %v1696 = vpop.f32.mrf.mxu0
      %1697 = vmatprep.mubr.bf16.mxu0 %v998
      %1698 = vmatmul.mubr.bf16.gmra.mxu0 %v997
      %v1699 = vpop.f32.mrf.mxu0
      %v1700 = vadd.f32 0.0, %v1699
      %v1701 = vpop.f32.mrf.mxu0
      %v1702 = vpop.f32.mrf.mxu0
      %v1703 = vadd.f32 0.0, %v1702
      %v1704 = vpop.f32.mrf.mxu0
      %1705 = vmatprep.mubr.bf16.mxu0 %v1006
      %1706 = vmatmul.mubr.bf16.gmra.mxu0 %v1005
      %v1707 = vpop.f32.mrf.mxu0
      %v1708 = vadd.f32 0.0, %v1707
      %v1709 = vpop.f32.mrf.mxu0
      %v1710 = vpop.f32.mrf.mxu0
      %v1711 = vadd.f32 0.0, %v1710
      %v1712 = vpop.f32.mrf.mxu0
      %1713 = vmatprep.mubr.bf16.mxu0 %v1014
      %1714 = vmatmul.mubr.bf16.gmra.mxu0 %v1013
      %v1715 = vpop.f32.mrf.mxu0
      %v1716 = vadd.f32 0.0, %v1715
      %v1717 = vpop.f32.mrf.mxu0
      %v1718 = vpop.f32.mrf.mxu0
      %v1719 = vadd.f32 0.0, %v1718
      %v1720 = vpop.f32.mrf.mxu0
      %1721 = vmatprep.mubr.bf16.mxu0 %v1022
      %1722 = vmatmul.mubr.bf16.gmra.mxu0 %v1021
      %v1723 = vpop.f32.mrf.mxu0
      %v1724 = vadd.f32 0.0, %v1723
      %v1725 = vpop.f32.mrf.mxu0
      %v1726 = vpop.f32.mrf.mxu0
      %v1727 = vadd.f32 0.0, %v1726
      %v1728 = vpop.f32.mrf.mxu0
      %1729 = vmatprep.mubr.bf16.mxu0 %v1030
      %1730 = vmatmul.mubr.bf16.gmra.mxu0 %v1029
      %v1731 = vpop.f32.mrf.mxu0
      %v1732 = vadd.f32 0.0, %v1731
      %v1733 = vpop.f32.mrf.mxu0
      %v1734 = vpop.f32.mrf.mxu0
      %v1735 = vadd.f32 0.0, %v1734
      %v1736 = vpop.f32.mrf.mxu0
      %1737 = vmatprep.mubr.bf16.mxu0 %v1038
      %1738 = vmatmul.mubr.bf16.gmra.mxu0 %v1037
      %v1739 = vpop.f32.mrf.mxu0
      %v1740 = vadd.f32 0.0, %v1739
      %v1741 = vpop.f32.mrf.mxu0
      %v1742 = vpop.f32.mrf.mxu0
      %v1743 = vadd.f32 0.0, %v1742
      %v1744 = vpop.f32.mrf.mxu0
      %1745 = vdwg.mxu0
      %1746 = vmatprep.subr.bf16.mxu0 0
      %1747 = vmatpush1.bf16.msra.mxu0 %v1430
      %1748 = vmatprep.subr.bf16.mxu0 0
      %1749 = vmatpush1.bf16.msra.mxu0 %v1429
      %1750 = vmatprep.subr.bf16.mxu0 0
      %1751 = vmatpush1.bf16.msra.mxu0 %v1428
      %1752 = vmatprep.subr.bf16.mxu0 0
      %1753 = vmatpush1.bf16.msra.mxu0 %v1427
      %1754 = vmatprep.subr.bf16.mxu0 0
      %1755 = vmatpush1.bf16.msra.mxu0 %v1426
      %1756 = vmatprep.subr.bf16.mxu0 0
      %1757 = vmatpush1.bf16.msra.mxu0 %v1425
      %1758 = vmatprep.subr.bf16.mxu0 0
      %1759 = vmatpush1.bf16.msra.mxu0 %v1424
      %1760 = vmatprep.subr.bf16.mxu0 0
      %1761 = vmatpush1.bf16.msra.mxu0 %v1423
      %1762 = vmatprep.subr.bf16.mxu0 0
      %1763 = vmatpush2.bf16.msra.mxu0 %v1438
      %1764 = vmatprep.subr.bf16.mxu0 0
      %1765 = vmatpush2.bf16.msra.mxu0 %v1437
      %1766 = vmatprep.subr.bf16.mxu0 0
      %1767 = vmatpush2.bf16.msra.mxu0 %v1436
      %1768 = vmatprep.subr.bf16.mxu0 0
      %1769 = vmatpush2.bf16.msra.mxu0 %v1435
      %1770 = vmatprep.subr.bf16.mxu0 0
      %1771 = vmatpush2.bf16.msra.mxu0 %v1434
      %1772 = vmatprep.subr.bf16.mxu0 0
      %1773 = vmatpush2.bf16.msra.mxu0 %v1433
      %1774 = vmatprep.subr.bf16.mxu0 0
      %1775 = vmatpush2.bf16.msra.mxu0 %v1432
      %1776 = vmatprep.subr.bf16.mxu0 0
      %1777 = vmatpush2.bf16.msra.mxu0 %v1431
      %1778 = vmatprep.mubr.bf16.mxu0 %v920
      %1779 = vmatmul.mubr.bf16.gmra.mxu0 %v919
      %v1780 = vpop.f32.mrf.mxu0
      %v1781 = vadd.f32 %v1620, %v1780
      %v1782 = vpop.f32.mrf.mxu0
      %v1783 = vpop.f32.mrf.mxu0
      %v1784 = vadd.f32 %v1623, %v1783
      %v1785 = vpop.f32.mrf.mxu0
      %1786 = vmatprep.mubr.bf16.mxu0 %v928
      %1787 = vmatmul.mubr.bf16.gmra.mxu0 %v927
      %v1788 = vpop.f32.mrf.mxu0
      %v1789 = vadd.f32 %v1628, %v1788
      %v1790 = vpop.f32.mrf.mxu0
      %v1791 = vpop.f32.mrf.mxu0
      %v1792 = vadd.f32 %v1631, %v1791
      %v1793 = vpop.f32.mrf.mxu0
      %1794 = vmatprep.mubr.bf16.mxu0 %v936
      %1795 = vmatmul.mubr.bf16.gmra.mxu0 %v935
      %v1796 = vpop.f32.mrf.mxu0
      %v1797 = vadd.f32 %v1636, %v1796
      %v1798 = vpop.f32.mrf.mxu0
      %v1799 = vpop.f32.mrf.mxu0
      %v1800 = vadd.f32 %v1639, %v1799
      %v1801 = vpop.f32.mrf.mxu0
      %1802 = vmatprep.mubr.bf16.mxu0 %v944
      %1803 = vmatmul.mubr.bf16.gmra.mxu0 %v943
      %v1804 = vpop.f32.mrf.mxu0
      %v1805 = vadd.f32 %v1644, %v1804
      %v1806 = vpop.f32.mrf.mxu0
      %v1807 = vpop.f32.mrf.mxu0
      %v1808 = vadd.f32 %v1647, %v1807
      %v1809 = vpop.f32.mrf.mxu0
      %1810 = vmatprep.mubr.bf16.mxu0 %v952
      %1811 = vmatmul.mubr.bf16.gmra.mxu0 %v951
      %v1812 = vpop.f32.mrf.mxu0
      %v1813 = vadd.f32 %v1652, %v1812
      %v1814 = vpop.f32.mrf.mxu0
      %v1815 = vpop.f32.mrf.mxu0
      %v1816 = vadd.f32 %v1655, %v1815
      %v1817 = vpop.f32.mrf.mxu0
      %1818 = vmatprep.mubr.bf16.mxu0 %v960
      %1819 = vmatmul.mubr.bf16.gmra.mxu0 %v959
      %v1820 = vpop.f32.mrf.mxu0
      %v1821 = vadd.f32 %v1660, %v1820
      %v1822 = vpop.f32.mrf.mxu0
      %v1823 = vpop.f32.mrf.mxu0
      %v1824 = vadd.f32 %v1663, %v1823
      %v1825 = vpop.f32.mrf.mxu0
      %1826 = vmatprep.mubr.bf16.mxu0 %v968
      %1827 = vmatmul.mubr.bf16.gmra.mxu0 %v967
      %v1828 = vpop.f32.mrf.mxu0
      %v1829 = vadd.f32 %v1668, %v1828
      %v1830 = vpop.f32.mrf.mxu0
      %v1831 = vpop.f32.mrf.mxu0
      %v1832 = vadd.f32 %v1671, %v1831
      %v1833 = vpop.f32.mrf.mxu0
      %1834 = vmatprep.mubr.bf16.mxu0 %v976
      %1835 = vmatmul.mubr.bf16.gmra.mxu0 %v975
      %v1836 = vpop.f32.mrf.mxu0
      %v1837 = vadd.f32 %v1676, %v1836
      %v1838 = vpop.f32.mrf.mxu0
      %v1839 = vpop.f32.mrf.mxu0
      %v1840 = vadd.f32 %v1679, %v1839
      %v1841 = vpop.f32.mrf.mxu0
      %1842 = vmatprep.mubr.bf16.mxu0 %v984
      %1843 = vmatmul.mubr.bf16.gmra.mxu0 %v983
      %v1844 = vpop.f32.mrf.mxu0
      %v1845 = vadd.f32 %v1684, %v1844
      %v1846 = vpop.f32.mrf.mxu0
      %v1847 = vpop.f32.mrf.mxu0
      %v1848 = vadd.f32 %v1687, %v1847
      %v1849 = vpop.f32.mrf.mxu0
      %1850 = vmatprep.mubr.bf16.mxu0 %v992
      %1851 = vmatmul.mubr.bf16.gmra.mxu0 %v991
      %v1852 = vpop.f32.mrf.mxu0
      %v1853 = vadd.f32 %v1692, %v1852
      %v1854 = vpop.f32.mrf.mxu0
      %v1855 = vpop.f32.mrf.mxu0
      %v1856 = vadd.f32 %v1695, %v1855
      %v1857 = vpop.f32.mrf.mxu0
      %1858 = vmatprep.mubr.bf16.mxu0 %v1000
      %1859 = vmatmul.mubr.bf16.gmra.mxu0 %v999
      %v1860 = vpop.f32.mrf.mxu0
      %v1861 = vadd.f32 %v1700, %v1860
      %v1862 = vpop.f32.mrf.mxu0
      %v1863 = vpop.f32.mrf.mxu0
      %v1864 = vadd.f32 %v1703, %v1863
      %v1865 = vpop.f32.mrf.mxu0
      %1866 = vmatprep.mubr.bf16.mxu0 %v1008
      %1867 = vmatmul.mubr.bf16.gmra.mxu0 %v1007
      %v1868 = vpop.f32.mrf.mxu0
      %v1869 = vadd.f32 %v1708, %v1868
      %v1870 = vpop.f32.mrf.mxu0
      %v1871 = vpop.f32.mrf.mxu0
      %v1872 = vadd.f32 %v1711, %v1871
      %v1873 = vpop.f32.mrf.mxu0
      %1874 = vmatprep.mubr.bf16.mxu0 %v1016
      %1875 = vmatmul.mubr.bf16.gmra.mxu0 %v1015
      %v1876 = vpop.f32.mrf.mxu0
      %v1877 = vadd.f32 %v1716, %v1876
      %v1878 = vpop.f32.mrf.mxu0
      %v1879 = vpop.f32.mrf.mxu0
      %v1880 = vadd.f32 %v1719, %v1879
      %v1881 = vpop.f32.mrf.mxu0
      %1882 = vmatprep.mubr.bf16.mxu0 %v1024
      %1883 = vmatmul.mubr.bf16.gmra.mxu0 %v1023
      %v1884 = vpop.f32.mrf.mxu0
      %v1885 = vadd.f32 %v1724, %v1884
      %v1886 = vpop.f32.mrf.mxu0
      %v1887 = vpop.f32.mrf.mxu0
      %v1888 = vadd.f32 %v1727, %v1887
      %v1889 = vpop.f32.mrf.mxu0
      %1890 = vmatprep.mubr.bf16.mxu0 %v1032
      %1891 = vmatmul.mubr.bf16.gmra.mxu0 %v1031
      %v1892 = vpop.f32.mrf.mxu0
      %v1893 = vadd.f32 %v1732, %v1892
      %v1894 = vpop.f32.mrf.mxu0
      %v1895 = vpop.f32.mrf.mxu0
      %v1896 = vadd.f32 %v1735, %v1895
      %v1897 = vpop.f32.mrf.mxu0
      %1898 = vmatprep.mubr.bf16.mxu0 %v1040
      %1899 = vmatmul.mubr.bf16.gmra.mxu0 %v1039
      %v1900 = vpop.f32.mrf.mxu0
      %v1901 = vadd.f32 %v1740, %v1900
      %v1902 = vpop.f32.mrf.mxu0
      %v1903 = vpop.f32.mrf.mxu0
      %v1904 = vadd.f32 %v1743, %v1903
      %v1905 = vpop.f32.mrf.mxu0
      %1906 = vdwg.mxu0
      %1907 = vmatprep.subr.bf16.mxu0 0
      %1908 = vmatpush1.bf16.msra.mxu0 %v1446
      %1909 = vmatprep.subr.bf16.mxu0 0
      %1910 = vmatpush1.bf16.msra.mxu0 %v1445
      %1911 = vmatprep.subr.bf16.mxu0 0
      %1912 = vmatpush1.bf16.msra.mxu0 %v1444
      %1913 = vmatprep.subr.bf16.mxu0 0
      %1914 = vmatpush1.bf16.msra.mxu0 %v1443
      %1915 = vmatprep.subr.bf16.mxu0 0
      %1916 = vmatpush1.bf16.msra.mxu0 %v1442
      %1917 = vmatprep.subr.bf16.mxu0 0
      %1918 = vmatpush1.bf16.msra.mxu0 %v1441
      %1919 = vmatprep.subr.bf16.mxu0 0
      %1920 = vmatpush1.bf16.msra.mxu0 %v1440
      %1921 = vmatprep.subr.bf16.mxu0 0
      %1922 = vmatpush1.bf16.msra.mxu0 %v1439
      %1923 = vmatprep.subr.bf16.mxu0 0
      %1924 = vmatpush2.bf16.msra.mxu0 %v1454
      %1925 = vmatprep.subr.bf16.mxu0 0
      %1926 = vmatpush2.bf16.msra.mxu0 %v1453
      %1927 = vmatprep.subr.bf16.mxu0 0
      %1928 = vmatpush2.bf16.msra.mxu0 %v1452
      %1929 = vmatprep.subr.bf16.mxu0 0
      %1930 = vmatpush2.bf16.msra.mxu0 %v1451
      %1931 = vmatprep.subr.bf16.mxu0 0
      %1932 = vmatpush2.bf16.msra.mxu0 %v1450
      %1933 = vmatprep.subr.bf16.mxu0 0
      %1934 = vmatpush2.bf16.msra.mxu0 %v1449
      %1935 = vmatprep.subr.bf16.mxu0 0
      %1936 = vmatpush2.bf16.msra.mxu0 %v1448
      %1937 = vmatprep.subr.bf16.mxu0 0
      %1938 = vmatpush2.bf16.msra.mxu0 %v1447
      %1939 = vmatprep.mubr.bf16.mxu0 %v922
      %1940 = vmatmul.mubr.bf16.gmra.mxu0 %v921
      %v1941 = vpop.f32.mrf.mxu0
      %v1942 = vadd.f32 %v1781, %v1941
      %v1943 = vpop.f32.mrf.mxu0
      %v1944 = vpop.f32.mrf.mxu0
      %v1945 = vadd.f32 %v1784, %v1944
      %v1946 = vpop.f32.mrf.mxu0
      %1947 = vmatprep.mubr.bf16.mxu0 %v930
      %1948 = vmatmul.mubr.bf16.gmra.mxu0 %v929
      %v1949 = vpop.f32.mrf.mxu0
      %v1950 = vadd.f32 %v1789, %v1949
      %v1951 = vpop.f32.mrf.mxu0
      %v1952 = vpop.f32.mrf.mxu0
      %v1953 = vadd.f32 %v1792, %v1952
      %v1954 = vpop.f32.mrf.mxu0
      %1955 = vmatprep.mubr.bf16.mxu0 %v938
      %1956 = vmatmul.mubr.bf16.gmra.mxu0 %v937
      %v1957 = vpop.f32.mrf.mxu0
      %v1958 = vadd.f32 %v1797, %v1957
      %v1959 = vpop.f32.mrf.mxu0
      %v1960 = vpop.f32.mrf.mxu0
      %v1961 = vadd.f32 %v1800, %v1960
      %v1962 = vpop.f32.mrf.mxu0
      %1963 = vmatprep.mubr.bf16.mxu0 %v946
      %1964 = vmatmul.mubr.bf16.gmra.mxu0 %v945
      %v1965 = vpop.f32.mrf.mxu0
      %v1966 = vadd.f32 %v1805, %v1965
      %v1967 = vpop.f32.mrf.mxu0
      %v1968 = vpop.f32.mrf.mxu0
      %v1969 = vadd.f32 %v1808, %v1968
      %v1970 = vpop.f32.mrf.mxu0
      %1971 = vmatprep.mubr.bf16.mxu0 %v954
      %1972 = vmatmul.mubr.bf16.gmra.mxu0 %v953
      %v1973 = vpop.f32.mrf.mxu0
      %v1974 = vadd.f32 %v1813, %v1973
      %v1975 = vpop.f32.mrf.mxu0
      %v1976 = vpop.f32.mrf.mxu0
      %v1977 = vadd.f32 %v1816, %v1976
      %v1978 = vpop.f32.mrf.mxu0
      %1979 = vmatprep.mubr.bf16.mxu0 %v962
      %1980 = vmatmul.mubr.bf16.gmra.mxu0 %v961
      %v1981 = vpop.f32.mrf.mxu0
      %v1982 = vadd.f32 %v1821, %v1981
      %v1983 = vpop.f32.mrf.mxu0
      %v1984 = vpop.f32.mrf.mxu0
      %v1985 = vadd.f32 %v1824, %v1984
      %v1986 = vpop.f32.mrf.mxu0
      %1987 = vmatprep.mubr.bf16.mxu0 %v970
      %1988 = vmatmul.mubr.bf16.gmra.mxu0 %v969
      %v1989 = vpop.f32.mrf.mxu0
      %v1990 = vadd.f32 %v1829, %v1989
      %v1991 = vpop.f32.mrf.mxu0
      %v1992 = vpop.f32.mrf.mxu0
      %v1993 = vadd.f32 %v1832, %v1992
      %v1994 = vpop.f32.mrf.mxu0
      %1995 = vmatprep.mubr.bf16.mxu0 %v978
      %1996 = vmatmul.mubr.bf16.gmra.mxu0 %v977
      %v1997 = vpop.f32.mrf.mxu0
      %v1998 = vadd.f32 %v1837, %v1997
      %v1999 = vpop.f32.mrf.mxu0
      %v2000 = vpop.f32.mrf.mxu0
      %v2001 = vadd.f32 %v1840, %v2000
      %v2002 = vpop.f32.mrf.mxu0
      %2003 = vmatprep.mubr.bf16.mxu0 %v986
      %2004 = vmatmul.mubr.bf16.gmra.mxu0 %v985
      %v2005 = vpop.f32.mrf.mxu0
      %v2006 = vadd.f32 %v1845, %v2005
      %v2007 = vpop.f32.mrf.mxu0
      %v2008 = vpop.f32.mrf.mxu0
      %v2009 = vadd.f32 %v1848, %v2008
      %v2010 = vpop.f32.mrf.mxu0
      %2011 = vmatprep.mubr.bf16.mxu0 %v994
      %2012 = vmatmul.mubr.bf16.gmra.mxu0 %v993
      %v2013 = vpop.f32.mrf.mxu0
      %v2014 = vadd.f32 %v1853, %v2013
      %v2015 = vpop.f32.mrf.mxu0
      %v2016 = vpop.f32.mrf.mxu0
      %v2017 = vadd.f32 %v1856, %v2016
      %v2018 = vpop.f32.mrf.mxu0
      %2019 = vmatprep.mubr.bf16.mxu0 %v1002
      %2020 = vmatmul.mubr.bf16.gmra.mxu0 %v1001
      %v2021 = vpop.f32.mrf.mxu0
      %v2022 = vadd.f32 %v1861, %v2021
      %v2023 = vpop.f32.mrf.mxu0
      %v2024 = vpop.f32.mrf.mxu0
      %v2025 = vadd.f32 %v1864, %v2024
      %v2026 = vpop.f32.mrf.mxu0
      %2027 = vmatprep.mubr.bf16.mxu0 %v1010
      %2028 = vmatmul.mubr.bf16.gmra.mxu0 %v1009
      %v2029 = vpop.f32.mrf.mxu0
      %v2030 = vadd.f32 %v1869, %v2029
      %v2031 = vpop.f32.mrf.mxu0
      %v2032 = vpop.f32.mrf.mxu0
      %v2033 = vadd.f32 %v1872, %v2032
      %v2034 = vpop.f32.mrf.mxu0
      %2035 = vmatprep.mubr.bf16.mxu0 %v1018
      %2036 = vmatmul.mubr.bf16.gmra.mxu0 %v1017
      %v2037 = vpop.f32.mrf.mxu0
      %v2038 = vadd.f32 %v1877, %v2037
      %v2039 = vpop.f32.mrf.mxu0
      %v2040 = vpop.f32.mrf.mxu0
      %v2041 = vadd.f32 %v1880, %v2040
      %v2042 = vpop.f32.mrf.mxu0
      %2043 = vmatprep.mubr.bf16.mxu0 %v1026
      %2044 = vmatmul.mubr.bf16.gmra.mxu0 %v1025
      %v2045 = vpop.f32.mrf.mxu0
      %v2046 = vadd.f32 %v1885, %v2045
      %v2047 = vpop.f32.mrf.mxu0
      %v2048 = vpop.f32.mrf.mxu0
      %v2049 = vadd.f32 %v1888, %v2048
      %v2050 = vpop.f32.mrf.mxu0
      %2051 = vmatprep.mubr.bf16.mxu0 %v1034
      %2052 = vmatmul.mubr.bf16.gmra.mxu0 %v1033
      %v2053 = vpop.f32.mrf.mxu0
      %v2054 = vadd.f32 %v1893, %v2053
      %v2055 = vpop.f32.mrf.mxu0
      %v2056 = vpop.f32.mrf.mxu0
      %v2057 = vadd.f32 %v1896, %v2056
      %v2058 = vpop.f32.mrf.mxu0
      %2059 = vmatprep.mubr.bf16.mxu0 %v1042
      %2060 = vmatmul.mubr.bf16.gmra.mxu0 %v1041
      %v2061 = vpop.f32.mrf.mxu0
      %v2062 = vadd.f32 %v1901, %v2061
      %v2063 = vpop.f32.mrf.mxu0
      %v2064 = vpop.f32.mrf.mxu0
      %v2065 = vadd.f32 %v1904, %v2064
      %v2066 = vpop.f32.mrf.mxu0
      %2067 = vdwg.mxu0
      %2068 = vmatprep.subr.bf16.mxu0 0
      %2069 = vmatpush1.bf16.msra.mxu0 %v1462
      %2070 = vmatprep.subr.bf16.mxu0 0
      %2071 = vmatpush1.bf16.msra.mxu0 %v1461
      %2072 = vmatprep.subr.bf16.mxu0 0
      %2073 = vmatpush1.bf16.msra.mxu0 %v1460
      %2074 = vmatprep.subr.bf16.mxu0 0
      %2075 = vmatpush1.bf16.msra.mxu0 %v1459
      %2076 = vmatprep.subr.bf16.mxu0 0
      %2077 = vmatpush1.bf16.msra.mxu0 %v1458
      %2078 = vmatprep.subr.bf16.mxu0 0
      %2079 = vmatpush1.bf16.msra.mxu0 %v1457
      %2080 = vmatprep.subr.bf16.mxu0 0
      %2081 = vmatpush1.bf16.msra.mxu0 %v1456
      %2082 = vmatprep.subr.bf16.mxu0 0
      %2083 = vmatpush1.bf16.msra.mxu0 %v1455
      %2084 = vmatprep.subr.bf16.mxu0 0
      %2085 = vmatpush2.bf16.msra.mxu0 0
      %2086 = vmatprep.subr.bf16.mxu0 0
      %2087 = vmatpush2.bf16.msra.mxu0 %v1583
      %2088 = vmatprep.subr.bf16.mxu0 0
      %2089 = vmatpush2.bf16.msra.mxu0 %v1468
      %2090 = vmatprep.subr.bf16.mxu0 0
      %2091 = vmatpush2.bf16.msra.mxu0 %v1467
      %2092 = vmatprep.subr.bf16.mxu0 0
      %2093 = vmatpush2.bf16.msra.mxu0 %v1466
      %2094 = vmatprep.subr.bf16.mxu0 0
      %2095 = vmatpush2.bf16.msra.mxu0 %v1465
      %2096 = vmatprep.subr.bf16.mxu0 0
      %2097 = vmatpush2.bf16.msra.mxu0 %v1464
      %2098 = vmatprep.subr.bf16.mxu0 0
      %2099 = vmatpush2.bf16.msra.mxu0 %v1463
      %2100 = vmatprep.mubr.bf16.mxu0 %v1534
      %2101 = vmatmul.mubr.bf16.gmra.mxu0 %v923
      %v2102 = vpop.f32.mrf.mxu0
      %v2103 = vadd.f32 %v1942, %v2102
      %v2104 = vpop.f32.mrf.mxu0
      %v2105 = vpop.f32.mrf.mxu0
      %v2106 = vadd.f32 %v1945, %v2105
      %v2107 = vpop.f32.mrf.mxu0
      %2108 = vmatprep.mubr.bf16.mxu0 %v1537
      %2109 = vmatmul.mubr.bf16.gmra.mxu0 %v931
      %v2110 = vpop.f32.mrf.mxu0
      %v2111 = vadd.f32 %v1950, %v2110
      %v2112 = vpop.f32.mrf.mxu0
      %v2113 = vpop.f32.mrf.mxu0
      %v2114 = vadd.f32 %v1953, %v2113
      %v2115 = vpop.f32.mrf.mxu0
      %2116 = vmatprep.mubr.bf16.mxu0 %v1540
      %2117 = vmatmul.mubr.bf16.gmra.mxu0 %v939
      %v2118 = vpop.f32.mrf.mxu0
      %v2119 = vadd.f32 %v1958, %v2118
      %v2120 = vpop.f32.mrf.mxu0
      %v2121 = vpop.f32.mrf.mxu0
      %v2122 = vadd.f32 %v1961, %v2121
      %v2123 = vpop.f32.mrf.mxu0
      %2124 = vmatprep.mubr.bf16.mxu0 %v1543
      %2125 = vmatmul.mubr.bf16.gmra.mxu0 %v947
      %v2126 = vpop.f32.mrf.mxu0
      %v2127 = vadd.f32 %v1966, %v2126
      %v2128 = vpop.f32.mrf.mxu0
      %v2129 = vpop.f32.mrf.mxu0
      %v2130 = vadd.f32 %v1969, %v2129
      %v2131 = vpop.f32.mrf.mxu0
      %2132 = vmatprep.mubr.bf16.mxu0 %v1546
      %2133 = vmatmul.mubr.bf16.gmra.mxu0 %v955
      %v2134 = vpop.f32.mrf.mxu0
      %v2135 = vadd.f32 %v1974, %v2134
      %v2136 = vpop.f32.mrf.mxu0
      %v2137 = vpop.f32.mrf.mxu0
      %v2138 = vadd.f32 %v1977, %v2137
      %v2139 = vpop.f32.mrf.mxu0
      %2140 = vmatprep.mubr.bf16.mxu0 %v1549
      %2141 = vmatmul.mubr.bf16.gmra.mxu0 %v963
      %v2142 = vpop.f32.mrf.mxu0
      %v2143 = vadd.f32 %v1982, %v2142
      %v2144 = vpop.f32.mrf.mxu0
      %v2145 = vpop.f32.mrf.mxu0
      %v2146 = vadd.f32 %v1985, %v2145
      %v2147 = vpop.f32.mrf.mxu0
      %2148 = vmatprep.mubr.bf16.mxu0 %v1552
      %2149 = vmatmul.mubr.bf16.gmra.mxu0 %v971
      %v2150 = vpop.f32.mrf.mxu0
      %v2151 = vadd.f32 %v1990, %v2150
      %v2152 = vpop.f32.mrf.mxu0
      %v2153 = vpop.f32.mrf.mxu0
      %v2154 = vadd.f32 %v1993, %v2153
      %v2155 = vpop.f32.mrf.mxu0
      %2156 = vmatprep.mubr.bf16.mxu0 %v1555
      %2157 = vmatmul.mubr.bf16.gmra.mxu0 %v979
      %v2158 = vpop.f32.mrf.mxu0
      %v2159 = vadd.f32 %v1998, %v2158
      %v2160 = vpop.f32.mrf.mxu0
      %v2161 = vpop.f32.mrf.mxu0
      %v2162 = vadd.f32 %v2001, %v2161
      %v2163 = vpop.f32.mrf.mxu0
      %2164 = vmatprep.mubr.bf16.mxu0 %v1558
      %2165 = vmatmul.mubr.bf16.gmra.mxu0 %v987
      %v2166 = vpop.f32.mrf.mxu0
      %v2167 = vadd.f32 %v2006, %v2166
      %v2168 = vpop.f32.mrf.mxu0
      %v2169 = vpop.f32.mrf.mxu0
      %v2170 = vadd.f32 %v2009, %v2169
      %v2171 = vpop.f32.mrf.mxu0
      %2172 = vmatprep.mubr.bf16.mxu0 %v1561
      %2173 = vmatmul.mubr.bf16.gmra.mxu0 %v995
      %v2174 = vpop.f32.mrf.mxu0
      %v2175 = vadd.f32 %v2014, %v2174
      %v2176 = vpop.f32.mrf.mxu0
      %v2177 = vpop.f32.mrf.mxu0
      %v2178 = vadd.f32 %v2017, %v2177
      %v2179 = vpop.f32.mrf.mxu0
      %2180 = vmatprep.mubr.bf16.mxu0 %v1564
      %2181 = vmatmul.mubr.bf16.gmra.mxu0 %v1003
      %v2182 = vpop.f32.mrf.mxu0
      %v2183 = vadd.f32 %v2022, %v2182
      %v2184 = vpop.f32.mrf.mxu0
      %v2185 = vpop.f32.mrf.mxu0
      %v2186 = vadd.f32 %v2025, %v2185
      %v2187 = vpop.f32.mrf.mxu0
      %2188 = vmatprep.mubr.bf16.mxu0 %v1567
      %2189 = vmatmul.mubr.bf16.gmra.mxu0 %v1011
      %v2190 = vpop.f32.mrf.mxu0
      %v2191 = vadd.f32 %v2030, %v2190
      %v2192 = vpop.f32.mrf.mxu0
      %v2193 = vpop.f32.mrf.mxu0
      %v2194 = vadd.f32 %v2033, %v2193
      %v2195 = vpop.f32.mrf.mxu0
      %2196 = vmatprep.mubr.bf16.mxu0 %v1570
      %2197 = vmatmul.mubr.bf16.gmra.mxu0 %v1019
      %v2198 = vpop.f32.mrf.mxu0
      %v2199 = vadd.f32 %v2038, %v2198
      %v2200 = vpop.f32.mrf.mxu0
      %v2201 = vpop.f32.mrf.mxu0
      %v2202 = vadd.f32 %v2041, %v2201
      %v2203 = vpop.f32.mrf.mxu0
      %2204 = vmatprep.mubr.bf16.mxu0 %v1573
      %2205 = vmatmul.mubr.bf16.gmra.mxu0 %v1027
      %v2206 = vpop.f32.mrf.mxu0
      %v2207 = vadd.f32 %v2046, %v2206
      %v2208 = vpop.f32.mrf.mxu0
      %v2209 = vpop.f32.mrf.mxu0
      %v2210 = vadd.f32 %v2049, %v2209
      %v2211 = vpop.f32.mrf.mxu0
      %2212 = vmatprep.mubr.bf16.mxu0 %v1576
      %2213 = vmatmul.mubr.bf16.gmra.mxu0 %v1035
      %v2214 = vpop.f32.mrf.mxu0
      %v2215 = vadd.f32 %v2054, %v2214
      %v2216 = vpop.f32.mrf.mxu0
      %v2217 = vpop.f32.mrf.mxu0
      %v2218 = vadd.f32 %v2057, %v2217
      %v2219 = vpop.f32.mrf.mxu0
      %2220 = vmatprep.mubr.bf16.mxu0 %v1579
      %2221 = vmatmul.mubr.bf16.gmra.mxu0 %v1043
      %v2222 = vpop.f32.mrf.mxu0
      %v2223 = vadd.f32 %v2062, %v2222
      %v2224 = vpop.f32.mrf.mxu0
      %v2225 = vpop.f32.mrf.mxu0
      %v2226 = vadd.f32 %v2065, %v2225
      %v2227 = vpop.f32.mrf.mxu0
      %2228 = vdwg.mxu0
      %v2229 = vadd.f32 %v2103, 0.0
      %v2230 = vadd.f32 %v2106, 0.0
      %v2231 = vadd.f32 %v2111, 0.0
      %v2232 = vadd.f32 %v2114, 0.0
      %v2233 = vadd.f32 %v2119, 0.0
      %v2234 = vadd.f32 %v2122, 0.0
      %v2235 = vadd.f32 %v2127, 0.0
      %v2236 = vadd.f32 %v2130, 0.0
      %2245 = vrot.lane.b32.xlu0 %v2135, 127
      %v2246 = vpop.permute.xlu0 %2245
      %2247 = vrot.lane.b32.xlu0 %v2138, 127
      %v2248 = vpop.permute.xlu0 %2247
      %2249 = vrot.lane.b32.xlu0 %v2143, 127
      %v2250 = vpop.permute.xlu0 %2249
      %2251 = vrot.lane.b32.xlu0 %v2146, 127
      %v2252 = vpop.permute.xlu0 %2251
      %2253 = vrot.lane.b32.xlu0 %v2151, 127
      %v2254 = vpop.permute.xlu0 %2253
      %2255 = vrot.lane.b32.xlu0 %v2154, 127
      %v2256 = vpop.permute.xlu0 %2255
      %2257 = vrot.lane.b32.xlu0 %v2159, 127
      %v2258 = vpop.permute.xlu0 %2257
      %2259 = vrot.lane.b32.xlu0 %v2162, 127
      %v2260 = vpop.permute.xlu0 %2259
      %v2269 = vadd.f32 %v2229, %v2246
      %v2270 = vadd.f32 %v2230, %v2248
      %v2271 = vadd.f32 %v2231, %v2250
      %v2272 = vadd.f32 %v2232, %v2252
      %v2273 = vadd.f32 %v2233, %v2254
      %v2274 = vadd.f32 %v2234, %v2256
      %v2275 = vadd.f32 %v2235, %v2258
      %v2276 = vadd.f32 %v2236, %v2260
      %2285 = vrot.lane.b32.xlu0 %v2167, 126
      %v2286 = vpop.permute.xlu0 %2285
      %2287 = vrot.lane.b32.xlu0 %v2170, 126
      %v2288 = vpop.permute.xlu0 %2287
      %2289 = vrot.lane.b32.xlu0 %v2175, 126
      %v2290 = vpop.permute.xlu0 %2289
      %2291 = vrot.lane.b32.xlu0 %v2178, 126
      %v2292 = vpop.permute.xlu0 %2291
      %2293 = vrot.lane.b32.xlu0 %v2183, 126
      %v2294 = vpop.permute.xlu0 %2293
      %2295 = vrot.lane.b32.xlu0 %v2186, 126
      %v2296 = vpop.permute.xlu0 %2295
      %2297 = vrot.lane.b32.xlu0 %v2191, 126
      %v2298 = vpop.permute.xlu0 %2297
      %2299 = vrot.lane.b32.xlu0 %v2194, 126
      %v2300 = vpop.permute.xlu0 %2299
      %v2309 = vadd.f32 %v2269, %v2286
      %v2310 = vadd.f32 %v2270, %v2288
      %v2311 = vadd.f32 %v2271, %v2290
      %v2312 = vadd.f32 %v2272, %v2292
      %v2313 = vadd.f32 %v2273, %v2294
      %v2314 = vadd.f32 %v2274, %v2296
      %v2315 = vadd.f32 %v2275, %v2298
      %v2316 = vadd.f32 %v2276, %v2300
      %2325 = vrot.lane.b32.xlu0 %v2199, 125
      %v2326 = vpop.permute.xlu0 %2325
      %2327 = vrot.lane.b32.xlu0 %v2202, 125
      %v2328 = vpop.permute.xlu0 %2327
      %2329 = vrot.lane.b32.xlu0 %v2207, 125
      %v2330 = vpop.permute.xlu0 %2329
      %2331 = vrot.lane.b32.xlu0 %v2210, 125
      %v2332 = vpop.permute.xlu0 %2331
      %2333 = vrot.lane.b32.xlu0 %v2215, 125
      %v2334 = vpop.permute.xlu0 %2333
      %2335 = vrot.lane.b32.xlu0 %v2218, 125
      %v2336 = vpop.permute.xlu0 %2335
      %2337 = vrot.lane.b32.xlu0 %v2223, 125
      %v2338 = vpop.permute.xlu0 %2337
      %2339 = vrot.lane.b32.xlu0 %v2226, 125
      %v2340 = vpop.permute.xlu0 %2339
      %v2349 = vadd.f32 %v2309, %v2326
      %v2350 = vadd.f32 %v2310, %v2328
      %v2351 = vadd.f32 %v2311, %v2330
      %v2352 = vadd.f32 %v2312, %v2332
      %v2353 = vadd.f32 %v2313, %v2334
      %v2354 = vadd.f32 %v2314, %v2336
      %v2355 = vadd.f32 %v2315, %v2338
      %v2356 = vadd.f32 %v2316, %v2340
      %s2357 = scalar_lea.vmem %s1, 1024
      %v2358 = vld [vmem:[%s2357] sm:$0xff]
      %v2359 = vld [vmem:[%s2357 + $0x8] sm:$0xff]
      %v2360 = vld [vmem:[%s2357 + $0x10] sm:$0xff]
      %v2361 = vld [vmem:[%s2357 + $0x18] sm:$0xff]
      %v2362 = vld [vmem:[%s2357 + $0x20] sm:$0xff]
      %v2363 = vld [vmem:[%s2357 + $0x28] sm:$0xff]
      %v2364 = vld [vmem:[%s2357 + $0x30] sm:$0xff]
      %v2365 = vld [vmem:[%s2357 + $0x38] sm:$0xff]
      %v2366 = vld [vmem:[%s2357 + $0x40] sm:$0xff]
      %v2367 = vld [vmem:[%s2357 + $0x48] sm:$0xff]
      %v2368 = vld [vmem:[%s2357 + $0x50] sm:$0xff]
      %v2369 = vld [vmem:[%s2357 + $0x58] sm:$0xff]
      %v2370 = vld [vmem:[%s2357 + $0x60] sm:$0xff]
      %v2371 = vld [vmem:[%s2357 + $0x68] sm:$0xff]
      %v2372 = vld [vmem:[%s2357 + $0x70] sm:$0xff]
      %v2373 = vld [vmem:[%s2357 + $0x78] sm:$0xff]
      %v2374 = vld [vmem:[%s2357 + $0x80] sm:$0xff]
      %v2375 = vld [vmem:[%s2357 + $0x88] sm:$0xff]
      %v2376 = vld [vmem:[%s2357 + $0x90] sm:$0xff]
      %v2377 = vld [vmem:[%s2357 + $0x98] sm:$0xff]
      %v2378 = vld [vmem:[%s2357 + $0xa0] sm:$0xff]
      %v2379 = vld [vmem:[%s2357 + $0xa8] sm:$0xff]
      %v2380 = vld [vmem:[%s2357 + $0xb0] sm:$0xff]
      %v2381 = vld [vmem:[%s2357 + $0xb8] sm:$0xff]
      %v2382 = vld [vmem:[%s2357 + $0xc0] sm:$0xff]
      %v2383 = vld [vmem:[%s2357 + $0xc8] sm:$0xff]
      %v2384 = vld [vmem:[%s2357 + $0xd0] sm:$0xff]
      %v2385 = vld [vmem:[%s2357 + $0xd8] sm:$0xff]
      %v2386 = vld [vmem:[%s2357 + $0xe0] sm:$0xff]
      %v2387 = vld [vmem:[%s2357 + $0xe8] sm:$0xff]
      %v2388 = vld [vmem:[%s2357 + $0xf0] sm:$0xff]
      %v2389 = vld [vmem:[%s2357 + $0xf8] sm:$0xff]
      %v2390 = vld [vmem:[%s2357 + $0x100] sm:$0xff]
      %v2391 = vld [vmem:[%s2357 + $0x108] sm:$0xff]
      %v2392 = vld [vmem:[%s2357 + $0x110] sm:$0xff]
      %v2393 = vld [vmem:[%s2357 + $0x118] sm:$0xff]
      %v2394 = vld [vmem:[%s2357 + $0x120] sm:$0xff]
      %v2395 = vld [vmem:[%s2357 + $0x128] sm:$0xff]
      %v2396 = vld [vmem:[%s2357 + $0x130] sm:$0xff]
      %v2397 = vld [vmem:[%s2357 + $0x138] sm:$0xff]
      %v2398 = vld [vmem:[%s2357 + $0x140] sm:$0xff]
      %v2399 = vld [vmem:[%s2357 + $0x148] sm:$0xff]
      %v2400 = vld [vmem:[%s2357 + $0x150] sm:$0xff]
      %v2401 = vld [vmem:[%s2357 + $0x158] sm:$0xff]
      %v2402 = vld [vmem:[%s2357 + $0x160] sm:$0xff]
      %v2403 = vld [vmem:[%s2357 + $0x168] sm:$0xff]
      %v2404 = vld [vmem:[%s2357 + $0x170] sm:$0xff]
      %v2405 = vld [vmem:[%s2357 + $0x178] sm:$0xff]
      %v2406 = vld [vmem:[%s2357 + $0x180] sm:$0xff]
      %v2407 = vld [vmem:[%s2357 + $0x188] sm:$0xff]
      %v2408 = vld [vmem:[%s2357 + $0x190] sm:$0xff]
      %v2409 = vld [vmem:[%s2357 + $0x198] sm:$0xff]
      %v2410 = vld [vmem:[%s2357 + $0x1a0] sm:$0xff]
      %v2411 = vld [vmem:[%s2357 + $0x1a8] sm:$0xff]
      %v2412 = vld [vmem:[%s2357 + $0x1b0] sm:$0xff]
      %v2413 = vld [vmem:[%s2357 + $0x1b8] sm:$0xff]
      %v2414 = vld [vmem:[%s2357 + $0x1c0] sm:$0xff]
      %v2415 = vld [vmem:[%s2357 + $0x1c8] sm:$0xff]
      %v2416 = vld [vmem:[%s2357 + $0x1d0] sm:$0xff]
      %v2417 = vld [vmem:[%s2357 + $0x1d8] sm:$0xff]
      %v2418 = vld [vmem:[%s2357 + $0x1e0] sm:$0xff]
      %v2419 = vld [vmem:[%s2357 + $0x1e8] sm:$0xff]
      %v2420 = vld [vmem:[%s2357 + $0x1f0] sm:$0xff]
      %v2421 = vld [vmem:[%s2357 + $0x1f8] sm:$0xff]
      %v2422 = vld [vmem:[%s2357 + $0x200] sm:$0xff]
      %v2423 = vld [vmem:[%s2357 + $0x208] sm:$0xff]
      %v2424 = vld [vmem:[%s2357 + $0x210] sm:$0xff]
      %v2425 = vld [vmem:[%s2357 + $0x218] sm:$0xff]
      %v2426 = vld [vmem:[%s2357 + $0x220] sm:$0xff]
      %v2427 = vld [vmem:[%s2357 + $0x228] sm:$0xff]
      %v2428 = vld [vmem:[%s2357 + $0x230] sm:$0xff]
      %v2429 = vld [vmem:[%s2357 + $0x238] sm:$0xff]
      %v2430 = vld [vmem:[%s2357 + $0x240] sm:$0xff]
      %v2431 = vld [vmem:[%s2357 + $0x248] sm:$0xff]
      %v2432 = vld [vmem:[%s2357 + $0x250] sm:$0xff]
      %v2433 = vld [vmem:[%s2357 + $0x258] sm:$0xff]
      %v2434 = vld [vmem:[%s2357 + $0x260] sm:$0xff]
      %v2435 = vld [vmem:[%s2357 + $0x268] sm:$0xff]
      %v2436 = vld [vmem:[%s2357 + $0x270] sm:$0xff]
      %v2437 = vld [vmem:[%s2357 + $0x278] sm:$0xff]
      %v2438 = vld [vmem:[%s2357 + $0x280] sm:$0xff]
      %v2439 = vld [vmem:[%s2357 + $0x288] sm:$0xff]
      %v2440 = vld [vmem:[%s2357 + $0x290] sm:$0xff]
      %v2441 = vld [vmem:[%s2357 + $0x298] sm:$0xff]
      %v2442 = vld [vmem:[%s2357 + $0x2a0] sm:$0xff]
      %v2443 = vld [vmem:[%s2357 + $0x2a8] sm:$0xff]
      %v2444 = vld [vmem:[%s2357 + $0x2b0] sm:$0xff]
      %v2445 = vld [vmem:[%s2357 + $0x2b8] sm:$0xff]
      %v2446 = vld [vmem:[%s2357 + $0x2c0] sm:$0xff]
      %v2447 = vld [vmem:[%s2357 + $0x2c8] sm:$0xff]
      %v2448 = vld [vmem:[%s2357 + $0x2d0] sm:$0xff]
      %v2449 = vld [vmem:[%s2357 + $0x2d8] sm:$0xff]
      %v2450 = vld [vmem:[%s2357 + $0x2e0] sm:$0xff]
      %v2451 = vld [vmem:[%s2357 + $0x2e8] sm:$0xff]
      %v2452 = vld [vmem:[%s2357 + $0x2f0] sm:$0xff]
      %v2453 = vld [vmem:[%s2357 + $0x2f8] sm:$0xff]
      %v2454 = vld [vmem:[%s2357 + $0x300] sm:$0xff]
      %v2455 = vld [vmem:[%s2357 + $0x308] sm:$0xff]
      %v2456 = vld [vmem:[%s2357 + $0x310] sm:$0xff]
      %v2457 = vld [vmem:[%s2357 + $0x318] sm:$0xff]
      %v2458 = vld [vmem:[%s2357 + $0x320] sm:$0xff]
      %v2459 = vld [vmem:[%s2357 + $0x328] sm:$0xff]
      %v2460 = vld [vmem:[%s2357 + $0x330] sm:$0xff]
      %v2461 = vld [vmem:[%s2357 + $0x338] sm:$0xff]
      %v2462 = vld [vmem:[%s2357 + $0x340] sm:$0xff]
      %v2463 = vld [vmem:[%s2357 + $0x348] sm:$0xff]
      %v2464 = vld [vmem:[%s2357 + $0x350] sm:$0xff]
      %v2465 = vld [vmem:[%s2357 + $0x358] sm:$0xff]
      %v2466 = vld [vmem:[%s2357 + $0x360] sm:$0xff]
      %v2467 = vld [vmem:[%s2357 + $0x368] sm:$0xff]
      %v2468 = vld [vmem:[%s2357 + $0x370] sm:$0xff]
      %v2469 = vld [vmem:[%s2357 + $0x378] sm:$0xff]
      %v2470 = vld [vmem:[%s2357 + $0x380] sm:$0xff]
      %v2471 = vld [vmem:[%s2357 + $0x388] sm:$0xff]
      %v2472 = vld [vmem:[%s2357 + $0x390] sm:$0xff]
      %v2473 = vld [vmem:[%s2357 + $0x398] sm:$0xff]
      %v2474 = vld [vmem:[%s2357 + $0x3a0] sm:$0xff]
      %v2475 = vld [vmem:[%s2357 + $0x3a8] sm:$0xff]
      %v2476 = vld [vmem:[%s2357 + $0x3b0] sm:$0xff]
      %v2477 = vld [vmem:[%s2357 + $0x3b8] sm:$0xff]
      %v2478 = vld [vmem:[%s2357 + $0x3c0] sm:$0xff]
      %v2479 = vld [vmem:[%s2357 + $0x3c8] sm:$0xff]
      %v2480 = vld [vmem:[%s2357 + $0x3d0] sm:$0xff]
      %v2481 = vld [vmem:[%s2357 + $0x3d8] sm:$0xff]
      %v2482 = vld [vmem:[%s2357 + $0x3e0] sm:$0xff]
      %v2483 = vld [vmem:[%s2357 + $0x3e8] sm:$0xff]
      %v2484 = vld [vmem:[%s2357 + $0x3f0] sm:$0xff]
      %v2485 = vld [vmem:[%s2357 + $0x3f8] sm:$0xff]
      %v2614 = vunpack.c.l.b16 %v2358
      %v2615 = vunpack.c.h.b16 %v2358
      %v2616 = vunpack.c.l.b16 %v2359
      %v2617 = vunpack.c.h.b16 %v2359
      %v2618 = vunpack.c.l.b16 %v2360
      %v2619 = vunpack.c.h.b16 %v2360
      %v2620 = vunpack.c.l.b16 %v2361
      %v2621 = vunpack.c.h.b16 %v2361
      %v2622 = vunpack.c.l.b16 %v2362
      %v2623 = vunpack.c.h.b16 %v2362
      %v2624 = vunpack.c.l.b16 %v2363
      %v2625 = vunpack.c.h.b16 %v2363
      %v2626 = vunpack.c.l.b16 %v2364
      %v2627 = vunpack.c.h.b16 %v2364
      %v2628 = vunpack.c.l.b16 %v2365
      %v2629 = vunpack.c.h.b16 %v2365
      %v2630 = vunpack.c.l.b16 %v2366
      %v2631 = vunpack.c.h.b16 %v2366
      %v2632 = vunpack.c.l.b16 %v2367
      %v2633 = vunpack.c.h.b16 %v2367
      %v2634 = vunpack.c.l.b16 %v2368
      %v2635 = vunpack.c.h.b16 %v2368
      %v2636 = vunpack.c.l.b16 %v2369
      %v2637 = vunpack.c.h.b16 %v2369
      %v2638 = vunpack.c.l.b16 %v2370
      %v2639 = vunpack.c.h.b16 %v2370
      %v2640 = vunpack.c.l.b16 %v2371
      %v2641 = vunpack.c.h.b16 %v2371
      %v2642 = vunpack.c.l.b16 %v2372
      %v2643 = vunpack.c.h.b16 %v2372
      %v2644 = vunpack.c.l.b16 %v2373
      %v2645 = vunpack.c.h.b16 %v2373
      %v2646 = vunpack.c.l.b16 %v2374
      %v2647 = vunpack.c.h.b16 %v2374
      %v2648 = vunpack.c.l.b16 %v2375
      %v2649 = vunpack.c.h.b16 %v2375
      %v2650 = vunpack.c.l.b16 %v2376
      %v2651 = vunpack.c.h.b16 %v2376
      %v2652 = vunpack.c.l.b16 %v2377
      %v2653 = vunpack.c.h.b16 %v2377
      %v2654 = vunpack.c.l.b16 %v2378
      %v2655 = vunpack.c.h.b16 %v2378
      %v2656 = vunpack.c.l.b16 %v2379
      %v2657 = vunpack.c.h.b16 %v2379
      %v2658 = vunpack.c.l.b16 %v2380
      %v2659 = vunpack.c.h.b16 %v2380
      %v2660 = vunpack.c.l.b16 %v2381
      %v2661 = vunpack.c.h.b16 %v2381
      %v2662 = vunpack.c.l.b16 %v2382
      %v2663 = vunpack.c.h.b16 %v2382
      %v2664 = vunpack.c.l.b16 %v2383
      %v2665 = vunpack.c.h.b16 %v2383
      %v2666 = vunpack.c.l.b16 %v2384
      %v2667 = vunpack.c.h.b16 %v2384
      %v2668 = vunpack.c.l.b16 %v2385
      %v2669 = vunpack.c.h.b16 %v2385
      %v2670 = vunpack.c.l.b16 %v2386
      %v2671 = vunpack.c.h.b16 %v2386
      %v2672 = vunpack.c.l.b16 %v2387
      %v2673 = vunpack.c.h.b16 %v2387
      %v2674 = vunpack.c.l.b16 %v2388
      %v2675 = vunpack.c.h.b16 %v2388
      %v2676 = vunpack.c.l.b16 %v2389
      %v2677 = vunpack.c.h.b16 %v2389
      %v2678 = vunpack.c.l.b16 %v2390
      %v2679 = vunpack.c.h.b16 %v2390
      %v2680 = vunpack.c.l.b16 %v2391
      %v2681 = vunpack.c.h.b16 %v2391
      %v2682 = vunpack.c.l.b16 %v2392
      %v2683 = vunpack.c.h.b16 %v2392
      %v2684 = vunpack.c.l.b16 %v2393
      %v2685 = vunpack.c.h.b16 %v2393
      %v2686 = vunpack.c.l.b16 %v2394
      %v2687 = vunpack.c.h.b16 %v2394
      %v2688 = vunpack.c.l.b16 %v2395
      %v2689 = vunpack.c.h.b16 %v2395
      %v2690 = vunpack.c.l.b16 %v2396
      %v2691 = vunpack.c.h.b16 %v2396
      %v2692 = vunpack.c.l.b16 %v2397
      %v2693 = vunpack.c.h.b16 %v2397
      %v2694 = vunpack.c.l.b16 %v2398
      %v2695 = vunpack.c.h.b16 %v2398
      %v2696 = vunpack.c.l.b16 %v2399
      %v2697 = vunpack.c.h.b16 %v2399
      %v2698 = vunpack.c.l.b16 %v2400
      %v2699 = vunpack.c.h.b16 %v2400
      %v2700 = vunpack.c.l.b16 %v2401
      %v2701 = vunpack.c.h.b16 %v2401
      %v2702 = vunpack.c.l.b16 %v2402
      %v2703 = vunpack.c.h.b16 %v2402
      %v2704 = vunpack.c.l.b16 %v2403
      %v2705 = vunpack.c.h.b16 %v2403
      %v2706 = vunpack.c.l.b16 %v2404
      %v2707 = vunpack.c.h.b16 %v2404
      %v2708 = vunpack.c.l.b16 %v2405
      %v2709 = vunpack.c.h.b16 %v2405
      %v2710 = vunpack.c.l.b16 %v2406
      %v2711 = vunpack.c.h.b16 %v2406
      %v2712 = vunpack.c.l.b16 %v2407
      %v2713 = vunpack.c.h.b16 %v2407
      %v2714 = vunpack.c.l.b16 %v2408
      %v2715 = vunpack.c.h.b16 %v2408
      %v2716 = vunpack.c.l.b16 %v2409
      %v2717 = vunpack.c.h.b16 %v2409
      %v2718 = vunpack.c.l.b16 %v2410
      %v2719 = vunpack.c.h.b16 %v2410
      %v2720 = vunpack.c.l.b16 %v2411
      %v2721 = vunpack.c.h.b16 %v2411
      %v2722 = vunpack.c.l.b16 %v2412
      %v2723 = vunpack.c.h.b16 %v2412
      %v2724 = vunpack.c.l.b16 %v2413
      %v2725 = vunpack.c.h.b16 %v2413
      %v2726 = vunpack.c.l.b16 %v2414
      %v2727 = vunpack.c.h.b16 %v2414
      %v2728 = vunpack.c.l.b16 %v2415
      %v2729 = vunpack.c.h.b16 %v2415
      %v2730 = vunpack.c.l.b16 %v2416
      %v2731 = vunpack.c.h.b16 %v2416
      %v2732 = vunpack.c.l.b16 %v2417
      %v2733 = vunpack.c.h.b16 %v2417
      %v2734 = vunpack.c.l.b16 %v2418
      %v2735 = vunpack.c.h.b16 %v2418
      %v2736 = vunpack.c.l.b16 %v2419
      %v2737 = vunpack.c.h.b16 %v2419
      %v2738 = vunpack.c.l.b16 %v2420
      %v2739 = vunpack.c.h.b16 %v2420
      %v2740 = vunpack.c.l.b16 %v2421
      %v2741 = vunpack.c.h.b16 %v2421
      %v2742 = vunpack.c.l.b16 %v2422
      %v2743 = vunpack.c.h.b16 %v2422
      %v2744 = vunpack.c.l.b16 %v2423
      %v2745 = vunpack.c.h.b16 %v2423
      %v2746 = vunpack.c.l.b16 %v2424
      %v2747 = vunpack.c.h.b16 %v2424
      %v2748 = vunpack.c.l.b16 %v2425
      %v2749 = vunpack.c.h.b16 %v2425
      %v2750 = vunpack.c.l.b16 %v2426
      %v2751 = vunpack.c.h.b16 %v2426
      %v2752 = vunpack.c.l.b16 %v2427
      %v2753 = vunpack.c.h.b16 %v2427
      %v2754 = vunpack.c.l.b16 %v2428
      %v2755 = vunpack.c.h.b16 %v2428
      %v2756 = vunpack.c.l.b16 %v2429
      %v2757 = vunpack.c.h.b16 %v2429
      %v2758 = vunpack.c.l.b16 %v2430
      %v2759 = vunpack.c.h.b16 %v2430
      %v2760 = vunpack.c.l.b16 %v2431
      %v2761 = vunpack.c.h.b16 %v2431
      %v2762 = vunpack.c.l.b16 %v2432
      %v2763 = vunpack.c.h.b16 %v2432
      %v2764 = vunpack.c.l.b16 %v2433
      %v2765 = vunpack.c.h.b16 %v2433
      %v2766 = vunpack.c.l.b16 %v2434
      %v2767 = vunpack.c.h.b16 %v2434
      %v2768 = vunpack.c.l.b16 %v2435
      %v2769 = vunpack.c.h.b16 %v2435
      %v2770 = vunpack.c.l.b16 %v2436
      %v2771 = vunpack.c.h.b16 %v2436
      %v2772 = vunpack.c.l.b16 %v2437
      %v2773 = vunpack.c.h.b16 %v2437
      %v2774 = vunpack.c.l.b16 %v2438
      %v2775 = vunpack.c.h.b16 %v2438
      %v2776 = vunpack.c.l.b16 %v2439
      %v2777 = vunpack.c.h.b16 %v2439
      %v2778 = vunpack.c.l.b16 %v2440
      %v2779 = vunpack.c.h.b16 %v2440
      %v2780 = vunpack.c.l.b16 %v2441
      %v2781 = vunpack.c.h.b16 %v2441
      %v2782 = vunpack.c.l.b16 %v2442
      %v2783 = vunpack.c.h.b16 %v2442
      %v2784 = vunpack.c.l.b16 %v2443
      %v2785 = vunpack.c.h.b16 %v2443
      %v2786 = vunpack.c.l.b16 %v2444
      %v2787 = vunpack.c.h.b16 %v2444
      %v2788 = vunpack.c.l.b16 %v2445
      %v2789 = vunpack.c.h.b16 %v2445
      %v2790 = vunpack.c.l.b16 %v2446
      %v2791 = vunpack.c.h.b16 %v2446
      %v2792 = vunpack.c.l.b16 %v2447
      %v2793 = vunpack.c.h.b16 %v2447
      %v2794 = vunpack.c.l.b16 %v2448
      %v2795 = vunpack.c.h.b16 %v2448
      %v2796 = vunpack.c.l.b16 %v2449
      %v2797 = vunpack.c.h.b16 %v2449
      %v2798 = vunpack.c.l.b16 %v2450
      %v2799 = vunpack.c.h.b16 %v2450
      %v2800 = vunpack.c.l.b16 %v2451
      %v2801 = vunpack.c.h.b16 %v2451
      %v2802 = vunpack.c.l.b16 %v2452
      %v2803 = vunpack.c.h.b16 %v2452
      %v2804 = vunpack.c.l.b16 %v2453
      %v2805 = vunpack.c.h.b16 %v2453
      %v2806 = vunpack.c.l.b16 %v2454
      %v2807 = vunpack.c.h.b16 %v2454
      %v2808 = vunpack.c.l.b16 %v2455
      %v2809 = vunpack.c.h.b16 %v2455
      %v2810 = vunpack.c.l.b16 %v2456
      %v2811 = vunpack.c.h.b16 %v2456
      %v2812 = vunpack.c.l.b16 %v2457
      %v2813 = vunpack.c.h.b16 %v2457
      %v2814 = vunpack.c.l.b16 %v2458
      %v2815 = vunpack.c.h.b16 %v2458
      %v2816 = vunpack.c.l.b16 %v2459
      %v2817 = vunpack.c.h.b16 %v2459
      %v2818 = vunpack.c.l.b16 %v2460
      %v2819 = vunpack.c.h.b16 %v2460
      %v2820 = vunpack.c.l.b16 %v2461
      %v2821 = vunpack.c.h.b16 %v2461
      %v2822 = vunpack.c.l.b16 %v2462
      %v2823 = vunpack.c.h.b16 %v2462
      %v2824 = vunpack.c.l.b16 %v2463
      %v2825 = vunpack.c.h.b16 %v2463
      %v2826 = vunpack.c.l.b16 %v2464
      %v2827 = vunpack.c.h.b16 %v2464
      %v2828 = vunpack.c.l.b16 %v2465
      %v2829 = vunpack.c.h.b16 %v2465
      %v2830 = vunpack.c.l.b16 %v2466
      %v2831 = vunpack.c.h.b16 %v2466
      %v2832 = vunpack.c.l.b16 %v2467
      %v2833 = vunpack.c.h.b16 %v2467
      %v2834 = vunpack.c.l.b16 %v2468
      %v2835 = vunpack.c.h.b16 %v2468
      %v2836 = vunpack.c.l.b16 %v2469
      %v2837 = vunpack.c.h.b16 %v2469
      %v2838 = vunpack.c.l.b16 %v2470
      %v2839 = vunpack.c.h.b16 %v2470
      %v2840 = vunpack.c.l.b16 %v2471
      %v2841 = vunpack.c.h.b16 %v2471
      %v2842 = vunpack.c.l.b16 %v2472
      %v2843 = vunpack.c.h.b16 %v2472
      %v2844 = vunpack.c.l.b16 %v2473
      %v2845 = vunpack.c.h.b16 %v2473
      %v2846 = vunpack.c.l.b16 %v2474
      %v2847 = vunpack.c.h.b16 %v2474
      %v2848 = vunpack.c.l.b16 %v2475
      %v2849 = vunpack.c.h.b16 %v2475
      %v2850 = vunpack.c.l.b16 %v2476
      %v2851 = vunpack.c.h.b16 %v2476
      %v2852 = vunpack.c.l.b16 %v2477
      %v2853 = vunpack.c.h.b16 %v2477
      %v2854 = vunpack.c.l.b16 %v2478
      %v2855 = vunpack.c.h.b16 %v2478
      %v2856 = vunpack.c.l.b16 %v2479
      %v2857 = vunpack.c.h.b16 %v2479
      %v2858 = vunpack.c.l.b16 %v2480
      %v2859 = vunpack.c.h.b16 %v2480
      %v2860 = vunpack.c.l.b16 %v2481
      %v2861 = vunpack.c.h.b16 %v2481
      %v2862 = vunpack.c.l.b16 %v2482
      %v2863 = vunpack.c.h.b16 %v2482
      %v2864 = vunpack.c.l.b16 %v2483
      %v2865 = vunpack.c.h.b16 %v2483
      %v2866 = vunpack.c.l.b16 %v2484
      %v2867 = vunpack.c.h.b16 %v2484
      %v2868 = vunpack.c.l.b16 %v2485
      %v2869 = vunpack.c.h.b16 %v2485
      %v2870 = vpack.c.b16 %v2622, %v2614
      %v2871 = vpack.c.b16 %v2623, %v2615
      %v2872 = vpack.c.b16 %v2624, %v2616
      %v2873 = vpack.c.b16 %v2625, %v2617
      %v2874 = vpack.c.b16 %v2626, %v2618
      %v2875 = vpack.c.b16 %v2627, %v2619
      %v2876 = vpack.c.b16 %v2628, %v2620
      %v2877 = vpack.c.b16 %v2629, %v2621
      %v2878 = vpack.c.b16 %v2638, %v2630
      %v2879 = vpack.c.b16 %v2639, %v2631
      %v2880 = vpack.c.b16 %v2640, %v2632
      %v2881 = vpack.c.b16 %v2641, %v2633
      %v2882 = vpack.c.b16 %v2642, %v2634
      %v2883 = vpack.c.b16 %v2643, %v2635
      %v2884 = vpack.c.b16 %v2644, %v2636
      %v2885 = vpack.c.b16 %v2645, %v2637
      %v2886 = vpack.c.b16 %v2654, %v2646
      %v2887 = vpack.c.b16 %v2655, %v2647
      %v2888 = vpack.c.b16 %v2656, %v2648
      %v2889 = vpack.c.b16 %v2657, %v2649
      %v2890 = vpack.c.b16 %v2658, %v2650
      %v2891 = vpack.c.b16 %v2659, %v2651
      %v2892 = vpack.c.b16 %v2660, %v2652
      %v2893 = vpack.c.b16 %v2661, %v2653
      %v2894 = vpack.c.b16 %v2670, %v2662
      %v2895 = vpack.c.b16 %v2671, %v2663
      %v2896 = vpack.c.b16 %v2672, %v2664
      %v2897 = vpack.c.b16 %v2673, %v2665
      %v2898 = vpack.c.b16 %v2674, %v2666
      %v2899 = vpack.c.b16 %v2675, %v2667
      %v2900 = vpack.c.b16 %v2676, %v2668
      %v2901 = vpack.c.b16 %v2677, %v2669
      %v2902 = vpack.c.b16 %v2686, %v2678
      %v2903 = vpack.c.b16 %v2687, %v2679
      %v2904 = vpack.c.b16 %v2688, %v2680
      %v2905 = vpack.c.b16 %v2689, %v2681
      %v2906 = vpack.c.b16 %v2690, %v2682
      %v2907 = vpack.c.b16 %v2691, %v2683
      %v2908 = vpack.c.b16 %v2692, %v2684
      %v2909 = vpack.c.b16 %v2693, %v2685
      %v2910 = vpack.c.b16 %v2702, %v2694
      %v2911 = vpack.c.b16 %v2703, %v2695
      %v2912 = vpack.c.b16 %v2704, %v2696
      %v2913 = vpack.c.b16 %v2705, %v2697
      %v2914 = vpack.c.b16 %v2706, %v2698
      %v2915 = vpack.c.b16 %v2707, %v2699
      %v2916 = vpack.c.b16 %v2708, %v2700
      %v2917 = vpack.c.b16 %v2709, %v2701
      %v2918 = vpack.c.b16 %v2718, %v2710
      %v2919 = vpack.c.b16 %v2719, %v2711
      %v2920 = vpack.c.b16 %v2720, %v2712
      %v2921 = vpack.c.b16 %v2721, %v2713
      %v2922 = vpack.c.b16 %v2722, %v2714
      %v2923 = vpack.c.b16 %v2723, %v2715
      %v2924 = vpack.c.b16 %v2724, %v2716
      %v2925 = vpack.c.b16 %v2725, %v2717
      %v2926 = vpack.c.b16 %v2734, %v2726
      %v2927 = vpack.c.b16 %v2735, %v2727
      %v2928 = vpack.c.b16 %v2736, %v2728
      %v2929 = vpack.c.b16 %v2737, %v2729
      %v2930 = vpack.c.b16 %v2738, %v2730
      %v2931 = vpack.c.b16 %v2739, %v2731
      %v2932 = vpack.c.b16 %v2740, %v2732
      %v2933 = vpack.c.b16 %v2741, %v2733
      %v2934 = vpack.c.b16 %v2750, %v2742
      %v2935 = vpack.c.b16 %v2751, %v2743
      %v2936 = vpack.c.b16 %v2752, %v2744
      %v2937 = vpack.c.b16 %v2753, %v2745
      %v2938 = vpack.c.b16 %v2754, %v2746
      %v2939 = vpack.c.b16 %v2755, %v2747
      %v2940 = vpack.c.b16 %v2756, %v2748
      %v2941 = vpack.c.b16 %v2757, %v2749
      %v2942 = vpack.c.b16 %v2766, %v2758
      %v2943 = vpack.c.b16 %v2767, %v2759
      %v2944 = vpack.c.b16 %v2768, %v2760
      %v2945 = vpack.c.b16 %v2769, %v2761
      %v2946 = vpack.c.b16 %v2770, %v2762
      %v2947 = vpack.c.b16 %v2771, %v2763
      %v2948 = vpack.c.b16 %v2772, %v2764
      %v2949 = vpack.c.b16 %v2773, %v2765
      %v2950 = vpack.c.b16 %v2782, %v2774
      %v2951 = vpack.c.b16 %v2783, %v2775
      %v2952 = vpack.c.b16 %v2784, %v2776
      %v2953 = vpack.c.b16 %v2785, %v2777
      %v2954 = vpack.c.b16 %v2786, %v2778
      %v2955 = vpack.c.b16 %v2787, %v2779
      %v2956 = vpack.c.b16 %v2788, %v2780
      %v2957 = vpack.c.b16 %v2789, %v2781
      %v2958 = vpack.c.b16 %v2798, %v2790
      %v2959 = vpack.c.b16 %v2799, %v2791
      %v2960 = vpack.c.b16 %v2800, %v2792
      %v2961 = vpack.c.b16 %v2801, %v2793
      %v2962 = vpack.c.b16 %v2802, %v2794
      %v2963 = vpack.c.b16 %v2803, %v2795
      %v2964 = vpack.c.b16 %v2804, %v2796
      %v2965 = vpack.c.b16 %v2805, %v2797
      %v2966 = vpack.c.b16 %v2814, %v2806
      %v2967 = vpack.c.b16 %v2815, %v2807
      %v2968 = vpack.c.b16 %v2816, %v2808
      %v2969 = vpack.c.b16 %v2817, %v2809
      %v2970 = vpack.c.b16 %v2818, %v2810
      %v2971 = vpack.c.b16 %v2819, %v2811
      %v2972 = vpack.c.b16 %v2820, %v2812
      %v2973 = vpack.c.b16 %v2821, %v2813
      %v2974 = vpack.c.b16 %v2830, %v2822
      %v2975 = vpack.c.b16 %v2831, %v2823
      %v2976 = vpack.c.b16 %v2832, %v2824
      %v2977 = vpack.c.b16 %v2833, %v2825
      %v2978 = vpack.c.b16 %v2834, %v2826
      %v2979 = vpack.c.b16 %v2835, %v2827
      %v2980 = vpack.c.b16 %v2836, %v2828
      %v2981 = vpack.c.b16 %v2837, %v2829
      %v2982 = vpack.c.b16 %v2846, %v2838
      %v2983 = vpack.c.b16 %v2847, %v2839
      %v2984 = vpack.c.b16 %v2848, %v2840
      %v2985 = vpack.c.b16 %v2849, %v2841
      %v2986 = vpack.c.b16 %v2850, %v2842
      %v2987 = vpack.c.b16 %v2851, %v2843
      %v2988 = vpack.c.b16 %v2852, %v2844
      %v2989 = vpack.c.b16 %v2853, %v2845
      %v2990 = vpack.c.b16 %v2862, %v2854
      %v2991 = vpack.c.b16 %v2863, %v2855
      %v2992 = vpack.c.b16 %v2864, %v2856
      %v2993 = vpack.c.b16 %v2865, %v2857
      %v2994 = vpack.c.b16 %v2866, %v2858
      %v2995 = vpack.c.b16 %v2867, %v2859
      %v2996 = vpack.c.b16 %v2868, %v2860
      %v2997 = vpack.c.b16 %v2869, %v2861
      %v3111 = vsel %vm1532, %v2877, 0
      %v3114 = vsel %vm1532, %v2885, 0
      %v3117 = vsel %vm1532, %v2893, 0
      %v3120 = vsel %vm1532, %v2901, 0
      %v3123 = vsel %vm1532, %v2909, 0
      %v3126 = vsel %vm1532, %v2917, 0
      %v3129 = vsel %vm1532, %v2925, 0
      %v3132 = vsel %vm1532, %v2933, 0
      %v3135 = vsel %vm1532, %v2941, 0
      %v3138 = vsel %vm1532, %v2949, 0
      %v3141 = vsel %vm1532, %v2957, 0
      %v3144 = vsel %vm1532, %v2965, 0
      %v3147 = vsel %vm1532, %v2973, 0
      %v3150 = vsel %vm1532, %v2981, 0
      %v3153 = vsel %vm1532, %v2989, 0
      %v3156 = vsel %vm1532, %v2997, 0
      %3158 = vmatprep.subr.bf16.mxu0 0
      %3159 = vmatpush1.bf16.msra.mxu0 %v1414
      %3160 = vmatprep.subr.bf16.mxu0 0
      %3161 = vmatpush1.bf16.msra.mxu0 %v1413
      %3162 = vmatprep.subr.bf16.mxu0 0
      %3163 = vmatpush1.bf16.msra.mxu0 %v1412
      %3164 = vmatprep.subr.bf16.mxu0 0
      %3165 = vmatpush1.bf16.msra.mxu0 %v1411
      %3166 = vmatprep.subr.bf16.mxu0 0
      %3167 = vmatpush1.bf16.msra.mxu0 %v1410
      %3168 = vmatprep.subr.bf16.mxu0 0
      %3169 = vmatpush1.bf16.msra.mxu0 %v1409
      %3170 = vmatprep.subr.bf16.mxu0 0
      %3171 = vmatpush1.bf16.msra.mxu0 %v1408
      %3172 = vmatprep.subr.bf16.mxu0 0
      %3173 = vmatpush1.bf16.msra.mxu0 %v1407
      %3174 = vmatprep.subr.bf16.mxu0 0
      %3175 = vmatpush2.bf16.msra.mxu0 %v1422
      %3176 = vmatprep.subr.bf16.mxu0 0
      %3177 = vmatpush2.bf16.msra.mxu0 %v1421
      %3178 = vmatprep.subr.bf16.mxu0 0
      %3179 = vmatpush2.bf16.msra.mxu0 %v1420
      %3180 = vmatprep.subr.bf16.mxu0 0
      %3181 = vmatpush2.bf16.msra.mxu0 %v1419
      %3182 = vmatprep.subr.bf16.mxu0 0
      %3183 = vmatpush2.bf16.msra.mxu0 %v1418
      %3184 = vmatprep.subr.bf16.mxu0 0
      %3185 = vmatpush2.bf16.msra.mxu0 %v1417
      %3186 = vmatprep.subr.bf16.mxu0 0
      %3187 = vmatpush2.bf16.msra.mxu0 %v1416
      %3188 = vmatprep.subr.bf16.mxu0 0
      %3189 = vmatpush2.bf16.msra.mxu0 %v1415
      %3190 = vmatprep.mubr.bf16.mxu0 %v2871
      %3191 = vmatmul.mubr.bf16.gmra.mxu0 %v2870
      %v3192 = vpop.f32.mrf.mxu0
      %v3193 = vadd.f32 0.0, %v3192
      %v3194 = vpop.f32.mrf.mxu0
      %v3195 = vpop.f32.mrf.mxu0
      %v3196 = vadd.f32 0.0, %v3195
      %v3197 = vpop.f32.mrf.mxu0
      %3198 = vmatprep.mubr.bf16.mxu0 %v2879
      %3199 = vmatmul.mubr.bf16.gmra.mxu0 %v2878
      %v3200 = vpop.f32.mrf.mxu0
      %v3201 = vadd.f32 0.0, %v3200
      %v3202 = vpop.f32.mrf.mxu0
      %v3203 = vpop.f32.mrf.mxu0
      %v3204 = vadd.f32 0.0, %v3203
      %v3205 = vpop.f32.mrf.mxu0
      %3206 = vmatprep.mubr.bf16.mxu0 %v2887
      %3207 = vmatmul.mubr.bf16.gmra.mxu0 %v2886
      %v3208 = vpop.f32.mrf.mxu0
      %v3209 = vadd.f32 0.0, %v3208
      %v3210 = vpop.f32.mrf.mxu0
      %v3211 = vpop.f32.mrf.mxu0
      %v3212 = vadd.f32 0.0, %v3211
      %v3213 = vpop.f32.mrf.mxu0
      %3214 = vmatprep.mubr.bf16.mxu0 %v2895
      %3215 = vmatmul.mubr.bf16.gmra.mxu0 %v2894
      %v3216 = vpop.f32.mrf.mxu0
      %v3217 = vadd.f32 0.0, %v3216
      %v3218 = vpop.f32.mrf.mxu0
      %v3219 = vpop.f32.mrf.mxu0
      %v3220 = vadd.f32 0.0, %v3219
      %v3221 = vpop.f32.mrf.mxu0
      %3222 = vmatprep.mubr.bf16.mxu0 %v2903
      %3223 = vmatmul.mubr.bf16.gmra.mxu0 %v2902
      %v3224 = vpop.f32.mrf.mxu0
      %v3225 = vadd.f32 0.0, %v3224
      %v3226 = vpop.f32.mrf.mxu0
      %v3227 = vpop.f32.mrf.mxu0
      %v3228 = vadd.f32 0.0, %v3227
      %v3229 = vpop.f32.mrf.mxu0
      %3230 = vmatprep.mubr.bf16.mxu0 %v2911
      %3231 = vmatmul.mubr.bf16.gmra.mxu0 %v2910
      %v3232 = vpop.f32.mrf.mxu0
      %v3233 = vadd.f32 0.0, %v3232
      %v3234 = vpop.f32.mrf.mxu0
      %v3235 = vpop.f32.mrf.mxu0
      %v3236 = vadd.f32 0.0, %v3235
      %v3237 = vpop.f32.mrf.mxu0
      %3238 = vmatprep.mubr.bf16.mxu0 %v2919
      %3239 = vmatmul.mubr.bf16.gmra.mxu0 %v2918
      %v3240 = vpop.f32.mrf.mxu0
      %v3241 = vadd.f32 0.0, %v3240
      %v3242 = vpop.f32.mrf.mxu0
      %v3243 = vpop.f32.mrf.mxu0
      %v3244 = vadd.f32 0.0, %v3243
      %v3245 = vpop.f32.mrf.mxu0
      %3246 = vmatprep.mubr.bf16.mxu0 %v2927
      %3247 = vmatmul.mubr.bf16.gmra.mxu0 %v2926
      %v3248 = vpop.f32.mrf.mxu0
      %v3249 = vadd.f32 0.0, %v3248
      %v3250 = vpop.f32.mrf.mxu0
      %v3251 = vpop.f32.mrf.mxu0
      %v3252 = vadd.f32 0.0, %v3251
      %v3253 = vpop.f32.mrf.mxu0
      %3254 = vmatprep.mubr.bf16.mxu0 %v2935
      %3255 = vmatmul.mubr.bf16.gmra.mxu0 %v2934
      %v3256 = vpop.f32.mrf.mxu0
      %v3257 = vadd.f32 0.0, %v3256
      %v3258 = vpop.f32.mrf.mxu0
      %v3259 = vpop.f32.mrf.mxu0
      %v3260 = vadd.f32 0.0, %v3259
      %v3261 = vpop.f32.mrf.mxu0
      %3262 = vmatprep.mubr.bf16.mxu0 %v2943
      %3263 = vmatmul.mubr.bf16.gmra.mxu0 %v2942
      %v3264 = vpop.f32.mrf.mxu0
      %v3265 = vadd.f32 0.0, %v3264
      %v3266 = vpop.f32.mrf.mxu0
      %v3267 = vpop.f32.mrf.mxu0
      %v3268 = vadd.f32 0.0, %v3267
      %v3269 = vpop.f32.mrf.mxu0
      %3270 = vmatprep.mubr.bf16.mxu0 %v2951
      %3271 = vmatmul.mubr.bf16.gmra.mxu0 %v2950
      %v3272 = vpop.f32.mrf.mxu0
      %v3273 = vadd.f32 0.0, %v3272
      %v3274 = vpop.f32.mrf.mxu0
      %v3275 = vpop.f32.mrf.mxu0
      %v3276 = vadd.f32 0.0, %v3275
      %v3277 = vpop.f32.mrf.mxu0
      %3278 = vmatprep.mubr.bf16.mxu0 %v2959
      %3279 = vmatmul.mubr.bf16.gmra.mxu0 %v2958
      %v3280 = vpop.f32.mrf.mxu0
      %v3281 = vadd.f32 0.0, %v3280
      %v3282 = vpop.f32.mrf.mxu0
      %v3283 = vpop.f32.mrf.mxu0
      %v3284 = vadd.f32 0.0, %v3283
      %v3285 = vpop.f32.mrf.mxu0
      %3286 = vmatprep.mubr.bf16.mxu0 %v2967
      %3287 = vmatmul.mubr.bf16.gmra.mxu0 %v2966
      %v3288 = vpop.f32.mrf.mxu0
      %v3289 = vadd.f32 0.0, %v3288
      %v3290 = vpop.f32.mrf.mxu0
      %v3291 = vpop.f32.mrf.mxu0
      %v3292 = vadd.f32 0.0, %v3291
      %v3293 = vpop.f32.mrf.mxu0
      %3294 = vmatprep.mubr.bf16.mxu0 %v2975
      %3295 = vmatmul.mubr.bf16.gmra.mxu0 %v2974
      %v3296 = vpop.f32.mrf.mxu0
      %v3297 = vadd.f32 0.0, %v3296
      %v3298 = vpop.f32.mrf.mxu0
      %v3299 = vpop.f32.mrf.mxu0
      %v3300 = vadd.f32 0.0, %v3299
      %v3301 = vpop.f32.mrf.mxu0
      %3302 = vmatprep.mubr.bf16.mxu0 %v2983
      %3303 = vmatmul.mubr.bf16.gmra.mxu0 %v2982
      %v3304 = vpop.f32.mrf.mxu0
      %v3305 = vadd.f32 0.0, %v3304
      %v3306 = vpop.f32.mrf.mxu0
      %v3307 = vpop.f32.mrf.mxu0
      %v3308 = vadd.f32 0.0, %v3307
      %v3309 = vpop.f32.mrf.mxu0
      %3310 = vmatprep.mubr.bf16.mxu0 %v2991
      %3311 = vmatmul.mubr.bf16.gmra.mxu0 %v2990
      %v3312 = vpop.f32.mrf.mxu0
      %v3313 = vadd.f32 0.0, %v3312
      %v3314 = vpop.f32.mrf.mxu0
      %v3315 = vpop.f32.mrf.mxu0
      %v3316 = vadd.f32 0.0, %v3315
      %v3317 = vpop.f32.mrf.mxu0
      %3318 = vdwg.mxu0
      %3319 = vmatprep.subr.bf16.mxu0 0
      %3320 = vmatpush1.bf16.msra.mxu0 %v1430
      %3321 = vmatprep.subr.bf16.mxu0 0
      %3322 = vmatpush1.bf16.msra.mxu0 %v1429
      %3323 = vmatprep.subr.bf16.mxu0 0
      %3324 = vmatpush1.bf16.msra.mxu0 %v1428
      %3325 = vmatprep.subr.bf16.mxu0 0
      %3326 = vmatpush1.bf16.msra.mxu0 %v1427
      %3327 = vmatprep.subr.bf16.mxu0 0
      %3328 = vmatpush1.bf16.msra.mxu0 %v1426
      %3329 = vmatprep.subr.bf16.mxu0 0
      %3330 = vmatpush1.bf16.msra.mxu0 %v1425
      %3331 = vmatprep.subr.bf16.mxu0 0
      %3332 = vmatpush1.bf16.msra.mxu0 %v1424
      %3333 = vmatprep.subr.bf16.mxu0 0
      %3334 = vmatpush1.bf16.msra.mxu0 %v1423
      %3335 = vmatprep.subr.bf16.mxu0 0
      %3336 = vmatpush2.bf16.msra.mxu0 %v1438
      %3337 = vmatprep.subr.bf16.mxu0 0
      %3338 = vmatpush2.bf16.msra.mxu0 %v1437
      %3339 = vmatprep.subr.bf16.mxu0 0
      %3340 = vmatpush2.bf16.msra.mxu0 %v1436
      %3341 = vmatprep.subr.bf16.mxu0 0
      %3342 = vmatpush2.bf16.msra.mxu0 %v1435
      %3343 = vmatprep.subr.bf16.mxu0 0
      %3344 = vmatpush2.bf16.msra.mxu0 %v1434
      %3345 = vmatprep.subr.bf16.mxu0 0
      %3346 = vmatpush2.bf16.msra.mxu0 %v1433
      %3347 = vmatprep.subr.bf16.mxu0 0
      %3348 = vmatpush2.bf16.msra.mxu0 %v1432
      %3349 = vmatprep.subr.bf16.mxu0 0
      %3350 = vmatpush2.bf16.msra.mxu0 %v1431
      %3351 = vmatprep.mubr.bf16.mxu0 %v2873
      %3352 = vmatmul.mubr.bf16.gmra.mxu0 %v2872
      %v3353 = vpop.f32.mrf.mxu0
      %v3354 = vadd.f32 %v3193, %v3353
      %v3355 = vpop.f32.mrf.mxu0
      %v3356 = vpop.f32.mrf.mxu0
      %v3357 = vadd.f32 %v3196, %v3356
      %v3358 = vpop.f32.mrf.mxu0
      %3359 = vmatprep.mubr.bf16.mxu0 %v2881
      %3360 = vmatmul.mubr.bf16.gmra.mxu0 %v2880
      %v3361 = vpop.f32.mrf.mxu0
      %v3362 = vadd.f32 %v3201, %v3361
      %v3363 = vpop.f32.mrf.mxu0
      %v3364 = vpop.f32.mrf.mxu0
      %v3365 = vadd.f32 %v3204, %v3364
      %v3366 = vpop.f32.mrf.mxu0
      %3367 = vmatprep.mubr.bf16.mxu0 %v2889
      %3368 = vmatmul.mubr.bf16.gmra.mxu0 %v2888
      %v3369 = vpop.f32.mrf.mxu0
      %v3370 = vadd.f32 %v3209, %v3369
      %v3371 = vpop.f32.mrf.mxu0
      %v3372 = vpop.f32.mrf.mxu0
      %v3373 = vadd.f32 %v3212, %v3372
      %v3374 = vpop.f32.mrf.mxu0
      %3375 = vmatprep.mubr.bf16.mxu0 %v2897
      %3376 = vmatmul.mubr.bf16.gmra.mxu0 %v2896
      %v3377 = vpop.f32.mrf.mxu0
      %v3378 = vadd.f32 %v3217, %v3377
      %v3379 = vpop.f32.mrf.mxu0
      %v3380 = vpop.f32.mrf.mxu0
      %v3381 = vadd.f32 %v3220, %v3380
      %v3382 = vpop.f32.mrf.mxu0
      %3383 = vmatprep.mubr.bf16.mxu0 %v2905
      %3384 = vmatmul.mubr.bf16.gmra.mxu0 %v2904
      %v3385 = vpop.f32.mrf.mxu0
      %v3386 = vadd.f32 %v3225, %v3385
      %v3387 = vpop.f32.mrf.mxu0
      %v3388 = vpop.f32.mrf.mxu0
      %v3389 = vadd.f32 %v3228, %v3388
      %v3390 = vpop.f32.mrf.mxu0
      %3391 = vmatprep.mubr.bf16.mxu0 %v2913
      %3392 = vmatmul.mubr.bf16.gmra.mxu0 %v2912
      %v3393 = vpop.f32.mrf.mxu0
      %v3394 = vadd.f32 %v3233, %v3393
      %v3395 = vpop.f32.mrf.mxu0
      %v3396 = vpop.f32.mrf.mxu0
      %v3397 = vadd.f32 %v3236, %v3396
      %v3398 = vpop.f32.mrf.mxu0
      %3399 = vmatprep.mubr.bf16.mxu0 %v2921
      %3400 = vmatmul.mubr.bf16.gmra.mxu0 %v2920
      %v3401 = vpop.f32.mrf.mxu0
      %v3402 = vadd.f32 %v3241, %v3401
      %v3403 = vpop.f32.mrf.mxu0
      %v3404 = vpop.f32.mrf.mxu0
      %v3405 = vadd.f32 %v3244, %v3404
      %v3406 = vpop.f32.mrf.mxu0
      %3407 = vmatprep.mubr.bf16.mxu0 %v2929
      %3408 = vmatmul.mubr.bf16.gmra.mxu0 %v2928
      %v3409 = vpop.f32.mrf.mxu0
      %v3410 = vadd.f32 %v3249, %v3409
      %v3411 = vpop.f32.mrf.mxu0
      %v3412 = vpop.f32.mrf.mxu0
      %v3413 = vadd.f32 %v3252, %v3412
      %v3414 = vpop.f32.mrf.mxu0
      %3415 = vmatprep.mubr.bf16.mxu0 %v2937
      %3416 = vmatmul.mubr.bf16.gmra.mxu0 %v2936
      %v3417 = vpop.f32.mrf.mxu0
      %v3418 = vadd.f32 %v3257, %v3417
      %v3419 = vpop.f32.mrf.mxu0
      %v3420 = vpop.f32.mrf.mxu0
      %v3421 = vadd.f32 %v3260, %v3420
      %v3422 = vpop.f32.mrf.mxu0
      %3423 = vmatprep.mubr.bf16.mxu0 %v2945
      %3424 = vmatmul.mubr.bf16.gmra.mxu0 %v2944
      %v3425 = vpop.f32.mrf.mxu0
      %v3426 = vadd.f32 %v3265, %v3425
      %v3427 = vpop.f32.mrf.mxu0
      %v3428 = vpop.f32.mrf.mxu0
      %v3429 = vadd.f32 %v3268, %v3428
      %v3430 = vpop.f32.mrf.mxu0
      %3431 = vmatprep.mubr.bf16.mxu0 %v2953
      %3432 = vmatmul.mubr.bf16.gmra.mxu0 %v2952
      %v3433 = vpop.f32.mrf.mxu0
      %v3434 = vadd.f32 %v3273, %v3433
      %v3435 = vpop.f32.mrf.mxu0
      %v3436 = vpop.f32.mrf.mxu0
      %v3437 = vadd.f32 %v3276, %v3436
      %v3438 = vpop.f32.mrf.mxu0
      %3439 = vmatprep.mubr.bf16.mxu0 %v2961
      %3440 = vmatmul.mubr.bf16.gmra.mxu0 %v2960
      %v3441 = vpop.f32.mrf.mxu0
      %v3442 = vadd.f32 %v3281, %v3441
      %v3443 = vpop.f32.mrf.mxu0
      %v3444 = vpop.f32.mrf.mxu0
      %v3445 = vadd.f32 %v3284, %v3444
      %v3446 = vpop.f32.mrf.mxu0
      %3447 = vmatprep.mubr.bf16.mxu0 %v2969
      %3448 = vmatmul.mubr.bf16.gmra.mxu0 %v2968
      %v3449 = vpop.f32.mrf.mxu0
      %v3450 = vadd.f32 %v3289, %v3449
      %v3451 = vpop.f32.mrf.mxu0
      %v3452 = vpop.f32.mrf.mxu0
      %v3453 = vadd.f32 %v3292, %v3452
      %v3454 = vpop.f32.mrf.mxu0
      %3455 = vmatprep.mubr.bf16.mxu0 %v2977
      %3456 = vmatmul.mubr.bf16.gmra.mxu0 %v2976
      %v3457 = vpop.f32.mrf.mxu0
      %v3458 = vadd.f32 %v3297, %v3457
      %v3459 = vpop.f32.mrf.mxu0
      %v3460 = vpop.f32.mrf.mxu0
      %v3461 = vadd.f32 %v3300, %v3460
      %v3462 = vpop.f32.mrf.mxu0
      %3463 = vmatprep.mubr.bf16.mxu0 %v2985
      %3464 = vmatmul.mubr.bf16.gmra.mxu0 %v2984
      %v3465 = vpop.f32.mrf.mxu0
      %v3466 = vadd.f32 %v3305, %v3465
      %v3467 = vpop.f32.mrf.mxu0
      %v3468 = vpop.f32.mrf.mxu0
      %v3469 = vadd.f32 %v3308, %v3468
      %v3470 = vpop.f32.mrf.mxu0
      %3471 = vmatprep.mubr.bf16.mxu0 %v2993
      %3472 = vmatmul.mubr.bf16.gmra.mxu0 %v2992
      %v3473 = vpop.f32.mrf.mxu0
      %v3474 = vadd.f32 %v3313, %v3473
      %v3475 = vpop.f32.mrf.mxu0
      %v3476 = vpop.f32.mrf.mxu0
      %v3477 = vadd.f32 %v3316, %v3476
      %v3478 = vpop.f32.mrf.mxu0
      %3479 = vdwg.mxu0
      %3480 = vmatprep.subr.bf16.mxu0 0
      %3481 = vmatpush1.bf16.msra.mxu0 %v1446
      %3482 = vmatprep.subr.bf16.mxu0 0
      %3483 = vmatpush1.bf16.msra.mxu0 %v1445
      %3484 = vmatprep.subr.bf16.mxu0 0
      %3485 = vmatpush1.bf16.msra.mxu0 %v1444
      %3486 = vmatprep.subr.bf16.mxu0 0
      %3487 = vmatpush1.bf16.msra.mxu0 %v1443
      %3488 = vmatprep.subr.bf16.mxu0 0
      %3489 = vmatpush1.bf16.msra.mxu0 %v1442
      %3490 = vmatprep.subr.bf16.mxu0 0
      %3491 = vmatpush1.bf16.msra.mxu0 %v1441
      %3492 = vmatprep.subr.bf16.mxu0 0
      %3493 = vmatpush1.bf16.msra.mxu0 %v1440
      %3494 = vmatprep.subr.bf16.mxu0 0
      %3495 = vmatpush1.bf16.msra.mxu0 %v1439
      %3496 = vmatprep.subr.bf16.mxu0 0
      %3497 = vmatpush2.bf16.msra.mxu0 %v1454
      %3498 = vmatprep.subr.bf16.mxu0 0
      %3499 = vmatpush2.bf16.msra.mxu0 %v1453
      %3500 = vmatprep.subr.bf16.mxu0 0
      %3501 = vmatpush2.bf16.msra.mxu0 %v1452
      %3502 = vmatprep.subr.bf16.mxu0 0
      %3503 = vmatpush2.bf16.msra.mxu0 %v1451
      %3504 = vmatprep.subr.bf16.mxu0 0
      %3505 = vmatpush2.bf16.msra.mxu0 %v1450
      %3506 = vmatprep.subr.bf16.mxu0 0
      %3507 = vmatpush2.bf16.msra.mxu0 %v1449
      %3508 = vmatprep.subr.bf16.mxu0 0
      %3509 = vmatpush2.bf16.msra.mxu0 %v1448
      %3510 = vmatprep.subr.bf16.mxu0 0
      %3511 = vmatpush2.bf16.msra.mxu0 %v1447
      %3512 = vmatprep.mubr.bf16.mxu0 %v2875
      %3513 = vmatmul.mubr.bf16.gmra.mxu0 %v2874
      %v3514 = vpop.f32.mrf.mxu0
      %v3515 = vadd.f32 %v3354, %v3514
      %v3516 = vpop.f32.mrf.mxu0
      %v3517 = vpop.f32.mrf.mxu0
      %v3518 = vadd.f32 %v3357, %v3517
      %v3519 = vpop.f32.mrf.mxu0
      %3520 = vmatprep.mubr.bf16.mxu0 %v2883
      %3521 = vmatmul.mubr.bf16.gmra.mxu0 %v2882
      %v3522 = vpop.f32.mrf.mxu0
      %v3523 = vadd.f32 %v3362, %v3522
      %v3524 = vpop.f32.mrf.mxu0
      %v3525 = vpop.f32.mrf.mxu0
      %v3526 = vadd.f32 %v3365, %v3525
      %v3527 = vpop.f32.mrf.mxu0
      %3528 = vmatprep.mubr.bf16.mxu0 %v2891
      %3529 = vmatmul.mubr.bf16.gmra.mxu0 %v2890
      %v3530 = vpop.f32.mrf.mxu0
      %v3531 = vadd.f32 %v3370, %v3530
      %v3532 = vpop.f32.mrf.mxu0
      %v3533 = vpop.f32.mrf.mxu0
      %v3534 = vadd.f32 %v3373, %v3533
      %v3535 = vpop.f32.mrf.mxu0
      %3536 = vmatprep.mubr.bf16.mxu0 %v2899
      %3537 = vmatmul.mubr.bf16.gmra.mxu0 %v2898
      %v3538 = vpop.f32.mrf.mxu0
      %v3539 = vadd.f32 %v3378, %v3538
      %v3540 = vpop.f32.mrf.mxu0
      %v3541 = vpop.f32.mrf.mxu0
      %v3542 = vadd.f32 %v3381, %v3541
      %v3543 = vpop.f32.mrf.mxu0
      %3544 = vmatprep.mubr.bf16.mxu0 %v2907
      %3545 = vmatmul.mubr.bf16.gmra.mxu0 %v2906
      %v3546 = vpop.f32.mrf.mxu0
      %v3547 = vadd.f32 %v3386, %v3546
      %v3548 = vpop.f32.mrf.mxu0
      %v3549 = vpop.f32.mrf.mxu0
      %v3550 = vadd.f32 %v3389, %v3549
      %v3551 = vpop.f32.mrf.mxu0
      %3552 = vmatprep.mubr.bf16.mxu0 %v2915
      %3553 = vmatmul.mubr.bf16.gmra.mxu0 %v2914
      %v3554 = vpop.f32.mrf.mxu0
      %v3555 = vadd.f32 %v3394, %v3554
      %v3556 = vpop.f32.mrf.mxu0
      %v3557 = vpop.f32.mrf.mxu0
      %v3558 = vadd.f32 %v3397, %v3557
      %v3559 = vpop.f32.mrf.mxu0
      %3560 = vmatprep.mubr.bf16.mxu0 %v2923
      %3561 = vmatmul.mubr.bf16.gmra.mxu0 %v2922
      %v3562 = vpop.f32.mrf.mxu0
      %v3563 = vadd.f32 %v3402, %v3562
      %v3564 = vpop.f32.mrf.mxu0
      %v3565 = vpop.f32.mrf.mxu0
      %v3566 = vadd.f32 %v3405, %v3565
      %v3567 = vpop.f32.mrf.mxu0
      %3568 = vmatprep.mubr.bf16.mxu0 %v2931
      %3569 = vmatmul.mubr.bf16.gmra.mxu0 %v2930
      %v3570 = vpop.f32.mrf.mxu0
      %v3571 = vadd.f32 %v3410, %v3570
      %v3572 = vpop.f32.mrf.mxu0
      %v3573 = vpop.f32.mrf.mxu0
      %v3574 = vadd.f32 %v3413, %v3573
      %v3575 = vpop.f32.mrf.mxu0
      %3576 = vmatprep.mubr.bf16.mxu0 %v2939
      %3577 = vmatmul.mubr.bf16.gmra.mxu0 %v2938
      %v3578 = vpop.f32.mrf.mxu0
      %v3579 = vadd.f32 %v3418, %v3578
      %v3580 = vpop.f32.mrf.mxu0
      %v3581 = vpop.f32.mrf.mxu0
      %v3582 = vadd.f32 %v3421, %v3581
      %v3583 = vpop.f32.mrf.mxu0
      %3584 = vmatprep.mubr.bf16.mxu0 %v2947
      %3585 = vmatmul.mubr.bf16.gmra.mxu0 %v2946
      %v3586 = vpop.f32.mrf.mxu0
      %v3587 = vadd.f32 %v3426, %v3586
      %v3588 = vpop.f32.mrf.mxu0
      %v3589 = vpop.f32.mrf.mxu0
      %v3590 = vadd.f32 %v3429, %v3589
      %v3591 = vpop.f32.mrf.mxu0
      %3592 = vmatprep.mubr.bf16.mxu0 %v2955
      %3593 = vmatmul.mubr.bf16.gmra.mxu0 %v2954
      %v3594 = vpop.f32.mrf.mxu0
      %v3595 = vadd.f32 %v3434, %v3594
      %v3596 = vpop.f32.mrf.mxu0
      %v3597 = vpop.f32.mrf.mxu0
      %v3598 = vadd.f32 %v3437, %v3597
      %v3599 = vpop.f32.mrf.mxu0
      %3600 = vmatprep.mubr.bf16.mxu0 %v2963
      %3601 = vmatmul.mubr.bf16.gmra.mxu0 %v2962
      %v3602 = vpop.f32.mrf.mxu0
      %v3603 = vadd.f32 %v3442, %v3602
      %v3604 = vpop.f32.mrf.mxu0
      %v3605 = vpop.f32.mrf.mxu0
      %v3606 = vadd.f32 %v3445, %v3605
      %v3607 = vpop.f32.mrf.mxu0
      %3608 = vmatprep.mubr.bf16.mxu0 %v2971
      %3609 = vmatmul.mubr.bf16.gmra.mxu0 %v2970
      %v3610 = vpop.f32.mrf.mxu0
      %v3611 = vadd.f32 %v3450, %v3610
      %v3612 = vpop.f32.mrf.mxu0
      %v3613 = vpop.f32.mrf.mxu0
      %v3614 = vadd.f32 %v3453, %v3613
      %v3615 = vpop.f32.mrf.mxu0
      %3616 = vmatprep.mubr.bf16.mxu0 %v2979
      %3617 = vmatmul.mubr.bf16.gmra.mxu0 %v2978
      %v3618 = vpop.f32.mrf.mxu0
      %v3619 = vadd.f32 %v3458, %v3618
      %v3620 = vpop.f32.mrf.mxu0
      %v3621 = vpop.f32.mrf.mxu0
      %v3622 = vadd.f32 %v3461, %v3621
      %v3623 = vpop.f32.mrf.mxu0
      %3624 = vmatprep.mubr.bf16.mxu0 %v2987
      %3625 = vmatmul.mubr.bf16.gmra.mxu0 %v2986
      %v3626 = vpop.f32.mrf.mxu0
      %v3627 = vadd.f32 %v3466, %v3626
      %v3628 = vpop.f32.mrf.mxu0
      %v3629 = vpop.f32.mrf.mxu0
      %v3630 = vadd.f32 %v3469, %v3629
      %v3631 = vpop.f32.mrf.mxu0
      %3632 = vmatprep.mubr.bf16.mxu0 %v2995
      %3633 = vmatmul.mubr.bf16.gmra.mxu0 %v2994
      %v3634 = vpop.f32.mrf.mxu0
      %v3635 = vadd.f32 %v3474, %v3634
      %v3636 = vpop.f32.mrf.mxu0
      %v3637 = vpop.f32.mrf.mxu0
      %v3638 = vadd.f32 %v3477, %v3637
      %v3639 = vpop.f32.mrf.mxu0
      %3640 = vdwg.mxu0
      %3641 = vmatprep.subr.bf16.mxu0 0
      %3642 = vmatpush1.bf16.msra.mxu0 %v1462
      %3643 = vmatprep.subr.bf16.mxu0 0
      %3644 = vmatpush1.bf16.msra.mxu0 %v1461
      %3645 = vmatprep.subr.bf16.mxu0 0
      %3646 = vmatpush1.bf16.msra.mxu0 %v1460
      %3647 = vmatprep.subr.bf16.mxu0 0
      %3648 = vmatpush1.bf16.msra.mxu0 %v1459
      %3649 = vmatprep.subr.bf16.mxu0 0
      %3650 = vmatpush1.bf16.msra.mxu0 %v1458
      %3651 = vmatprep.subr.bf16.mxu0 0
      %3652 = vmatpush1.bf16.msra.mxu0 %v1457
      %3653 = vmatprep.subr.bf16.mxu0 0
      %3654 = vmatpush1.bf16.msra.mxu0 %v1456
      %3655 = vmatprep.subr.bf16.mxu0 0
      %3656 = vmatpush1.bf16.msra.mxu0 %v1455
      %3657 = vmatprep.subr.bf16.mxu0 0
      %3658 = vmatpush2.bf16.msra.mxu0 0
      %3659 = vmatprep.subr.bf16.mxu0 0
      %3660 = vmatpush2.bf16.msra.mxu0 %v1583
      %3661 = vmatprep.subr.bf16.mxu0 0
      %3662 = vmatpush2.bf16.msra.mxu0 %v1468
      %3663 = vmatprep.subr.bf16.mxu0 0
      %3664 = vmatpush2.bf16.msra.mxu0 %v1467
      %3665 = vmatprep.subr.bf16.mxu0 0
      %3666 = vmatpush2.bf16.msra.mxu0 %v1466
      %3667 = vmatprep.subr.bf16.mxu0 0
      %3668 = vmatpush2.bf16.msra.mxu0 %v1465
      %3669 = vmatprep.subr.bf16.mxu0 0
      %3670 = vmatpush2.bf16.msra.mxu0 %v1464
      %3671 = vmatprep.subr.bf16.mxu0 0
      %3672 = vmatpush2.bf16.msra.mxu0 %v1463
      %3673 = vmatprep.mubr.bf16.mxu0 %v3111
      %3674 = vmatmul.mubr.bf16.gmra.mxu0 %v2876
      %v3675 = vpop.f32.mrf.mxu0
      %v3676 = vadd.f32 %v3515, %v3675
      %v3677 = vpop.f32.mrf.mxu0
      %v3678 = vpop.f32.mrf.mxu0
      %v3679 = vadd.f32 %v3518, %v3678
      %v3680 = vpop.f32.mrf.mxu0
      %3681 = vmatprep.mubr.bf16.mxu0 %v3114
      %3682 = vmatmul.mubr.bf16.gmra.mxu0 %v2884
      %v3683 = vpop.f32.mrf.mxu0
      %v3684 = vadd.f32 %v3523, %v3683
      %v3685 = vpop.f32.mrf.mxu0
      %v3686 = vpop.f32.mrf.mxu0
      %v3687 = vadd.f32 %v3526, %v3686
      %v3688 = vpop.f32.mrf.mxu0
      %3689 = vmatprep.mubr.bf16.mxu0 %v3117
      %3690 = vmatmul.mubr.bf16.gmra.mxu0 %v2892
      %v3691 = vpop.f32.mrf.mxu0
      %v3692 = vadd.f32 %v3531, %v3691
      %v3693 = vpop.f32.mrf.mxu0
      %v3694 = vpop.f32.mrf.mxu0
      %v3695 = vadd.f32 %v3534, %v3694
      %v3696 = vpop.f32.mrf.mxu0
      %3697 = vmatprep.mubr.bf16.mxu0 %v3120
      %3698 = vmatmul.mubr.bf16.gmra.mxu0 %v2900
      %v3699 = vpop.f32.mrf.mxu0
      %v3700 = vadd.f32 %v3539, %v3699
      %v3701 = vpop.f32.mrf.mxu0
      %v3702 = vpop.f32.mrf.mxu0
      %v3703 = vadd.f32 %v3542, %v3702
      %v3704 = vpop.f32.mrf.mxu0
      %3705 = vmatprep.mubr.bf16.mxu0 %v3123
      %3706 = vmatmul.mubr.bf16.gmra.mxu0 %v2908
      %v3707 = vpop.f32.mrf.mxu0
      %v3708 = vadd.f32 %v3547, %v3707
      %v3709 = vpop.f32.mrf.mxu0
      %v3710 = vpop.f32.mrf.mxu0
      %v3711 = vadd.f32 %v3550, %v3710
      %v3712 = vpop.f32.mrf.mxu0
      %3713 = vmatprep.mubr.bf16.mxu0 %v3126
      %3714 = vmatmul.mubr.bf16.gmra.mxu0 %v2916
      %v3715 = vpop.f32.mrf.mxu0
      %v3716 = vadd.f32 %v3555, %v3715
      %v3717 = vpop.f32.mrf.mxu0
      %v3718 = vpop.f32.mrf.mxu0
      %v3719 = vadd.f32 %v3558, %v3718
      %v3720 = vpop.f32.mrf.mxu0
      %3721 = vmatprep.mubr.bf16.mxu0 %v3129
      %3722 = vmatmul.mubr.bf16.gmra.mxu0 %v2924
      %v3723 = vpop.f32.mrf.mxu0
      %v3724 = vadd.f32 %v3563, %v3723
      %v3725 = vpop.f32.mrf.mxu0
      %v3726 = vpop.f32.mrf.mxu0
      %v3727 = vadd.f32 %v3566, %v3726
      %v3728 = vpop.f32.mrf.mxu0
      %3729 = vmatprep.mubr.bf16.mxu0 %v3132
      %3730 = vmatmul.mubr.bf16.gmra.mxu0 %v2932
      %v3731 = vpop.f32.mrf.mxu0
      %v3732 = vadd.f32 %v3571, %v3731
      %v3733 = vpop.f32.mrf.mxu0
      %v3734 = vpop.f32.mrf.mxu0
      %v3735 = vadd.f32 %v3574, %v3734
      %v3736 = vpop.f32.mrf.mxu0
      %3737 = vmatprep.mubr.bf16.mxu0 %v3135
      %3738 = vmatmul.mubr.bf16.gmra.mxu0 %v2940
      %v3739 = vpop.f32.mrf.mxu0
      %v3740 = vadd.f32 %v3579, %v3739
      %v3741 = vpop.f32.mrf.mxu0
      %v3742 = vpop.f32.mrf.mxu0
      %v3743 = vadd.f32 %v3582, %v3742
      %v3744 = vpop.f32.mrf.mxu0
      %3745 = vmatprep.mubr.bf16.mxu0 %v3138
      %3746 = vmatmul.mubr.bf16.gmra.mxu0 %v2948
      %v3747 = vpop.f32.mrf.mxu0
      %v3748 = vadd.f32 %v3587, %v3747
      %v3749 = vpop.f32.mrf.mxu0
      %v3750 = vpop.f32.mrf.mxu0
      %v3751 = vadd.f32 %v3590, %v3750
      %v3752 = vpop.f32.mrf.mxu0
      %3753 = vmatprep.mubr.bf16.mxu0 %v3141
      %3754 = vmatmul.mubr.bf16.gmra.mxu0 %v2956
      %v3755 = vpop.f32.mrf.mxu0
      %v3756 = vadd.f32 %v3595, %v3755
      %v3757 = vpop.f32.mrf.mxu0
      %v3758 = vpop.f32.mrf.mxu0
      %v3759 = vadd.f32 %v3598, %v3758
      %v3760 = vpop.f32.mrf.mxu0
      %3761 = vmatprep.mubr.bf16.mxu0 %v3144
      %3762 = vmatmul.mubr.bf16.gmra.mxu0 %v2964
      %v3763 = vpop.f32.mrf.mxu0
      %v3764 = vadd.f32 %v3603, %v3763
      %v3765 = vpop.f32.mrf.mxu0
      %v3766 = vpop.f32.mrf.mxu0
      %v3767 = vadd.f32 %v3606, %v3766
      %v3768 = vpop.f32.mrf.mxu0
      %3769 = vmatprep.mubr.bf16.mxu0 %v3147
      %3770 = vmatmul.mubr.bf16.gmra.mxu0 %v2972
      %v3771 = vpop.f32.mrf.mxu0
      %v3772 = vadd.f32 %v3611, %v3771
      %v3773 = vpop.f32.mrf.mxu0
      %v3774 = vpop.f32.mrf.mxu0
      %v3775 = vadd.f32 %v3614, %v3774
      %v3776 = vpop.f32.mrf.mxu0
      %3777 = vmatprep.mubr.bf16.mxu0 %v3150
      %3778 = vmatmul.mubr.bf16.gmra.mxu0 %v2980
      %v3779 = vpop.f32.mrf.mxu0
      %v3780 = vadd.f32 %v3619, %v3779
      %v3781 = vpop.f32.mrf.mxu0
      %v3782 = vpop.f32.mrf.mxu0
      %v3783 = vadd.f32 %v3622, %v3782
      %v3784 = vpop.f32.mrf.mxu0
      %3785 = vmatprep.mubr.bf16.mxu0 %v3153
      %3786 = vmatmul.mubr.bf16.gmra.mxu0 %v2988
      %v3787 = vpop.f32.mrf.mxu0
      %v3788 = vadd.f32 %v3627, %v3787
      %v3789 = vpop.f32.mrf.mxu0
      %v3790 = vpop.f32.mrf.mxu0
      %v3791 = vadd.f32 %v3630, %v3790
      %v3792 = vpop.f32.mrf.mxu0
      %3793 = vmatprep.mubr.bf16.mxu0 %v3156
      %3794 = vmatmul.mubr.bf16.gmra.mxu0 %v2996
      %v3795 = vpop.f32.mrf.mxu0
      %v3796 = vadd.f32 %v3635, %v3795
      %v3797 = vpop.f32.mrf.mxu0
      %v3798 = vpop.f32.mrf.mxu0
      %v3799 = vadd.f32 %v3638, %v3798
      %v3800 = vpop.f32.mrf.mxu0
      %3801 = vdwg.mxu0
      %3810 = vrot.lane.b32.xlu0 %v3676, 124
      %v3811 = vpop.permute.xlu0 %3810
      %3812 = vrot.lane.b32.xlu0 %v3679, 124
      %v3813 = vpop.permute.xlu0 %3812
      %3814 = vrot.lane.b32.xlu0 %v3684, 124
      %v3815 = vpop.permute.xlu0 %3814
      %3816 = vrot.lane.b32.xlu0 %v3687, 124
      %v3817 = vpop.permute.xlu0 %3816
      %3818 = vrot.lane.b32.xlu0 %v3692, 124
      %v3819 = vpop.permute.xlu0 %3818
      %3820 = vrot.lane.b32.xlu0 %v3695, 124
      %v3821 = vpop.permute.xlu0 %3820
      %3822 = vrot.lane.b32.xlu0 %v3700, 124
      %v3823 = vpop.permute.xlu0 %3822
      %3824 = vrot.lane.b32.xlu0 %v3703, 124
      %v3825 = vpop.permute.xlu0 %3824
      %v3834 = vadd.f32 %v2349, %v3811
      %v3835 = vadd.f32 %v2350, %v3813
      %v3836 = vadd.f32 %v2351, %v3815
      %v3837 = vadd.f32 %v2352, %v3817
      %v3838 = vadd.f32 %v2353, %v3819
      %v3839 = vadd.f32 %v2354, %v3821
      %v3840 = vadd.f32 %v2355, %v3823
      %v3841 = vadd.f32 %v2356, %v3825
      %3850 = vrot.lane.b32.xlu0 %v3708, 123
      %v3851 = vpop.permute.xlu0 %3850
      %3852 = vrot.lane.b32.xlu0 %v3711, 123
      %v3853 = vpop.permute.xlu0 %3852
      %3854 = vrot.lane.b32.xlu0 %v3716, 123
      %v3855 = vpop.permute.xlu0 %3854
      %3856 = vrot.lane.b32.xlu0 %v3719, 123
      %v3857 = vpop.permute.xlu0 %3856
      %3858 = vrot.lane.b32.xlu0 %v3724, 123
      %v3859 = vpop.permute.xlu0 %3858
      %3860 = vrot.lane.b32.xlu0 %v3727, 123
      %v3861 = vpop.permute.xlu0 %3860
      %3862 = vrot.lane.b32.xlu0 %v3732, 123
      %v3863 = vpop.permute.xlu0 %3862
      %3864 = vrot.lane.b32.xlu0 %v3735, 123
      %v3865 = vpop.permute.xlu0 %3864
      %v3874 = vadd.f32 %v3834, %v3851
      %v3875 = vadd.f32 %v3835, %v3853
      %v3876 = vadd.f32 %v3836, %v3855
      %v3877 = vadd.f32 %v3837, %v3857
      %v3878 = vadd.f32 %v3838, %v3859
      %v3879 = vadd.f32 %v3839, %v3861
      %v3880 = vadd.f32 %v3840, %v3863
      %v3881 = vadd.f32 %v3841, %v3865
      %3890 = vrot.lane.b32.xlu0 %v3740, 122
      %v3891 = vpop.permute.xlu0 %3890
      %3892 = vrot.lane.b32.xlu0 %v3743, 122
      %v3893 = vpop.permute.xlu0 %3892
      %3894 = vrot.lane.b32.xlu0 %v3748, 122
      %v3895 = vpop.permute.xlu0 %3894
      %3896 = vrot.lane.b32.xlu0 %v3751, 122
      %v3897 = vpop.permute.xlu0 %3896
      %3898 = vrot.lane.b32.xlu0 %v3756, 122
      %v3899 = vpop.permute.xlu0 %3898
      %3900 = vrot.lane.b32.xlu0 %v3759, 122
      %v3901 = vpop.permute.xlu0 %3900
      %3902 = vrot.lane.b32.xlu0 %v3764, 122
      %v3903 = vpop.permute.xlu0 %3902
      %3904 = vrot.lane.b32.xlu0 %v3767, 122
      %v3905 = vpop.permute.xlu0 %3904
      %v3914 = vadd.f32 %v3874, %v3891
      %v3915 = vadd.f32 %v3875, %v3893
      %v3916 = vadd.f32 %v3876, %v3895
      %v3917 = vadd.f32 %v3877, %v3897
      %v3918 = vadd.f32 %v3878, %v3899
      %v3919 = vadd.f32 %v3879, %v3901
      %v3920 = vadd.f32 %v3880, %v3903
      %v3921 = vadd.f32 %v3881, %v3905
      %3930 = vrot.lane.b32.xlu0 %v3772, 121
      %v3931 = vpop.permute.xlu0 %3930
      %3932 = vrot.lane.b32.xlu0 %v3775, 121
      %v3933 = vpop.permute.xlu0 %3932
      %3934 = vrot.lane.b32.xlu0 %v3780, 121
      %v3935 = vpop.permute.xlu0 %3934
      %3936 = vrot.lane.b32.xlu0 %v3783, 121
      %v3937 = vpop.permute.xlu0 %3936
      %3938 = vrot.lane.b32.xlu0 %v3788, 121
      %v3939 = vpop.permute.xlu0 %3938
      %3940 = vrot.lane.b32.xlu0 %v3791, 121
      %v3941 = vpop.permute.xlu0 %3940
      %3942 = vrot.lane.b32.xlu0 %v3796, 121
      %v3943 = vpop.permute.xlu0 %3942
      %3944 = vrot.lane.b32.xlu0 %v3799, 121
      %v3945 = vpop.permute.xlu0 %3944
      %v3954 = vadd.f32 %v3914, %v3931
      %v3955 = vadd.f32 %v3915, %v3933
      %v3956 = vadd.f32 %v3916, %v3935
      %v3957 = vadd.f32 %v3917, %v3937
      %v3958 = vadd.f32 %v3918, %v3939
      %v3959 = vadd.f32 %v3919, %v3941
      %v3960 = vadd.f32 %v3920, %v3943
      %v3961 = vadd.f32 %v3921, %v3945
      %v3962 = vld [vmem:[%s2] sm:$0xff]
      %v3963 = vld [vmem:[%s2 + $0x8] sm:$0xff]
      %v3964 = vld [vmem:[%s2 + $0x10] sm:$0xff]
      %v3965 = vld [vmem:[%s2 + $0x18] sm:$0xff]
      %v3966 = vld [vmem:[%s2 + $0x20] sm:$0xff]
      %v3967 = vld [vmem:[%s2 + $0x28] sm:$0xff]
      %v3968 = vld [vmem:[%s2 + $0x30] sm:$0xff]
      %v3969 = vld [vmem:[%s2 + $0x38] sm:$0xff]
      %3971 = vset.pattern.permute.xlu0 0
      %3972 = vperm.xlu0 %3971, %v3962
      %v3973 = vpop.permute.xlu0 %3972
      %3976 = vset.pattern.permute.xlu0 0
      %3977 = vperm.xlu0 %3976, %v3963
      %v3978 = vpop.permute.xlu0 %3977
      %3981 = vset.pattern.permute.xlu0 0
      %3982 = vperm.xlu0 %3981, %v3964
      %v3983 = vpop.permute.xlu0 %3982
      %3986 = vset.pattern.permute.xlu0 0
      %3987 = vperm.xlu0 %3986, %v3965
      %v3988 = vpop.permute.xlu0 %3987
      %v3990 = vadd.f32 %v3954, %v3973
      %v3991 = vadd.f32 %v3955, %v3978
      %v3992 = vadd.f32 %v3956, %v3983
      %v3993 = vadd.f32 %v3957, %v3988
      %3995 = vset.pattern.permute.xlu0 0
      %3996 = vperm.xlu0 %3995, %v3966
      %v3997 = vpop.permute.xlu0 %3996
      %4000 = vset.pattern.permute.xlu0 0
      %4001 = vperm.xlu0 %4000, %v3967
      %v4002 = vpop.permute.xlu0 %4001
      %4005 = vset.pattern.permute.xlu0 0
      %4006 = vperm.xlu0 %4005, %v3968
      %v4007 = vpop.permute.xlu0 %4006
      %4010 = vset.pattern.permute.xlu0 0
      %4011 = vperm.xlu0 %4010, %v3969
      %v4012 = vpop.permute.xlu0 %4011
      %v4014 = vadd.f32 %v3958, %v3997
      %v4015 = vadd.f32 %v3959, %v4002
      %v4016 = vadd.f32 %v3960, %v4007
      %v4017 = vadd.f32 %v3961, %v4012
      %v4018 = vmul.f32 %v4014, 0.5
      %v4019 = vmul.f32 %v4015, 0.5
      %v4020 = vmul.f32 %v4016, 0.5
      %v4021 = vmul.f32 %v4017, 0.5
      %v4022 = vtanh.pop %v4018
      %v4023 = vtanh.pop %v4019
      %v4024 = vtanh.pop %v4020
      %v4025 = vtanh.pop %v4021
      %v4026 = vadd.f32 %v4022, 1.0
      %v4027 = vadd.f32 %v4023, 1.0
      %v4028 = vadd.f32 %v4024, 1.0
      %v4029 = vadd.f32 %v4025, 1.0
      %v4030 = vmul.f32 %v4026, 0.5
      %v4031 = vmul.f32 %v4027, 0.5
      %v4032 = vmul.f32 %v4028, 0.5
      %v4033 = vmul.f32 %v4029, 0.5
      %v4034 = vmul.f32 %v3990, %v4030
      %v4035 = vmul.f32 %v3991, %v4031
      %v4036 = vmul.f32 %v3992, %v4032
      %v4037 = vmul.f32 %v3993, %v4033
      %v4038 = vmax.f32 %v4034, 0.0
      %v4039 = vmax.f32 %v4035, 0.0
      %v4040 = vmax.f32 %v4036, 0.0
      %v4041 = vmax.f32 %v4037, 0.0
      %v4042 = vpack.c.bf16 %v4039, %v4038
      %v4043 = vpack.c.bf16 %v4041, %v4040
      %4046 = vrot.lane.b32.xlu0 %v4042, 127
      %v4047 = vpop.permute.xlu0 %4046
      %4048 = vrot.lane.b32.xlu0 %v4043, 127
      %v4049 = vpop.permute.xlu0 %4048
      %4052 = vrot.lane.b32.xlu0 %v4042, 126
      %v4053 = vpop.permute.xlu0 %4052
      %4054 = vrot.lane.b32.xlu0 %v4043, 126
      %v4055 = vpop.permute.xlu0 %4054
      %4058 = vrot.lane.b32.xlu0 %v4042, 125
      %v4059 = vpop.permute.xlu0 %4058
      %4060 = vrot.lane.b32.xlu0 %v4043, 125
      %v4061 = vpop.permute.xlu0 %4060
      %4064 = vrot.lane.b32.xlu0 %v4042, 124
      %v4065 = vpop.permute.xlu0 %4064
      %4066 = vrot.lane.b32.xlu0 %v4043, 124
      %v4067 = vpop.permute.xlu0 %4066
      %4070 = vrot.lane.b32.xlu0 %v4042, 123
      %v4071 = vpop.permute.xlu0 %4070
      %4072 = vrot.lane.b32.xlu0 %v4043, 123
      %v4073 = vpop.permute.xlu0 %4072
      %4076 = vrot.lane.b32.xlu0 %v4042, 122
      %v4077 = vpop.permute.xlu0 %4076
      %4078 = vrot.lane.b32.xlu0 %v4043, 122
      %v4079 = vpop.permute.xlu0 %4078
      %4082 = vrot.lane.b32.xlu0 %v4042, 121
      %v4083 = vpop.permute.xlu0 %4082
      %4084 = vrot.lane.b32.xlu0 %v4043, 121
      %v4085 = vpop.permute.xlu0 %4084
      %v4088 = vld [vmem:[%s3] sm:$0xff]
      %v4089 = vld [vmem:[%s3 + $0x8] sm:$0xff]
      %v4090 = vld [vmem:[%s3 + $0x10] sm:$0xff]
      %v4091 = vld [vmem:[%s3 + $0x18] sm:$0xff]
      %v4092 = vld [vmem:[%s3 + $0x20] sm:$0xff]
      %v4093 = vld [vmem:[%s3 + $0x28] sm:$0xff]
      %v4094 = vld [vmem:[%s3 + $0x30] sm:$0xff]
      %v4095 = vld [vmem:[%s3 + $0x38] sm:$0xff]
      %v4096 = vld [vmem:[%s3 + $0x40] sm:$0xff]
      %v4097 = vld [vmem:[%s3 + $0x48] sm:$0xff]
      %v4098 = vld [vmem:[%s3 + $0x50] sm:$0xff]
      %v4099 = vld [vmem:[%s3 + $0x58] sm:$0xff]
      %v4100 = vld [vmem:[%s3 + $0x60] sm:$0xff]
      %v4101 = vld [vmem:[%s3 + $0x68] sm:$0xff]
      %v4102 = vld [vmem:[%s3 + $0x70] sm:$0xff]
      %v4103 = vld [vmem:[%s3 + $0x78] sm:$0xff]
      %v4120 = vunpack.c.l.b16 %v4088
      %v4121 = vunpack.c.h.b16 %v4088
      %v4122 = vunpack.c.l.b16 %v4089
      %v4123 = vunpack.c.h.b16 %v4089
      %v4124 = vunpack.c.l.b16 %v4090
      %v4125 = vunpack.c.h.b16 %v4090
      %v4126 = vunpack.c.l.b16 %v4091
      %v4127 = vunpack.c.h.b16 %v4091
      %v4128 = vunpack.c.l.b16 %v4092
      %v4129 = vunpack.c.h.b16 %v4092
      %v4130 = vunpack.c.l.b16 %v4093
      %v4131 = vunpack.c.h.b16 %v4093
      %v4132 = vunpack.c.l.b16 %v4094
      %v4133 = vunpack.c.h.b16 %v4094
      %v4134 = vunpack.c.l.b16 %v4095
      %v4135 = vunpack.c.h.b16 %v4095
      %v4136 = vunpack.c.l.b16 %v4096
      %v4137 = vunpack.c.h.b16 %v4096
      %v4138 = vunpack.c.l.b16 %v4097
      %v4139 = vunpack.c.h.b16 %v4097
      %v4140 = vunpack.c.l.b16 %v4098
      %v4141 = vunpack.c.h.b16 %v4098
      %v4142 = vunpack.c.l.b16 %v4099
      %v4143 = vunpack.c.h.b16 %v4099
      %v4144 = vunpack.c.l.b16 %v4100
      %v4145 = vunpack.c.h.b16 %v4100
      %v4146 = vunpack.c.l.b16 %v4101
      %v4147 = vunpack.c.h.b16 %v4101
      %v4148 = vunpack.c.l.b16 %v4102
      %v4149 = vunpack.c.h.b16 %v4102
      %v4150 = vunpack.c.l.b16 %v4103
      %v4151 = vunpack.c.h.b16 %v4103
      %v4152 = vpack.c.b16 %v4122, %v4120
      %v4153 = vpack.c.b16 %v4123, %v4121
      %v4154 = vpack.c.b16 %v4126, %v4124
      %v4155 = vpack.c.b16 %v4127, %v4125
      %v4156 = vpack.c.b16 %v4130, %v4128
      %v4157 = vpack.c.b16 %v4131, %v4129
      %v4158 = vpack.c.b16 %v4134, %v4132
      %v4159 = vpack.c.b16 %v4135, %v4133
      %v4160 = vpack.c.b16 %v4138, %v4136
      %v4161 = vpack.c.b16 %v4139, %v4137
      %v4162 = vpack.c.b16 %v4142, %v4140
      %v4163 = vpack.c.b16 %v4143, %v4141
      %v4164 = vpack.c.b16 %v4146, %v4144
      %v4165 = vpack.c.b16 %v4147, %v4145
      %v4166 = vpack.c.b16 %v4150, %v4148
      %v4167 = vpack.c.b16 %v4151, %v4149
      %4184 = vmatprep.subr.bf16.mxu0 0
      %4185 = vmatpush1.bf16.msra.mxu0 %v4061
      %4186 = vmatprep.subr.bf16.mxu0 0
      %4187 = vmatpush1.bf16.msra.mxu0 %v4059
      %4188 = vmatprep.subr.bf16.mxu0 0
      %4189 = vmatpush1.bf16.msra.mxu0 %v4055
      %4190 = vmatprep.subr.bf16.mxu0 0
      %4191 = vmatpush1.bf16.msra.mxu0 %v4053
      %4192 = vmatprep.subr.bf16.mxu0 0
      %4193 = vmatpush1.bf16.msra.mxu0 %v4049
      %4194 = vmatprep.subr.bf16.mxu0 0
      %4195 = vmatpush1.bf16.msra.mxu0 %v4047
      %4196 = vmatprep.subr.bf16.mxu0 0
      %4197 = vmatpush1.bf16.msra.mxu0 %v4043
      %4198 = vmatprep.subr.bf16.mxu0 0
      %4199 = vmatpush1.bf16.msra.mxu0 %v4042
      %4200 = vmatprep.subr.bf16.mxu0 0
      %4201 = vmatpush2.bf16.msra.mxu0 %v4085
      %4202 = vmatprep.subr.bf16.mxu0 0
      %4203 = vmatpush2.bf16.msra.mxu0 %v4083
      %4204 = vmatprep.subr.bf16.mxu0 0
      %4205 = vmatpush2.bf16.msra.mxu0 %v4079
      %4206 = vmatprep.subr.bf16.mxu0 0
      %4207 = vmatpush2.bf16.msra.mxu0 %v4077
      %4208 = vmatprep.subr.bf16.mxu0 0
      %4209 = vmatpush2.bf16.msra.mxu0 %v4073
      %4210 = vmatprep.subr.bf16.mxu0 0
      %4211 = vmatpush2.bf16.msra.mxu0 %v4071
      %4212 = vmatprep.subr.bf16.mxu0 0
      %4213 = vmatpush2.bf16.msra.mxu0 %v4067
      %4214 = vmatprep.subr.bf16.mxu0 0
      %4215 = vmatpush2.bf16.msra.mxu0 %v4065
      %4216 = vmatprep.mubr.bf16.mxu0 %v4153
      %4217 = vmatmul.mubr.bf16.gmra.mxu0 %v4152
      %v4218 = vpop.f32.mrf.mxu0
      %v4219 = vadd.f32 0.0, %v4218
      %v4220 = vpop.f32.mrf.mxu0
      %v4221 = vpop.f32.mrf.mxu0
      %v4222 = vadd.f32 0.0, %v4221
      %v4223 = vpop.f32.mrf.mxu0
      %4224 = vmatprep.mubr.bf16.mxu0 %v4155
      %4225 = vmatmul.mubr.bf16.gmra.mxu0 %v4154
      %v4226 = vpop.f32.mrf.mxu0
      %v4227 = vadd.f32 0.0, %v4226
      %v4228 = vpop.f32.mrf.mxu0
      %v4229 = vpop.f32.mrf.mxu0
      %v4230 = vadd.f32 0.0, %v4229
      %v4231 = vpop.f32.mrf.mxu0
      %4232 = vmatprep.mubr.bf16.mxu0 %v4157
      %4233 = vmatmul.mubr.bf16.gmra.mxu0 %v4156
      %v4234 = vpop.f32.mrf.mxu0
      %v4235 = vadd.f32 0.0, %v4234
      %v4236 = vpop.f32.mrf.mxu0
      %v4237 = vpop.f32.mrf.mxu0
      %v4238 = vadd.f32 0.0, %v4237
      %v4239 = vpop.f32.mrf.mxu0
      %4240 = vmatprep.mubr.bf16.mxu0 %v4159
      %4241 = vmatmul.mubr.bf16.gmra.mxu0 %v4158
      %v4242 = vpop.f32.mrf.mxu0
      %v4243 = vadd.f32 0.0, %v4242
      %v4244 = vpop.f32.mrf.mxu0
      %v4245 = vpop.f32.mrf.mxu0
      %v4246 = vadd.f32 0.0, %v4245
      %v4247 = vpop.f32.mrf.mxu0
      %4248 = vmatprep.mubr.bf16.mxu0 %v4161
      %4249 = vmatmul.mubr.bf16.gmra.mxu0 %v4160
      %v4250 = vpop.f32.mrf.mxu0
      %v4251 = vadd.f32 0.0, %v4250
      %v4252 = vpop.f32.mrf.mxu0
      %v4253 = vpop.f32.mrf.mxu0
      %v4254 = vadd.f32 0.0, %v4253
      %v4255 = vpop.f32.mrf.mxu0
      %4256 = vmatprep.mubr.bf16.mxu0 %v4163
      %4257 = vmatmul.mubr.bf16.gmra.mxu0 %v4162
      %v4258 = vpop.f32.mrf.mxu0
      %v4259 = vadd.f32 0.0, %v4258
      %v4260 = vpop.f32.mrf.mxu0
      %v4261 = vpop.f32.mrf.mxu0
      %v4262 = vadd.f32 0.0, %v4261
      %v4263 = vpop.f32.mrf.mxu0
      %4264 = vmatprep.mubr.bf16.mxu0 %v4165
      %4265 = vmatmul.mubr.bf16.gmra.mxu0 %v4164
      %v4266 = vpop.f32.mrf.mxu0
      %v4267 = vadd.f32 0.0, %v4266
      %v4268 = vpop.f32.mrf.mxu0
      %v4269 = vpop.f32.mrf.mxu0
      %v4270 = vadd.f32 0.0, %v4269
      %v4271 = vpop.f32.mrf.mxu0
      %4272 = vmatprep.mubr.bf16.mxu0 %v4167
      %4273 = vmatmul.mubr.bf16.gmra.mxu0 %v4166
      %v4274 = vpop.f32.mrf.mxu0
      %v4275 = vadd.f32 0.0, %v4274
      %v4276 = vpop.f32.mrf.mxu0
      %v4277 = vpop.f32.mrf.mxu0
      %v4278 = vadd.f32 0.0, %v4277
      %v4279 = vpop.f32.mrf.mxu0
      %4280 = vdwg.mxu0
      %v4281 = vld [vmem:[%s4] sm:$0xff]
      %v4282 = vld [vmem:[%s4 + $0x8] sm:$0xff]
      %v4283 = vld [vmem:[%s4 + $0x10] sm:$0xff]
      %v4284 = vld [vmem:[%s4 + $0x18] sm:$0xff]
      %v4285 = vld [vmem:[%s4 + $0x20] sm:$0xff]
      %v4286 = vld [vmem:[%s4 + $0x28] sm:$0xff]
      %v4287 = vld [vmem:[%s4 + $0x30] sm:$0xff]
      %v4288 = vld [vmem:[%s4 + $0x38] sm:$0xff]
      %v4289 = vld [vmem:[%s4 + $0x40] sm:$0xff]
      %v4290 = vld [vmem:[%s4 + $0x48] sm:$0xff]
      %v4291 = vld [vmem:[%s4 + $0x50] sm:$0xff]
      %v4292 = vld [vmem:[%s4 + $0x58] sm:$0xff]
      %v4293 = vld [vmem:[%s4 + $0x60] sm:$0xff]
      %v4294 = vld [vmem:[%s4 + $0x68] sm:$0xff]
      %v4295 = vld [vmem:[%s4 + $0x70] sm:$0xff]
      %v4296 = vld [vmem:[%s4 + $0x78] sm:$0xff]
      %4298 = vset.pattern.permute.xlu0 0
      %4299 = vperm.xlu0 %4298, %v4281
      %v4300 = vpop.permute.xlu0 %4299
      %4303 = vset.pattern.permute.xlu0 0
      %4304 = vperm.xlu0 %4303, %v4282
      %v4305 = vpop.permute.xlu0 %4304
      %4308 = vset.pattern.permute.xlu0 0
      %4309 = vperm.xlu0 %4308, %v4283
      %v4310 = vpop.permute.xlu0 %4309
      %4313 = vset.pattern.permute.xlu0 0
      %4314 = vperm.xlu0 %4313, %v4284
      %v4315 = vpop.permute.xlu0 %4314
      %4318 = vset.pattern.permute.xlu0 0
      %4319 = vperm.xlu0 %4318, %v4285
      %v4320 = vpop.permute.xlu0 %4319
      %4323 = vset.pattern.permute.xlu0 0
      %4324 = vperm.xlu0 %4323, %v4286
      %v4325 = vpop.permute.xlu0 %4324
      %4328 = vset.pattern.permute.xlu0 0
      %4329 = vperm.xlu0 %4328, %v4287
      %v4330 = vpop.permute.xlu0 %4329
      %4333 = vset.pattern.permute.xlu0 0
      %4334 = vperm.xlu0 %4333, %v4288
      %v4335 = vpop.permute.xlu0 %4334
      %v4337 = vadd.f32 %v4219, %v4300
      %v4338 = vadd.f32 %v4222, %v4305
      %v4339 = vadd.f32 %v4227, %v4310
      %v4340 = vadd.f32 %v4230, %v4315
      %v4341 = vadd.f32 %v4235, %v4320
      %v4342 = vadd.f32 %v4238, %v4325
      %v4343 = vadd.f32 %v4243, %v4330
      %v4344 = vadd.f32 %v4246, %v4335
      %4346 = vset.pattern.permute.xlu0 0
      %4347 = vperm.xlu0 %4346, %v4289
      %v4348 = vpop.permute.xlu0 %4347
      %4351 = vset.pattern.permute.xlu0 0
      %4352 = vperm.xlu0 %4351, %v4290
      %v4353 = vpop.permute.xlu0 %4352
      %4356 = vset.pattern.permute.xlu0 0
      %4357 = vperm.xlu0 %4356, %v4291
      %v4358 = vpop.permute.xlu0 %4357
      %4361 = vset.pattern.permute.xlu0 0
      %4362 = vperm.xlu0 %4361, %v4292
      %v4363 = vpop.permute.xlu0 %4362
      %4366 = vset.pattern.permute.xlu0 0
      %4367 = vperm.xlu0 %4366, %v4293
      %v4368 = vpop.permute.xlu0 %4367
      %4371 = vset.pattern.permute.xlu0 0
      %4372 = vperm.xlu0 %4371, %v4294
      %v4373 = vpop.permute.xlu0 %4372
      %4376 = vset.pattern.permute.xlu0 0
      %4377 = vperm.xlu0 %4376, %v4295
      %v4378 = vpop.permute.xlu0 %4377
      %4381 = vset.pattern.permute.xlu0 0
      %4382 = vperm.xlu0 %4381, %v4296
      %v4383 = vpop.permute.xlu0 %4382
      %v4385 = vadd.f32 %v4251, %v4348
      %v4386 = vadd.f32 %v4254, %v4353
      %v4387 = vadd.f32 %v4259, %v4358
      %v4388 = vadd.f32 %v4262, %v4363
      %v4389 = vadd.f32 %v4267, %v4368
      %v4390 = vadd.f32 %v4270, %v4373
      %v4391 = vadd.f32 %v4275, %v4378
      %v4392 = vadd.f32 %v4278, %v4383
      %v4393 = vmul.f32 %v4385, 0.5
      %v4394 = vmul.f32 %v4386, 0.5
      %v4395 = vmul.f32 %v4387, 0.5
      %v4396 = vmul.f32 %v4388, 0.5
      %v4397 = vmul.f32 %v4389, 0.5
      %v4398 = vmul.f32 %v4390, 0.5
      %v4399 = vmul.f32 %v4391, 0.5
      %v4400 = vmul.f32 %v4392, 0.5
      %v4401 = vtanh.pop %v4393
      %v4402 = vtanh.pop %v4394
      %v4403 = vtanh.pop %v4395
      %v4404 = vtanh.pop %v4396
      %v4405 = vtanh.pop %v4397
      %v4406 = vtanh.pop %v4398
      %v4407 = vtanh.pop %v4399
      %v4408 = vtanh.pop %v4400
      %v4409 = vadd.f32 %v4401, 1.0
      %v4410 = vadd.f32 %v4402, 1.0
      %v4411 = vadd.f32 %v4403, 1.0
      %v4412 = vadd.f32 %v4404, 1.0
      %v4413 = vadd.f32 %v4405, 1.0
      %v4414 = vadd.f32 %v4406, 1.0
      %v4415 = vadd.f32 %v4407, 1.0
      %v4416 = vadd.f32 %v4408, 1.0
      %v4417 = vmul.f32 %v4409, 0.5
      %v4418 = vmul.f32 %v4410, 0.5
      %v4419 = vmul.f32 %v4411, 0.5
      %v4420 = vmul.f32 %v4412, 0.5
      %v4421 = vmul.f32 %v4413, 0.5
      %v4422 = vmul.f32 %v4414, 0.5
      %v4423 = vmul.f32 %v4415, 0.5
      %v4424 = vmul.f32 %v4416, 0.5
      %v4425 = vmul.f32 %v4337, %v4417
      %v4426 = vmul.f32 %v4338, %v4418
      %v4427 = vmul.f32 %v4339, %v4419
      %v4428 = vmul.f32 %v4340, %v4420
      %v4429 = vmul.f32 %v4341, %v4421
      %v4430 = vmul.f32 %v4342, %v4422
      %v4431 = vmul.f32 %v4343, %v4423
      %v4432 = vmul.f32 %v4344, %v4424
      %v4433 = vmax.f32 %v4425, 0.0
      %v4434 = vmax.f32 %v4426, 0.0
      %v4435 = vmax.f32 %v4427, 0.0
      %v4436 = vmax.f32 %v4428, 0.0
      %v4437 = vmax.f32 %v4429, 0.0
      %v4438 = vmax.f32 %v4430, 0.0
      %v4439 = vmax.f32 %v4431, 0.0
      %v4440 = vmax.f32 %v4432, 0.0
      %v4441 = vpack.c.bf16 %v4434, %v4433
      %v4442 = vpack.c.bf16 %v4436, %v4435
      %v4443 = vpack.c.bf16 %v4438, %v4437
      %v4444 = vpack.c.bf16 %v4440, %v4439
      %4449 = vrot.lane.b32.xlu0 %v4441, 127
      %v4450 = vpop.permute.xlu0 %4449
      %4451 = vrot.lane.b32.xlu0 %v4442, 127
      %v4452 = vpop.permute.xlu0 %4451
      %4453 = vrot.lane.b32.xlu0 %v4443, 127
      %v4454 = vpop.permute.xlu0 %4453
      %4455 = vrot.lane.b32.xlu0 %v4444, 127
      %v4456 = vpop.permute.xlu0 %4455
      %4461 = vrot.lane.b32.xlu0 %v4441, 126
      %v4462 = vpop.permute.xlu0 %4461
      %4463 = vrot.lane.b32.xlu0 %v4442, 126
      %v4464 = vpop.permute.xlu0 %4463
      %4465 = vrot.lane.b32.xlu0 %v4443, 126
      %v4466 = vpop.permute.xlu0 %4465
      %4467 = vrot.lane.b32.xlu0 %v4444, 126
      %v4468 = vpop.permute.xlu0 %4467
      %4473 = vrot.lane.b32.xlu0 %v4441, 125
      %v4474 = vpop.permute.xlu0 %4473
      %4475 = vrot.lane.b32.xlu0 %v4442, 125
      %v4476 = vpop.permute.xlu0 %4475
      %4477 = vrot.lane.b32.xlu0 %v4443, 125
      %v4478 = vpop.permute.xlu0 %4477
      %4479 = vrot.lane.b32.xlu0 %v4444, 125
      %v4480 = vpop.permute.xlu0 %4479
      %4485 = vrot.lane.b32.xlu0 %v4441, 124
      %v4486 = vpop.permute.xlu0 %4485
      %4487 = vrot.lane.b32.xlu0 %v4442, 124
      %v4488 = vpop.permute.xlu0 %4487
      %4489 = vrot.lane.b32.xlu0 %v4443, 124
      %v4490 = vpop.permute.xlu0 %4489
      %4491 = vrot.lane.b32.xlu0 %v4444, 124
      %v4492 = vpop.permute.xlu0 %4491
      %4497 = vrot.lane.b32.xlu0 %v4441, 123
      %v4498 = vpop.permute.xlu0 %4497
      %4499 = vrot.lane.b32.xlu0 %v4442, 123
      %v4500 = vpop.permute.xlu0 %4499
      %4501 = vrot.lane.b32.xlu0 %v4443, 123
      %v4502 = vpop.permute.xlu0 %4501
      %4503 = vrot.lane.b32.xlu0 %v4444, 123
      %v4504 = vpop.permute.xlu0 %4503
      %4509 = vrot.lane.b32.xlu0 %v4441, 122
      %v4510 = vpop.permute.xlu0 %4509
      %4511 = vrot.lane.b32.xlu0 %v4442, 122
      %v4512 = vpop.permute.xlu0 %4511
      %4513 = vrot.lane.b32.xlu0 %v4443, 122
      %v4514 = vpop.permute.xlu0 %4513
      %4515 = vrot.lane.b32.xlu0 %v4444, 122
      %v4516 = vpop.permute.xlu0 %4515
      %4521 = vrot.lane.b32.xlu0 %v4441, 121
      %v4522 = vpop.permute.xlu0 %4521
      %4523 = vrot.lane.b32.xlu0 %v4442, 121
      %v4524 = vpop.permute.xlu0 %4523
      %4525 = vrot.lane.b32.xlu0 %v4443, 121
      %v4526 = vpop.permute.xlu0 %4525
      %4527 = vrot.lane.b32.xlu0 %v4444, 121
      %v4528 = vpop.permute.xlu0 %4527
      %v4533 = vld [vmem:[%s5] sm:$0xff]
      %v4534 = vld [vmem:[%s5 + $0x8] sm:$0xff]
      %v4535 = vld [vmem:[%s5 + $0x10] sm:$0xff]
      %v4536 = vld [vmem:[%s5 + $0x18] sm:$0xff]
      %v4537 = vld [vmem:[%s5 + $0x20] sm:$0xff]
      %v4538 = vld [vmem:[%s5 + $0x28] sm:$0xff]
      %v4539 = vld [vmem:[%s5 + $0x30] sm:$0xff]
      %v4540 = vld [vmem:[%s5 + $0x38] sm:$0xff]
      %v4541 = vld [vmem:[%s5 + $0x40] sm:$0xff]
      %v4542 = vld [vmem:[%s5 + $0x48] sm:$0xff]
      %v4543 = vld [vmem:[%s5 + $0x50] sm:$0xff]
      %v4544 = vld [vmem:[%s5 + $0x58] sm:$0xff]
      %v4545 = vld [vmem:[%s5 + $0x60] sm:$0xff]
      %v4546 = vld [vmem:[%s5 + $0x68] sm:$0xff]
      %v4547 = vld [vmem:[%s5 + $0x70] sm:$0xff]
      %v4548 = vld [vmem:[%s5 + $0x78] sm:$0xff]
      %v4549 = vld [vmem:[%s5 + $0x80] sm:$0xff]
      %v4550 = vld [vmem:[%s5 + $0x88] sm:$0xff]
      %v4551 = vld [vmem:[%s5 + $0x90] sm:$0xff]
      %v4552 = vld [vmem:[%s5 + $0x98] sm:$0xff]
      %v4553 = vld [vmem:[%s5 + $0xa0] sm:$0xff]
      %v4554 = vld [vmem:[%s5 + $0xa8] sm:$0xff]
      %v4555 = vld [vmem:[%s5 + $0xb0] sm:$0xff]
      %v4556 = vld [vmem:[%s5 + $0xb8] sm:$0xff]
      %v4557 = vld [vmem:[%s5 + $0xc0] sm:$0xff]
      %v4558 = vld [vmem:[%s5 + $0xc8] sm:$0xff]
      %v4559 = vld [vmem:[%s5 + $0xd0] sm:$0xff]
      %v4560 = vld [vmem:[%s5 + $0xd8] sm:$0xff]
      %v4561 = vld [vmem:[%s5 + $0xe0] sm:$0xff]
      %v4562 = vld [vmem:[%s5 + $0xe8] sm:$0xff]
      %v4563 = vld [vmem:[%s5 + $0xf0] sm:$0xff]
      %v4564 = vld [vmem:[%s5 + $0xf8] sm:$0xff]
      %v4565 = vld [vmem:[%s5 + $0x100] sm:$0xff]
      %v4566 = vld [vmem:[%s5 + $0x108] sm:$0xff]
      %v4567 = vld [vmem:[%s5 + $0x110] sm:$0xff]
      %v4568 = vld [vmem:[%s5 + $0x118] sm:$0xff]
      %v4569 = vld [vmem:[%s5 + $0x120] sm:$0xff]
      %v4570 = vld [vmem:[%s5 + $0x128] sm:$0xff]
      %v4571 = vld [vmem:[%s5 + $0x130] sm:$0xff]
      %v4572 = vld [vmem:[%s5 + $0x138] sm:$0xff]
      %v4573 = vld [vmem:[%s5 + $0x140] sm:$0xff]
      %v4574 = vld [vmem:[%s5 + $0x148] sm:$0xff]
      %v4575 = vld [vmem:[%s5 + $0x150] sm:$0xff]
      %v4576 = vld [vmem:[%s5 + $0x158] sm:$0xff]
      %v4577 = vld [vmem:[%s5 + $0x160] sm:$0xff]
      %v4578 = vld [vmem:[%s5 + $0x168] sm:$0xff]
      %v4579 = vld [vmem:[%s5 + $0x170] sm:$0xff]
      %v4580 = vld [vmem:[%s5 + $0x178] sm:$0xff]
      %v4629 = vunpack.c.l.b16 %v4533
      %v4630 = vunpack.c.h.b16 %v4533
      %v4631 = vunpack.c.l.b16 %v4534
      %v4632 = vunpack.c.h.b16 %v4534
      %v4633 = vunpack.c.l.b16 %v4535
      %v4634 = vunpack.c.h.b16 %v4535
      %v4635 = vunpack.c.l.b16 %v4536
      %v4636 = vunpack.c.h.b16 %v4536
      %v4637 = vunpack.c.l.b16 %v4537
      %v4638 = vunpack.c.h.b16 %v4537
      %v4639 = vunpack.c.l.b16 %v4538
      %v4640 = vunpack.c.h.b16 %v4538
      %v4641 = vunpack.c.l.b16 %v4539
      %v4642 = vunpack.c.h.b16 %v4539
      %v4643 = vunpack.c.l.b16 %v4540
      %v4644 = vunpack.c.h.b16 %v4540
      %v4645 = vunpack.c.l.b16 %v4541
      %v4646 = vunpack.c.h.b16 %v4541
      %v4647 = vunpack.c.l.b16 %v4542
      %v4648 = vunpack.c.h.b16 %v4542
      %v4649 = vunpack.c.l.b16 %v4543
      %v4650 = vunpack.c.h.b16 %v4543
      %v4651 = vunpack.c.l.b16 %v4544
      %v4652 = vunpack.c.h.b16 %v4544
      %v4653 = vunpack.c.l.b16 %v4545
      %v4654 = vunpack.c.h.b16 %v4545
      %v4655 = vunpack.c.l.b16 %v4546
      %v4656 = vunpack.c.h.b16 %v4546
      %v4657 = vunpack.c.l.b16 %v4547
      %v4658 = vunpack.c.h.b16 %v4547
      %v4659 = vunpack.c.l.b16 %v4548
      %v4660 = vunpack.c.h.b16 %v4548
      %v4661 = vunpack.c.l.b16 %v4549
      %v4662 = vunpack.c.h.b16 %v4549
      %v4663 = vunpack.c.l.b16 %v4550
      %v4664 = vunpack.c.h.b16 %v4550
      %v4665 = vunpack.c.l.b16 %v4551
      %v4666 = vunpack.c.h.b16 %v4551
      %v4667 = vunpack.c.l.b16 %v4552
      %v4668 = vunpack.c.h.b16 %v4552
      %v4669 = vunpack.c.l.b16 %v4553
      %v4670 = vunpack.c.h.b16 %v4553
      %v4671 = vunpack.c.l.b16 %v4554
      %v4672 = vunpack.c.h.b16 %v4554
      %v4673 = vunpack.c.l.b16 %v4555
      %v4674 = vunpack.c.h.b16 %v4555
      %v4675 = vunpack.c.l.b16 %v4556
      %v4676 = vunpack.c.h.b16 %v4556
      %v4677 = vunpack.c.l.b16 %v4557
      %v4678 = vunpack.c.h.b16 %v4557
      %v4679 = vunpack.c.l.b16 %v4558
      %v4680 = vunpack.c.h.b16 %v4558
      %v4681 = vunpack.c.l.b16 %v4559
      %v4682 = vunpack.c.h.b16 %v4559
      %v4683 = vunpack.c.l.b16 %v4560
      %v4684 = vunpack.c.h.b16 %v4560
      %v4685 = vunpack.c.l.b16 %v4561
      %v4686 = vunpack.c.h.b16 %v4561
      %v4687 = vunpack.c.l.b16 %v4562
      %v4688 = vunpack.c.h.b16 %v4562
      %v4689 = vunpack.c.l.b16 %v4563
      %v4690 = vunpack.c.h.b16 %v4563
      %v4691 = vunpack.c.l.b16 %v4564
      %v4692 = vunpack.c.h.b16 %v4564
      %v4693 = vunpack.c.l.b16 %v4565
      %v4694 = vunpack.c.h.b16 %v4565
      %v4695 = vunpack.c.l.b16 %v4566
      %v4696 = vunpack.c.h.b16 %v4566
      %v4697 = vunpack.c.l.b16 %v4567
      %v4698 = vunpack.c.h.b16 %v4567
      %v4699 = vunpack.c.l.b16 %v4568
      %v4700 = vunpack.c.h.b16 %v4568
      %v4701 = vunpack.c.l.b16 %v4569
      %v4702 = vunpack.c.h.b16 %v4569
      %v4703 = vunpack.c.l.b16 %v4570
      %v4704 = vunpack.c.h.b16 %v4570
      %v4705 = vunpack.c.l.b16 %v4571
      %v4706 = vunpack.c.h.b16 %v4571
      %v4707 = vunpack.c.l.b16 %v4572
      %v4708 = vunpack.c.h.b16 %v4572
      %v4709 = vunpack.c.l.b16 %v4573
      %v4710 = vunpack.c.h.b16 %v4573
      %v4711 = vunpack.c.l.b16 %v4574
      %v4712 = vunpack.c.h.b16 %v4574
      %v4713 = vunpack.c.l.b16 %v4575
      %v4714 = vunpack.c.h.b16 %v4575
      %v4715 = vunpack.c.l.b16 %v4576
      %v4716 = vunpack.c.h.b16 %v4576
      %v4717 = vunpack.c.l.b16 %v4577
      %v4718 = vunpack.c.h.b16 %v4577
      %v4719 = vunpack.c.l.b16 %v4578
      %v4720 = vunpack.c.h.b16 %v4578
      %v4721 = vunpack.c.l.b16 %v4579
      %v4722 = vunpack.c.h.b16 %v4579
      %v4723 = vunpack.c.l.b16 %v4580
      %v4724 = vunpack.c.h.b16 %v4580
      %v4725 = vpack.c.b16 %v4633, %v4629
      %v4726 = vpack.c.b16 %v4634, %v4630
      %v4727 = vpack.c.b16 %v4635, %v4631
      %v4728 = vpack.c.b16 %v4636, %v4632
      %v4729 = vpack.c.b16 %v4641, %v4637
      %v4730 = vpack.c.b16 %v4642, %v4638
      %v4731 = vpack.c.b16 %v4643, %v4639
      %v4732 = vpack.c.b16 %v4644, %v4640
      %v4733 = vpack.c.b16 %v4649, %v4645
      %v4734 = vpack.c.b16 %v4650, %v4646
      %v4735 = vpack.c.b16 %v4651, %v4647
      %v4736 = vpack.c.b16 %v4652, %v4648
      %v4737 = vpack.c.b16 %v4657, %v4653
      %v4738 = vpack.c.b16 %v4658, %v4654
      %v4739 = vpack.c.b16 %v4659, %v4655
      %v4740 = vpack.c.b16 %v4660, %v4656
      %v4741 = vpack.c.b16 %v4665, %v4661
      %v4742 = vpack.c.b16 %v4666, %v4662
      %v4743 = vpack.c.b16 %v4667, %v4663
      %v4744 = vpack.c.b16 %v4668, %v4664
      %v4745 = vpack.c.b16 %v4673, %v4669
      %v4746 = vpack.c.b16 %v4674, %v4670
      %v4747 = vpack.c.b16 %v4675, %v4671
      %v4748 = vpack.c.b16 %v4676, %v4672
      %v4749 = vpack.c.b16 %v4681, %v4677
      %v4750 = vpack.c.b16 %v4682, %v4678
      %v4751 = vpack.c.b16 %v4683, %v4679
      %v4752 = vpack.c.b16 %v4684, %v4680
      %v4753 = vpack.c.b16 %v4689, %v4685
      %v4754 = vpack.c.b16 %v4690, %v4686
      %v4755 = vpack.c.b16 %v4691, %v4687
      %v4756 = vpack.c.b16 %v4692, %v4688
      %v4757 = vpack.c.b16 %v4697, %v4693
      %v4758 = vpack.c.b16 %v4698, %v4694
      %v4759 = vpack.c.b16 %v4699, %v4695
      %v4760 = vpack.c.b16 %v4700, %v4696
      %v4761 = vpack.c.b16 %v4705, %v4701
      %v4762 = vpack.c.b16 %v4706, %v4702
      %v4763 = vpack.c.b16 %v4707, %v4703
      %v4764 = vpack.c.b16 %v4708, %v4704
      %v4765 = vpack.c.b16 %v4713, %v4709
      %v4766 = vpack.c.b16 %v4714, %v4710
      %v4767 = vpack.c.b16 %v4715, %v4711
      %v4768 = vpack.c.b16 %v4716, %v4712
      %v4769 = vpack.c.b16 %v4721, %v4717
      %v4770 = vpack.c.b16 %v4722, %v4718
      %v4771 = vpack.c.b16 %v4723, %v4719
      %v4772 = vpack.c.b16 %v4724, %v4720
      %4821 = vmatprep.subr.bf16.mxu0 0
      %4822 = vmatpush1.bf16.msra.mxu0 %v4456
      %4823 = vmatprep.subr.bf16.mxu0 0
      %4824 = vmatpush1.bf16.msra.mxu0 %v4454
      %4825 = vmatprep.subr.bf16.mxu0 0
      %4826 = vmatpush1.bf16.msra.mxu0 %v4452
      %4827 = vmatprep.subr.bf16.mxu0 0
      %4828 = vmatpush1.bf16.msra.mxu0 %v4450
      %4829 = vmatprep.subr.bf16.mxu0 0
      %4830 = vmatpush1.bf16.msra.mxu0 %v4444
      %4831 = vmatprep.subr.bf16.mxu0 0
      %4832 = vmatpush1.bf16.msra.mxu0 %v4443
      %4833 = vmatprep.subr.bf16.mxu0 0
      %4834 = vmatpush1.bf16.msra.mxu0 %v4442
      %4835 = vmatprep.subr.bf16.mxu0 0
      %4836 = vmatpush1.bf16.msra.mxu0 %v4441
      %4837 = vmatprep.subr.bf16.mxu0 0
      %4838 = vmatpush2.bf16.msra.mxu0 %v4480
      %4839 = vmatprep.subr.bf16.mxu0 0
      %4840 = vmatpush2.bf16.msra.mxu0 %v4478
      %4841 = vmatprep.subr.bf16.mxu0 0
      %4842 = vmatpush2.bf16.msra.mxu0 %v4476
      %4843 = vmatprep.subr.bf16.mxu0 0
      %4844 = vmatpush2.bf16.msra.mxu0 %v4474
      %4845 = vmatprep.subr.bf16.mxu0 0
      %4846 = vmatpush2.bf16.msra.mxu0 %v4468
      %4847 = vmatprep.subr.bf16.mxu0 0
      %4848 = vmatpush2.bf16.msra.mxu0 %v4466
      %4849 = vmatprep.subr.bf16.mxu0 0
      %4850 = vmatpush2.bf16.msra.mxu0 %v4464
      %4851 = vmatprep.subr.bf16.mxu0 0
      %4852 = vmatpush2.bf16.msra.mxu0 %v4462
      %4853 = vmatprep.mubr.bf16.mxu0 %v4726
      %4854 = vmatmul.mubr.bf16.gmra.mxu0 %v4725
      %v4855 = vpop.f32.mrf.mxu0
      %v4856 = vadd.f32 0.0, %v4855
      %v4857 = vpop.f32.mrf.mxu0
      %v4858 = vpop.f32.mrf.mxu0
      %v4859 = vadd.f32 0.0, %v4858
      %v4860 = vpop.f32.mrf.mxu0
      %4861 = vmatprep.mubr.bf16.mxu0 %v4730
      %4862 = vmatmul.mubr.bf16.gmra.mxu0 %v4729
      %v4863 = vpop.f32.mrf.mxu0
      %v4864 = vadd.f32 0.0, %v4863
      %v4865 = vpop.f32.mrf.mxu0
      %v4866 = vpop.f32.mrf.mxu0
      %v4867 = vadd.f32 0.0, %v4866
      %v4868 = vpop.f32.mrf.mxu0
      %4869 = vmatprep.mubr.bf16.mxu0 %v4734
      %4870 = vmatmul.mubr.bf16.gmra.mxu0 %v4733
      %v4871 = vpop.f32.mrf.mxu0
      %v4872 = vadd.f32 0.0, %v4871
      %v4873 = vpop.f32.mrf.mxu0
      %v4874 = vpop.f32.mrf.mxu0
      %v4875 = vadd.f32 0.0, %v4874
      %v4876 = vpop.f32.mrf.mxu0
      %4877 = vmatprep.mubr.bf16.mxu0 %v4738
      %4878 = vmatmul.mubr.bf16.gmra.mxu0 %v4737
      %v4879 = vpop.f32.mrf.mxu0
      %v4880 = vadd.f32 0.0, %v4879
      %v4881 = vpop.f32.mrf.mxu0
      %v4882 = vpop.f32.mrf.mxu0
      %v4883 = vadd.f32 0.0, %v4882
      %v4884 = vpop.f32.mrf.mxu0
      %4885 = vmatprep.mubr.bf16.mxu0 %v4742
      %4886 = vmatmul.mubr.bf16.gmra.mxu0 %v4741
      %v4887 = vpop.f32.mrf.mxu0
      %v4888 = vadd.f32 0.0, %v4887
      %v4889 = vpop.f32.mrf.mxu0
      %v4890 = vpop.f32.mrf.mxu0
      %v4891 = vadd.f32 0.0, %v4890
      %v4892 = vpop.f32.mrf.mxu0
      %4893 = vmatprep.mubr.bf16.mxu0 %v4746
      %4894 = vmatmul.mubr.bf16.gmra.mxu0 %v4745
      %v4895 = vpop.f32.mrf.mxu0
      %v4896 = vadd.f32 0.0, %v4895
      %v4897 = vpop.f32.mrf.mxu0
      %v4898 = vpop.f32.mrf.mxu0
      %v4899 = vadd.f32 0.0, %v4898
      %v4900 = vpop.f32.mrf.mxu0
      %4901 = vmatprep.mubr.bf16.mxu0 %v4750
      %4902 = vmatmul.mubr.bf16.gmra.mxu0 %v4749
      %v4903 = vpop.f32.mrf.mxu0
      %v4904 = vadd.f32 0.0, %v4903
      %v4905 = vpop.f32.mrf.mxu0
      %v4906 = vpop.f32.mrf.mxu0
      %v4907 = vadd.f32 0.0, %v4906
      %v4908 = vpop.f32.mrf.mxu0
      %4909 = vmatprep.mubr.bf16.mxu0 %v4754
      %4910 = vmatmul.mubr.bf16.gmra.mxu0 %v4753
      %v4911 = vpop.f32.mrf.mxu0
      %v4912 = vadd.f32 0.0, %v4911
      %v4913 = vpop.f32.mrf.mxu0
      %v4914 = vpop.f32.mrf.mxu0
      %v4915 = vadd.f32 0.0, %v4914
      %v4916 = vpop.f32.mrf.mxu0
      %4917 = vmatprep.mubr.bf16.mxu0 %v4758
      %4918 = vmatmul.mubr.bf16.gmra.mxu0 %v4757
      %v4919 = vpop.f32.mrf.mxu0
      %v4920 = vadd.f32 0.0, %v4919
      %v4921 = vpop.f32.mrf.mxu0
      %v4922 = vpop.f32.mrf.mxu0
      %v4923 = vadd.f32 0.0, %v4922
      %v4924 = vpop.f32.mrf.mxu0
      %4925 = vmatprep.mubr.bf16.mxu0 %v4762
      %4926 = vmatmul.mubr.bf16.gmra.mxu0 %v4761
      %v4927 = vpop.f32.mrf.mxu0
      %v4928 = vadd.f32 0.0, %v4927
      %v4929 = vpop.f32.mrf.mxu0
      %v4930 = vpop.f32.mrf.mxu0
      %v4931 = vadd.f32 0.0, %v4930
      %v4932 = vpop.f32.mrf.mxu0
      %4933 = vmatprep.mubr.bf16.mxu0 %v4766
      %4934 = vmatmul.mubr.bf16.gmra.mxu0 %v4765
      %v4935 = vpop.f32.mrf.mxu0
      %v4936 = vadd.f32 0.0, %v4935
      %v4937 = vpop.f32.mrf.mxu0
      %v4938 = vpop.f32.mrf.mxu0
      %v4939 = vadd.f32 0.0, %v4938
      %v4940 = vpop.f32.mrf.mxu0
      %4941 = vmatprep.mubr.bf16.mxu0 %v4770
      %4942 = vmatmul.mubr.bf16.gmra.mxu0 %v4769
      %v4943 = vpop.f32.mrf.mxu0
      %v4944 = vadd.f32 0.0, %v4943
      %v4945 = vpop.f32.mrf.mxu0
      %v4946 = vpop.f32.mrf.mxu0
      %v4947 = vadd.f32 0.0, %v4946
      %v4948 = vpop.f32.mrf.mxu0
      %4949 = vdwg.mxu0
      %4950 = vmatprep.subr.bf16.mxu0 0
      %4951 = vmatpush1.bf16.msra.mxu0 %v4504
      %4952 = vmatprep.subr.bf16.mxu0 0
      %4953 = vmatpush1.bf16.msra.mxu0 %v4502
      %4954 = vmatprep.subr.bf16.mxu0 0
      %4955 = vmatpush1.bf16.msra.mxu0 %v4500
      %4956 = vmatprep.subr.bf16.mxu0 0
      %4957 = vmatpush1.bf16.msra.mxu0 %v4498
      %4958 = vmatprep.subr.bf16.mxu0 0
      %4959 = vmatpush1.bf16.msra.mxu0 %v4492
      %4960 = vmatprep.subr.bf16.mxu0 0
      %4961 = vmatpush1.bf16.msra.mxu0 %v4490
      %4962 = vmatprep.subr.bf16.mxu0 0
      %4963 = vmatpush1.bf16.msra.mxu0 %v4488
      %4964 = vmatprep.subr.bf16.mxu0 0
      %4965 = vmatpush1.bf16.msra.mxu0 %v4486
      %4966 = vmatprep.subr.bf16.mxu0 0
      %4967 = vmatpush2.bf16.msra.mxu0 %v4528
      %4968 = vmatprep.subr.bf16.mxu0 0
      %4969 = vmatpush2.bf16.msra.mxu0 %v4526
      %4970 = vmatprep.subr.bf16.mxu0 0
      %4971 = vmatpush2.bf16.msra.mxu0 %v4524
      %4972 = vmatprep.subr.bf16.mxu0 0
      %4973 = vmatpush2.bf16.msra.mxu0 %v4522
      %4974 = vmatprep.subr.bf16.mxu0 0
      %4975 = vmatpush2.bf16.msra.mxu0 %v4516
      %4976 = vmatprep.subr.bf16.mxu0 0
      %4977 = vmatpush2.bf16.msra.mxu0 %v4514
      %4978 = vmatprep.subr.bf16.mxu0 0
      %4979 = vmatpush2.bf16.msra.mxu0 %v4512
      %4980 = vmatprep.subr.bf16.mxu0 0
      %4981 = vmatpush2.bf16.msra.mxu0 %v4510
      %4982 = vmatprep.mubr.bf16.mxu0 %v4728
      %4983 = vmatmul.mubr.bf16.gmra.mxu0 %v4727
      %v4984 = vpop.f32.mrf.mxu0
      %v4985 = vadd.f32 %v4856, %v4984
      %v4986 = vpop.f32.mrf.mxu0
      %v4987 = vpop.f32.mrf.mxu0
      %v4988 = vadd.f32 %v4859, %v4987
      %v4989 = vpop.f32.mrf.mxu0
      %4990 = vmatprep.mubr.bf16.mxu0 %v4732
      %4991 = vmatmul.mubr.bf16.gmra.mxu0 %v4731
      %v4992 = vpop.f32.mrf.mxu0
      %v4993 = vadd.f32 %v4864, %v4992
      %v4994 = vpop.f32.mrf.mxu0
      %v4995 = vpop.f32.mrf.mxu0
      %v4996 = vadd.f32 %v4867, %v4995
      %v4997 = vpop.f32.mrf.mxu0
      %4998 = vmatprep.mubr.bf16.mxu0 %v4736
      %4999 = vmatmul.mubr.bf16.gmra.mxu0 %v4735
      %v5000 = vpop.f32.mrf.mxu0
      %v5001 = vadd.f32 %v4872, %v5000
      %v5002 = vpop.f32.mrf.mxu0
      %v5003 = vpop.f32.mrf.mxu0
      %v5004 = vadd.f32 %v4875, %v5003
      %v5005 = vpop.f32.mrf.mxu0
      %5006 = vmatprep.mubr.bf16.mxu0 %v4740
      %5007 = vmatmul.mubr.bf16.gmra.mxu0 %v4739
      %v5008 = vpop.f32.mrf.mxu0
      %v5009 = vadd.f32 %v4880, %v5008
      %v5010 = vpop.f32.mrf.mxu0
      %v5011 = vpop.f32.mrf.mxu0
      %v5012 = vadd.f32 %v4883, %v5011
      %v5013 = vpop.f32.mrf.mxu0
      %5014 = vmatprep.mubr.bf16.mxu0 %v4744
      %5015 = vmatmul.mubr.bf16.gmra.mxu0 %v4743
      %v5016 = vpop.f32.mrf.mxu0
      %v5017 = vadd.f32 %v4888, %v5016
      %v5018 = vpop.f32.mrf.mxu0
      %v5019 = vpop.f32.mrf.mxu0
      %v5020 = vadd.f32 %v4891, %v5019
      %v5021 = vpop.f32.mrf.mxu0
      %5022 = vmatprep.mubr.bf16.mxu0 %v4748
      %5023 = vmatmul.mubr.bf16.gmra.mxu0 %v4747
      %v5024 = vpop.f32.mrf.mxu0
      %v5025 = vadd.f32 %v4896, %v5024
      %v5026 = vpop.f32.mrf.mxu0
      %v5027 = vpop.f32.mrf.mxu0
      %v5028 = vadd.f32 %v4899, %v5027
      %v5029 = vpop.f32.mrf.mxu0
      %5030 = vmatprep.mubr.bf16.mxu0 %v4752
      %5031 = vmatmul.mubr.bf16.gmra.mxu0 %v4751
      %v5032 = vpop.f32.mrf.mxu0
      %v5033 = vadd.f32 %v4904, %v5032
      %v5034 = vpop.f32.mrf.mxu0
      %v5035 = vpop.f32.mrf.mxu0
      %v5036 = vadd.f32 %v4907, %v5035
      %v5037 = vpop.f32.mrf.mxu0
      %5038 = vmatprep.mubr.bf16.mxu0 %v4756
      %5039 = vmatmul.mubr.bf16.gmra.mxu0 %v4755
      %v5040 = vpop.f32.mrf.mxu0
      %v5041 = vadd.f32 %v4912, %v5040
      %v5042 = vpop.f32.mrf.mxu0
      %v5043 = vpop.f32.mrf.mxu0
      %v5044 = vadd.f32 %v4915, %v5043
      %v5045 = vpop.f32.mrf.mxu0
      %5046 = vmatprep.mubr.bf16.mxu0 %v4760
      %5047 = vmatmul.mubr.bf16.gmra.mxu0 %v4759
      %v5048 = vpop.f32.mrf.mxu0
      %v5049 = vadd.f32 %v4920, %v5048
      %v5050 = vpop.f32.mrf.mxu0
      %v5051 = vpop.f32.mrf.mxu0
      %v5052 = vadd.f32 %v4923, %v5051
      %v5053 = vpop.f32.mrf.mxu0
      %5054 = vmatprep.mubr.bf16.mxu0 %v4764
      %5055 = vmatmul.mubr.bf16.gmra.mxu0 %v4763
      %v5056 = vpop.f32.mrf.mxu0
      %v5057 = vadd.f32 %v4928, %v5056
      %v5058 = vpop.f32.mrf.mxu0
      %v5059 = vpop.f32.mrf.mxu0
      %v5060 = vadd.f32 %v4931, %v5059
      %v5061 = vpop.f32.mrf.mxu0
      %5062 = vmatprep.mubr.bf16.mxu0 %v4768
      %5063 = vmatmul.mubr.bf16.gmra.mxu0 %v4767
      %v5064 = vpop.f32.mrf.mxu0
      %v5065 = vadd.f32 %v4936, %v5064
      %v5066 = vpop.f32.mrf.mxu0
      %v5067 = vpop.f32.mrf.mxu0
      %v5068 = vadd.f32 %v4939, %v5067
      %v5069 = vpop.f32.mrf.mxu0
      %5070 = vmatprep.mubr.bf16.mxu0 %v4772
      %5071 = vmatmul.mubr.bf16.gmra.mxu0 %v4771
      %v5072 = vpop.f32.mrf.mxu0
      %v5073 = vadd.f32 %v4944, %v5072
      %v5074 = vpop.f32.mrf.mxu0
      %v5075 = vpop.f32.mrf.mxu0
      %v5076 = vadd.f32 %v4947, %v5075
      %v5077 = vpop.f32.mrf.mxu0
      %5078 = vdwg.mxu0
      %v5079 = vld [vmem:[%s6] sm:$0xff]
      %v5080 = vld [vmem:[%s6 + $0x8] sm:$0xff]
      %v5081 = vld [vmem:[%s6 + $0x10] sm:$0xff]
      %v5082 = vld [vmem:[%s6 + $0x18] sm:$0xff]
      %v5083 = vld [vmem:[%s6 + $0x20] sm:$0xff]
      %v5084 = vld [vmem:[%s6 + $0x28] sm:$0xff]
      %v5085 = vld [vmem:[%s6 + $0x30] sm:$0xff]
      %v5086 = vld [vmem:[%s6 + $0x38] sm:$0xff]
      %v5087 = vld [vmem:[%s6 + $0x40] sm:$0xff]
      %v5088 = vld [vmem:[%s6 + $0x48] sm:$0xff]
      %v5089 = vld [vmem:[%s6 + $0x50] sm:$0xff]
      %v5090 = vld [vmem:[%s6 + $0x58] sm:$0xff]
      %v5091 = vld [vmem:[%s6 + $0x60] sm:$0xff]
      %v5092 = vld [vmem:[%s6 + $0x68] sm:$0xff]
      %v5093 = vld [vmem:[%s6 + $0x70] sm:$0xff]
      %v5094 = vld [vmem:[%s6 + $0x78] sm:$0xff]
      %v5095 = vld [vmem:[%s6 + $0x80] sm:$0xff]
      %v5096 = vld [vmem:[%s6 + $0x88] sm:$0xff]
      %v5097 = vld [vmem:[%s6 + $0x90] sm:$0xff]
      %v5098 = vld [vmem:[%s6 + $0x98] sm:$0xff]
      %v5099 = vld [vmem:[%s6 + $0xa0] sm:$0xff]
      %v5100 = vld [vmem:[%s6 + $0xa8] sm:$0xff]
      %v5101 = vld [vmem:[%s6 + $0xb0] sm:$0xff]
      %v5102 = vld [vmem:[%s6 + $0xb8] sm:$0xff]
      %5104 = vset.pattern.permute.xlu0 0
      %5105 = vperm.xlu0 %5104, %v5079
      %v5106 = vpop.permute.xlu0 %5105
      %5109 = vset.pattern.permute.xlu0 0
      %5110 = vperm.xlu0 %5109, %v5080
      %v5111 = vpop.permute.xlu0 %5110
      %5114 = vset.pattern.permute.xlu0 0
      %5115 = vperm.xlu0 %5114, %v5081
      %v5116 = vpop.permute.xlu0 %5115
      %5119 = vset.pattern.permute.xlu0 0
      %5120 = vperm.xlu0 %5119, %v5082
      %v5121 = vpop.permute.xlu0 %5120
      %5124 = vset.pattern.permute.xlu0 0
      %5125 = vperm.xlu0 %5124, %v5083
      %v5126 = vpop.permute.xlu0 %5125
      %5129 = vset.pattern.permute.xlu0 0
      %5130 = vperm.xlu0 %5129, %v5084
      %v5131 = vpop.permute.xlu0 %5130
      %5134 = vset.pattern.permute.xlu0 0
      %5135 = vperm.xlu0 %5134, %v5085
      %v5136 = vpop.permute.xlu0 %5135
      %5139 = vset.pattern.permute.xlu0 0
      %5140 = vperm.xlu0 %5139, %v5086
      %v5141 = vpop.permute.xlu0 %5140
      %5144 = vset.pattern.permute.xlu0 0
      %5145 = vperm.xlu0 %5144, %v5087
      %v5146 = vpop.permute.xlu0 %5145
      %5149 = vset.pattern.permute.xlu0 0
      %5150 = vperm.xlu0 %5149, %v5088
      %v5151 = vpop.permute.xlu0 %5150
      %5154 = vset.pattern.permute.xlu0 0
      %5155 = vperm.xlu0 %5154, %v5089
      %v5156 = vpop.permute.xlu0 %5155
      %5159 = vset.pattern.permute.xlu0 0
      %5160 = vperm.xlu0 %5159, %v5090
      %v5161 = vpop.permute.xlu0 %5160
      %v5163 = vadd.f32 %v4985, %v5106
      %v5164 = vadd.f32 %v4988, %v5111
      %v5165 = vadd.f32 %v4993, %v5116
      %v5166 = vadd.f32 %v4996, %v5121
      %v5167 = vadd.f32 %v5001, %v5126
      %v5168 = vadd.f32 %v5004, %v5131
      %v5169 = vadd.f32 %v5009, %v5136
      %v5170 = vadd.f32 %v5012, %v5141
      %v5171 = vadd.f32 %v5017, %v5146
      %v5172 = vadd.f32 %v5020, %v5151
      %v5173 = vadd.f32 %v5025, %v5156
      %v5174 = vadd.f32 %v5028, %v5161
      %5176 = vset.pattern.permute.xlu0 0
      %5177 = vperm.xlu0 %5176, %v5091
      %v5178 = vpop.permute.xlu0 %5177
      %5181 = vset.pattern.permute.xlu0 0
      %5182 = vperm.xlu0 %5181, %v5092
      %v5183 = vpop.permute.xlu0 %5182
      %5186 = vset.pattern.permute.xlu0 0
      %5187 = vperm.xlu0 %5186, %v5093
      %v5188 = vpop.permute.xlu0 %5187
      %5191 = vset.pattern.permute.xlu0 0
      %5192 = vperm.xlu0 %5191, %v5094
      %v5193 = vpop.permute.xlu0 %5192
      %5196 = vset.pattern.permute.xlu0 0
      %5197 = vperm.xlu0 %5196, %v5095
      %v5198 = vpop.permute.xlu0 %5197
      %5201 = vset.pattern.permute.xlu0 0
      %5202 = vperm.xlu0 %5201, %v5096
      %v5203 = vpop.permute.xlu0 %5202
      %5206 = vset.pattern.permute.xlu0 0
      %5207 = vperm.xlu0 %5206, %v5097
      %v5208 = vpop.permute.xlu0 %5207
      %5211 = vset.pattern.permute.xlu0 0
      %5212 = vperm.xlu0 %5211, %v5098
      %v5213 = vpop.permute.xlu0 %5212
      %5216 = vset.pattern.permute.xlu0 0
      %5217 = vperm.xlu0 %5216, %v5099
      %v5218 = vpop.permute.xlu0 %5217
      %5221 = vset.pattern.permute.xlu0 0
      %5222 = vperm.xlu0 %5221, %v5100
      %v5223 = vpop.permute.xlu0 %5222
      %5226 = vset.pattern.permute.xlu0 0
      %5227 = vperm.xlu0 %5226, %v5101
      %v5228 = vpop.permute.xlu0 %5227
      %5231 = vset.pattern.permute.xlu0 0
      %5232 = vperm.xlu0 %5231, %v5102
      %v5233 = vpop.permute.xlu0 %5232
      %v5235 = vadd.f32 %v5033, %v5178
      %v5236 = vadd.f32 %v5036, %v5183
      %v5237 = vadd.f32 %v5041, %v5188
      %v5238 = vadd.f32 %v5044, %v5193
      %v5239 = vadd.f32 %v5049, %v5198
      %v5240 = vadd.f32 %v5052, %v5203
      %v5241 = vadd.f32 %v5057, %v5208
      %v5242 = vadd.f32 %v5060, %v5213
      %v5243 = vadd.f32 %v5065, %v5218
      %v5244 = vadd.f32 %v5068, %v5223
      %v5245 = vadd.f32 %v5073, %v5228
      %v5246 = vadd.f32 %v5076, %v5233
      %v5247 = vmul.f32 %v5235, 0.5
      %v5248 = vmul.f32 %v5236, 0.5
      %v5249 = vmul.f32 %v5237, 0.5
      %v5250 = vmul.f32 %v5238, 0.5
      %v5251 = vmul.f32 %v5239, 0.5
      %v5252 = vmul.f32 %v5240, 0.5
      %v5253 = vmul.f32 %v5241, 0.5
      %v5254 = vmul.f32 %v5242, 0.5
      %v5255 = vmul.f32 %v5243, 0.5
      %v5256 = vmul.f32 %v5244, 0.5
      %v5257 = vmul.f32 %v5245, 0.5
      %v5258 = vmul.f32 %v5246, 0.5
      %v5259 = vtanh.pop %v5247
      %v5260 = vtanh.pop %v5248
      %v5261 = vtanh.pop %v5249
      %v5262 = vtanh.pop %v5250
      %v5263 = vtanh.pop %v5251
      %v5264 = vtanh.pop %v5252
      %v5265 = vtanh.pop %v5253
      %v5266 = vtanh.pop %v5254
      %v5267 = vtanh.pop %v5255
      %v5268 = vtanh.pop %v5256
      %v5269 = vtanh.pop %v5257
      %v5270 = vtanh.pop %v5258
      %v5271 = vadd.f32 %v5259, 1.0
      %v5272 = vadd.f32 %v5260, 1.0
      %v5273 = vadd.f32 %v5261, 1.0
      %v5274 = vadd.f32 %v5262, 1.0
      %v5275 = vadd.f32 %v5263, 1.0
      %v5276 = vadd.f32 %v5264, 1.0
      %v5277 = vadd.f32 %v5265, 1.0
      %v5278 = vadd.f32 %v5266, 1.0
      %v5279 = vadd.f32 %v5267, 1.0
      %v5280 = vadd.f32 %v5268, 1.0
      %v5281 = vadd.f32 %v5269, 1.0
      %v5282 = vadd.f32 %v5270, 1.0
      %v5283 = vmul.f32 %v5271, 0.5
      %v5284 = vmul.f32 %v5272, 0.5
      %v5285 = vmul.f32 %v5273, 0.5
      %v5286 = vmul.f32 %v5274, 0.5
      %v5287 = vmul.f32 %v5275, 0.5
      %v5288 = vmul.f32 %v5276, 0.5
      %v5289 = vmul.f32 %v5277, 0.5
      %v5290 = vmul.f32 %v5278, 0.5
      %v5291 = vmul.f32 %v5279, 0.5
      %v5292 = vmul.f32 %v5280, 0.5
      %v5293 = vmul.f32 %v5281, 0.5
      %v5294 = vmul.f32 %v5282, 0.5
      %v5295 = vmul.f32 %v5163, %v5283
      %v5296 = vmul.f32 %v5164, %v5284
      %v5297 = vmul.f32 %v5165, %v5285
      %v5298 = vmul.f32 %v5166, %v5286
      %v5299 = vmul.f32 %v5167, %v5287
      %v5300 = vmul.f32 %v5168, %v5288
      %v5301 = vmul.f32 %v5169, %v5289
      %v5302 = vmul.f32 %v5170, %v5290
      %v5303 = vmul.f32 %v5171, %v5291
      %v5304 = vmul.f32 %v5172, %v5292
      %v5305 = vmul.f32 %v5173, %v5293
      %v5306 = vmul.f32 %v5174, %v5294
      %v5307 = vmax.f32 %v5295, 0.0
      %v5308 = vmax.f32 %v5296, 0.0
      %v5309 = vmax.f32 %v5297, 0.0
      %v5310 = vmax.f32 %v5298, 0.0
      %v5311 = vmax.f32 %v5299, 0.0
      %v5312 = vmax.f32 %v5300, 0.0
      %v5313 = vmax.f32 %v5301, 0.0
      %v5314 = vmax.f32 %v5302, 0.0
      %v5315 = vmax.f32 %v5303, 0.0
      %v5316 = vmax.f32 %v5304, 0.0
      %v5317 = vmax.f32 %v5305, 0.0
      %v5318 = vmax.f32 %v5306, 0.0
      %vm5319 = vcmask 875520
      %5320 = vst.msk [vmem:[%s278] sm:$0xff] %vm5319, %v5307
      %5321 = vst.msk [vmem:[%s278 + $0x8] sm:$0xff] %vm5319, %v5308
      %5322 = vst.msk [vmem:[%s278 + $0x10] sm:$0xff] %vm5319, %v5309
      %5323 = vst.msk [vmem:[%s278 + $0x18] sm:$0xff] %vm5319, %v5310
      %5324 = vst.msk [vmem:[%s278 + $0x20] sm:$0xff] %vm5319, %v5311
      %5325 = vst.msk [vmem:[%s278 + $0x28] sm:$0xff] %vm5319, %v5312
      %5326 = vst.msk [vmem:[%s278 + $0x30] sm:$0xff] %vm5319, %v5313
      %5327 = vst.msk [vmem:[%s278 + $0x38] sm:$0xff] %vm5319, %v5314
      %5328 = vst.msk [vmem:[%s278 + $0x40] sm:$0xff] %vm5319, %v5315
      %5329 = vst.msk [vmem:[%s278 + $0x48] sm:$0xff] %vm5319, %v5316
      %5330 = vst.msk [vmem:[%s278 + $0x50] sm:$0xff] %vm5319, %v5317
      %5331 = vst.msk [vmem:[%s278 + $0x58] sm:$0xff] %vm5319, %v5318
      %p5332 = scmp.lt.s32.totalorder %s18, 1
      %s5333 = scalar_select %p5332, %s18, 1
      %s5334 = smul.addr %s5333, 12
      %s5335 = smul.addr %s5334, 8
      %s5336 = scalar_lea.vmem %s7, %s5335
      // Predicated region
      $region49: #{gated_cnn_forward.2} parent=47 // pred_check
        %p5337 = pneg %p188
      $region50: #{gated_cnn_forward.2} parent=47 // pred_check_branch
        %5339 = sbr.rel (%p5337) target = $region52
      $region51: #{gated_cnn_forward.2} parent=47 // pred_region
        _
      $region52: #{gated_cnn_forward.2} parent=47 // pred_fallthru
        _
    $region48: #{gated_cnn_forward.2} parent=5 // pred_fallthru
      _
    %p5340 = scmp.le.s32.totalorder 2, %s13
    // Predicated region
    $region53: #{gated_cnn_forward.2} parent=5 // pred_check
      %p5341 = pneg %p5340
    $region54: #{gated_cnn_forward.2} parent=5 // pred_check_branch
      %5343 = sbr.rel (%p5341) target = $region56
    $region55: #{gated_cnn_forward.2} parent=5 // pred_region
      %s5344 = ssub.s32 %s13, 2
      // Predicated region
      $region57: #{gated_cnn_forward.2} parent=55 // pred_check
        %p5345 = pneg %p194
      $region58: #{gated_cnn_forward.2} parent=55 // pred_check_branch
        %5347 = sbr.rel (%p5345) target = $region60
      $region59: #{gated_cnn_forward.2} parent=55 // pred_region
        %p5348 = scmp.lt.s32.totalorder %s19, 1
        %s5349 = scalar_select %p5348, %s19, 1
        %s5350 = smul.addr %s5349, 12
        %s5351 = smul.addr %s5350, 8
        %s5352 = scalar_lea.vmem %s7, %s5351
      $region60: #{gated_cnn_forward.2} parent=55 // pred_fallthru
        _
    $region56: #{gated_cnn_forward.2} parent=5 // pred_fallthru
      _
  $region6: #{gated_cnn_forward.2} parent=0 // loop_footer
    %s17 = sadd.s32 1, %s13
  $region7: #{gated_cnn_forward.2} parent=0 // loop_footer_branch
    %12 = sbr.rel target = $region3
  $region8: #{gated_cnn_forward.2} parent=0 // loop_exit
    _

// kernel: gated_cnn_forward.3
$region0: #{gated_cnn_forward.3}
  #allocation0 [shape = 'u32[]', space=smem, size = 0x4, offset = 0x4, fixed_abs, tag = 'smem constant byte address 0x4 - core index']
  #allocation1 [shape = 'u32[144,128]{1,0:T(1,128)}', space=vmem, size = 0x12000, scoped, tag = 'internal scratch']
  %s0 = inlined_call_operand.vmem [shape: f32[2,10272], index: 0, kind: input, shape index: {}]
  %s1 = inlined_call_operand.vmem [shape: bf16[10272,128], index: 1, kind: input, shape index: {}]
  %s2 = inlined_call_operand.vmem [shape: f32[1,128], index: 2, kind: input, shape index: {}]
  %s3 = inlined_call_operand.hbm [shape: f32[2,128], index: 3, kind: output, shape index: {}]
  %s4 = sld [smem:[#allocation0]]
  $region22: #{gated_cnn_forward.3} parent=0
    _
  %s6 = ssub.s32 1, %s4
  %s7 = scalar_select 0, %s6, %s4
  $region1: #{gated_cnn_forward.3} parent=0
    #allocation2 [shape = 'u8[1024]{0}', space=vmem, size = 0x400, scoped, tag = 'output window, operand 0, single buffered']
    #allocation3 [shape = 's32[1]{0}', space=sflag, size = 0x4, scoped, tag = 'scoped memory for gated_cnn_forward.3']
    %8 = vsyncpa [#allocation3], 0
    // Predicated region
    $region2: #{gated_cnn_forward.3} parent=1 // pred_check
      _
    $region3: #{gated_cnn_forward.3} parent=1 // pred_check_branch
      %10 = sbr.rel (0) target = $region5
    $region4: #{gated_cnn_forward.3} parent=1 // pred_region
      _
    $region5: #{gated_cnn_forward.3} parent=1 // pred_fallthru
      _
    // Predicated region
    $region6: #{gated_cnn_forward.3} parent=1 // pred_check
      _
    $region7: #{gated_cnn_forward.3} parent=1 // pred_check_branch
      %12 = sbr.rel (0) target = $region9
    $region8: #{gated_cnn_forward.3} parent=1 // pred_region
      _
    $region9: #{gated_cnn_forward.3} parent=1 // pred_fallthru
      _
    // Predicated region
    $region10: #{gated_cnn_forward.3} parent=1 // pred_check
      _
    $region11: #{gated_cnn_forward.3} parent=1 // pred_check_branch
      %14 = sbr.rel (0) target = $region13
    $region12: #{gated_cnn_forward.3} parent=1 // pred_region
      _
    $region13: #{gated_cnn_forward.3} parent=1 // pred_fallthru
      _
    %v16 = vld [vmem:[%s0] sm:$0xff]
    %v17 = vld [vmem:[%s0 + $0x8] sm:$0xff]
    %v18 = vld [vmem:[%s0 + $0x10] sm:$0xff]
    %v19 = vld [vmem:[%s0 + $0x18] sm:$0xff]
    %v20 = vld [vmem:[%s0 + $0x20] sm:$0xff]
    %v21 = vld [vmem:[%s0 + $0x28] sm:$0xff]
    %v22 = vld [vmem:[%s0 + $0x30] sm:$0xff]
    %v23 = vld [vmem:[%s0 + $0x38] sm:$0xff]
    %v24 = vld [vmem:[%s0 + $0x40] sm:$0xff]
    %v25 = vld [vmem:[%s0 + $0x48] sm:$0xff]
    %v26 = vld [vmem:[%s0 + $0x50] sm:$0xff]
    %v27 = vld [vmem:[%s0 + $0x58] sm:$0xff]
    %v28 = vld [vmem:[%s0 + $0x60] sm:$0xff]
    %v29 = vld [vmem:[%s0 + $0x68] sm:$0xff]
    %v30 = vld [vmem:[%s0 + $0x70] sm:$0xff]
    %v31 = vld [vmem:[%s0 + $0x78] sm:$0xff]
    %v32 = vld [vmem:[%s0 + $0x80] sm:$0xff]
    %v33 = vld [vmem:[%s0 + $0x88] sm:$0xff]
    %v34 = vld [vmem:[%s0 + $0x90] sm:$0xff]
    %v35 = vld [vmem:[%s0 + $0x98] sm:$0xff]
    %v36 = vld [vmem:[%s0 + $0xa0] sm:$0x3]
    %v58 = vcombine.high %v16, %v16
    %v60 = vunpack.c.l.s4 1983009808
    %v61 = vunpack.c.0.s8 %v60
    %v62 = vlaneseq
    %v63 = vshrl.u32 %v62, 7
    %v64 = vsub.s32 %v61, %v63
    %v65 = vrot.slane %v16, %v64
    %v67 = vunpack.c.l.s4 1983009808
    %v68 = vunpack.c.0.s8 %v67
    %v69 = vlaneseq
    %v70 = vshrl.u32 %v69, 7
    %v71 = vsub.s32 %v68, %v70
    %v72 = vrot.slane %v58, %v71
    %v73 = vcombine.high %v65, %v65
    %v74 = vcombine.high %v72, %v72
    %v75 = vcombine.high %v17, %v17
    %v77 = vunpack.c.l.s4 1983009808
    %v78 = vunpack.c.0.s8 %v77
    %v79 = vlaneseq
    %v80 = vshrl.u32 %v79, 7
    %v81 = vsub.s32 %v78, %v80
    %v82 = vrot.slane %v17, %v81
    %v84 = vunpack.c.l.s4 1983009808
    %v85 = vunpack.c.0.s8 %v84
    %v86 = vlaneseq
    %v87 = vshrl.u32 %v86, 7
    %v88 = vsub.s32 %v85, %v87
    %v89 = vrot.slane %v75, %v88
    %v90 = vcombine.high %v82, %v82
    %v91 = vcombine.high %v89, %v89
    %v92 = vcombine.high %v18, %v18
    %v94 = vunpack.c.l.s4 1983009808
    %v95 = vunpack.c.0.s8 %v94
    %v96 = vlaneseq
    %v97 = vshrl.u32 %v96, 7
    %v98 = vsub.s32 %v95, %v97
    %v99 = vrot.slane %v18, %v98
    %v101 = vunpack.c.l.s4 1983009808
    %v102 = vunpack.c.0.s8 %v101
    %v103 = vlaneseq
    %v104 = vshrl.u32 %v103, 7
    %v105 = vsub.s32 %v102, %v104
    %v106 = vrot.slane %v92, %v105
    %v107 = vcombine.high %v99, %v99
    %v108 = vcombine.high %v106, %v106
    %v109 = vcombine.high %v19, %v19
    %v111 = vunpack.c.l.s4 1983009808
    %v112 = vunpack.c.0.s8 %v111
    %v113 = vlaneseq
    %v114 = vshrl.u32 %v113, 7
    %v115 = vsub.s32 %v112, %v114
    %v116 = vrot.slane %v19, %v115
    %v118 = vunpack.c.l.s4 1983009808
    %v119 = vunpack.c.0.s8 %v118
    %v120 = vlaneseq
    %v121 = vshrl.u32 %v120, 7
    %v122 = vsub.s32 %v119, %v121
    %v123 = vrot.slane %v109, %v122
    %v124 = vcombine.high %v116, %v116
    %v125 = vcombine.high %v123, %v123
    %v126 = vcombine.high %v20, %v20
    %v128 = vunpack.c.l.s4 1983009808
    %v129 = vunpack.c.0.s8 %v128
    %v130 = vlaneseq
    %v131 = vshrl.u32 %v130, 7
    %v132 = vsub.s32 %v129, %v131
    %v133 = vrot.slane %v20, %v132
    %v135 = vunpack.c.l.s4 1983009808
    %v136 = vunpack.c.0.s8 %v135
    %v137 = vlaneseq
    %v138 = vshrl.u32 %v137, 7
    %v139 = vsub.s32 %v136, %v138
    %v140 = vrot.slane %v126, %v139
    %v141 = vcombine.high %v133, %v133
    %v142 = vcombine.high %v140, %v140
    %v143 = vcombine.high %v21, %v21
    %v145 = vunpack.c.l.s4 1983009808
    %v146 = vunpack.c.0.s8 %v145
    %v147 = vlaneseq
    %v148 = vshrl.u32 %v147, 7
    %v149 = vsub.s32 %v146, %v148
    %v150 = vrot.slane %v21, %v149
    %v152 = vunpack.c.l.s4 1983009808
    %v153 = vunpack.c.0.s8 %v152
    %v154 = vlaneseq
    %v155 = vshrl.u32 %v154, 7
    %v156 = vsub.s32 %v153, %v155
    %v157 = vrot.slane %v143, %v156
    %v158 = vcombine.high %v150, %v150
    %v159 = vcombine.high %v157, %v157
    %v160 = vcombine.high %v22, %v22
    %v162 = vunpack.c.l.s4 1983009808
    %v163 = vunpack.c.0.s8 %v162
    %v164 = vlaneseq
    %v165 = vshrl.u32 %v164, 7
    %v166 = vsub.s32 %v163, %v165
    %v167 = vrot.slane %v22, %v166
    %v169 = vunpack.c.l.s4 1983009808
    %v170 = vunpack.c.0.s8 %v169
    %v171 = vlaneseq
    %v172 = vshrl.u32 %v171, 7
    %v173 = vsub.s32 %v170, %v172
    %v174 = vrot.slane %v160, %v173
    %v175 = vcombine.high %v167, %v167
    %v176 = vcombine.high %v174, %v174
    %v177 = vcombine.high %v23, %v23
    %v179 = vunpack.c.l.s4 1983009808
    %v180 = vunpack.c.0.s8 %v179
    %v181 = vlaneseq
    %v182 = vshrl.u32 %v181, 7
    %v183 = vsub.s32 %v180, %v182
    %v184 = vrot.slane %v23, %v183
    %v186 = vunpack.c.l.s4 1983009808
    %v187 = vunpack.c.0.s8 %v186
    %v188 = vlaneseq
    %v189 = vshrl.u32 %v188, 7
    %v190 = vsub.s32 %v187, %v189
    %v191 = vrot.slane %v177, %v190
    %v192 = vcombine.high %v184, %v184
    %v193 = vcombine.high %v191, %v191
    %v194 = vcombine.high %v24, %v24
    %v196 = vunpack.c.l.s4 1983009808
    %v197 = vunpack.c.0.s8 %v196
    %v198 = vlaneseq
    %v199 = vshrl.u32 %v198, 7
    %v200 = vsub.s32 %v197, %v199
    %v201 = vrot.slane %v24, %v200
    %v203 = vunpack.c.l.s4 1983009808
    %v204 = vunpack.c.0.s8 %v203
    %v205 = vlaneseq
    %v206 = vshrl.u32 %v205, 7
    %v207 = vsub.s32 %v204, %v206
    %v208 = vrot.slane %v194, %v207
    %v209 = vcombine.high %v201, %v201
    %v210 = vcombine.high %v208, %v208
    %v211 = vcombine.high %v25, %v25
    %v213 = vunpack.c.l.s4 1983009808
    %v214 = vunpack.c.0.s8 %v213
    %v215 = vlaneseq
    %v216 = vshrl.u32 %v215, 7
    %v217 = vsub.s32 %v214, %v216
    %v218 = vrot.slane %v25, %v217
    %v220 = vunpack.c.l.s4 1983009808
    %v221 = vunpack.c.0.s8 %v220
    %v222 = vlaneseq
    %v223 = vshrl.u32 %v222, 7
    %v224 = vsub.s32 %v221, %v223
    %v225 = vrot.slane %v211, %v224
    %v226 = vcombine.high %v218, %v218
    %v227 = vcombine.high %v225, %v225
    %v228 = vcombine.high %v26, %v26
    %v230 = vunpack.c.l.s4 1983009808
    %v231 = vunpack.c.0.s8 %v230
    %v232 = vlaneseq
    %v233 = vshrl.u32 %v232, 7
    %v234 = vsub.s32 %v231, %v233
    %v235 = vrot.slane %v26, %v234
    %v237 = vunpack.c.l.s4 1983009808
    %v238 = vunpack.c.0.s8 %v237
    %v239 = vlaneseq
    %v240 = vshrl.u32 %v239, 7
    %v241 = vsub.s32 %v238, %v240
    %v242 = vrot.slane %v228, %v241
    %v243 = vcombine.high %v235, %v235
    %v244 = vcombine.high %v242, %v242
    %v245 = vcombine.high %v27, %v27
    %v247 = vunpack.c.l.s4 1983009808
    %v248 = vunpack.c.0.s8 %v247
    %v249 = vlaneseq
    %v250 = vshrl.u32 %v249, 7
    %v251 = vsub.s32 %v248, %v250
    %v252 = vrot.slane %v27, %v251
    %v254 = vunpack.c.l.s4 1983009808
    %v255 = vunpack.c.0.s8 %v254
    %v256 = vlaneseq
    %v257 = vshrl.u32 %v256, 7
    %v258 = vsub.s32 %v255, %v257
    %v259 = vrot.slane %v245, %v258
    %v260 = vcombine.high %v252, %v252
    %v261 = vcombine.high %v259, %v259
    %v262 = vcombine.high %v28, %v28
    %v264 = vunpack.c.l.s4 1983009808
    %v265 = vunpack.c.0.s8 %v264
    %v266 = vlaneseq
    %v267 = vshrl.u32 %v266, 7
    %v268 = vsub.s32 %v265, %v267
    %v269 = vrot.slane %v28, %v268
    %v271 = vunpack.c.l.s4 1983009808
    %v272 = vunpack.c.0.s8 %v271
    %v273 = vlaneseq
    %v274 = vshrl.u32 %v273, 7
    %v275 = vsub.s32 %v272, %v274
    %v276 = vrot.slane %v262, %v275
    %v277 = vcombine.high %v269, %v269
    %v278 = vcombine.high %v276, %v276
    %v279 = vcombine.high %v29, %v29
    %v281 = vunpack.c.l.s4 1983009808
    %v282 = vunpack.c.0.s8 %v281
    %v283 = vlaneseq
    %v284 = vshrl.u32 %v283, 7
    %v285 = vsub.s32 %v282, %v284
    %v286 = vrot.slane %v29, %v285
    %v288 = vunpack.c.l.s4 1983009808
    %v289 = vunpack.c.0.s8 %v288
    %v290 = vlaneseq
    %v291 = vshrl.u32 %v290, 7
    %v292 = vsub.s32 %v289, %v291
    %v293 = vrot.slane %v279, %v292
    %v294 = vcombine.high %v286, %v286
    %v295 = vcombine.high %v293, %v293
    %v296 = vcombine.high %v30, %v30
    %v298 = vunpack.c.l.s4 1983009808
    %v299 = vunpack.c.0.s8 %v298
    %v300 = vlaneseq
    %v301 = vshrl.u32 %v300, 7
    %v302 = vsub.s32 %v299, %v301
    %v303 = vrot.slane %v30, %v302
    %v305 = vunpack.c.l.s4 1983009808
    %v306 = vunpack.c.0.s8 %v305
    %v307 = vlaneseq
    %v308 = vshrl.u32 %v307, 7
    %v309 = vsub.s32 %v306, %v308
    %v310 = vrot.slane %v296, %v309
    %v311 = vcombine.high %v303, %v303
    %v312 = vcombine.high %v310, %v310
    %v313 = vcombine.high %v31, %v31
    %v315 = vunpack.c.l.s4 1983009808
    %v316 = vunpack.c.0.s8 %v315
    %v317 = vlaneseq
    %v318 = vshrl.u32 %v317, 7
    %v319 = vsub.s32 %v316, %v318
    %v320 = vrot.slane %v31, %v319
    %v322 = vunpack.c.l.s4 1983009808
    %v323 = vunpack.c.0.s8 %v322
    %v324 = vlaneseq
    %v325 = vshrl.u32 %v324, 7
    %v326 = vsub.s32 %v323, %v325
    %v327 = vrot.slane %v313, %v326
    %v328 = vcombine.high %v320, %v320
    %v329 = vcombine.high %v327, %v327
    %v330 = vcombine.high %v32, %v32
    %v332 = vunpack.c.l.s4 1983009808
    %v333 = vunpack.c.0.s8 %v332
    %v334 = vlaneseq
    %v335 = vshrl.u32 %v334, 7
    %v336 = vsub.s32 %v333, %v335
    %v337 = vrot.slane %v32, %v336
    %v339 = vunpack.c.l.s4 1983009808
    %v340 = vunpack.c.0.s8 %v339
    %v341 = vlaneseq
    %v342 = vshrl.u32 %v341, 7
    %v343 = vsub.s32 %v340, %v342
    %v344 = vrot.slane %v330, %v343
    %v345 = vcombine.high %v337, %v337
    %v346 = vcombine.high %v344, %v344
    %v347 = vcombine.high %v33, %v33
    %v349 = vunpack.c.l.s4 1983009808
    %v350 = vunpack.c.0.s8 %v349
    %v351 = vlaneseq
    %v352 = vshrl.u32 %v351, 7
    %v353 = vsub.s32 %v350, %v352
    %v354 = vrot.slane %v33, %v353
    %v356 = vunpack.c.l.s4 1983009808
    %v357 = vunpack.c.0.s8 %v356
    %v358 = vlaneseq
    %v359 = vshrl.u32 %v358, 7
    %v360 = vsub.s32 %v357, %v359
    %v361 = vrot.slane %v347, %v360
    %v362 = vcombine.high %v354, %v354
    %v363 = vcombine.high %v361, %v361
    %v364 = vcombine.high %v34, %v34
    %v366 = vunpack.c.l.s4 1983009808
    %v367 = vunpack.c.0.s8 %v366
    %v368 = vlaneseq
    %v369 = vshrl.u32 %v368, 7
    %v370 = vsub.s32 %v367, %v369
    %v371 = vrot.slane %v34, %v370
    %v373 = vunpack.c.l.s4 1983009808
    %v374 = vunpack.c.0.s8 %v373
    %v375 = vlaneseq
    %v376 = vshrl.u32 %v375, 7
    %v377 = vsub.s32 %v374, %v376
    %v378 = vrot.slane %v364, %v377
    %v379 = vcombine.high %v371, %v371
    %v380 = vcombine.high %v378, %v378
    %v381 = vcombine.high %v35, %v35
    %v383 = vunpack.c.l.s4 1983009808
    %v384 = vunpack.c.0.s8 %v383
    %v385 = vlaneseq
    %v386 = vshrl.u32 %v385, 7
    %v387 = vsub.s32 %v384, %v386
    %v388 = vrot.slane %v35, %v387
    %v390 = vunpack.c.l.s4 1983009808
    %v391 = vunpack.c.0.s8 %v390
    %v392 = vlaneseq
    %v393 = vshrl.u32 %v392, 7
    %v394 = vsub.s32 %v391, %v393
    %v395 = vrot.slane %v381, %v394
    %v396 = vcombine.high %v388, %v388
    %v397 = vcombine.high %v395, %v395
    %v399 = vunpack.c.l.s4 1983009808
    %v400 = vunpack.c.0.s8 %v399
    %v401 = vlaneseq
    %v402 = vshrl.u32 %v401, 7
    %v403 = vsub.s32 %v400, %v402
    %v404 = vrot.slane %v36, %v403
    %v486 = vpack.c.bf16 %v65, %v65
    %v487 = vpack.c.bf16 %v73, %v73
    %v488 = vpack.c.bf16 %v72, %v72
    %v489 = vpack.c.bf16 %v74, %v74
    %v490 = vpack.c.bf16 %v82, %v82
    %v491 = vpack.c.bf16 %v90, %v90
    %v492 = vpack.c.bf16 %v89, %v89
    %v493 = vpack.c.bf16 %v91, %v91
    %v494 = vpack.c.bf16 %v99, %v99
    %v495 = vpack.c.bf16 %v107, %v107
    %v496 = vpack.c.bf16 %v106, %v106
    %v497 = vpack.c.bf16 %v108, %v108
    %v498 = vpack.c.bf16 %v116, %v116
    %v499 = vpack.c.bf16 %v124, %v124
    %v500 = vpack.c.bf16 %v123, %v123
    %v501 = vpack.c.bf16 %v125, %v125
    %v502 = vpack.c.bf16 %v133, %v133
    %v503 = vpack.c.bf16 %v141, %v141
    %v504 = vpack.c.bf16 %v140, %v140
    %v505 = vpack.c.bf16 %v142, %v142
    %v506 = vpack.c.bf16 %v150, %v150
    %v507 = vpack.c.bf16 %v158, %v158
    %v508 = vpack.c.bf16 %v157, %v157
    %v509 = vpack.c.bf16 %v159, %v159
    %v510 = vpack.c.bf16 %v167, %v167
    %v511 = vpack.c.bf16 %v175, %v175
    %v512 = vpack.c.bf16 %v174, %v174
    %v513 = vpack.c.bf16 %v176, %v176
    %v514 = vpack.c.bf16 %v184, %v184
    %v515 = vpack.c.bf16 %v192, %v192
    %v516 = vpack.c.bf16 %v191, %v191
    %v517 = vpack.c.bf16 %v193, %v193
    %v518 = vpack.c.bf16 %v201, %v201
    %v519 = vpack.c.bf16 %v209, %v209
    %v520 = vpack.c.bf16 %v208, %v208
    %v521 = vpack.c.bf16 %v210, %v210
    %v522 = vpack.c.bf16 %v218, %v218
    %v523 = vpack.c.bf16 %v226, %v226
    %v524 = vpack.c.bf16 %v225, %v225
    %v525 = vpack.c.bf16 %v227, %v227
    %v526 = vpack.c.bf16 %v235, %v235
    %v527 = vpack.c.bf16 %v243, %v243
    %v528 = vpack.c.bf16 %v242, %v242
    %v529 = vpack.c.bf16 %v244, %v244
    %v530 = vpack.c.bf16 %v252, %v252
    %v531 = vpack.c.bf16 %v260, %v260
    %v532 = vpack.c.bf16 %v259, %v259
    %v533 = vpack.c.bf16 %v261, %v261
    %v534 = vpack.c.bf16 %v269, %v269
    %v535 = vpack.c.bf16 %v277, %v277
    %v536 = vpack.c.bf16 %v276, %v276
    %v537 = vpack.c.bf16 %v278, %v278
    %v538 = vpack.c.bf16 %v286, %v286
    %v539 = vpack.c.bf16 %v294, %v294
    %v540 = vpack.c.bf16 %v293, %v293
    %v541 = vpack.c.bf16 %v295, %v295
    %v542 = vpack.c.bf16 %v303, %v303
    %v543 = vpack.c.bf16 %v311, %v311
    %v544 = vpack.c.bf16 %v310, %v310
    %v545 = vpack.c.bf16 %v312, %v312
    %v546 = vpack.c.bf16 %v320, %v320
    %v547 = vpack.c.bf16 %v328, %v328
    %v548 = vpack.c.bf16 %v327, %v327
    %v549 = vpack.c.bf16 %v329, %v329
    %v550 = vpack.c.bf16 %v337, %v337
    %v551 = vpack.c.bf16 %v345, %v345
    %v552 = vpack.c.bf16 %v344, %v344
    %v553 = vpack.c.bf16 %v346, %v346
    %v554 = vpack.c.bf16 %v354, %v354
    %v555 = vpack.c.bf16 %v362, %v362
    %v556 = vpack.c.bf16 %v361, %v361
    %v557 = vpack.c.bf16 %v363, %v363
    %v558 = vpack.c.bf16 %v371, %v371
    %v559 = vpack.c.bf16 %v379, %v379
    %v560 = vpack.c.bf16 %v378, %v378
    %v561 = vpack.c.bf16 %v380, %v380
    %v562 = vpack.c.bf16 %v388, %v388
    %v563 = vpack.c.bf16 %v396, %v396
    %v564 = vpack.c.bf16 %v395, %v395
    %v565 = vpack.c.bf16 %v397, %v397
    %v566 = vpack.c.bf16 %v404, %v404
    %v567 = vld [vmem:[%s1] sm:$0xf]
    %v568 = vld [vmem:[%s1 + $0x4] sm:$0xf]
    %v569 = vld [vmem:[%s1 + $0x8] sm:$0xf]
    %v570 = vld [vmem:[%s1 + $0xc] sm:$0xf]
    %v571 = vld [vmem:[%s1 + $0x10] sm:$0xf]
    %v572 = vld [vmem:[%s1 + $0x14] sm:$0xf]
    %v573 = vld [vmem:[%s1 + $0x18] sm:$0xf]
    %v574 = vld [vmem:[%s1 + $0x1c] sm:$0xf]
    %v575 = vld [vmem:[%s1 + $0x20] sm:$0xf]
    %v576 = vld [vmem:[%s1 + $0x24] sm:$0xf]
    %v577 = vld [vmem:[%s1 + $0x28] sm:$0xf]
    %v578 = vld [vmem:[%s1 + $0x2c] sm:$0xf]
    %v579 = vld [vmem:[%s1 + $0x30] sm:$0xf]
    %v580 = vld [vmem:[%s1 + $0x34] sm:$0xf]
    %v581 = vld [vmem:[%s1 + $0x38] sm:$0xf]
    %v582 = vld [vmem:[%s1 + $0x3c] sm:$0xf]
    %v583 = vld [vmem:[%s1 + $0x40] sm:$0xf]
    %v584 = vld [vmem:[%s1 + $0x44] sm:$0xf]
    %v585 = vld [vmem:[%s1 + $0x48] sm:$0xf]
    %v586 = vld [vmem:[%s1 + $0x4c] sm:$0xf]
    %v587 = vld [vmem:[%s1 + $0x50] sm:$0xf]
    %v588 = vld [vmem:[%s1 + $0x54] sm:$0xf]
    %v589 = vld [vmem:[%s1 + $0x58] sm:$0xf]
    %v590 = vld [vmem:[%s1 + $0x5c] sm:$0xf]
    %v591 = vld [vmem:[%s1 + $0x60] sm:$0xf]
    %v592 = vld [vmem:[%s1 + $0x64] sm:$0xf]
    %v593 = vld [vmem:[%s1 + $0x68] sm:$0xf]
    %v594 = vld [vmem:[%s1 + $0x6c] sm:$0xf]
    %v595 = vld [vmem:[%s1 + $0x70] sm:$0xf]
    %v596 = vld [vmem:[%s1 + $0x74] sm:$0xf]
    %v597 = vld [vmem:[%s1 + $0x78] sm:$0xf]
    %v598 = vld [vmem:[%s1 + $0x7c] sm:$0xf]
    %v599 = vld [vmem:[%s1 + $0x80] sm:$0xf]
    %v600 = vld [vmem:[%s1 + $0x84] sm:$0xf]
    %v601 = vld [vmem:[%s1 + $0x88] sm:$0xf]
    %v602 = vld [vmem:[%s1 + $0x8c] sm:$0xf]
    %v603 = vld [vmem:[%s1 + $0x90] sm:$0xf]
    %v604 = vld [vmem:[%s1 + $0x94] sm:$0xf]
    %v605 = vld [vmem:[%s1 + $0x98] sm:$0xf]
    %v606 = vld [vmem:[%s1 + $0x9c] sm:$0xf]
    %v607 = vld [vmem:[%s1 + $0xa0] sm:$0xf]
    %v608 = vld [vmem:[%s1 + $0xa4] sm:$0xf]
    %v609 = vld [vmem:[%s1 + $0xa8] sm:$0xf]
    %v610 = vld [vmem:[%s1 + $0xac] sm:$0xf]
    %v611 = vld [vmem:[%s1 + $0xb0] sm:$0xf]
    %v612 = vld [vmem:[%s1 + $0xb4] sm:$0xf]
    %v613 = vld [vmem:[%s1 + $0xb8] sm:$0xf]
    %v614 = vld [vmem:[%s1 + $0xbc] sm:$0xf]
    %v615 = vld [vmem:[%s1 + $0xc0] sm:$0xf]
    %v616 = vld [vmem:[%s1 + $0xc4] sm:$0xf]
    %v617 = vld [vmem:[%s1 + $0xc8] sm:$0xf]
    %v618 = vld [vmem:[%s1 + $0xcc] sm:$0xf]
    %v619 = vld [vmem:[%s1 + $0xd0] sm:$0xf]
    %v620 = vld [vmem:[%s1 + $0xd4] sm:$0xf]
    %v621 = vld [vmem:[%s1 + $0xd8] sm:$0xf]
    %v622 = vld [vmem:[%s1 + $0xdc] sm:$0xf]
    %v623 = vld [vmem:[%s1 + $0xe0] sm:$0xf]
    %v624 = vld [vmem:[%s1 + $0xe4] sm:$0xf]
    %v625 = vld [vmem:[%s1 + $0xe8] sm:$0xf]
    %v626 = vld [vmem:[%s1 + $0xec] sm:$0xf]
    %v627 = vld [vmem:[%s1 + $0xf0] sm:$0xf]
    %v628 = vld [vmem:[%s1 + $0xf4] sm:$0xf]
    %v629 = vld [vmem:[%s1 + $0xf8] sm:$0xf]
    %v630 = vld [vmem:[%s1 + $0xfc] sm:$0xf]
    %v631 = vld [vmem:[%s1 + $0x100] sm:$0xf]
    %v632 = vld [vmem:[%s1 + $0x104] sm:$0xf]
    %v633 = vld [vmem:[%s1 + $0x108] sm:$0xf]
    %v634 = vld [vmem:[%s1 + $0x10c] sm:$0xf]
    %v635 = vld [vmem:[%s1 + $0x110] sm:$0xf]
    %v636 = vld [vmem:[%s1 + $0x114] sm:$0xf]
    %v637 = vld [vmem:[%s1 + $0x118] sm:$0xf]
    %v638 = vld [vmem:[%s1 + $0x11c] sm:$0xf]
    %v639 = vld [vmem:[%s1 + $0x120] sm:$0xf]
    %v640 = vld [vmem:[%s1 + $0x124] sm:$0xf]
    %v641 = vld [vmem:[%s1 + $0x128] sm:$0xf]
    %v642 = vld [vmem:[%s1 + $0x12c] sm:$0xf]
    %v643 = vld [vmem:[%s1 + $0x130] sm:$0xf]
    %v644 = vld [vmem:[%s1 + $0x134] sm:$0xf]
    %v645 = vld [vmem:[%s1 + $0x138] sm:$0xf]
    %v646 = vld [vmem:[%s1 + $0x13c] sm:$0xf]
    %v647 = vld [vmem:[%s1 + $0x140] sm:$0xf]
    %v648 = vld [vmem:[%s1 + $0x144] sm:$0xf]
    %v649 = vld [vmem:[%s1 + $0x148] sm:$0xf]
    %v650 = vld [vmem:[%s1 + $0x14c] sm:$0xf]
    %v651 = vld [vmem:[%s1 + $0x150] sm:$0xf]
    %v652 = vld [vmem:[%s1 + $0x154] sm:$0xf]
    %v653 = vld [vmem:[%s1 + $0x158] sm:$0xf]
    %v654 = vld [vmem:[%s1 + $0x15c] sm:$0xf]
    %v655 = vld [vmem:[%s1 + $0x160] sm:$0xf]
    %v656 = vld [vmem:[%s1 + $0x164] sm:$0xf]
    %v657 = vld [vmem:[%s1 + $0x168] sm:$0xf]
    %v658 = vld [vmem:[%s1 + $0x16c] sm:$0xf]
    %v659 = vld [vmem:[%s1 + $0x170] sm:$0xf]
    %v660 = vld [vmem:[%s1 + $0x174] sm:$0xf]
    %v661 = vld [vmem:[%s1 + $0x178] sm:$0xf]
    %v662 = vld [vmem:[%s1 + $0x17c] sm:$0xf]
    %v663 = vld [vmem:[%s1 + $0x180] sm:$0xf]
    %v664 = vld [vmem:[%s1 + $0x184] sm:$0xf]
    %v665 = vld [vmem:[%s1 + $0x188] sm:$0xf]
    %v666 = vld [vmem:[%s1 + $0x18c] sm:$0xf]
    %v667 = vld [vmem:[%s1 + $0x190] sm:$0xf]
    %v668 = vld [vmem:[%s1 + $0x194] sm:$0xf]
    %v669 = vld [vmem:[%s1 + $0x198] sm:$0xf]
    %v670 = vld [vmem:[%s1 + $0x19c] sm:$0xf]
    %v671 = vld [vmem:[%s1 + $0x1a0] sm:$0xf]
    %v672 = vld [vmem:[%s1 + $0x1a4] sm:$0xf]
    %v673 = vld [vmem:[%s1 + $0x1a8] sm:$0xf]
    %v674 = vld [vmem:[%s1 + $0x1ac] sm:$0xf]
    %v675 = vld [vmem:[%s1 + $0x1b0] sm:$0xf]
    %v676 = vld [vmem:[%s1 + $0x1b4] sm:$0xf]
    %v677 = vld [vmem:[%s1 + $0x1b8] sm:$0xf]
    %v678 = vld [vmem:[%s1 + $0x1bc] sm:$0xf]
    %v679 = vld [vmem:[%s1 + $0x1c0] sm:$0xf]
    %v680 = vld [vmem:[%s1 + $0x1c4] sm:$0xf]
    %v681 = vld [vmem:[%s1 + $0x1c8] sm:$0xf]
    %v682 = vld [vmem:[%s1 + $0x1cc] sm:$0xf]
    %v683 = vld [vmem:[%s1 + $0x1d0] sm:$0xf]
    %v684 = vld [vmem:[%s1 + $0x1d4] sm:$0xf]
    %v685 = vld [vmem:[%s1 + $0x1d8] sm:$0xf]
    %v686 = vld [vmem:[%s1 + $0x1dc] sm:$0xf]
    %v687 = vld [vmem:[%s1 + $0x1e0] sm:$0xf]
    %v688 = vld [vmem:[%s1 + $0x1e4] sm:$0xf]
    %v689 = vld [vmem:[%s1 + $0x1e8] sm:$0xf]
    %v690 = vld [vmem:[%s1 + $0x1ec] sm:$0xf]
    %v691 = vld [vmem:[%s1 + $0x1f0] sm:$0xf]
    %v692 = vld [vmem:[%s1 + $0x1f4] sm:$0xf]
    %v693 = vld [vmem:[%s1 + $0x1f8] sm:$0xf]
    %v694 = vld [vmem:[%s1 + $0x1fc] sm:$0xf]
    %v695 = vld [vmem:[%s1 + $0x200] sm:$0xf]
    %v696 = vld [vmem:[%s1 + $0x204] sm:$0xf]
    %v697 = vld [vmem:[%s1 + $0x208] sm:$0xf]
    %v698 = vld [vmem:[%s1 + $0x20c] sm:$0xf]
    %v699 = vld [vmem:[%s1 + $0x210] sm:$0xf]
    %v700 = vld [vmem:[%s1 + $0x214] sm:$0xf]
    %v701 = vld [vmem:[%s1 + $0x218] sm:$0xf]
    %v702 = vld [vmem:[%s1 + $0x21c] sm:$0xf]
    %v703 = vld [vmem:[%s1 + $0x220] sm:$0xf]
    %v704 = vld [vmem:[%s1 + $0x224] sm:$0xf]
    %v705 = vld [vmem:[%s1 + $0x228] sm:$0xf]
    %v706 = vld [vmem:[%s1 + $0x22c] sm:$0xf]
    %v707 = vld [vmem:[%s1 + $0x230] sm:$0xf]
    %v708 = vld [vmem:[%s1 + $0x234] sm:$0xf]
    %v709 = vld [vmem:[%s1 + $0x238] sm:$0xf]
    %v710 = vld [vmem:[%s1 + $0x23c] sm:$0xf]
    %v711 = vld [vmem:[%s1 + $0x240] sm:$0xf]
    %v712 = vld [vmem:[%s1 + $0x244] sm:$0xf]
    %v713 = vld [vmem:[%s1 + $0x248] sm:$0xf]
    %v714 = vld [vmem:[%s1 + $0x24c] sm:$0xf]
    %v715 = vld [vmem:[%s1 + $0x250] sm:$0xf]
    %v716 = vld [vmem:[%s1 + $0x254] sm:$0xf]
    %v717 = vld [vmem:[%s1 + $0x258] sm:$0xf]
    %v718 = vld [vmem:[%s1 + $0x25c] sm:$0xf]
    %v719 = vld [vmem:[%s1 + $0x260] sm:$0xf]
    %v720 = vld [vmem:[%s1 + $0x264] sm:$0xf]
    %v721 = vld [vmem:[%s1 + $0x268] sm:$0xf]
    %v722 = vld [vmem:[%s1 + $0x26c] sm:$0xf]
    %v723 = vld [vmem:[%s1 + $0x270] sm:$0xf]
    %v724 = vld [vmem:[%s1 + $0x274] sm:$0xf]
    %v725 = vld [vmem:[%s1 + $0x278] sm:$0xf]
    %v726 = vld [vmem:[%s1 + $0x27c] sm:$0xf]
    %v727 = vld [vmem:[%s1 + $0x280] sm:$0xf]
    %v728 = vld [vmem:[%s1 + $0x284] sm:$0xf]
    %v729 = vld [vmem:[%s1 + $0x288] sm:$0xf]
    %v730 = vld [vmem:[%s1 + $0x28c] sm:$0xf]
    %v731 = vld [vmem:[%s1 + $0x290] sm:$0xf]
    %v732 = vld [vmem:[%s1 + $0x294] sm:$0xf]
    %v733 = vld [vmem:[%s1 + $0x298] sm:$0xf]
    %v734 = vld [vmem:[%s1 + $0x29c] sm:$0xf]
    %v735 = vld [vmem:[%s1 + $0x2a0] sm:$0xf]
    %v736 = vld [vmem:[%s1 + $0x2a4] sm:$0xf]
    %v737 = vld [vmem:[%s1 + $0x2a8] sm:$0xf]
    %v738 = vld [vmem:[%s1 + $0x2ac] sm:$0xf]
    %v739 = vld [vmem:[%s1 + $0x2b0] sm:$0xf]
    %v740 = vld [vmem:[%s1 + $0x2b4] sm:$0xf]
    %v741 = vld [vmem:[%s1 + $0x2b8] sm:$0xf]
    %v742 = vld [vmem:[%s1 + $0x2bc] sm:$0xf]
    %v743 = vld [vmem:[%s1 + $0x2c0] sm:$0xf]
    %v744 = vld [vmem:[%s1 + $0x2c4] sm:$0xf]
    %v745 = vld [vmem:[%s1 + $0x2c8] sm:$0xf]
    %v746 = vld [vmem:[%s1 + $0x2cc] sm:$0xf]
    %v747 = vld [vmem:[%s1 + $0x2d0] sm:$0xf]
    %v748 = vld [vmem:[%s1 + $0x2d4] sm:$0xf]
    %v749 = vld [vmem:[%s1 + $0x2d8] sm:$0xf]
    %v750 = vld [vmem:[%s1 + $0x2dc] sm:$0xf]
    %v751 = vld [vmem:[%s1 + $0x2e0] sm:$0xf]
    %v752 = vld [vmem:[%s1 + $0x2e4] sm:$0xf]
    %v753 = vld [vmem:[%s1 + $0x2e8] sm:$0xf]
    %v754 = vld [vmem:[%s1 + $0x2ec] sm:$0xf]
    %v755 = vld [vmem:[%s1 + $0x2f0] sm:$0xf]
    %v756 = vld [vmem:[%s1 + $0x2f4] sm:$0xf]
    %v757 = vld [vmem:[%s1 + $0x2f8] sm:$0xf]
    %v758 = vld [vmem:[%s1 + $0x2fc] sm:$0xf]
    %v759 = vld [vmem:[%s1 + $0x300] sm:$0xf]
    %v760 = vld [vmem:[%s1 + $0x304] sm:$0xf]
    %v761 = vld [vmem:[%s1 + $0x308] sm:$0xf]
    %v762 = vld [vmem:[%s1 + $0x30c] sm:$0xf]
    %v763 = vld [vmem:[%s1 + $0x310] sm:$0xf]
    %v764 = vld [vmem:[%s1 + $0x314] sm:$0xf]
    %v765 = vld [vmem:[%s1 + $0x318] sm:$0xf]
    %v766 = vld [vmem:[%s1 + $0x31c] sm:$0xf]
    %v767 = vld [vmem:[%s1 + $0x320] sm:$0xf]
    %v768 = vld [vmem:[%s1 + $0x324] sm:$0xf]
    %v769 = vld [vmem:[%s1 + $0x328] sm:$0xf]
    %v770 = vld [vmem:[%s1 + $0x32c] sm:$0xf]
    %v771 = vld [vmem:[%s1 + $0x330] sm:$0xf]
    %v772 = vld [vmem:[%s1 + $0x334] sm:$0xf]
    %v773 = vld [vmem:[%s1 + $0x338] sm:$0xf]
    %v774 = vld [vmem:[%s1 + $0x33c] sm:$0xf]
    %v775 = vld [vmem:[%s1 + $0x340] sm:$0xf]
    %v776 = vld [vmem:[%s1 + $0x344] sm:$0xf]
    %v777 = vld [vmem:[%s1 + $0x348] sm:$0xf]
    %v778 = vld [vmem:[%s1 + $0x34c] sm:$0xf]
    %v779 = vld [vmem:[%s1 + $0x350] sm:$0xf]
    %v780 = vld [vmem:[%s1 + $0x354] sm:$0xf]
    %v781 = vld [vmem:[%s1 + $0x358] sm:$0xf]
    %v782 = vld [vmem:[%s1 + $0x35c] sm:$0xf]
    %v783 = vld [vmem:[%s1 + $0x360] sm:$0xf]
    %v784 = vld [vmem:[%s1 + $0x364] sm:$0xf]
    %v785 = vld [vmem:[%s1 + $0x368] sm:$0xf]
    %v786 = vld [vmem:[%s1 + $0x36c] sm:$0xf]
    %v787 = vld [vmem:[%s1 + $0x370] sm:$0xf]
    %v788 = vld [vmem:[%s1 + $0x374] sm:$0xf]
    %v789 = vld [vmem:[%s1 + $0x378] sm:$0xf]
    %v790 = vld [vmem:[%s1 + $0x37c] sm:$0xf]
    %v791 = vld [vmem:[%s1 + $0x380] sm:$0xf]
    %v792 = vld [vmem:[%s1 + $0x384] sm:$0xf]
    %v793 = vld [vmem:[%s1 + $0x388] sm:$0xf]
    %v794 = vld [vmem:[%s1 + $0x38c] sm:$0xf]
    %v795 = vld [vmem:[%s1 + $0x390] sm:$0xf]
    %v796 = vld [vmem:[%s1 + $0x394] sm:$0xf]
    %v797 = vld [vmem:[%s1 + $0x398] sm:$0xf]
    %v798 = vld [vmem:[%s1 + $0x39c] sm:$0xf]
    %v799 = vld [vmem:[%s1 + $0x3a0] sm:$0xf]
    %v800 = vld [vmem:[%s1 + $0x3a4] sm:$0xf]
    %v801 = vld [vmem:[%s1 + $0x3a8] sm:$0xf]
    %v802 = vld [vmem:[%s1 + $0x3ac] sm:$0xf]
    %v803 = vld [vmem:[%s1 + $0x3b0] sm:$0xf]
    %v804 = vld [vmem:[%s1 + $0x3b4] sm:$0xf]
    %v805 = vld [vmem:[%s1 + $0x3b8] sm:$0xf]
    %v806 = vld [vmem:[%s1 + $0x3bc] sm:$0xf]
    %v807 = vld [vmem:[%s1 + $0x3c0] sm:$0xf]
    %v808 = vld [vmem:[%s1 + $0x3c4] sm:$0xf]
    %v809 = vld [vmem:[%s1 + $0x3c8] sm:$0xf]
    %v810 = vld [vmem:[%s1 + $0x3cc] sm:$0xf]
    %v811 = vld [vmem:[%s1 + $0x3d0] sm:$0xf]
    %v812 = vld [vmem:[%s1 + $0x3d4] sm:$0xf]
    %v813 = vld [vmem:[%s1 + $0x3d8] sm:$0xf]
    %v814 = vld [vmem:[%s1 + $0x3dc] sm:$0xf]
    %v815 = vld [vmem:[%s1 + $0x3e0] sm:$0xf]
    %v816 = vld [vmem:[%s1 + $0x3e4] sm:$0xf]
    %v817 = vld [vmem:[%s1 + $0x3e8] sm:$0xf]
    %v818 = vld [vmem:[%s1 + $0x3ec] sm:$0xf]
    %v819 = vld [vmem:[%s1 + $0x3f0] sm:$0xf]
    %v820 = vld [vmem:[%s1 + $0x3f4] sm:$0xf]
    %v821 = vld [vmem:[%s1 + $0x3f8] sm:$0xf]
    %v822 = vld [vmem:[%s1 + $0x3fc] sm:$0xf]
    %v823 = vld [vmem:[%s1 + $0x400] sm:$0xf]
    %v824 = vld [vmem:[%s1 + $0x404] sm:$0xf]
    %v825 = vld [vmem:[%s1 + $0x408] sm:$0xf]
    %v826 = vld [vmem:[%s1 + $0x40c] sm:$0xf]
    %v827 = vld [vmem:[%s1 + $0x410] sm:$0xf]
    %v828 = vld [vmem:[%s1 + $0x414] sm:$0xf]
    %v829 = vld [vmem:[%s1 + $0x418] sm:$0xf]
    %v830 = vld [vmem:[%s1 + $0x41c] sm:$0xf]
    %v831 = vld [vmem:[%s1 + $0x420] sm:$0xf]
    %v832 = vld [vmem:[%s1 + $0x424] sm:$0xf]
    %v833 = vld [vmem:[%s1 + $0x428] sm:$0xf]
    %v834 = vld [vmem:[%s1 + $0x42c] sm:$0xf]
    %v835 = vld [vmem:[%s1 + $0x430] sm:$0xf]
    %v836 = vld [vmem:[%s1 + $0x434] sm:$0xf]
    %v837 = vld [vmem:[%s1 + $0x438] sm:$0xf]
    %v838 = vld [vmem:[%s1 + $0x43c] sm:$0xf]
    %v839 = vld [vmem:[%s1 + $0x440] sm:$0xf]
    %v840 = vld [vmem:[%s1 + $0x444] sm:$0xf]
    %v841 = vld [vmem:[%s1 + $0x448] sm:$0xf]
    %v842 = vld [vmem:[%s1 + $0x44c] sm:$0xf]
    %v843 = vld [vmem:[%s1 + $0x450] sm:$0xf]
    %v844 = vld [vmem:[%s1 + $0x454] sm:$0xf]
    %v845 = vld [vmem:[%s1 + $0x458] sm:$0xf]
    %v846 = vld [vmem:[%s1 + $0x45c] sm:$0xf]
    %v847 = vld [vmem:[%s1 + $0x460] sm:$0xf]
    %v848 = vld [vmem:[%s1 + $0x464] sm:$0xf]
    %v849 = vld [vmem:[%s1 + $0x468] sm:$0xf]
    %v850 = vld [vmem:[%s1 + $0x46c] sm:$0xf]
    %v851 = vld [vmem:[%s1 + $0x470] sm:$0xf]
    %v852 = vld [vmem:[%s1 + $0x474] sm:$0xf]
    %v853 = vld [vmem:[%s1 + $0x478] sm:$0xf]
    %v854 = vld [vmem:[%s1 + $0x47c] sm:$0xf]
    %v855 = vld [vmem:[%s1 + $0x480] sm:$0xf]
    %v856 = vld [vmem:[%s1 + $0x484] sm:$0xf]
    %v857 = vld [vmem:[%s1 + $0x488] sm:$0xf]
    %v858 = vld [vmem:[%s1 + $0x48c] sm:$0xf]
    %v859 = vld [vmem:[%s1 + $0x490] sm:$0xf]
    %v860 = vld [vmem:[%s1 + $0x494] sm:$0xf]
    %v861 = vld [vmem:[%s1 + $0x498] sm:$0xf]
    %v862 = vld [vmem:[%s1 + $0x49c] sm:$0xf]
    %v863 = vld [vmem:[%s1 + $0x4a0] sm:$0xf]
    %v864 = vld [vmem:[%s1 + $0x4a4] sm:$0xf]
    %v865 = vld [vmem:[%s1 + $0x4a8] sm:$0xf]
    %v866 = vld [vmem:[%s1 + $0x4ac] sm:$0xf]
    %v867 = vld [vmem:[%s1 + $0x4b0] sm:$0xf]
    %v868 = vld [vmem:[%s1 + $0x4b4] sm:$0xf]
    %v869 = vld [vmem:[%s1 + $0x4b8] sm:$0xf]
    %v870 = vld [vmem:[%s1 + $0x4bc] sm:$0xf]
    %v871 = vld [vmem:[%s1 + $0x4c0] sm:$0xf]
    %v872 = vld [vmem:[%s1 + $0x4c4] sm:$0xf]
    %v873 = vld [vmem:[%s1 + $0x4c8] sm:$0xf]
    %v874 = vld [vmem:[%s1 + $0x4cc] sm:$0xf]
    %v875 = vld [vmem:[%s1 + $0x4d0] sm:$0xf]
    %v876 = vld [vmem:[%s1 + $0x4d4] sm:$0xf]
    %v877 = vld [vmem:[%s1 + $0x4d8] sm:$0xf]
    %v878 = vld [vmem:[%s1 + $0x4dc] sm:$0xf]
    %v879 = vld [vmem:[%s1 + $0x4e0] sm:$0xf]
    %v880 = vld [vmem:[%s1 + $0x4e4] sm:$0xf]
    %v881 = vld [vmem:[%s1 + $0x4e8] sm:$0xf]
    %v882 = vld [vmem:[%s1 + $0x4ec] sm:$0xf]
    %v883 = vld [vmem:[%s1 + $0x4f0] sm:$0xf]
    %v884 = vld [vmem:[%s1 + $0x4f4] sm:$0xf]
    %v885 = vld [vmem:[%s1 + $0x4f8] sm:$0xf]
    %v886 = vld [vmem:[%s1 + $0x4fc] sm:$0xf]
    %v887 = vld [vmem:[%s1 + $0x500] sm:$0xf]
    %v888 = vld [vmem:[%s1 + $0x504] sm:$0xf]
    %v889 = vld [vmem:[%s1 + $0x508] sm:$0xf]
    %v890 = vld [vmem:[%s1 + $0x50c] sm:$0xf]
    %v891 = vld [vmem:[%s1 + $0x510] sm:$0xf]
    %v892 = vld [vmem:[%s1 + $0x514] sm:$0xf]
    %v893 = vld [vmem:[%s1 + $0x518] sm:$0xf]
    %v894 = vld [vmem:[%s1 + $0x51c] sm:$0xf]
    %v895 = vld [vmem:[%s1 + $0x520] sm:$0xf]
    %v896 = vld [vmem:[%s1 + $0x524] sm:$0xf]
    %v897 = vld [vmem:[%s1 + $0x528] sm:$0xf]
    %v898 = vld [vmem:[%s1 + $0x52c] sm:$0xf]
    %v899 = vld [vmem:[%s1 + $0x530] sm:$0xf]
    %v900 = vld [vmem:[%s1 + $0x534] sm:$0xf]
    %v901 = vld [vmem:[%s1 + $0x538] sm:$0xf]
    %v902 = vld [vmem:[%s1 + $0x53c] sm:$0xf]
    %v903 = vld [vmem:[%s1 + $0x540] sm:$0xf]
    %v904 = vld [vmem:[%s1 + $0x544] sm:$0xf]
    %v905 = vld [vmem:[%s1 + $0x548] sm:$0xf]
    %v906 = vld [vmem:[%s1 + $0x54c] sm:$0xf]
    %v907 = vld [vmem:[%s1 + $0x550] sm:$0xf]
    %v908 = vld [vmem:[%s1 + $0x554] sm:$0xf]
    %v909 = vld [vmem:[%s1 + $0x558] sm:$0xf]
    %v910 = vld [vmem:[%s1 + $0x55c] sm:$0xf]
    %v911 = vld [vmem:[%s1 + $0x560] sm:$0xf]
    %v912 = vld [vmem:[%s1 + $0x564] sm:$0xf]
    %v913 = vld [vmem:[%s1 + $0x568] sm:$0xf]
    %v914 = vld [vmem:[%s1 + $0x56c] sm:$0xf]
    %v915 = vld [vmem:[%s1 + $0x570] sm:$0xf]
    %v916 = vld [vmem:[%s1 + $0x574] sm:$0xf]
    %v917 = vld [vmem:[%s1 + $0x578] sm:$0xf]
    %v918 = vld [vmem:[%s1 + $0x57c] sm:$0xf]
    %v919 = vld [vmem:[%s1 + $0x580] sm:$0xf]
    %v920 = vld [vmem:[%s1 + $0x584] sm:$0xf]
    %v921 = vld [vmem:[%s1 + $0x588] sm:$0xf]
    %v922 = vld [vmem:[%s1 + $0x58c] sm:$0xf]
    %v923 = vld [vmem:[%s1 + $0x590] sm:$0xf]
    %v924 = vld [vmem:[%s1 + $0x594] sm:$0xf]
    %v925 = vld [vmem:[%s1 + $0x598] sm:$0xf]
    %v926 = vld [vmem:[%s1 + $0x59c] sm:$0xf]
    %v927 = vld [vmem:[%s1 + $0x5a0] sm:$0xf]
    %v928 = vld [vmem:[%s1 + $0x5a4] sm:$0xf]
    %v929 = vld [vmem:[%s1 + $0x5a8] sm:$0xf]
    %v930 = vld [vmem:[%s1 + $0x5ac] sm:$0xf]
    %v931 = vld [vmem:[%s1 + $0x5b0] sm:$0xf]
    %v932 = vld [vmem:[%s1 + $0x5b4] sm:$0xf]
    %v933 = vld [vmem:[%s1 + $0x5b8] sm:$0xf]
    %v934 = vld [vmem:[%s1 + $0x5bc] sm:$0xf]
    %v935 = vld [vmem:[%s1 + $0x5c0] sm:$0xf]
    %v936 = vld [vmem:[%s1 + $0x5c4] sm:$0xf]
    %v937 = vld [vmem:[%s1 + $0x5c8] sm:$0xf]
    %v938 = vld [vmem:[%s1 + $0x5cc] sm:$0xf]
    %v939 = vld [vmem:[%s1 + $0x5d0] sm:$0xf]
    %v940 = vld [vmem:[%s1 + $0x5d4] sm:$0xf]
    %v941 = vld [vmem:[%s1 + $0x5d8] sm:$0xf]
    %v942 = vld [vmem:[%s1 + $0x5dc] sm:$0xf]
    %v943 = vld [vmem:[%s1 + $0x5e0] sm:$0xf]
    %v944 = vld [vmem:[%s1 + $0x5e4] sm:$0xf]
    %v945 = vld [vmem:[%s1 + $0x5e8] sm:$0xf]
    %v946 = vld [vmem:[%s1 + $0x5ec] sm:$0xf]
    %v947 = vld [vmem:[%s1 + $0x5f0] sm:$0xf]
    %v948 = vld [vmem:[%s1 + $0x5f4] sm:$0xf]
    %v949 = vld [vmem:[%s1 + $0x5f8] sm:$0xf]
    %v950 = vld [vmem:[%s1 + $0x5fc] sm:$0xf]
    %v951 = vld [vmem:[%s1 + $0x600] sm:$0xf]
    %v952 = vld [vmem:[%s1 + $0x604] sm:$0xf]
    %v953 = vld [vmem:[%s1 + $0x608] sm:$0xf]
    %v954 = vld [vmem:[%s1 + $0x60c] sm:$0xf]
    %v955 = vld [vmem:[%s1 + $0x610] sm:$0xf]
    %v956 = vld [vmem:[%s1 + $0x614] sm:$0xf]
    %v957 = vld [vmem:[%s1 + $0x618] sm:$0xf]
    %v958 = vld [vmem:[%s1 + $0x61c] sm:$0xf]
    %v959 = vld [vmem:[%s1 + $0x620] sm:$0xf]
    %v960 = vld [vmem:[%s1 + $0x624] sm:$0xf]
    %v961 = vld [vmem:[%s1 + $0x628] sm:$0xf]
    %v962 = vld [vmem:[%s1 + $0x62c] sm:$0xf]
    %v963 = vld [vmem:[%s1 + $0x630] sm:$0xf]
    %v964 = vld [vmem:[%s1 + $0x634] sm:$0xf]
    %v965 = vld [vmem:[%s1 + $0x638] sm:$0xf]
    %v966 = vld [vmem:[%s1 + $0x63c] sm:$0xf]
    %v967 = vld [vmem:[%s1 + $0x640] sm:$0xf]
    %v968 = vld [vmem:[%s1 + $0x644] sm:$0xf]
    %v969 = vld [vmem:[%s1 + $0x648] sm:$0xf]
    %v970 = vld [vmem:[%s1 + $0x64c] sm:$0xf]
    %v971 = vld [vmem:[%s1 + $0x650] sm:$0xf]
    %v972 = vld [vmem:[%s1 + $0x654] sm:$0xf]
    %v973 = vld [vmem:[%s1 + $0x658] sm:$0xf]
    %v974 = vld [vmem:[%s1 + $0x65c] sm:$0xf]
    %v975 = vld [vmem:[%s1 + $0x660] sm:$0xf]
    %v976 = vld [vmem:[%s1 + $0x664] sm:$0xf]
    %v977 = vld [vmem:[%s1 + $0x668] sm:$0xf]
    %v978 = vld [vmem:[%s1 + $0x66c] sm:$0xf]
    %v979 = vld [vmem:[%s1 + $0x670] sm:$0xf]
    %v980 = vld [vmem:[%s1 + $0x674] sm:$0xf]
    %v981 = vld [vmem:[%s1 + $0x678] sm:$0xf]
    %v982 = vld [vmem:[%s1 + $0x67c] sm:$0xf]
    %v983 = vld [vmem:[%s1 + $0x680] sm:$0xf]
    %v984 = vld [vmem:[%s1 + $0x684] sm:$0xf]
    %v985 = vld [vmem:[%s1 + $0x688] sm:$0xf]
    %v986 = vld [vmem:[%s1 + $0x68c] sm:$0xf]
    %v987 = vld [vmem:[%s1 + $0x690] sm:$0xf]
    %v988 = vld [vmem:[%s1 + $0x694] sm:$0xf]
    %v989 = vld [vmem:[%s1 + $0x698] sm:$0xf]
    %v990 = vld [vmem:[%s1 + $0x69c] sm:$0xf]
    %v991 = vld [vmem:[%s1 + $0x6a0] sm:$0xf]
    %v992 = vld [vmem:[%s1 + $0x6a4] sm:$0xf]
    %v993 = vld [vmem:[%s1 + $0x6a8] sm:$0xf]
    %v994 = vld [vmem:[%s1 + $0x6ac] sm:$0xf]
    %v995 = vld [vmem:[%s1 + $0x6b0] sm:$0xf]
    %v996 = vld [vmem:[%s1 + $0x6b4] sm:$0xf]
    %v997 = vld [vmem:[%s1 + $0x6b8] sm:$0xf]
    %v998 = vld [vmem:[%s1 + $0x6bc] sm:$0xf]
    %v999 = vld [vmem:[%s1 + $0x6c0] sm:$0xf]
    %v1000 = vld [vmem:[%s1 + $0x6c4] sm:$0xf]
    %v1001 = vld [vmem:[%s1 + $0x6c8] sm:$0xf]
    %v1002 = vld [vmem:[%s1 + $0x6cc] sm:$0xf]
    %v1003 = vld [vmem:[%s1 + $0x6d0] sm:$0xf]
    %v1004 = vld [vmem:[%s1 + $0x6d4] sm:$0xf]
    %v1005 = vld [vmem:[%s1 + $0x6d8] sm:$0xf]
    %v1006 = vld [vmem:[%s1 + $0x6dc] sm:$0xf]
    %v1007 = vld [vmem:[%s1 + $0x6e0] sm:$0xf]
    %v1008 = vld [vmem:[%s1 + $0x6e4] sm:$0xf]
    %v1009 = vld [vmem:[%s1 + $0x6e8] sm:$0xf]
    %v1010 = vld [vmem:[%s1 + $0x6ec] sm:$0xf]
    %v1011 = vld [vmem:[%s1 + $0x6f0] sm:$0xf]
    %v1012 = vld [vmem:[%s1 + $0x6f4] sm:$0xf]
    %v1013 = vld [vmem:[%s1 + $0x6f8] sm:$0xf]
    %v1014 = vld [vmem:[%s1 + $0x6fc] sm:$0xf]
    %v1015 = vld [vmem:[%s1 + $0x700] sm:$0xf]
    %v1016 = vld [vmem:[%s1 + $0x704] sm:$0xf]
    %v1017 = vld [vmem:[%s1 + $0x708] sm:$0xf]
    %v1018 = vld [vmem:[%s1 + $0x70c] sm:$0xf]
    %v1019 = vld [vmem:[%s1 + $0x710] sm:$0xf]
    %v1020 = vld [vmem:[%s1 + $0x714] sm:$0xf]
    %v1021 = vld [vmem:[%s1 + $0x718] sm:$0xf]
    %v1022 = vld [vmem:[%s1 + $0x71c] sm:$0xf]
    %v1023 = vld [vmem:[%s1 + $0x720] sm:$0xf]
    %v1024 = vld [vmem:[%s1 + $0x724] sm:$0xf]
    %v1025 = vld [vmem:[%s1 + $0x728] sm:$0xf]
    %v1026 = vld [vmem:[%s1 + $0x72c] sm:$0xf]
    %v1027 = vld [vmem:[%s1 + $0x730] sm:$0xf]
    %v1028 = vld [vmem:[%s1 + $0x734] sm:$0xf]
    %v1029 = vld [vmem:[%s1 + $0x738] sm:$0xf]
    %v1030 = vld [vmem:[%s1 + $0x73c] sm:$0xf]
    %v1031 = vld [vmem:[%s1 + $0x740] sm:$0xf]
    %v1032 = vld [vmem:[%s1 + $0x744] sm:$0xf]
    %v1033 = vld [vmem:[%s1 + $0x748] sm:$0xf]
    %v1034 = vld [vmem:[%s1 + $0x74c] sm:$0xf]
    %v1035 = vld [vmem:[%s1 + $0x750] sm:$0xf]
    %v1036 = vld [vmem:[%s1 + $0x754] sm:$0xf]
    %v1037 = vld [vmem:[%s1 + $0x758] sm:$0xf]
    %v1038 = vld [vmem:[%s1 + $0x75c] sm:$0xf]
    %v1039 = vld [vmem:[%s1 + $0x760] sm:$0xf]
    %v1040 = vld [vmem:[%s1 + $0x764] sm:$0xf]
    %v1041 = vld [vmem:[%s1 + $0x768] sm:$0xf]
    %v1042 = vld [vmem:[%s1 + $0x76c] sm:$0xf]
    %v1043 = vld [vmem:[%s1 + $0x770] sm:$0xf]
    %v1044 = vld [vmem:[%s1 + $0x774] sm:$0xf]
    %v1045 = vld [vmem:[%s1 + $0x778] sm:$0xf]
    %v1046 = vld [vmem:[%s1 + $0x77c] sm:$0xf]
    %v1047 = vld [vmem:[%s1 + $0x780] sm:$0xf]
    %v1048 = vld [vmem:[%s1 + $0x784] sm:$0xf]
    %v1049 = vld [vmem:[%s1 + $0x788] sm:$0xf]
    %v1050 = vld [vmem:[%s1 + $0x78c] sm:$0xf]
    %v1051 = vld [vmem:[%s1 + $0x790] sm:$0xf]
    %v1052 = vld [vmem:[%s1 + $0x794] sm:$0xf]
    %v1053 = vld [vmem:[%s1 + $0x798] sm:$0xf]
    %v1054 = vld [vmem:[%s1 + $0x79c] sm:$0xf]
    %v1055 = vld [vmem:[%s1 + $0x7a0] sm:$0xf]
    %v1056 = vld [vmem:[%s1 + $0x7a4] sm:$0xf]
    %v1057 = vld [vmem:[%s1 + $0x7a8] sm:$0xf]
    %v1058 = vld [vmem:[%s1 + $0x7ac] sm:$0xf]
    %v1059 = vld [vmem:[%s1 + $0x7b0] sm:$0xf]
    %v1060 = vld [vmem:[%s1 + $0x7b4] sm:$0xf]
    %v1061 = vld [vmem:[%s1 + $0x7b8] sm:$0xf]
    %v1062 = vld [vmem:[%s1 + $0x7bc] sm:$0xf]
    %v1063 = vld [vmem:[%s1 + $0x7c0] sm:$0xf]
    %v1064 = vld [vmem:[%s1 + $0x7c4] sm:$0xf]
    %v1065 = vld [vmem:[%s1 + $0x7c8] sm:$0xf]
    %v1066 = vld [vmem:[%s1 + $0x7cc] sm:$0xf]
    %v1067 = vld [vmem:[%s1 + $0x7d0] sm:$0xf]
    %v1068 = vld [vmem:[%s1 + $0x7d4] sm:$0xf]
    %v1069 = vld [vmem:[%s1 + $0x7d8] sm:$0xf]
    %v1070 = vld [vmem:[%s1 + $0x7dc] sm:$0xf]
    %v1071 = vld [vmem:[%s1 + $0x7e0] sm:$0xf]
    %v1072 = vld [vmem:[%s1 + $0x7e4] sm:$0xf]
    %v1073 = vld [vmem:[%s1 + $0x7e8] sm:$0xf]
    %v1074 = vld [vmem:[%s1 + $0x7ec] sm:$0xf]
    %v1075 = vld [vmem:[%s1 + $0x7f0] sm:$0xf]
    %v1076 = vld [vmem:[%s1 + $0x7f4] sm:$0xf]
    %v1077 = vld [vmem:[%s1 + $0x7f8] sm:$0xf]
    %v1078 = vld [vmem:[%s1 + $0x7fc] sm:$0xf]
    %v1079 = vld [vmem:[%s1 + $0x800] sm:$0xf]
    %v1080 = vld [vmem:[%s1 + $0x804] sm:$0xf]
    %v1081 = vld [vmem:[%s1 + $0x808] sm:$0xf]
    %v1082 = vld [vmem:[%s1 + $0x80c] sm:$0xf]
    %v1083 = vld [vmem:[%s1 + $0x810] sm:$0xf]
    %v1084 = vld [vmem:[%s1 + $0x814] sm:$0xf]
    %v1085 = vld [vmem:[%s1 + $0x818] sm:$0xf]
    %v1086 = vld [vmem:[%s1 + $0x81c] sm:$0xf]
    %v1087 = vld [vmem:[%s1 + $0x820] sm:$0xf]
    %v1088 = vld [vmem:[%s1 + $0x824] sm:$0xf]
    %v1089 = vld [vmem:[%s1 + $0x828] sm:$0xf]
    %v1090 = vld [vmem:[%s1 + $0x82c] sm:$0xf]
    %v1091 = vld [vmem:[%s1 + $0x830] sm:$0xf]
    %v1092 = vld [vmem:[%s1 + $0x834] sm:$0xf]
    %v1093 = vld [vmem:[%s1 + $0x838] sm:$0xf]
    %v1094 = vld [vmem:[%s1 + $0x83c] sm:$0xf]
    %v1095 = vld [vmem:[%s1 + $0x840] sm:$0xf]
    %v1096 = vld [vmem:[%s1 + $0x844] sm:$0xf]
    %v1097 = vld [vmem:[%s1 + $0x848] sm:$0xf]
    %v1098 = vld [vmem:[%s1 + $0x84c] sm:$0xf]
    %v1099 = vld [vmem:[%s1 + $0x850] sm:$0xf]
    %v1100 = vld [vmem:[%s1 + $0x854] sm:$0xf]
    %v1101 = vld [vmem:[%s1 + $0x858] sm:$0xf]
    %v1102 = vld [vmem:[%s1 + $0x85c] sm:$0xf]
    %v1103 = vld [vmem:[%s1 + $0x860] sm:$0xf]
    %v1104 = vld [vmem:[%s1 + $0x864] sm:$0xf]
    %v1105 = vld [vmem:[%s1 + $0x868] sm:$0xf]
    %v1106 = vld [vmem:[%s1 + $0x86c] sm:$0xf]
    %v1107 = vld [vmem:[%s1 + $0x870] sm:$0xf]
    %v1108 = vld [vmem:[%s1 + $0x874] sm:$0xf]
    %v1109 = vld [vmem:[%s1 + $0x878] sm:$0xf]
    %v1110 = vld [vmem:[%s1 + $0x87c] sm:$0xf]
    %v1111 = vld [vmem:[%s1 + $0x880] sm:$0xf]
    %v1112 = vld [vmem:[%s1 + $0x884] sm:$0xf]
    %v1113 = vld [vmem:[%s1 + $0x888] sm:$0xf]
    %v1114 = vld [vmem:[%s1 + $0x88c] sm:$0xf]
    %v1115 = vld [vmem:[%s1 + $0x890] sm:$0xf]
    %v1116 = vld [vmem:[%s1 + $0x894] sm:$0xf]
    %v1117 = vld [vmem:[%s1 + $0x898] sm:$0xf]
    %v1118 = vld [vmem:[%s1 + $0x89c] sm:$0xf]
    %v1119 = vld [vmem:[%s1 + $0x8a0] sm:$0xf]
    %v1120 = vld [vmem:[%s1 + $0x8a4] sm:$0xf]
    %v1121 = vld [vmem:[%s1 + $0x8a8] sm:$0xf]
    %v1122 = vld [vmem:[%s1 + $0x8ac] sm:$0xf]
    %v1123 = vld [vmem:[%s1 + $0x8b0] sm:$0xf]
    %v1124 = vld [vmem:[%s1 + $0x8b4] sm:$0xf]
    %v1125 = vld [vmem:[%s1 + $0x8b8] sm:$0xf]
    %v1126 = vld [vmem:[%s1 + $0x8bc] sm:$0xf]
    %v1127 = vld [vmem:[%s1 + $0x8c0] sm:$0xf]
    %v1128 = vld [vmem:[%s1 + $0x8c4] sm:$0xf]
    %v1129 = vld [vmem:[%s1 + $0x8c8] sm:$0xf]
    %v1130 = vld [vmem:[%s1 + $0x8cc] sm:$0xf]
    %v1131 = vld [vmem:[%s1 + $0x8d0] sm:$0xf]
    %v1132 = vld [vmem:[%s1 + $0x8d4] sm:$0xf]
    %v1133 = vld [vmem:[%s1 + $0x8d8] sm:$0xf]
    %v1134 = vld [vmem:[%s1 + $0x8dc] sm:$0xf]
    %v1135 = vld [vmem:[%s1 + $0x8e0] sm:$0xf]
    %v1136 = vld [vmem:[%s1 + $0x8e4] sm:$0xf]
    %v1137 = vld [vmem:[%s1 + $0x8e8] sm:$0xf]
    %v1138 = vld [vmem:[%s1 + $0x8ec] sm:$0xf]
    %v1139 = vld [vmem:[%s1 + $0x8f0] sm:$0xf]
    %v1140 = vld [vmem:[%s1 + $0x8f4] sm:$0xf]
    %v1141 = vld [vmem:[%s1 + $0x8f8] sm:$0xf]
    %v1142 = vld [vmem:[%s1 + $0x8fc] sm:$0xf]
    %v1143 = vld [vmem:[%s1 + $0x900] sm:$0xf]
    %v1144 = vld [vmem:[%s1 + $0x904] sm:$0xf]
    %v1145 = vld [vmem:[%s1 + $0x908] sm:$0xf]
    %v1146 = vld [vmem:[%s1 + $0x90c] sm:$0xf]
    %v1147 = vld [vmem:[%s1 + $0x910] sm:$0xf]
    %v1148 = vld [vmem:[%s1 + $0x914] sm:$0xf]
    %v1149 = vld [vmem:[%s1 + $0x918] sm:$0xf]
    %v1150 = vld [vmem:[%s1 + $0x91c] sm:$0xf]
    %v1151 = vld [vmem:[%s1 + $0x920] sm:$0xf]
    %v1152 = vld [vmem:[%s1 + $0x924] sm:$0xf]
    %v1153 = vld [vmem:[%s1 + $0x928] sm:$0xf]
    %v1154 = vld [vmem:[%s1 + $0x92c] sm:$0xf]
    %v1155 = vld [vmem:[%s1 + $0x930] sm:$0xf]
    %v1156 = vld [vmem:[%s1 + $0x934] sm:$0xf]
    %v1157 = vld [vmem:[%s1 + $0x938] sm:$0xf]
    %v1158 = vld [vmem:[%s1 + $0x93c] sm:$0xf]
    %v1159 = vld [vmem:[%s1 + $0x940] sm:$0xf]
    %v1160 = vld [vmem:[%s1 + $0x944] sm:$0xf]
    %v1161 = vld [vmem:[%s1 + $0x948] sm:$0xf]
    %v1162 = vld [vmem:[%s1 + $0x94c] sm:$0xf]
    %v1163 = vld [vmem:[%s1 + $0x950] sm:$0xf]
    %v1164 = vld [vmem:[%s1 + $0x954] sm:$0xf]
    %v1165 = vld [vmem:[%s1 + $0x958] sm:$0xf]
    %v1166 = vld [vmem:[%s1 + $0x95c] sm:$0xf]
    %v1167 = vld [vmem:[%s1 + $0x960] sm:$0xf]
    %v1168 = vld [vmem:[%s1 + $0x964] sm:$0xf]
    %v1169 = vld [vmem:[%s1 + $0x968] sm:$0xf]
    %v1170 = vld [vmem:[%s1 + $0x96c] sm:$0xf]
    %v1171 = vld [vmem:[%s1 + $0x970] sm:$0xf]
    %v1172 = vld [vmem:[%s1 + $0x974] sm:$0xf]
    %v1173 = vld [vmem:[%s1 + $0x978] sm:$0xf]
    %v1174 = vld [vmem:[%s1 + $0x97c] sm:$0xf]
    %v1175 = vld [vmem:[%s1 + $0x980] sm:$0xf]
    %v1176 = vld [vmem:[%s1 + $0x984] sm:$0xf]
    %v1177 = vld [vmem:[%s1 + $0x988] sm:$0xf]
    %v1178 = vld [vmem:[%s1 + $0x98c] sm:$0xf]
    %v1179 = vld [vmem:[%s1 + $0x990] sm:$0xf]
    %v1180 = vld [vmem:[%s1 + $0x994] sm:$0xf]
    %v1181 = vld [vmem:[%s1 + $0x998] sm:$0xf]
    %v1182 = vld [vmem:[%s1 + $0x99c] sm:$0xf]
    %v1183 = vld [vmem:[%s1 + $0x9a0] sm:$0xf]
    %v1184 = vld [vmem:[%s1 + $0x9a4] sm:$0xf]
    %v1185 = vld [vmem:[%s1 + $0x9a8] sm:$0xf]
    %v1186 = vld [vmem:[%s1 + $0x9ac] sm:$0xf]
    %v1187 = vld [vmem:[%s1 + $0x9b0] sm:$0xf]
    %v1188 = vld [vmem:[%s1 + $0x9b4] sm:$0xf]
    %v1189 = vld [vmem:[%s1 + $0x9b8] sm:$0xf]
    %v1190 = vld [vmem:[%s1 + $0x9bc] sm:$0xf]
    %v1191 = vld [vmem:[%s1 + $0x9c0] sm:$0xf]
    %v1192 = vld [vmem:[%s1 + $0x9c4] sm:$0xf]
    %v1193 = vld [vmem:[%s1 + $0x9c8] sm:$0xf]
    %v1194 = vld [vmem:[%s1 + $0x9cc] sm:$0xf]
    %v1195 = vld [vmem:[%s1 + $0x9d0] sm:$0xf]
    %v1196 = vld [vmem:[%s1 + $0x9d4] sm:$0xf]
    %v1197 = vld [vmem:[%s1 + $0x9d8] sm:$0xf]
    %v1198 = vld [vmem:[%s1 + $0x9dc] sm:$0xf]
    %v1199 = vld [vmem:[%s1 + $0x9e0] sm:$0xf]
    %v1200 = vld [vmem:[%s1 + $0x9e4] sm:$0xf]
    %v1201 = vld [vmem:[%s1 + $0x9e8] sm:$0xf]
    %v1202 = vld [vmem:[%s1 + $0x9ec] sm:$0xf]
    %v1203 = vld [vmem:[%s1 + $0x9f0] sm:$0xf]
    %v1204 = vld [vmem:[%s1 + $0x9f4] sm:$0xf]
    %v1205 = vld [vmem:[%s1 + $0x9f8] sm:$0xf]
    %v1206 = vld [vmem:[%s1 + $0x9fc] sm:$0xf]
    %v1207 = vld [vmem:[%s1 + $0xa00] sm:$0xf]
    %v1208 = vld [vmem:[%s1 + $0xa04] sm:$0xf]
    %v1209 = vld [vmem:[%s1 + $0xa08] sm:$0xf]
    %v1210 = vld [vmem:[%s1 + $0xa0c] sm:$0xf]
    %v1211 = vld [vmem:[%s1 + $0xa10] sm:$0xf]
    %v1212 = vld [vmem:[%s1 + $0xa14] sm:$0xf]
    %v1213 = vld [vmem:[%s1 + $0xa18] sm:$0xf]
    %v1214 = vld [vmem:[%s1 + $0xa1c] sm:$0xf]
    %v1215 = vld [vmem:[%s1 + $0xa20] sm:$0xf]
    %v1216 = vld [vmem:[%s1 + $0xa24] sm:$0xf]
    %v1217 = vld [vmem:[%s1 + $0xa28] sm:$0xf]
    %v1218 = vld [vmem:[%s1 + $0xa2c] sm:$0xf]
    %v1219 = vld [vmem:[%s1 + $0xa30] sm:$0xf]
    %v1220 = vld [vmem:[%s1 + $0xa34] sm:$0xf]
    %v1221 = vld [vmem:[%s1 + $0xa38] sm:$0xf]
    %v1222 = vld [vmem:[%s1 + $0xa3c] sm:$0xf]
    %v1223 = vld [vmem:[%s1 + $0xa40] sm:$0xf]
    %v1224 = vld [vmem:[%s1 + $0xa44] sm:$0xf]
    %v1225 = vld [vmem:[%s1 + $0xa48] sm:$0xf]
    %v1226 = vld [vmem:[%s1 + $0xa4c] sm:$0xf]
    %v1227 = vld [vmem:[%s1 + $0xa50] sm:$0xf]
    %v1228 = vld [vmem:[%s1 + $0xa54] sm:$0xf]
    %v1229 = vld [vmem:[%s1 + $0xa58] sm:$0xf]
    %v1230 = vld [vmem:[%s1 + $0xa5c] sm:$0xf]
    %v1231 = vld [vmem:[%s1 + $0xa60] sm:$0xf]
    %v1232 = vld [vmem:[%s1 + $0xa64] sm:$0xf]
    %v1233 = vld [vmem:[%s1 + $0xa68] sm:$0xf]
    %v1234 = vld [vmem:[%s1 + $0xa6c] sm:$0xf]
    %v1235 = vld [vmem:[%s1 + $0xa70] sm:$0xf]
    %v1236 = vld [vmem:[%s1 + $0xa74] sm:$0xf]
    %v1237 = vld [vmem:[%s1 + $0xa78] sm:$0xf]
    %v1238 = vld [vmem:[%s1 + $0xa7c] sm:$0xf]
    %v1239 = vld [vmem:[%s1 + $0xa80] sm:$0xf]
    %v1240 = vld [vmem:[%s1 + $0xa84] sm:$0xf]
    %v1241 = vld [vmem:[%s1 + $0xa88] sm:$0xf]
    %v1242 = vld [vmem:[%s1 + $0xa8c] sm:$0xf]
    %v1243 = vld [vmem:[%s1 + $0xa90] sm:$0xf]
    %v1244 = vld [vmem:[%s1 + $0xa94] sm:$0xf]
    %v1245 = vld [vmem:[%s1 + $0xa98] sm:$0xf]
    %v1246 = vld [vmem:[%s1 + $0xa9c] sm:$0xf]
    %v1247 = vld [vmem:[%s1 + $0xaa0] sm:$0xf]
    %v1248 = vld [vmem:[%s1 + $0xaa4] sm:$0xf]
    %v1249 = vld [vmem:[%s1 + $0xaa8] sm:$0xf]
    %v1250 = vld [vmem:[%s1 + $0xaac] sm:$0xf]
    %v1251 = vld [vmem:[%s1 + $0xab0] sm:$0xf]
    %v1252 = vld [vmem:[%s1 + $0xab4] sm:$0xf]
    %v1253 = vld [vmem:[%s1 + $0xab8] sm:$0xf]
    %v1254 = vld [vmem:[%s1 + $0xabc] sm:$0xf]
    %v1255 = vld [vmem:[%s1 + $0xac0] sm:$0xf]
    %v1256 = vld [vmem:[%s1 + $0xac4] sm:$0xf]
    %v1257 = vld [vmem:[%s1 + $0xac8] sm:$0xf]
    %v1258 = vld [vmem:[%s1 + $0xacc] sm:$0xf]
    %v1259 = vld [vmem:[%s1 + $0xad0] sm:$0xf]
    %v1260 = vld [vmem:[%s1 + $0xad4] sm:$0xf]
    %v1261 = vld [vmem:[%s1 + $0xad8] sm:$0xf]
    %v1262 = vld [vmem:[%s1 + $0xadc] sm:$0xf]
    %v1263 = vld [vmem:[%s1 + $0xae0] sm:$0xf]
    %v1264 = vld [vmem:[%s1 + $0xae4] sm:$0xf]
    %v1265 = vld [vmem:[%s1 + $0xae8] sm:$0xf]
    %v1266 = vld [vmem:[%s1 + $0xaec] sm:$0xf]
    %v1267 = vld [vmem:[%s1 + $0xaf0] sm:$0xf]
    %v1268 = vld [vmem:[%s1 + $0xaf4] sm:$0xf]
    %v1269 = vld [vmem:[%s1 + $0xaf8] sm:$0xf]
    %v1270 = vld [vmem:[%s1 + $0xafc] sm:$0xf]
    %v1271 = vld [vmem:[%s1 + $0xb00] sm:$0xf]
    %v1272 = vld [vmem:[%s1 + $0xb04] sm:$0xf]
    %v1273 = vld [vmem:[%s1 + $0xb08] sm:$0xf]
    %v1274 = vld [vmem:[%s1 + $0xb0c] sm:$0xf]
    %v1275 = vld [vmem:[%s1 + $0xb10] sm:$0xf]
    %v1276 = vld [vmem:[%s1 + $0xb14] sm:$0xf]
    %v1277 = vld [vmem:[%s1 + $0xb18] sm:$0xf]
    %v1278 = vld [vmem:[%s1 + $0xb1c] sm:$0xf]
    %v1279 = vld [vmem:[%s1 + $0xb20] sm:$0xf]
    %v1280 = vld [vmem:[%s1 + $0xb24] sm:$0xf]
    %v1281 = vld [vmem:[%s1 + $0xb28] sm:$0xf]
    %v1282 = vld [vmem:[%s1 + $0xb2c] sm:$0xf]
    %v1283 = vld [vmem:[%s1 + $0xb30] sm:$0xf]
    %v1284 = vld [vmem:[%s1 + $0xb34] sm:$0xf]
    %v1285 = vld [vmem:[%s1 + $0xb38] sm:$0xf]
    %v1286 = vld [vmem:[%s1 + $0xb3c] sm:$0xf]
    %v1287 = vld [vmem:[%s1 + $0xb40] sm:$0xf]
    %v1288 = vld [vmem:[%s1 + $0xb44] sm:$0xf]
    %v1289 = vld [vmem:[%s1 + $0xb48] sm:$0xf]
    %v1290 = vld [vmem:[%s1 + $0xb4c] sm:$0xf]
    %v1291 = vld [vmem:[%s1 + $0xb50] sm:$0xf]
    %v1292 = vld [vmem:[%s1 + $0xb54] sm:$0xf]
    %v1293 = vld [vmem:[%s1 + $0xb58] sm:$0xf]
    %v1294 = vld [vmem:[%s1 + $0xb5c] sm:$0xf]
    %v1295 = vld [vmem:[%s1 + $0xb60] sm:$0xf]
    %v1296 = vld [vmem:[%s1 + $0xb64] sm:$0xf]
    %v1297 = vld [vmem:[%s1 + $0xb68] sm:$0xf]
    %v1298 = vld [vmem:[%s1 + $0xb6c] sm:$0xf]
    %v1299 = vld [vmem:[%s1 + $0xb70] sm:$0xf]
    %v1300 = vld [vmem:[%s1 + $0xb74] sm:$0xf]
    %v1301 = vld [vmem:[%s1 + $0xb78] sm:$0xf]
    %v1302 = vld [vmem:[%s1 + $0xb7c] sm:$0xf]
    %v1303 = vld [vmem:[%s1 + $0xb80] sm:$0xf]
    %v1304 = vld [vmem:[%s1 + $0xb84] sm:$0xf]
    %v1305 = vld [vmem:[%s1 + $0xb88] sm:$0xf]
    %v1306 = vld [vmem:[%s1 + $0xb8c] sm:$0xf]
    %v1307 = vld [vmem:[%s1 + $0xb90] sm:$0xf]
    %v1308 = vld [vmem:[%s1 + $0xb94] sm:$0xf]
    %v1309 = vld [vmem:[%s1 + $0xb98] sm:$0xf]
    %v1310 = vld [vmem:[%s1 + $0xb9c] sm:$0xf]
    %v1311 = vld [vmem:[%s1 + $0xba0] sm:$0xf]
    %v1312 = vld [vmem:[%s1 + $0xba4] sm:$0xf]
    %v1313 = vld [vmem:[%s1 + $0xba8] sm:$0xf]
    %v1314 = vld [vmem:[%s1 + $0xbac] sm:$0xf]
    %v1315 = vld [vmem:[%s1 + $0xbb0] sm:$0xf]
    %v1316 = vld [vmem:[%s1 + $0xbb4] sm:$0xf]
    %v1317 = vld [vmem:[%s1 + $0xbb8] sm:$0xf]
    %v1318 = vld [vmem:[%s1 + $0xbbc] sm:$0xf]
    %v1319 = vld [vmem:[%s1 + $0xbc0] sm:$0xf]
    %v1320 = vld [vmem:[%s1 + $0xbc4] sm:$0xf]
    %v1321 = vld [vmem:[%s1 + $0xbc8] sm:$0xf]
    %v1322 = vld [vmem:[%s1 + $0xbcc] sm:$0xf]
    %v1323 = vld [vmem:[%s1 + $0xbd0] sm:$0xf]
    %v1324 = vld [vmem:[%s1 + $0xbd4] sm:$0xf]
    %v1325 = vld [vmem:[%s1 + $0xbd8] sm:$0xf]
    %v1326 = vld [vmem:[%s1 + $0xbdc] sm:$0xf]
    %v1327 = vld [vmem:[%s1 + $0xbe0] sm:$0xf]
    %v1328 = vld [vmem:[%s1 + $0xbe4] sm:$0xf]
    %v1329 = vld [vmem:[%s1 + $0xbe8] sm:$0xf]
    %v1330 = vld [vmem:[%s1 + $0xbec] sm:$0xf]
    %v1331 = vld [vmem:[%s1 + $0xbf0] sm:$0xf]
    %v1332 = vld [vmem:[%s1 + $0xbf4] sm:$0xf]
    %v1333 = vld [vmem:[%s1 + $0xbf8] sm:$0xf]
    %v1334 = vld [vmem:[%s1 + $0xbfc] sm:$0xf]
    %v1335 = vld [vmem:[%s1 + $0xc00] sm:$0xf]
    %v1336 = vld [vmem:[%s1 + $0xc04] sm:$0xf]
    %v1337 = vld [vmem:[%s1 + $0xc08] sm:$0xf]
    %v1338 = vld [vmem:[%s1 + $0xc0c] sm:$0xf]
    %v1339 = vld [vmem:[%s1 + $0xc10] sm:$0xf]
    %v1340 = vld [vmem:[%s1 + $0xc14] sm:$0xf]
    %v1341 = vld [vmem:[%s1 + $0xc18] sm:$0xf]
    %v1342 = vld [vmem:[%s1 + $0xc1c] sm:$0xf]
    %v1343 = vld [vmem:[%s1 + $0xc20] sm:$0xf]
    %v1344 = vld [vmem:[%s1 + $0xc24] sm:$0xf]
    %v1345 = vld [vmem:[%s1 + $0xc28] sm:$0xf]
    %v1346 = vld [vmem:[%s1 + $0xc2c] sm:$0xf]
    %v1347 = vld [vmem:[%s1 + $0xc30] sm:$0xf]
    %v1348 = vld [vmem:[%s1 + $0xc34] sm:$0xf]
    %v1349 = vld [vmem:[%s1 + $0xc38] sm:$0xf]
    %v1350 = vld [vmem:[%s1 + $0xc3c] sm:$0xf]
    %v1351 = vld [vmem:[%s1 + $0xc40] sm:$0xf]
    %v1352 = vld [vmem:[%s1 + $0xc44] sm:$0xf]
    %v1353 = vld [vmem:[%s1 + $0xc48] sm:$0xf]
    %v1354 = vld [vmem:[%s1 + $0xc4c] sm:$0xf]
    %v1355 = vld [vmem:[%s1 + $0xc50] sm:$0xf]
    %v1356 = vld [vmem:[%s1 + $0xc54] sm:$0xf]
    %v1357 = vld [vmem:[%s1 + $0xc58] sm:$0xf]
    %v1358 = vld [vmem:[%s1 + $0xc5c] sm:$0xf]
    %v1359 = vld [vmem:[%s1 + $0xc60] sm:$0xf]
    %v1360 = vld [vmem:[%s1 + $0xc64] sm:$0xf]
    %v1361 = vld [vmem:[%s1 + $0xc68] sm:$0xf]
    %v1362 = vld [vmem:[%s1 + $0xc6c] sm:$0xf]
    %v1363 = vld [vmem:[%s1 + $0xc70] sm:$0xf]
    %v1364 = vld [vmem:[%s1 + $0xc74] sm:$0xf]
    %v1365 = vld [vmem:[%s1 + $0xc78] sm:$0xf]
    %v1366 = vld [vmem:[%s1 + $0xc7c] sm:$0xf]
    %v1367 = vld [vmem:[%s1 + $0xc80] sm:$0xf]
    %v1368 = vld [vmem:[%s1 + $0xc84] sm:$0xf]
    %v1369 = vld [vmem:[%s1 + $0xc88] sm:$0xf]
    %v1370 = vld [vmem:[%s1 + $0xc8c] sm:$0xf]
    %v1371 = vld [vmem:[%s1 + $0xc90] sm:$0xf]
    %v1372 = vld [vmem:[%s1 + $0xc94] sm:$0xf]
    %v1373 = vld [vmem:[%s1 + $0xc98] sm:$0xf]
    %v1374 = vld [vmem:[%s1 + $0xc9c] sm:$0xf]
    %v1375 = vld [vmem:[%s1 + $0xca0] sm:$0xf]
    %v1376 = vld [vmem:[%s1 + $0xca4] sm:$0xf]
    %v1377 = vld [vmem:[%s1 + $0xca8] sm:$0xf]
    %v1378 = vld [vmem:[%s1 + $0xcac] sm:$0xf]
    %v1379 = vld [vmem:[%s1 + $0xcb0] sm:$0xf]
    %v1380 = vld [vmem:[%s1 + $0xcb4] sm:$0xf]
    %v1381 = vld [vmem:[%s1 + $0xcb8] sm:$0xf]
    %v1382 = vld [vmem:[%s1 + $0xcbc] sm:$0xf]
    %v1383 = vld [vmem:[%s1 + $0xcc0] sm:$0xf]
    %v1384 = vld [vmem:[%s1 + $0xcc4] sm:$0xf]
    %v1385 = vld [vmem:[%s1 + $0xcc8] sm:$0xf]
    %v1386 = vld [vmem:[%s1 + $0xccc] sm:$0xf]
    %v1387 = vld [vmem:[%s1 + $0xcd0] sm:$0xf]
    %v1388 = vld [vmem:[%s1 + $0xcd4] sm:$0xf]
    %v1389 = vld [vmem:[%s1 + $0xcd8] sm:$0xf]
    %v1390 = vld [vmem:[%s1 + $0xcdc] sm:$0xf]
    %v1391 = vld [vmem:[%s1 + $0xce0] sm:$0xf]
    %v1392 = vld [vmem:[%s1 + $0xce4] sm:$0xf]
    %v1393 = vld [vmem:[%s1 + $0xce8] sm:$0xf]
    %v1394 = vld [vmem:[%s1 + $0xcec] sm:$0xf]
    %v1395 = vld [vmem:[%s1 + $0xcf0] sm:$0xf]
    %v1396 = vld [vmem:[%s1 + $0xcf4] sm:$0xf]
    %v1397 = vld [vmem:[%s1 + $0xcf8] sm:$0xf]
    %v1398 = vld [vmem:[%s1 + $0xcfc] sm:$0xf]
    %v1399 = vld [vmem:[%s1 + $0xd00] sm:$0xf]
    %v1400 = vld [vmem:[%s1 + $0xd04] sm:$0xf]
    %v1401 = vld [vmem:[%s1 + $0xd08] sm:$0xf]
    %v1402 = vld [vmem:[%s1 + $0xd0c] sm:$0xf]
    %v1403 = vld [vmem:[%s1 + $0xd10] sm:$0xf]
    %v1404 = vld [vmem:[%s1 + $0xd14] sm:$0xf]
    %v1405 = vld [vmem:[%s1 + $0xd18] sm:$0xf]
    %v1406 = vld [vmem:[%s1 + $0xd1c] sm:$0xf]
    %v1407 = vld [vmem:[%s1 + $0xd20] sm:$0xf]
    %v1408 = vld [vmem:[%s1 + $0xd24] sm:$0xf]
    %v1409 = vld [vmem:[%s1 + $0xd28] sm:$0xf]
    %v1410 = vld [vmem:[%s1 + $0xd2c] sm:$0xf]
    %v1411 = vld [vmem:[%s1 + $0xd30] sm:$0xf]
    %v1412 = vld [vmem:[%s1 + $0xd34] sm:$0xf]
    %v1413 = vld [vmem:[%s1 + $0xd38] sm:$0xf]
    %v1414 = vld [vmem:[%s1 + $0xd3c] sm:$0xf]
    %v1415 = vld [vmem:[%s1 + $0xd40] sm:$0xf]
    %v1416 = vld [vmem:[%s1 + $0xd44] sm:$0xf]
    %v1417 = vld [vmem:[%s1 + $0xd48] sm:$0xf]
    %v1418 = vld [vmem:[%s1 + $0xd4c] sm:$0xf]
    %v1419 = vld [vmem:[%s1 + $0xd50] sm:$0xf]
    %v1420 = vld [vmem:[%s1 + $0xd54] sm:$0xf]
    %v1421 = vld [vmem:[%s1 + $0xd58] sm:$0xf]
    %v1422 = vld [vmem:[%s1 + $0xd5c] sm:$0xf]
    %v1423 = vld [vmem:[%s1 + $0xd60] sm:$0xf]
    %v1424 = vld [vmem:[%s1 + $0xd64] sm:$0xf]
    %v1425 = vld [vmem:[%s1 + $0xd68] sm:$0xf]
    %v1426 = vld [vmem:[%s1 + $0xd6c] sm:$0xf]
    %v1427 = vld [vmem:[%s1 + $0xd70] sm:$0xf]
    %v1428 = vld [vmem:[%s1 + $0xd74] sm:$0xf]
    %v1429 = vld [vmem:[%s1 + $0xd78] sm:$0xf]
    %v1430 = vld [vmem:[%s1 + $0xd7c] sm:$0xf]
    %v1431 = vld [vmem:[%s1 + $0xd80] sm:$0xf]
    %v1432 = vld [vmem:[%s1 + $0xd84] sm:$0xf]
    %v1433 = vld [vmem:[%s1 + $0xd88] sm:$0xf]
    %v1434 = vld [vmem:[%s1 + $0xd8c] sm:$0xf]
    %v1435 = vld [vmem:[%s1 + $0xd90] sm:$0xf]
    %v1436 = vld [vmem:[%s1 + $0xd94] sm:$0xf]
    %v1437 = vld [vmem:[%s1 + $0xd98] sm:$0xf]
    %v1438 = vld [vmem:[%s1 + $0xd9c] sm:$0xf]
    %v1439 = vld [vmem:[%s1 + $0xda0] sm:$0xf]
    %v1440 = vld [vmem:[%s1 + $0xda4] sm:$0xf]
    %v1441 = vld [vmem:[%s1 + $0xda8] sm:$0xf]
    %v1442 = vld [vmem:[%s1 + $0xdac] sm:$0xf]
    %v1443 = vld [vmem:[%s1 + $0xdb0] sm:$0xf]
    %v1444 = vld [vmem:[%s1 + $0xdb4] sm:$0xf]
    %v1445 = vld [vmem:[%s1 + $0xdb8] sm:$0xf]
    %v1446 = vld [vmem:[%s1 + $0xdbc] sm:$0xf]
    %v1447 = vld [vmem:[%s1 + $0xdc0] sm:$0xf]
    %v1448 = vld [vmem:[%s1 + $0xdc4] sm:$0xf]
    %v1449 = vld [vmem:[%s1 + $0xdc8] sm:$0xf]
    %v1450 = vld [vmem:[%s1 + $0xdcc] sm:$0xf]
    %v1451 = vld [vmem:[%s1 + $0xdd0] sm:$0xf]
    %v1452 = vld [vmem:[%s1 + $0xdd4] sm:$0xf]
    %v1453 = vld [vmem:[%s1 + $0xdd8] sm:$0xf]
    %v1454 = vld [vmem:[%s1 + $0xddc] sm:$0xf]
    %v1455 = vld [vmem:[%s1 + $0xde0] sm:$0xf]
    %v1456 = vld [vmem:[%s1 + $0xde4] sm:$0xf]
    %v1457 = vld [vmem:[%s1 + $0xde8] sm:$0xf]
    %v1458 = vld [vmem:[%s1 + $0xdec] sm:$0xf]
    %v1459 = vld [vmem:[%s1 + $0xdf0] sm:$0xf]
    %v1460 = vld [vmem:[%s1 + $0xdf4] sm:$0xf]
    %v1461 = vld [vmem:[%s1 + $0xdf8] sm:$0xf]
    %v1462 = vld [vmem:[%s1 + $0xdfc] sm:$0xf]
    %v1463 = vld [vmem:[%s1 + $0xe00] sm:$0xf]
    %v1464 = vld [vmem:[%s1 + $0xe04] sm:$0xf]
    %v1465 = vld [vmem:[%s1 + $0xe08] sm:$0xf]
    %v1466 = vld [vmem:[%s1 + $0xe0c] sm:$0xf]
    %v1467 = vld [vmem:[%s1 + $0xe10] sm:$0xf]
    %v1468 = vld [vmem:[%s1 + $0xe14] sm:$0xf]
    %v1469 = vld [vmem:[%s1 + $0xe18] sm:$0xf]
    %v1470 = vld [vmem:[%s1 + $0xe1c] sm:$0xf]
    %v1471 = vld [vmem:[%s1 + $0xe20] sm:$0xf]
    %v1472 = vld [vmem:[%s1 + $0xe24] sm:$0xf]
    %v1473 = vld [vmem:[%s1 + $0xe28] sm:$0xf]
    %v1474 = vld [vmem:[%s1 + $0xe2c] sm:$0xf]
    %v1475 = vld [vmem:[%s1 + $0xe30] sm:$0xf]
    %v1476 = vld [vmem:[%s1 + $0xe34] sm:$0xf]
    %v1477 = vld [vmem:[%s1 + $0xe38] sm:$0xf]
    %v1478 = vld [vmem:[%s1 + $0xe3c] sm:$0xf]
    %v1479 = vld [vmem:[%s1 + $0xe40] sm:$0xf]
    %v1480 = vld [vmem:[%s1 + $0xe44] sm:$0xf]
    %v1481 = vld [vmem:[%s1 + $0xe48] sm:$0xf]
    %v1482 = vld [vmem:[%s1 + $0xe4c] sm:$0xf]
    %v1483 = vld [vmem:[%s1 + $0xe50] sm:$0xf]
    %v1484 = vld [vmem:[%s1 + $0xe54] sm:$0xf]
    %v1485 = vld [vmem:[%s1 + $0xe58] sm:$0xf]
    %v1486 = vld [vmem:[%s1 + $0xe5c] sm:$0xf]
    %v1487 = vld [vmem:[%s1 + $0xe60] sm:$0xf]
    %v1488 = vld [vmem:[%s1 + $0xe64] sm:$0xf]
    %v1489 = vld [vmem:[%s1 + $0xe68] sm:$0xf]
    %v1490 = vld [vmem:[%s1 + $0xe6c] sm:$0xf]
    %v1491 = vld [vmem:[%s1 + $0xe70] sm:$0xf]
    %v1492 = vld [vmem:[%s1 + $0xe74] sm:$0xf]
    %v1493 = vld [vmem:[%s1 + $0xe78] sm:$0xf]
    %v1494 = vld [vmem:[%s1 + $0xe7c] sm:$0xf]
    %v1495 = vld [vmem:[%s1 + $0xe80] sm:$0xf]
    %v1496 = vld [vmem:[%s1 + $0xe84] sm:$0xf]
    %v1497 = vld [vmem:[%s1 + $0xe88] sm:$0xf]
    %v1498 = vld [vmem:[%s1 + $0xe8c] sm:$0xf]
    %v1499 = vld [vmem:[%s1 + $0xe90] sm:$0xf]
    %v1500 = vld [vmem:[%s1 + $0xe94] sm:$0xf]
    %v1501 = vld [vmem:[%s1 + $0xe98] sm:$0xf]
    %v1502 = vld [vmem:[%s1 + $0xe9c] sm:$0xf]
    %v1503 = vld [vmem:[%s1 + $0xea0] sm:$0xf]
    %v1504 = vld [vmem:[%s1 + $0xea4] sm:$0xf]
    %v1505 = vld [vmem:[%s1 + $0xea8] sm:$0xf]
    %v1506 = vld [vmem:[%s1 + $0xeac] sm:$0xf]
    %v1507 = vld [vmem:[%s1 + $0xeb0] sm:$0xf]
    %v1508 = vld [vmem:[%s1 + $0xeb4] sm:$0xf]
    %v1509 = vld [vmem:[%s1 + $0xeb8] sm:$0xf]
    %v1510 = vld [vmem:[%s1 + $0xebc] sm:$0xf]
    %v1511 = vld [vmem:[%s1 + $0xec0] sm:$0xf]
    %v1512 = vld [vmem:[%s1 + $0xec4] sm:$0xf]
    %v1513 = vld [vmem:[%s1 + $0xec8] sm:$0xf]
    %v1514 = vld [vmem:[%s1 + $0xecc] sm:$0xf]
    %v1515 = vld [vmem:[%s1 + $0xed0] sm:$0xf]
    %v1516 = vld [vmem:[%s1 + $0xed4] sm:$0xf]
    %v1517 = vld [vmem:[%s1 + $0xed8] sm:$0xf]
    %v1518 = vld [vmem:[%s1 + $0xedc] sm:$0xf]
    %v1519 = vld [vmem:[%s1 + $0xee0] sm:$0xf]
    %v1520 = vld [vmem:[%s1 + $0xee4] sm:$0xf]
    %v1521 = vld [vmem:[%s1 + $0xee8] sm:$0xf]
    %v1522 = vld [vmem:[%s1 + $0xeec] sm:$0xf]
    %v1523 = vld [vmem:[%s1 + $0xef0] sm:$0xf]
    %v1524 = vld [vmem:[%s1 + $0xef4] sm:$0xf]
    %v1525 = vld [vmem:[%s1 + $0xef8] sm:$0xf]
    %v1526 = vld [vmem:[%s1 + $0xefc] sm:$0xf]
    %v1527 = vld [vmem:[%s1 + $0xf00] sm:$0xf]
    %v1528 = vld [vmem:[%s1 + $0xf04] sm:$0xf]
    %v1529 = vld [vmem:[%s1 + $0xf08] sm:$0xf]
    %v1530 = vld [vmem:[%s1 + $0xf0c] sm:$0xf]
    %v1531 = vld [vmem:[%s1 + $0xf10] sm:$0xf]
    %v1532 = vld [vmem:[%s1 + $0xf14] sm:$0xf]
    %v1533 = vld [vmem:[%s1 + $0xf18] sm:$0xf]
    %v1534 = vld [vmem:[%s1 + $0xf1c] sm:$0xf]
    %v1535 = vld [vmem:[%s1 + $0xf20] sm:$0xf]
    %v1536 = vld [vmem:[%s1 + $0xf24] sm:$0xf]
    %v1537 = vld [vmem:[%s1 + $0xf28] sm:$0xf]
    %v1538 = vld [vmem:[%s1 + $0xf2c] sm:$0xf]
    %v1539 = vld [vmem:[%s1 + $0xf30] sm:$0xf]
    %v1540 = vld [vmem:[%s1 + $0xf34] sm:$0xf]
    %v1541 = vld [vmem:[%s1 + $0xf38] sm:$0xf]
    %v1542 = vld [vmem:[%s1 + $0xf3c] sm:$0xf]
    %v1543 = vld [vmem:[%s1 + $0xf40] sm:$0xf]
    %v1544 = vld [vmem:[%s1 + $0xf44] sm:$0xf]
    %v1545 = vld [vmem:[%s1 + $0xf48] sm:$0xf]
    %v1546 = vld [vmem:[%s1 + $0xf4c] sm:$0xf]
    %v1547 = vld [vmem:[%s1 + $0xf50] sm:$0xf]
    %v1548 = vld [vmem:[%s1 + $0xf54] sm:$0xf]
    %v1549 = vld [vmem:[%s1 + $0xf58] sm:$0xf]
    %v1550 = vld [vmem:[%s1 + $0xf5c] sm:$0xf]
    %v1551 = vld [vmem:[%s1 + $0xf60] sm:$0xf]
    %v1552 = vld [vmem:[%s1 + $0xf64] sm:$0xf]
    %v1553 = vld [vmem:[%s1 + $0xf68] sm:$0xf]
    %v1554 = vld [vmem:[%s1 + $0xf6c] sm:$0xf]
    %v1555 = vld [vmem:[%s1 + $0xf70] sm:$0xf]
    %v1556 = vld [vmem:[%s1 + $0xf74] sm:$0xf]
    %v1557 = vld [vmem:[%s1 + $0xf78] sm:$0xf]
    %v1558 = vld [vmem:[%s1 + $0xf7c] sm:$0xf]
    %v1559 = vld [vmem:[%s1 + $0xf80] sm:$0xf]
    %v1560 = vld [vmem:[%s1 + $0xf84] sm:$0xf]
    %v1561 = vld [vmem:[%s1 + $0xf88] sm:$0xf]
    %v1562 = vld [vmem:[%s1 + $0xf8c] sm:$0xf]
    %v1563 = vld [vmem:[%s1 + $0xf90] sm:$0xf]
    %v1564 = vld [vmem:[%s1 + $0xf94] sm:$0xf]
    %v1565 = vld [vmem:[%s1 + $0xf98] sm:$0xf]
    %v1566 = vld [vmem:[%s1 + $0xf9c] sm:$0xf]
    %v1567 = vld [vmem:[%s1 + $0xfa0] sm:$0xf]
    %v1568 = vld [vmem:[%s1 + $0xfa4] sm:$0xf]
    %v1569 = vld [vmem:[%s1 + $0xfa8] sm:$0xf]
    %v1570 = vld [vmem:[%s1 + $0xfac] sm:$0xf]
    %v1571 = vld [vmem:[%s1 + $0xfb0] sm:$0xf]
    %v1572 = vld [vmem:[%s1 + $0xfb4] sm:$0xf]
    %v1573 = vld [vmem:[%s1 + $0xfb8] sm:$0xf]
    %v1574 = vld [vmem:[%s1 + $0xfbc] sm:$0xf]
    %v1575 = vld [vmem:[%s1 + $0xfc0] sm:$0xf]
    %v1576 = vld [vmem:[%s1 + $0xfc4] sm:$0xf]
    %v1577 = vld [vmem:[%s1 + $0xfc8] sm:$0xf]
    %v1578 = vld [vmem:[%s1 + $0xfcc] sm:$0xf]
    %v1579 = vld [vmem:[%s1 + $0xfd0] sm:$0xf]
    %v1580 = vld [vmem:[%s1 + $0xfd4] sm:$0xf]
    %v1581 = vld [vmem:[%s1 + $0xfd8] sm:$0xf]
    %v1582 = vld [vmem:[%s1 + $0xfdc] sm:$0xf]
    %v1583 = vld [vmem:[%s1 + $0xfe0] sm:$0xf]
    %v1584 = vld [vmem:[%s1 + $0xfe4] sm:$0xf]
    %v1585 = vld [vmem:[%s1 + $0xfe8] sm:$0xf]
    %v1586 = vld [vmem:[%s1 + $0xfec] sm:$0xf]
    %v1587 = vld [vmem:[%s1 + $0xff0] sm:$0xf]
    %v1588 = vld [vmem:[%s1 + $0xff4] sm:$0xf]
    %v1589 = vld [vmem:[%s1 + $0xff8] sm:$0xf]
    %v1590 = vld [vmem:[%s1 + $0xffc] sm:$0xf]
    %v1591 = vld [vmem:[%s1 + $0x1000] sm:$0xf]
    %v1592 = vld [vmem:[%s1 + $0x1004] sm:$0xf]
    %v1593 = vld [vmem:[%s1 + $0x1008] sm:$0xf]
    %v1594 = vld [vmem:[%s1 + $0x100c] sm:$0xf]
    %v1595 = vld [vmem:[%s1 + $0x1010] sm:$0xf]
    %v1596 = vld [vmem:[%s1 + $0x1014] sm:$0xf]
    %v1597 = vld [vmem:[%s1 + $0x1018] sm:$0xf]
    %v1598 = vld [vmem:[%s1 + $0x101c] sm:$0xf]
    %v1599 = vld [vmem:[%s1 + $0x1020] sm:$0xf]
    %v1600 = vld [vmem:[%s1 + $0x1024] sm:$0xf]
    %v1601 = vld [vmem:[%s1 + $0x1028] sm:$0xf]
    %v1602 = vld [vmem:[%s1 + $0x102c] sm:$0xf]
    %v1603 = vld [vmem:[%s1 + $0x1030] sm:$0xf]
    %v1604 = vld [vmem:[%s1 + $0x1034] sm:$0xf]
    %v1605 = vld [vmem:[%s1 + $0x1038] sm:$0xf]
    %v1606 = vld [vmem:[%s1 + $0x103c] sm:$0xf]
    %v1607 = vld [vmem:[%s1 + $0x1040] sm:$0xf]
    %v1608 = vld [vmem:[%s1 + $0x1044] sm:$0xf]
    %v1609 = vld [vmem:[%s1 + $0x1048] sm:$0xf]
    %v1610 = vld [vmem:[%s1 + $0x104c] sm:$0xf]
    %v1611 = vld [vmem:[%s1 + $0x1050] sm:$0xf]
    %v1612 = vld [vmem:[%s1 + $0x1054] sm:$0xf]
    %v1613 = vld [vmem:[%s1 + $0x1058] sm:$0xf]
    %v1614 = vld [vmem:[%s1 + $0x105c] sm:$0xf]
    %v1615 = vld [vmem:[%s1 + $0x1060] sm:$0xf]
    %v1616 = vld [vmem:[%s1 + $0x1064] sm:$0xf]
    %v1617 = vld [vmem:[%s1 + $0x1068] sm:$0xf]
    %v1618 = vld [vmem:[%s1 + $0x106c] sm:$0xf]
    %v1619 = vld [vmem:[%s1 + $0x1070] sm:$0xf]
    %v1620 = vld [vmem:[%s1 + $0x1074] sm:$0xf]
    %v1621 = vld [vmem:[%s1 + $0x1078] sm:$0xf]
    %v1622 = vld [vmem:[%s1 + $0x107c] sm:$0xf]
    %v1623 = vld [vmem:[%s1 + $0x1080] sm:$0xf]
    %v1624 = vld [vmem:[%s1 + $0x1084] sm:$0xf]
    %v1625 = vld [vmem:[%s1 + $0x1088] sm:$0xf]
    %v1626 = vld [vmem:[%s1 + $0x108c] sm:$0xf]
    %v1627 = vld [vmem:[%s1 + $0x1090] sm:$0xf]
    %v1628 = vld [vmem:[%s1 + $0x1094] sm:$0xf]
    %v1629 = vld [vmem:[%s1 + $0x1098] sm:$0xf]
    %v1630 = vld [vmem:[%s1 + $0x109c] sm:$0xf]
    %v1631 = vld [vmem:[%s1 + $0x10a0] sm:$0xf]
    %v1632 = vld [vmem:[%s1 + $0x10a4] sm:$0xf]
    %v1633 = vld [vmem:[%s1 + $0x10a8] sm:$0xf]
    %v1634 = vld [vmem:[%s1 + $0x10ac] sm:$0xf]
    %v1635 = vld [vmem:[%s1 + $0x10b0] sm:$0xf]
    %v1636 = vld [vmem:[%s1 + $0x10b4] sm:$0xf]
    %v1637 = vld [vmem:[%s1 + $0x10b8] sm:$0xf]
    %v1638 = vld [vmem:[%s1 + $0x10bc] sm:$0xf]
    %v1639 = vld [vmem:[%s1 + $0x10c0] sm:$0xf]
    %v1640 = vld [vmem:[%s1 + $0x10c4] sm:$0xf]
    %v1641 = vld [vmem:[%s1 + $0x10c8] sm:$0xf]
    %v1642 = vld [vmem:[%s1 + $0x10cc] sm:$0xf]
    %v1643 = vld [vmem:[%s1 + $0x10d0] sm:$0xf]
    %v1644 = vld [vmem:[%s1 + $0x10d4] sm:$0xf]
    %v1645 = vld [vmem:[%s1 + $0x10d8] sm:$0xf]
    %v1646 = vld [vmem:[%s1 + $0x10dc] sm:$0xf]
    %v1647 = vld [vmem:[%s1 + $0x10e0] sm:$0xf]
    %v1648 = vld [vmem:[%s1 + $0x10e4] sm:$0xf]
    %v1649 = vld [vmem:[%s1 + $0x10e8] sm:$0xf]
    %v1650 = vld [vmem:[%s1 + $0x10ec] sm:$0xf]
    %v1651 = vld [vmem:[%s1 + $0x10f0] sm:$0xf]
    %v1652 = vld [vmem:[%s1 + $0x10f4] sm:$0xf]
    %v1653 = vld [vmem:[%s1 + $0x10f8] sm:$0xf]
    %v1654 = vld [vmem:[%s1 + $0x10fc] sm:$0xf]
    %v1655 = vld [vmem:[%s1 + $0x1100] sm:$0xf]
    %v1656 = vld [vmem:[%s1 + $0x1104] sm:$0xf]
    %v1657 = vld [vmem:[%s1 + $0x1108] sm:$0xf]
    %v1658 = vld [vmem:[%s1 + $0x110c] sm:$0xf]
    %v1659 = vld [vmem:[%s1 + $0x1110] sm:$0xf]
    %v1660 = vld [vmem:[%s1 + $0x1114] sm:$0xf]
    %v1661 = vld [vmem:[%s1 + $0x1118] sm:$0xf]
    %v1662 = vld [vmem:[%s1 + $0x111c] sm:$0xf]
    %v1663 = vld [vmem:[%s1 + $0x1120] sm:$0xf]
    %v1664 = vld [vmem:[%s1 + $0x1124] sm:$0xf]
    %v1665 = vld [vmem:[%s1 + $0x1128] sm:$0xf]
    %v1666 = vld [vmem:[%s1 + $0x112c] sm:$0xf]
    %v1667 = vld [vmem:[%s1 + $0x1130] sm:$0xf]
    %v1668 = vld [vmem:[%s1 + $0x1134] sm:$0xf]
    %v1669 = vld [vmem:[%s1 + $0x1138] sm:$0xf]
    %v1670 = vld [vmem:[%s1 + $0x113c] sm:$0xf]
    %v1671 = vld [vmem:[%s1 + $0x1140] sm:$0xf]
    %v1672 = vld [vmem:[%s1 + $0x1144] sm:$0xf]
    %v1673 = vld [vmem:[%s1 + $0x1148] sm:$0xf]
    %v1674 = vld [vmem:[%s1 + $0x114c] sm:$0xf]
    %v1675 = vld [vmem:[%s1 + $0x1150] sm:$0xf]
    %v1676 = vld [vmem:[%s1 + $0x1154] sm:$0xf]
    %v1677 = vld [vmem:[%s1 + $0x1158] sm:$0xf]
    %v1678 = vld [vmem:[%s1 + $0x115c] sm:$0xf]
    %v1679 = vld [vmem:[%s1 + $0x1160] sm:$0xf]
    %v1680 = vld [vmem:[%s1 + $0x1164] sm:$0xf]
    %v1681 = vld [vmem:[%s1 + $0x1168] sm:$0xf]
    %v1682 = vld [vmem:[%s1 + $0x116c] sm:$0xf]
    %v1683 = vld [vmem:[%s1 + $0x1170] sm:$0xf]
    %v1684 = vld [vmem:[%s1 + $0x1174] sm:$0xf]
    %v1685 = vld [vmem:[%s1 + $0x1178] sm:$0xf]
    %v1686 = vld [vmem:[%s1 + $0x117c] sm:$0xf]
    %v1687 = vld [vmem:[%s1 + $0x1180] sm:$0xf]
    %v1688 = vld [vmem:[%s1 + $0x1184] sm:$0xf]
    %v1689 = vld [vmem:[%s1 + $0x1188] sm:$0xf]
    %v1690 = vld [vmem:[%s1 + $0x118c] sm:$0xf]
    %v1691 = vld [vmem:[%s1 + $0x1190] sm:$0xf]
    %v1692 = vld [vmem:[%s1 + $0x1194] sm:$0xf]
    %v1693 = vld [vmem:[%s1 + $0x1198] sm:$0xf]
    %v1694 = vld [vmem:[%s1 + $0x119c] sm:$0xf]
    %v1695 = vld [vmem:[%s1 + $0x11a0] sm:$0xf]
    %v1696 = vld [vmem:[%s1 + $0x11a4] sm:$0xf]
    %v1697 = vld [vmem:[%s1 + $0x11a8] sm:$0xf]
    %v1698 = vld [vmem:[%s1 + $0x11ac] sm:$0xf]
    %v1699 = vld [vmem:[%s1 + $0x11b0] sm:$0xf]
    %v1700 = vld [vmem:[%s1 + $0x11b4] sm:$0xf]
    %v1701 = vld [vmem:[%s1 + $0x11b8] sm:$0xf]
    %v1702 = vld [vmem:[%s1 + $0x11bc] sm:$0xf]
    %v1703 = vld [vmem:[%s1 + $0x11c0] sm:$0xf]
    %v1704 = vld [vmem:[%s1 + $0x11c4] sm:$0xf]
    %v1705 = vld [vmem:[%s1 + $0x11c8] sm:$0xf]
    %v1706 = vld [vmem:[%s1 + $0x11cc] sm:$0xf]
    %v1707 = vld [vmem:[%s1 + $0x11d0] sm:$0xf]
    %v1708 = vld [vmem:[%s1 + $0x11d4] sm:$0xf]
    %v1709 = vld [vmem:[%s1 + $0x11d8] sm:$0xf]
    %v1710 = vld [vmem:[%s1 + $0x11dc] sm:$0xf]
    %v1711 = vld [vmem:[%s1 + $0x11e0] sm:$0xf]
    %v1712 = vld [vmem:[%s1 + $0x11e4] sm:$0xf]
    %v1713 = vld [vmem:[%s1 + $0x11e8] sm:$0xf]
    %v1714 = vld [vmem:[%s1 + $0x11ec] sm:$0xf]
    %v1715 = vld [vmem:[%s1 + $0x11f0] sm:$0xf]
    %v1716 = vld [vmem:[%s1 + $0x11f4] sm:$0xf]
    %v1717 = vld [vmem:[%s1 + $0x11f8] sm:$0xf]
    %v1718 = vld [vmem:[%s1 + $0x11fc] sm:$0xf]
    %v1719 = vld [vmem:[%s1 + $0x1200] sm:$0xf]
    %v1720 = vld [vmem:[%s1 + $0x1204] sm:$0xf]
    %v1721 = vld [vmem:[%s1 + $0x1208] sm:$0xf]
    %v1722 = vld [vmem:[%s1 + $0x120c] sm:$0xf]
    %v1723 = vld [vmem:[%s1 + $0x1210] sm:$0xf]
    %v1724 = vld [vmem:[%s1 + $0x1214] sm:$0xf]
    %v1725 = vld [vmem:[%s1 + $0x1218] sm:$0xf]
    %v1726 = vld [vmem:[%s1 + $0x121c] sm:$0xf]
    %v1727 = vld [vmem:[%s1 + $0x1220] sm:$0xf]
    %v1728 = vld [vmem:[%s1 + $0x1224] sm:$0xf]
    %v1729 = vld [vmem:[%s1 + $0x1228] sm:$0xf]
    %v1730 = vld [vmem:[%s1 + $0x122c] sm:$0xf]
    %v1731 = vld [vmem:[%s1 + $0x1230] sm:$0xf]
    %v1732 = vld [vmem:[%s1 + $0x1234] sm:$0xf]
    %v1733 = vld [vmem:[%s1 + $0x1238] sm:$0xf]
    %v1734 = vld [vmem:[%s1 + $0x123c] sm:$0xf]
    %v1735 = vld [vmem:[%s1 + $0x1240] sm:$0xf]
    %v1736 = vld [vmem:[%s1 + $0x1244] sm:$0xf]
    %v1737 = vld [vmem:[%s1 + $0x1248] sm:$0xf]
    %v1738 = vld [vmem:[%s1 + $0x124c] sm:$0xf]
    %v1739 = vld [vmem:[%s1 + $0x1250] sm:$0xf]
    %v1740 = vld [vmem:[%s1 + $0x1254] sm:$0xf]
    %v1741 = vld [vmem:[%s1 + $0x1258] sm:$0xf]
    %v1742 = vld [vmem:[%s1 + $0x125c] sm:$0xf]
    %v1743 = vld [vmem:[%s1 + $0x1260] sm:$0xf]
    %v1744 = vld [vmem:[%s1 + $0x1264] sm:$0xf]
    %v1745 = vld [vmem:[%s1 + $0x1268] sm:$0xf]
    %v1746 = vld [vmem:[%s1 + $0x126c] sm:$0xf]
    %v1747 = vld [vmem:[%s1 + $0x1270] sm:$0xf]
    %v1748 = vld [vmem:[%s1 + $0x1274] sm:$0xf]
    %v1749 = vld [vmem:[%s1 + $0x1278] sm:$0xf]
    %v1750 = vld [vmem:[%s1 + $0x127c] sm:$0xf]
    %v1751 = vld [vmem:[%s1 + $0x1280] sm:$0xf]
    %v1752 = vld [vmem:[%s1 + $0x1284] sm:$0xf]
    %v1753 = vld [vmem:[%s1 + $0x1288] sm:$0xf]
    %v1754 = vld [vmem:[%s1 + $0x128c] sm:$0xf]
    %v1755 = vld [vmem:[%s1 + $0x1290] sm:$0xf]
    %v1756 = vld [vmem:[%s1 + $0x1294] sm:$0xf]
    %v1757 = vld [vmem:[%s1 + $0x1298] sm:$0xf]
    %v1758 = vld [vmem:[%s1 + $0x129c] sm:$0xf]
    %v1759 = vld [vmem:[%s1 + $0x12a0] sm:$0xf]
    %v1760 = vld [vmem:[%s1 + $0x12a4] sm:$0xf]
    %v1761 = vld [vmem:[%s1 + $0x12a8] sm:$0xf]
    %v1762 = vld [vmem:[%s1 + $0x12ac] sm:$0xf]
    %v1763 = vld [vmem:[%s1 + $0x12b0] sm:$0xf]
    %v1764 = vld [vmem:[%s1 + $0x12b4] sm:$0xf]
    %v1765 = vld [vmem:[%s1 + $0x12b8] sm:$0xf]
    %v1766 = vld [vmem:[%s1 + $0x12bc] sm:$0xf]
    %v1767 = vld [vmem:[%s1 + $0x12c0] sm:$0xf]
    %v1768 = vld [vmem:[%s1 + $0x12c4] sm:$0xf]
    %v1769 = vld [vmem:[%s1 + $0x12c8] sm:$0xf]
    %v1770 = vld [vmem:[%s1 + $0x12cc] sm:$0xf]
    %v1771 = vld [vmem:[%s1 + $0x12d0] sm:$0xf]
    %v1772 = vld [vmem:[%s1 + $0x12d4] sm:$0xf]
    %v1773 = vld [vmem:[%s1 + $0x12d8] sm:$0xf]
    %v1774 = vld [vmem:[%s1 + $0x12dc] sm:$0xf]
    %v1775 = vld [vmem:[%s1 + $0x12e0] sm:$0xf]
    %v1776 = vld [vmem:[%s1 + $0x12e4] sm:$0xf]
    %v1777 = vld [vmem:[%s1 + $0x12e8] sm:$0xf]
    %v1778 = vld [vmem:[%s1 + $0x12ec] sm:$0xf]
    %v1779 = vld [vmem:[%s1 + $0x12f0] sm:$0xf]
    %v1780 = vld [vmem:[%s1 + $0x12f4] sm:$0xf]
    %v1781 = vld [vmem:[%s1 + $0x12f8] sm:$0xf]
    %v1782 = vld [vmem:[%s1 + $0x12fc] sm:$0xf]
    %v1783 = vld [vmem:[%s1 + $0x1300] sm:$0xf]
    %v1784 = vld [vmem:[%s1 + $0x1304] sm:$0xf]
    %v1785 = vld [vmem:[%s1 + $0x1308] sm:$0xf]
    %v1786 = vld [vmem:[%s1 + $0x130c] sm:$0xf]
    %v1787 = vld [vmem:[%s1 + $0x1310] sm:$0xf]
    %v1788 = vld [vmem:[%s1 + $0x1314] sm:$0xf]
    %v1789 = vld [vmem:[%s1 + $0x1318] sm:$0xf]
    %v1790 = vld [vmem:[%s1 + $0x131c] sm:$0xf]
    %v1791 = vld [vmem:[%s1 + $0x1320] sm:$0xf]
    %v1792 = vld [vmem:[%s1 + $0x1324] sm:$0xf]
    %v1793 = vld [vmem:[%s1 + $0x1328] sm:$0xf]
    %v1794 = vld [vmem:[%s1 + $0x132c] sm:$0xf]
    %v1795 = vld [vmem:[%s1 + $0x1330] sm:$0xf]
    %v1796 = vld [vmem:[%s1 + $0x1334] sm:$0xf]
    %v1797 = vld [vmem:[%s1 + $0x1338] sm:$0xf]
    %v1798 = vld [vmem:[%s1 + $0x133c] sm:$0xf]
    %v1799 = vld [vmem:[%s1 + $0x1340] sm:$0xf]
    %v1800 = vld [vmem:[%s1 + $0x1344] sm:$0xf]
    %v1801 = vld [vmem:[%s1 + $0x1348] sm:$0xf]
    %v1802 = vld [vmem:[%s1 + $0x134c] sm:$0xf]
    %v1803 = vld [vmem:[%s1 + $0x1350] sm:$0xf]
    %v1804 = vld [vmem:[%s1 + $0x1354] sm:$0xf]
    %v1805 = vld [vmem:[%s1 + $0x1358] sm:$0xf]
    %v1806 = vld [vmem:[%s1 + $0x135c] sm:$0xf]
    %v1807 = vld [vmem:[%s1 + $0x1360] sm:$0xf]
    %v1808 = vld [vmem:[%s1 + $0x1364] sm:$0xf]
    %v1809 = vld [vmem:[%s1 + $0x1368] sm:$0xf]
    %v1810 = vld [vmem:[%s1 + $0x136c] sm:$0xf]
    %v1811 = vld [vmem:[%s1 + $0x1370] sm:$0xf]
    %v1812 = vld [vmem:[%s1 + $0x1374] sm:$0xf]
    %v1813 = vld [vmem:[%s1 + $0x1378] sm:$0xf]
    %v1814 = vld [vmem:[%s1 + $0x137c] sm:$0xf]
    %v1815 = vld [vmem:[%s1 + $0x1380] sm:$0xf]
    %v1816 = vld [vmem:[%s1 + $0x1384] sm:$0xf]
    %v1817 = vld [vmem:[%s1 + $0x1388] sm:$0xf]
    %v1818 = vld [vmem:[%s1 + $0x138c] sm:$0xf]
    %v1819 = vld [vmem:[%s1 + $0x1390] sm:$0xf]
    %v1820 = vld [vmem:[%s1 + $0x1394] sm:$0xf]
    %v1821 = vld [vmem:[%s1 + $0x1398] sm:$0xf]
    %v1822 = vld [vmem:[%s1 + $0x139c] sm:$0xf]
    %v1823 = vld [vmem:[%s1 + $0x13a0] sm:$0xf]
    %v1824 = vld [vmem:[%s1 + $0x13a4] sm:$0xf]
    %v1825 = vld [vmem:[%s1 + $0x13a8] sm:$0xf]
    %v1826 = vld [vmem:[%s1 + $0x13ac] sm:$0xf]
    %v1827 = vld [vmem:[%s1 + $0x13b0] sm:$0xf]
    %v1828 = vld [vmem:[%s1 + $0x13b4] sm:$0xf]
    %v1829 = vld [vmem:[%s1 + $0x13b8] sm:$0xf]
    %v1830 = vld [vmem:[%s1 + $0x13bc] sm:$0xf]
    %v1831 = vld [vmem:[%s1 + $0x13c0] sm:$0xf]
    %v1832 = vld [vmem:[%s1 + $0x13c4] sm:$0xf]
    %v1833 = vld [vmem:[%s1 + $0x13c8] sm:$0xf]
    %v1834 = vld [vmem:[%s1 + $0x13cc] sm:$0xf]
    %v1835 = vld [vmem:[%s1 + $0x13d0] sm:$0xf]
    %v1836 = vld [vmem:[%s1 + $0x13d4] sm:$0xf]
    %v1837 = vld [vmem:[%s1 + $0x13d8] sm:$0xf]
    %v1838 = vld [vmem:[%s1 + $0x13dc] sm:$0xf]
    %v1839 = vld [vmem:[%s1 + $0x13e0] sm:$0xf]
    %v1840 = vld [vmem:[%s1 + $0x13e4] sm:$0xf]
    %v1841 = vld [vmem:[%s1 + $0x13e8] sm:$0xf]
    %v1842 = vld [vmem:[%s1 + $0x13ec] sm:$0xf]
    %v1843 = vld [vmem:[%s1 + $0x13f0] sm:$0xf]
    %v1844 = vld [vmem:[%s1 + $0x13f4] sm:$0xf]
    %v1845 = vld [vmem:[%s1 + $0x13f8] sm:$0xf]
    %v1846 = vld [vmem:[%s1 + $0x13fc] sm:$0xf]
    %v1847 = vld [vmem:[%s1 + $0x1400] sm:$0xf]
    %v1848 = vld [vmem:[%s1 + $0x1404] sm:$0xf]
    %v1849 = vld [vmem:[%s1 + $0x1408] sm:$0xf]
    %v1850 = vld [vmem:[%s1 + $0x140c] sm:$0xf]
    %v1851 = vld [vmem:[%s2] sm:$0x1]
    %v1853 = vlaneseq
    %v1854 = vshrl.u32 %v1853, 7
    %v1855 = vsub.s32 0, %v1854
    %v1856 = vrot.slane %v1851, %v1855
    %v3142 = vunpack.c.l.b16 %v567
    %v3143 = vunpack.c.l.b16 %v568
    %v3144 = vunpack.c.l.b16 %v569
    %v3145 = vunpack.c.l.b16 %v570
    %v3146 = vunpack.c.l.b16 %v571
    %v3147 = vunpack.c.l.b16 %v572
    %v3148 = vunpack.c.l.b16 %v573
    %v3149 = vunpack.c.l.b16 %v574
    %v3150 = vunpack.c.l.b16 %v575
    %v3151 = vunpack.c.l.b16 %v576
    %v3152 = vunpack.c.l.b16 %v577
    %v3153 = vunpack.c.l.b16 %v578
    %v3154 = vunpack.c.l.b16 %v579
    %v3155 = vunpack.c.l.b16 %v580
    %v3156 = vunpack.c.l.b16 %v581
    %v3157 = vunpack.c.l.b16 %v582
    %v3158 = vunpack.c.l.b16 %v583
    %v3159 = vunpack.c.l.b16 %v584
    %v3160 = vunpack.c.l.b16 %v585
    %v3161 = vunpack.c.l.b16 %v586
    %v3162 = vunpack.c.l.b16 %v587
    %v3163 = vunpack.c.l.b16 %v588
    %v3164 = vunpack.c.l.b16 %v589
    %v3165 = vunpack.c.l.b16 %v590
    %v3166 = vunpack.c.l.b16 %v591
    %v3167 = vunpack.c.l.b16 %v592
    %v3168 = vunpack.c.l.b16 %v593
    %v3169 = vunpack.c.l.b16 %v594
    %v3170 = vunpack.c.l.b16 %v595
    %v3171 = vunpack.c.l.b16 %v596
    %v3172 = vunpack.c.l.b16 %v597
    %v3173 = vunpack.c.l.b16 %v598
    %v3174 = vunpack.c.l.b16 %v599
    %v3175 = vunpack.c.l.b16 %v600
    %v3176 = vunpack.c.l.b16 %v601
    %v3177 = vunpack.c.l.b16 %v602
    %v3178 = vunpack.c.l.b16 %v603
    %v3179 = vunpack.c.l.b16 %v604
    %v3180 = vunpack.c.l.b16 %v605
    %v3181 = vunpack.c.l.b16 %v606
    %v3182 = vunpack.c.l.b16 %v607
    %v3183 = vunpack.c.l.b16 %v608
    %v3184 = vunpack.c.l.b16 %v609
    %v3185 = vunpack.c.l.b16 %v610
    %v3186 = vunpack.c.l.b16 %v611
    %v3187 = vunpack.c.l.b16 %v612
    %v3188 = vunpack.c.l.b16 %v613
    %v3189 = vunpack.c.l.b16 %v614
    %v3190 = vunpack.c.l.b16 %v615
    %v3191 = vunpack.c.l.b16 %v616
    %v3192 = vunpack.c.l.b16 %v617
    %v3193 = vunpack.c.l.b16 %v618
    %v3194 = vunpack.c.l.b16 %v619
    %v3195 = vunpack.c.l.b16 %v620
    %v3196 = vunpack.c.l.b16 %v621
    %v3197 = vunpack.c.l.b16 %v622
    %v3198 = vunpack.c.l.b16 %v623
    %v3199 = vunpack.c.l.b16 %v624
    %v3200 = vunpack.c.l.b16 %v625
    %v3201 = vunpack.c.l.b16 %v626
    %v3202 = vunpack.c.l.b16 %v627
    %v3203 = vunpack.c.l.b16 %v628
    %v3204 = vunpack.c.l.b16 %v629
    %v3205 = vunpack.c.l.b16 %v630
    %v3206 = vunpack.c.l.b16 %v631
    %v3207 = vunpack.c.l.b16 %v632
    %v3208 = vunpack.c.l.b16 %v633
    %v3209 = vunpack.c.l.b16 %v634
    %v3210 = vunpack.c.l.b16 %v635
    %v3211 = vunpack.c.l.b16 %v636
    %v3212 = vunpack.c.l.b16 %v637
    %v3213 = vunpack.c.l.b16 %v638
    %v3214 = vunpack.c.l.b16 %v639
    %v3215 = vunpack.c.l.b16 %v640
    %v3216 = vunpack.c.l.b16 %v641
    %v3217 = vunpack.c.l.b16 %v642
    %v3218 = vunpack.c.l.b16 %v643
    %v3219 = vunpack.c.l.b16 %v644
    %v3220 = vunpack.c.l.b16 %v645
    %v3221 = vunpack.c.l.b16 %v646
    %v3222 = vunpack.c.l.b16 %v647
    %v3223 = vunpack.c.l.b16 %v648
    %v3224 = vunpack.c.l.b16 %v649
    %v3225 = vunpack.c.l.b16 %v650
    %v3226 = vunpack.c.l.b16 %v651
    %v3227 = vunpack.c.l.b16 %v652
    %v3228 = vunpack.c.l.b16 %v653
    %v3229 = vunpack.c.l.b16 %v654
    %v3230 = vunpack.c.l.b16 %v655
    %v3231 = vunpack.c.l.b16 %v656
    %v3232 = vunpack.c.l.b16 %v657
    %v3233 = vunpack.c.l.b16 %v658
    %v3234 = vunpack.c.l.b16 %v659
    %v3235 = vunpack.c.l.b16 %v660
    %v3236 = vunpack.c.l.b16 %v661
    %v3237 = vunpack.c.l.b16 %v662
    %v3238 = vunpack.c.l.b16 %v663
    %v3239 = vunpack.c.l.b16 %v664
    %v3240 = vunpack.c.l.b16 %v665
    %v3241 = vunpack.c.l.b16 %v666
    %v3242 = vunpack.c.l.b16 %v667
    %v3243 = vunpack.c.l.b16 %v668
    %v3244 = vunpack.c.l.b16 %v669
    %v3245 = vunpack.c.l.b16 %v670
    %v3246 = vunpack.c.l.b16 %v671
    %v3247 = vunpack.c.l.b16 %v672
    %v3248 = vunpack.c.l.b16 %v673
    %v3249 = vunpack.c.l.b16 %v674
    %v3250 = vunpack.c.l.b16 %v675
    %v3251 = vunpack.c.l.b16 %v676
    %v3252 = vunpack.c.l.b16 %v677
    %v3253 = vunpack.c.l.b16 %v678
    %v3254 = vunpack.c.l.b16 %v679
    %v3255 = vunpack.c.l.b16 %v680
    %v3256 = vunpack.c.l.b16 %v681
    %v3257 = vunpack.c.l.b16 %v682
    %v3258 = vunpack.c.l.b16 %v683
    %v3259 = vunpack.c.l.b16 %v684
    %v3260 = vunpack.c.l.b16 %v685
    %v3261 = vunpack.c.l.b16 %v686
    %v3262 = vunpack.c.l.b16 %v687
    %v3263 = vunpack.c.l.b16 %v688
    %v3264 = vunpack.c.l.b16 %v689
    %v3265 = vunpack.c.l.b16 %v690
    %v3266 = vunpack.c.l.b16 %v691
    %v3267 = vunpack.c.l.b16 %v692
    %v3268 = vunpack.c.l.b16 %v693
    %v3269 = vunpack.c.l.b16 %v694
    %v3270 = vunpack.c.l.b16 %v695
    %v3271 = vunpack.c.l.b16 %v696
    %v3272 = vunpack.c.l.b16 %v697
    %v3273 = vunpack.c.l.b16 %v698
    %v3274 = vunpack.c.l.b16 %v699
    %v3275 = vunpack.c.l.b16 %v700
    %v3276 = vunpack.c.l.b16 %v701
    %v3277 = vunpack.c.l.b16 %v702
    %v3278 = vunpack.c.l.b16 %v703
    %v3279 = vunpack.c.l.b16 %v704
    %v3280 = vunpack.c.l.b16 %v705
    %v3281 = vunpack.c.l.b16 %v706
    %v3282 = vunpack.c.l.b16 %v707
    %v3283 = vunpack.c.l.b16 %v708
    %v3284 = vunpack.c.l.b16 %v709
    %v3285 = vunpack.c.l.b16 %v710
    %v3286 = vunpack.c.l.b16 %v711
    %v3287 = vunpack.c.l.b16 %v712
    %v3288 = vunpack.c.l.b16 %v713
    %v3289 = vunpack.c.l.b16 %v714
    %v3290 = vunpack.c.l.b16 %v715
    %v3291 = vunpack.c.l.b16 %v716
    %v3292 = vunpack.c.l.b16 %v717
    %v3293 = vunpack.c.l.b16 %v718
    %v3294 = vunpack.c.l.b16 %v719
    %v3295 = vunpack.c.l.b16 %v720
    %v3296 = vunpack.c.l.b16 %v721
    %v3297 = vunpack.c.l.b16 %v722
    %v3298 = vunpack.c.l.b16 %v723
    %v3299 = vunpack.c.l.b16 %v724
    %v3300 = vunpack.c.l.b16 %v725
    %v3301 = vunpack.c.l.b16 %v726
    %v3302 = vunpack.c.l.b16 %v727
    %v3303 = vunpack.c.l.b16 %v728
    %v3304 = vunpack.c.l.b16 %v729
    %v3305 = vunpack.c.l.b16 %v730
    %v3306 = vunpack.c.l.b16 %v731
    %v3307 = vunpack.c.l.b16 %v732
    %v3308 = vunpack.c.l.b16 %v733
    %v3309 = vunpack.c.l.b16 %v734
    %v3310 = vunpack.c.l.b16 %v735
    %v3311 = vunpack.c.l.b16 %v736
    %v3312 = vunpack.c.l.b16 %v737
    %v3313 = vunpack.c.l.b16 %v738
    %v3314 = vunpack.c.l.b16 %v739
    %v3315 = vunpack.c.l.b16 %v740
    %v3316 = vunpack.c.l.b16 %v741
    %v3317 = vunpack.c.l.b16 %v742
    %v3318 = vunpack.c.l.b16 %v743
    %v3319 = vunpack.c.l.b16 %v744
    %v3320 = vunpack.c.l.b16 %v745
    %v3321 = vunpack.c.l.b16 %v746
    %v3322 = vunpack.c.l.b16 %v747
    %v3323 = vunpack.c.l.b16 %v748
    %v3324 = vunpack.c.l.b16 %v749
    %v3325 = vunpack.c.l.b16 %v750
    %v3326 = vunpack.c.l.b16 %v751
    %v3327 = vunpack.c.l.b16 %v752
    %v3328 = vunpack.c.l.b16 %v753
    %v3329 = vunpack.c.l.b16 %v754
    %v3330 = vunpack.c.l.b16 %v755
    %v3331 = vunpack.c.l.b16 %v756
    %v3332 = vunpack.c.l.b16 %v757
    %v3333 = vunpack.c.l.b16 %v758
    %v3334 = vunpack.c.l.b16 %v759
    %v3335 = vunpack.c.l.b16 %v760
    %v3336 = vunpack.c.l.b16 %v761
    %v3337 = vunpack.c.l.b16 %v762
    %v3338 = vunpack.c.l.b16 %v763
    %v3339 = vunpack.c.l.b16 %v764
    %v3340 = vunpack.c.l.b16 %v765
    %v3341 = vunpack.c.l.b16 %v766
    %v3342 = vunpack.c.l.b16 %v767
    %v3343 = vunpack.c.l.b16 %v768
    %v3344 = vunpack.c.l.b16 %v769
    %v3345 = vunpack.c.l.b16 %v770
    %v3346 = vunpack.c.l.b16 %v771
    %v3347 = vunpack.c.l.b16 %v772
    %v3348 = vunpack.c.l.b16 %v773
    %v3349 = vunpack.c.l.b16 %v774
    %v3350 = vunpack.c.l.b16 %v775
    %v3351 = vunpack.c.l.b16 %v776
    %v3352 = vunpack.c.l.b16 %v777
    %v3353 = vunpack.c.l.b16 %v778
    %v3354 = vunpack.c.l.b16 %v779
    %v3355 = vunpack.c.l.b16 %v780
    %v3356 = vunpack.c.l.b16 %v781
    %v3357 = vunpack.c.l.b16 %v782
    %v3358 = vunpack.c.l.b16 %v783
    %v3359 = vunpack.c.l.b16 %v784
    %v3360 = vunpack.c.l.b16 %v785
    %v3361 = vunpack.c.l.b16 %v786
    %v3362 = vunpack.c.l.b16 %v787
    %v3363 = vunpack.c.l.b16 %v788
    %v3364 = vunpack.c.l.b16 %v789
    %v3365 = vunpack.c.l.b16 %v790
    %v3366 = vunpack.c.l.b16 %v791
    %v3367 = vunpack.c.l.b16 %v792
    %v3368 = vunpack.c.l.b16 %v793
    %v3369 = vunpack.c.l.b16 %v794
    %v3370 = vunpack.c.l.b16 %v795
    %v3371 = vunpack.c.l.b16 %v796
    %v3372 = vunpack.c.l.b16 %v797
    %v3373 = vunpack.c.l.b16 %v798
    %v3374 = vunpack.c.l.b16 %v799
    %v3375 = vunpack.c.l.b16 %v800
    %v3376 = vunpack.c.l.b16 %v801
    %v3377 = vunpack.c.l.b16 %v802
    %v3378 = vunpack.c.l.b16 %v803
    %v3379 = vunpack.c.l.b16 %v804
    %v3380 = vunpack.c.l.b16 %v805
    %v3381 = vunpack.c.l.b16 %v806
    %v3382 = vunpack.c.l.b16 %v807
    %v3383 = vunpack.c.l.b16 %v808
    %v3384 = vunpack.c.l.b16 %v809
    %v3385 = vunpack.c.l.b16 %v810
    %v3386 = vunpack.c.l.b16 %v811
    %v3387 = vunpack.c.l.b16 %v812
    %v3388 = vunpack.c.l.b16 %v813
    %v3389 = vunpack.c.l.b16 %v814
    %v3390 = vunpack.c.l.b16 %v815
    %v3391 = vunpack.c.l.b16 %v816
    %v3392 = vunpack.c.l.b16 %v817
    %v3393 = vunpack.c.l.b16 %v818
    %v3394 = vunpack.c.l.b16 %v819
    %v3395 = vunpack.c.l.b16 %v820
    %v3396 = vunpack.c.l.b16 %v821
    %v3397 = vunpack.c.l.b16 %v822
    %v3398 = vunpack.c.l.b16 %v823
    %v3399 = vunpack.c.l.b16 %v824
    %v3400 = vunpack.c.l.b16 %v825
    %v3401 = vunpack.c.l.b16 %v826
    %v3402 = vunpack.c.l.b16 %v827
    %v3403 = vunpack.c.l.b16 %v828
    %v3404 = vunpack.c.l.b16 %v829
    %v3405 = vunpack.c.l.b16 %v830
    %v3406 = vunpack.c.l.b16 %v831
    %v3407 = vunpack.c.l.b16 %v832
    %v3408 = vunpack.c.l.b16 %v833
    %v3409 = vunpack.c.l.b16 %v834
    %v3410 = vunpack.c.l.b16 %v835
    %v3411 = vunpack.c.l.b16 %v836
    %v3412 = vunpack.c.l.b16 %v837
    %v3413 = vunpack.c.l.b16 %v838
    %v3414 = vunpack.c.l.b16 %v839
    %v3415 = vunpack.c.l.b16 %v840
    %v3416 = vunpack.c.l.b16 %v841
    %v3417 = vunpack.c.l.b16 %v842
    %v3418 = vunpack.c.l.b16 %v843
    %v3419 = vunpack.c.l.b16 %v844
    %v3420 = vunpack.c.l.b16 %v845
    %v3421 = vunpack.c.l.b16 %v846
    %v3422 = vunpack.c.l.b16 %v847
    %v3423 = vunpack.c.l.b16 %v848
    %v3424 = vunpack.c.l.b16 %v849
    %v3425 = vunpack.c.l.b16 %v850
    %v3426 = vunpack.c.l.b16 %v851
    %v3427 = vunpack.c.l.b16 %v852
    %v3428 = vunpack.c.l.b16 %v853
    %v3429 = vunpack.c.l.b16 %v854
    %v3430 = vunpack.c.l.b16 %v855
    %v3431 = vunpack.c.l.b16 %v856
    %v3432 = vunpack.c.l.b16 %v857
    %v3433 = vunpack.c.l.b16 %v858
    %v3434 = vunpack.c.l.b16 %v859
    %v3435 = vunpack.c.l.b16 %v860
    %v3436 = vunpack.c.l.b16 %v861
    %v3437 = vunpack.c.l.b16 %v862
    %v3438 = vunpack.c.l.b16 %v863
    %v3439 = vunpack.c.l.b16 %v864
    %v3440 = vunpack.c.l.b16 %v865
    %v3441 = vunpack.c.l.b16 %v866
    %v3442 = vunpack.c.l.b16 %v867
    %v3443 = vunpack.c.l.b16 %v868
    %v3444 = vunpack.c.l.b16 %v869
    %v3445 = vunpack.c.l.b16 %v870
    %v3446 = vunpack.c.l.b16 %v871
    %v3447 = vunpack.c.l.b16 %v872
    %v3448 = vunpack.c.l.b16 %v873
    %v3449 = vunpack.c.l.b16 %v874
    %v3450 = vunpack.c.l.b16 %v875
    %v3451 = vunpack.c.l.b16 %v876
    %v3452 = vunpack.c.l.b16 %v877
    %v3453 = vunpack.c.l.b16 %v878
    %v3454 = vunpack.c.l.b16 %v879
    %v3455 = vunpack.c.l.b16 %v880
    %v3456 = vunpack.c.l.b16 %v881
    %v3457 = vunpack.c.l.b16 %v882
    %v3458 = vunpack.c.l.b16 %v883
    %v3459 = vunpack.c.l.b16 %v884
    %v3460 = vunpack.c.l.b16 %v885
    %v3461 = vunpack.c.l.b16 %v886
    %v3462 = vunpack.c.l.b16 %v887
    %v3463 = vunpack.c.l.b16 %v888
    %v3464 = vunpack.c.l.b16 %v889
    %v3465 = vunpack.c.l.b16 %v890
    %v3466 = vunpack.c.l.b16 %v891
    %v3467 = vunpack.c.l.b16 %v892
    %v3468 = vunpack.c.l.b16 %v893
    %v3469 = vunpack.c.l.b16 %v894
    %v3470 = vunpack.c.l.b16 %v895
    %v3471 = vunpack.c.l.b16 %v896
    %v3472 = vunpack.c.l.b16 %v897
    %v3473 = vunpack.c.l.b16 %v898
    %v3474 = vunpack.c.l.b16 %v899
    %v3475 = vunpack.c.l.b16 %v900
    %v3476 = vunpack.c.l.b16 %v901
    %v3477 = vunpack.c.l.b16 %v902
    %v3478 = vunpack.c.l.b16 %v903
    %v3479 = vunpack.c.l.b16 %v904
    %v3480 = vunpack.c.l.b16 %v905
    %v3481 = vunpack.c.l.b16 %v906
    %v3482 = vunpack.c.l.b16 %v907
    %v3483 = vunpack.c.l.b16 %v908
    %v3484 = vunpack.c.l.b16 %v909
    %v3485 = vunpack.c.l.b16 %v910
    %v3486 = vunpack.c.l.b16 %v911
    %v3487 = vunpack.c.l.b16 %v912
    %v3488 = vunpack.c.l.b16 %v913
    %v3489 = vunpack.c.l.b16 %v914
    %v3490 = vunpack.c.l.b16 %v915
    %v3491 = vunpack.c.l.b16 %v916
    %v3492 = vunpack.c.l.b16 %v917
    %v3493 = vunpack.c.l.b16 %v918
    %v3494 = vunpack.c.l.b16 %v919
    %v3495 = vunpack.c.l.b16 %v920
    %v3496 = vunpack.c.l.b16 %v921
    %v3497 = vunpack.c.l.b16 %v922
    %v3498 = vunpack.c.l.b16 %v923
    %v3499 = vunpack.c.l.b16 %v924
    %v3500 = vunpack.c.l.b16 %v925
    %v3501 = vunpack.c.l.b16 %v926
    %v3502 = vunpack.c.l.b16 %v927
    %v3503 = vunpack.c.l.b16 %v928
    %v3504 = vunpack.c.l.b16 %v929
    %v3505 = vunpack.c.l.b16 %v930
    %v3506 = vunpack.c.l.b16 %v931
    %v3507 = vunpack.c.l.b16 %v932
    %v3508 = vunpack.c.l.b16 %v933
    %v3509 = vunpack.c.l.b16 %v934
    %v3510 = vunpack.c.l.b16 %v935
    %v3511 = vunpack.c.l.b16 %v936
    %v3512 = vunpack.c.l.b16 %v937
    %v3513 = vunpack.c.l.b16 %v938
    %v3514 = vunpack.c.l.b16 %v939
    %v3515 = vunpack.c.l.b16 %v940
    %v3516 = vunpack.c.l.b16 %v941
    %v3517 = vunpack.c.l.b16 %v942
    %v3518 = vunpack.c.l.b16 %v943
    %v3519 = vunpack.c.l.b16 %v944
    %v3520 = vunpack.c.l.b16 %v945
    %v3521 = vunpack.c.l.b16 %v946
    %v3522 = vunpack.c.l.b16 %v947
    %v3523 = vunpack.c.l.b16 %v948
    %v3524 = vunpack.c.l.b16 %v949
    %v3525 = vunpack.c.l.b16 %v950
    %v3526 = vunpack.c.l.b16 %v951
    %v3527 = vunpack.c.l.b16 %v952
    %v3528 = vunpack.c.l.b16 %v953
    %v3529 = vunpack.c.l.b16 %v954
    %v3530 = vunpack.c.l.b16 %v955
    %v3531 = vunpack.c.l.b16 %v956
    %v3532 = vunpack.c.l.b16 %v957
    %v3533 = vunpack.c.l.b16 %v958
    %v3534 = vunpack.c.l.b16 %v959
    %v3535 = vunpack.c.l.b16 %v960
    %v3536 = vunpack.c.l.b16 %v961
    %v3537 = vunpack.c.l.b16 %v962
    %v3538 = vunpack.c.l.b16 %v963
    %v3539 = vunpack.c.l.b16 %v964
    %v3540 = vunpack.c.l.b16 %v965
    %v3541 = vunpack.c.l.b16 %v966
    %v3542 = vunpack.c.l.b16 %v967
    %v3543 = vunpack.c.l.b16 %v968
    %v3544 = vunpack.c.l.b16 %v969
    %v3545 = vunpack.c.l.b16 %v970
    %v3546 = vunpack.c.l.b16 %v971
    %v3547 = vunpack.c.l.b16 %v972
    %v3548 = vunpack.c.l.b16 %v973
    %v3549 = vunpack.c.l.b16 %v974
    %v3550 = vunpack.c.l.b16 %v975
    %v3551 = vunpack.c.l.b16 %v976
    %v3552 = vunpack.c.l.b16 %v977
    %v3553 = vunpack.c.l.b16 %v978
    %v3554 = vunpack.c.l.b16 %v979
    %v3555 = vunpack.c.l.b16 %v980
    %v3556 = vunpack.c.l.b16 %v981
    %v3557 = vunpack.c.l.b16 %v982
    %v3558 = vunpack.c.l.b16 %v983
    %v3559 = vunpack.c.l.b16 %v984
    %v3560 = vunpack.c.l.b16 %v985
    %v3561 = vunpack.c.l.b16 %v986
    %v3562 = vunpack.c.l.b16 %v987
    %v3563 = vunpack.c.l.b16 %v988
    %v3564 = vunpack.c.l.b16 %v989
    %v3565 = vunpack.c.l.b16 %v990
    %v3566 = vunpack.c.l.b16 %v991
    %v3567 = vunpack.c.l.b16 %v992
    %v3568 = vunpack.c.l.b16 %v993
    %v3569 = vunpack.c.l.b16 %v994
    %v3570 = vunpack.c.l.b16 %v995
    %v3571 = vunpack.c.l.b16 %v996
    %v3572 = vunpack.c.l.b16 %v997
    %v3573 = vunpack.c.l.b16 %v998
    %v3574 = vunpack.c.l.b16 %v999
    %v3575 = vunpack.c.l.b16 %v1000
    %v3576 = vunpack.c.l.b16 %v1001
    %v3577 = vunpack.c.l.b16 %v1002
    %v3578 = vunpack.c.l.b16 %v1003
    %v3579 = vunpack.c.l.b16 %v1004
    %v3580 = vunpack.c.l.b16 %v1005
    %v3581 = vunpack.c.l.b16 %v1006
    %v3582 = vunpack.c.l.b16 %v1007
    %v3583 = vunpack.c.l.b16 %v1008
    %v3584 = vunpack.c.l.b16 %v1009
    %v3585 = vunpack.c.l.b16 %v1010
    %v3586 = vunpack.c.l.b16 %v1011
    %v3587 = vunpack.c.l.b16 %v1012
    %v3588 = vunpack.c.l.b16 %v1013
    %v3589 = vunpack.c.l.b16 %v1014
    %v3590 = vunpack.c.l.b16 %v1015
    %v3591 = vunpack.c.l.b16 %v1016
    %v3592 = vunpack.c.l.b16 %v1017
    %v3593 = vunpack.c.l.b16 %v1018
    %v3594 = vunpack.c.l.b16 %v1019
    %v3595 = vunpack.c.l.b16 %v1020
    %v3596 = vunpack.c.l.b16 %v1021
    %v3597 = vunpack.c.l.b16 %v1022
    %v3598 = vunpack.c.l.b16 %v1023
    %v3599 = vunpack.c.l.b16 %v1024
    %v3600 = vunpack.c.l.b16 %v1025
    %v3601 = vunpack.c.l.b16 %v1026
    %v3602 = vunpack.c.l.b16 %v1027
    %v3603 = vunpack.c.l.b16 %v1028
    %v3604 = vunpack.c.l.b16 %v1029
    %v3605 = vunpack.c.l.b16 %v1030
    %v3606 = vunpack.c.l.b16 %v1031
    %v3607 = vunpack.c.l.b16 %v1032
    %v3608 = vunpack.c.l.b16 %v1033
    %v3609 = vunpack.c.l.b16 %v1034
    %v3610 = vunpack.c.l.b16 %v1035
    %v3611 = vunpack.c.l.b16 %v1036
    %v3612 = vunpack.c.l.b16 %v1037
    %v3613 = vunpack.c.l.b16 %v1038
    %v3614 = vunpack.c.l.b16 %v1039
    %v3615 = vunpack.c.l.b16 %v1040
    %v3616 = vunpack.c.l.b16 %v1041
    %v3617 = vunpack.c.l.b16 %v1042
    %v3618 = vunpack.c.l.b16 %v1043
    %v3619 = vunpack.c.l.b16 %v1044
    %v3620 = vunpack.c.l.b16 %v1045
    %v3621 = vunpack.c.l.b16 %v1046
    %v3622 = vunpack.c.l.b16 %v1047
    %v3623 = vunpack.c.l.b16 %v1048
    %v3624 = vunpack.c.l.b16 %v1049
    %v3625 = vunpack.c.l.b16 %v1050
    %v3626 = vunpack.c.l.b16 %v1051
    %v3627 = vunpack.c.l.b16 %v1052
    %v3628 = vunpack.c.l.b16 %v1053
    %v3629 = vunpack.c.l.b16 %v1054
    %v3630 = vunpack.c.l.b16 %v1055
    %v3631 = vunpack.c.l.b16 %v1056
    %v3632 = vunpack.c.l.b16 %v1057
    %v3633 = vunpack.c.l.b16 %v1058
    %v3634 = vunpack.c.l.b16 %v1059
    %v3635 = vunpack.c.l.b16 %v1060
    %v3636 = vunpack.c.l.b16 %v1061
    %v3637 = vunpack.c.l.b16 %v1062
    %v3638 = vunpack.c.l.b16 %v1063
    %v3639 = vunpack.c.l.b16 %v1064
    %v3640 = vunpack.c.l.b16 %v1065
    %v3641 = vunpack.c.l.b16 %v1066
    %v3642 = vunpack.c.l.b16 %v1067
    %v3643 = vunpack.c.l.b16 %v1068
    %v3644 = vunpack.c.l.b16 %v1069
    %v3645 = vunpack.c.l.b16 %v1070
    %v3646 = vunpack.c.l.b16 %v1071
    %v3647 = vunpack.c.l.b16 %v1072
    %v3648 = vunpack.c.l.b16 %v1073
    %v3649 = vunpack.c.l.b16 %v1074
    %v3650 = vunpack.c.l.b16 %v1075
    %v3651 = vunpack.c.l.b16 %v1076
    %v3652 = vunpack.c.l.b16 %v1077
    %v3653 = vunpack.c.l.b16 %v1078
    %v3654 = vunpack.c.l.b16 %v1079
    %v3655 = vunpack.c.l.b16 %v1080
    %v3656 = vunpack.c.l.b16 %v1081
    %v3657 = vunpack.c.l.b16 %v1082
    %v3658 = vunpack.c.l.b16 %v1083
    %v3659 = vunpack.c.l.b16 %v1084
    %v3660 = vunpack.c.l.b16 %v1085
    %v3661 = vunpack.c.l.b16 %v1086
    %v3662 = vunpack.c.l.b16 %v1087
    %v3663 = vunpack.c.l.b16 %v1088
    %v3664 = vunpack.c.l.b16 %v1089
    %v3665 = vunpack.c.l.b16 %v1090
    %v3666 = vunpack.c.l.b16 %v1091
    %v3667 = vunpack.c.l.b16 %v1092
    %v3668 = vunpack.c.l.b16 %v1093
    %v3669 = vunpack.c.l.b16 %v1094
    %v3670 = vunpack.c.l.b16 %v1095
    %v3671 = vunpack.c.l.b16 %v1096
    %v3672 = vunpack.c.l.b16 %v1097
    %v3673 = vunpack.c.l.b16 %v1098
    %v3674 = vunpack.c.l.b16 %v1099
    %v3675 = vunpack.c.l.b16 %v1100
    %v3676 = vunpack.c.l.b16 %v1101
    %v3677 = vunpack.c.l.b16 %v1102
    %v3678 = vunpack.c.l.b16 %v1103
    %v3679 = vunpack.c.l.b16 %v1104
    %v3680 = vunpack.c.l.b16 %v1105
    %v3681 = vunpack.c.l.b16 %v1106
    %v3682 = vunpack.c.l.b16 %v1107
    %v3683 = vunpack.c.l.b16 %v1108
    %v3684 = vunpack.c.l.b16 %v1109
    %v3685 = vunpack.c.l.b16 %v1110
    %v3686 = vunpack.c.l.b16 %v1111
    %v3687 = vunpack.c.l.b16 %v1112
    %v3688 = vunpack.c.l.b16 %v1113
    %v3689 = vunpack.c.l.b16 %v1114
    %v3690 = vunpack.c.l.b16 %v1115
    %v3691 = vunpack.c.l.b16 %v1116
    %v3692 = vunpack.c.l.b16 %v1117
    %v3693 = vunpack.c.l.b16 %v1118
    %v3694 = vunpack.c.l.b16 %v1119
    %v3695 = vunpack.c.l.b16 %v1120
    %v3696 = vunpack.c.l.b16 %v1121
    %v3697 = vunpack.c.l.b16 %v1122
    %v3698 = vunpack.c.l.b16 %v1123
    %v3699 = vunpack.c.l.b16 %v1124
    %v3700 = vunpack.c.l.b16 %v1125
    %v3701 = vunpack.c.l.b16 %v1126
    %v3702 = vunpack.c.l.b16 %v1127
    %v3703 = vunpack.c.l.b16 %v1128
    %v3704 = vunpack.c.l.b16 %v1129
    %v3705 = vunpack.c.l.b16 %v1130
    %v3706 = vunpack.c.l.b16 %v1131
    %v3707 = vunpack.c.l.b16 %v1132
    %v3708 = vunpack.c.l.b16 %v1133
    %v3709 = vunpack.c.l.b16 %v1134
    %v3710 = vunpack.c.l.b16 %v1135
    %v3711 = vunpack.c.l.b16 %v1136
    %v3712 = vunpack.c.l.b16 %v1137
    %v3713 = vunpack.c.l.b16 %v1138
    %v3714 = vunpack.c.l.b16 %v1139
    %v3715 = vunpack.c.l.b16 %v1140
    %v3716 = vunpack.c.l.b16 %v1141
    %v3717 = vunpack.c.l.b16 %v1142
    %v3718 = vunpack.c.l.b16 %v1143
    %v3719 = vunpack.c.l.b16 %v1144
    %v3720 = vunpack.c.l.b16 %v1145
    %v3721 = vunpack.c.l.b16 %v1146
    %v3722 = vunpack.c.l.b16 %v1147
    %v3723 = vunpack.c.l.b16 %v1148
    %v3724 = vunpack.c.l.b16 %v1149
    %v3725 = vunpack.c.l.b16 %v1150
    %v3726 = vunpack.c.l.b16 %v1151
    %v3727 = vunpack.c.l.b16 %v1152
    %v3728 = vunpack.c.l.b16 %v1153
    %v3729 = vunpack.c.l.b16 %v1154
    %v3730 = vunpack.c.l.b16 %v1155
    %v3731 = vunpack.c.l.b16 %v1156
    %v3732 = vunpack.c.l.b16 %v1157
    %v3733 = vunpack.c.l.b16 %v1158
    %v3734 = vunpack.c.l.b16 %v1159
    %v3735 = vunpack.c.l.b16 %v1160
    %v3736 = vunpack.c.l.b16 %v1161
    %v3737 = vunpack.c.l.b16 %v1162
    %v3738 = vunpack.c.l.b16 %v1163
    %v3739 = vunpack.c.l.b16 %v1164
    %v3740 = vunpack.c.l.b16 %v1165
    %v3741 = vunpack.c.l.b16 %v1166
    %v3742 = vunpack.c.l.b16 %v1167
    %v3743 = vunpack.c.l.b16 %v1168
    %v3744 = vunpack.c.l.b16 %v1169
    %v3745 = vunpack.c.l.b16 %v1170
    %v3746 = vunpack.c.l.b16 %v1171
    %v3747 = vunpack.c.l.b16 %v1172
    %v3748 = vunpack.c.l.b16 %v1173
    %v3749 = vunpack.c.l.b16 %v1174
    %v3750 = vunpack.c.l.b16 %v1175
    %v3751 = vunpack.c.l.b16 %v1176
    %v3752 = vunpack.c.l.b16 %v1177
    %v3753 = vunpack.c.l.b16 %v1178
    %v3754 = vunpack.c.l.b16 %v1179
    %v3755 = vunpack.c.l.b16 %v1180
    %v3756 = vunpack.c.l.b16 %v1181
    %v3757 = vunpack.c.l.b16 %v1182
    %v3758 = vunpack.c.l.b16 %v1183
    %v3759 = vunpack.c.l.b16 %v1184
    %v3760 = vunpack.c.l.b16 %v1185
    %v3761 = vunpack.c.l.b16 %v1186
    %v3762 = vunpack.c.l.b16 %v1187
    %v3763 = vunpack.c.l.b16 %v1188
    %v3764 = vunpack.c.l.b16 %v1189
    %v3765 = vunpack.c.l.b16 %v1190
    %v3766 = vunpack.c.l.b16 %v1191
    %v3767 = vunpack.c.l.b16 %v1192
    %v3768 = vunpack.c.l.b16 %v1193
    %v3769 = vunpack.c.l.b16 %v1194
    %v3770 = vunpack.c.l.b16 %v1195
    %v3771 = vunpack.c.l.b16 %v1196
    %v3772 = vunpack.c.l.b16 %v1197
    %v3773 = vunpack.c.l.b16 %v1198
    %v3774 = vunpack.c.l.b16 %v1199
    %v3775 = vunpack.c.l.b16 %v1200
    %v3776 = vunpack.c.l.b16 %v1201
    %v3777 = vunpack.c.l.b16 %v1202
    %v3778 = vunpack.c.l.b16 %v1203
    %v3779 = vunpack.c.l.b16 %v1204
    %v3780 = vunpack.c.l.b16 %v1205
    %v3781 = vunpack.c.l.b16 %v1206
    %v3782 = vunpack.c.l.b16 %v1207
    %v3783 = vunpack.c.l.b16 %v1208
    %v3784 = vunpack.c.l.b16 %v1209
    %v3785 = vunpack.c.l.b16 %v1210
    %v3786 = vunpack.c.l.b16 %v1211
    %v3787 = vunpack.c.l.b16 %v1212
    %v3788 = vunpack.c.l.b16 %v1213
    %v3789 = vunpack.c.l.b16 %v1214
    %v3790 = vunpack.c.l.b16 %v1215
    %v3791 = vunpack.c.l.b16 %v1216
    %v3792 = vunpack.c.l.b16 %v1217
    %v3793 = vunpack.c.l.b16 %v1218
    %v3794 = vunpack.c.l.b16 %v1219
    %v3795 = vunpack.c.l.b16 %v1220
    %v3796 = vunpack.c.l.b16 %v1221
    %v3797 = vunpack.c.l.b16 %v1222
    %v3798 = vunpack.c.l.b16 %v1223
    %v3799 = vunpack.c.l.b16 %v1224
    %v3800 = vunpack.c.l.b16 %v1225
    %v3801 = vunpack.c.l.b16 %v1226
    %v3802 = vunpack.c.l.b16 %v1227
    %v3803 = vunpack.c.l.b16 %v1228
    %v3804 = vunpack.c.l.b16 %v1229
    %v3805 = vunpack.c.l.b16 %v1230
    %v3806 = vunpack.c.l.b16 %v1231
    %v3807 = vunpack.c.l.b16 %v1232
    %v3808 = vunpack.c.l.b16 %v1233
    %v3809 = vunpack.c.l.b16 %v1234
    %v3810 = vunpack.c.l.b16 %v1235
    %v3811 = vunpack.c.l.b16 %v1236
    %v3812 = vunpack.c.l.b16 %v1237
    %v3813 = vunpack.c.l.b16 %v1238
    %v3814 = vunpack.c.l.b16 %v1239
    %v3815 = vunpack.c.l.b16 %v1240
    %v3816 = vunpack.c.l.b16 %v1241
    %v3817 = vunpack.c.l.b16 %v1242
    %v3818 = vunpack.c.l.b16 %v1243
    %v3819 = vunpack.c.l.b16 %v1244
    %v3820 = vunpack.c.l.b16 %v1245
    %v3821 = vunpack.c.l.b16 %v1246
    %v3822 = vunpack.c.l.b16 %v1247
    %v3823 = vunpack.c.l.b16 %v1248
    %v3824 = vunpack.c.l.b16 %v1249
    %v3825 = vunpack.c.l.b16 %v1250
    %v3826 = vunpack.c.l.b16 %v1251
    %v3827 = vunpack.c.l.b16 %v1252
    %v3828 = vunpack.c.l.b16 %v1253
    %v3829 = vunpack.c.l.b16 %v1254
    %v3830 = vunpack.c.l.b16 %v1255
    %v3831 = vunpack.c.l.b16 %v1256
    %v3832 = vunpack.c.l.b16 %v1257
    %v3833 = vunpack.c.l.b16 %v1258
    %v3834 = vunpack.c.l.b16 %v1259
    %v3835 = vunpack.c.l.b16 %v1260
    %v3836 = vunpack.c.l.b16 %v1261
    %v3837 = vunpack.c.l.b16 %v1262
    %v3838 = vunpack.c.l.b16 %v1263
    %v3839 = vunpack.c.l.b16 %v1264
    %v3840 = vunpack.c.l.b16 %v1265
    %v3841 = vunpack.c.l.b16 %v1266
    %v3842 = vunpack.c.l.b16 %v1267
    %v3843 = vunpack.c.l.b16 %v1268
    %v3844 = vunpack.c.l.b16 %v1269
    %v3845 = vunpack.c.l.b16 %v1270
    %v3846 = vunpack.c.l.b16 %v1271
    %v3847 = vunpack.c.l.b16 %v1272
    %v3848 = vunpack.c.l.b16 %v1273
    %v3849 = vunpack.c.l.b16 %v1274
    %v3850 = vunpack.c.l.b16 %v1275
    %v3851 = vunpack.c.l.b16 %v1276
    %v3852 = vunpack.c.l.b16 %v1277
    %v3853 = vunpack.c.l.b16 %v1278
    %v3854 = vunpack.c.l.b16 %v1279
    %v3855 = vunpack.c.l.b16 %v1280
    %v3856 = vunpack.c.l.b16 %v1281
    %v3857 = vunpack.c.l.b16 %v1282
    %v3858 = vunpack.c.l.b16 %v1283
    %v3859 = vunpack.c.l.b16 %v1284
    %v3860 = vunpack.c.l.b16 %v1285
    %v3861 = vunpack.c.l.b16 %v1286
    %v3862 = vunpack.c.l.b16 %v1287
    %v3863 = vunpack.c.l.b16 %v1288
    %v3864 = vunpack.c.l.b16 %v1289
    %v3865 = vunpack.c.l.b16 %v1290
    %v3866 = vunpack.c.l.b16 %v1291
    %v3867 = vunpack.c.l.b16 %v1292
    %v3868 = vunpack.c.l.b16 %v1293
    %v3869 = vunpack.c.l.b16 %v1294
    %v3870 = vunpack.c.l.b16 %v1295
    %v3871 = vunpack.c.l.b16 %v1296
    %v3872 = vunpack.c.l.b16 %v1297
    %v3873 = vunpack.c.l.b16 %v1298
    %v3874 = vunpack.c.l.b16 %v1299
    %v3875 = vunpack.c.l.b16 %v1300
    %v3876 = vunpack.c.l.b16 %v1301
    %v3877 = vunpack.c.l.b16 %v1302
    %v3878 = vunpack.c.l.b16 %v1303
    %v3879 = vunpack.c.l.b16 %v1304
    %v3880 = vunpack.c.l.b16 %v1305
    %v3881 = vunpack.c.l.b16 %v1306
    %v3882 = vunpack.c.l.b16 %v1307
    %v3883 = vunpack.c.l.b16 %v1308
    %v3884 = vunpack.c.l.b16 %v1309
    %v3885 = vunpack.c.l.b16 %v1310
    %v3886 = vunpack.c.l.b16 %v1311
    %v3887 = vunpack.c.l.b16 %v1312
    %v3888 = vunpack.c.l.b16 %v1313
    %v3889 = vunpack.c.l.b16 %v1314
    %v3890 = vunpack.c.l.b16 %v1315
    %v3891 = vunpack.c.l.b16 %v1316
    %v3892 = vunpack.c.l.b16 %v1317
    %v3893 = vunpack.c.l.b16 %v1318
    %v3894 = vunpack.c.l.b16 %v1319
    %v3895 = vunpack.c.l.b16 %v1320
    %v3896 = vunpack.c.l.b16 %v1321
    %v3897 = vunpack.c.l.b16 %v1322
    %v3898 = vunpack.c.l.b16 %v1323
    %v3899 = vunpack.c.l.b16 %v1324
    %v3900 = vunpack.c.l.b16 %v1325
    %v3901 = vunpack.c.l.b16 %v1326
    %v3902 = vunpack.c.l.b16 %v1327
    %v3903 = vunpack.c.l.b16 %v1328
    %v3904 = vunpack.c.l.b16 %v1329
    %v3905 = vunpack.c.l.b16 %v1330
    %v3906 = vunpack.c.l.b16 %v1331
    %v3907 = vunpack.c.l.b16 %v1332
    %v3908 = vunpack.c.l.b16 %v1333
    %v3909 = vunpack.c.l.b16 %v1334
    %v3910 = vunpack.c.l.b16 %v1335
    %v3911 = vunpack.c.l.b16 %v1336
    %v3912 = vunpack.c.l.b16 %v1337
    %v3913 = vunpack.c.l.b16 %v1338
    %v3914 = vunpack.c.l.b16 %v1339
    %v3915 = vunpack.c.l.b16 %v1340
    %v3916 = vunpack.c.l.b16 %v1341
    %v3917 = vunpack.c.l.b16 %v1342
    %v3918 = vunpack.c.l.b16 %v1343
    %v3919 = vunpack.c.l.b16 %v1344
    %v3920 = vunpack.c.l.b16 %v1345
    %v3921 = vunpack.c.l.b16 %v1346
    %v3922 = vunpack.c.l.b16 %v1347
    %v3923 = vunpack.c.l.b16 %v1348
    %v3924 = vunpack.c.l.b16 %v1349
    %v3925 = vunpack.c.l.b16 %v1350
    %v3926 = vunpack.c.l.b16 %v1351
    %v3927 = vunpack.c.l.b16 %v1352
    %v3928 = vunpack.c.l.b16 %v1353
    %v3929 = vunpack.c.l.b16 %v1354
    %v3930 = vunpack.c.l.b16 %v1355
    %v3931 = vunpack.c.l.b16 %v1356
    %v3932 = vunpack.c.l.b16 %v1357
    %v3933 = vunpack.c.l.b16 %v1358
    %v3934 = vunpack.c.l.b16 %v1359
    %v3935 = vunpack.c.l.b16 %v1360
    %v3936 = vunpack.c.l.b16 %v1361
    %v3937 = vunpack.c.l.b16 %v1362
    %v3938 = vunpack.c.l.b16 %v1363
    %v3939 = vunpack.c.l.b16 %v1364
    %v3940 = vunpack.c.l.b16 %v1365
    %v3941 = vunpack.c.l.b16 %v1366
    %v3942 = vunpack.c.l.b16 %v1367
    %v3943 = vunpack.c.l.b16 %v1368
    %v3944 = vunpack.c.l.b16 %v1369
    %v3945 = vunpack.c.l.b16 %v1370
    %v3946 = vunpack.c.l.b16 %v1371
    %v3947 = vunpack.c.l.b16 %v1372
    %v3948 = vunpack.c.l.b16 %v1373
    %v3949 = vunpack.c.l.b16 %v1374
    %v3950 = vunpack.c.l.b16 %v1375
    %v3951 = vunpack.c.l.b16 %v1376
    %v3952 = vunpack.c.l.b16 %v1377
    %v3953 = vunpack.c.l.b16 %v1378
    %v3954 = vunpack.c.l.b16 %v1379
    %v3955 = vunpack.c.l.b16 %v1380
    %v3956 = vunpack.c.l.b16 %v1381
    %v3957 = vunpack.c.l.b16 %v1382
    %v3958 = vunpack.c.l.b16 %v1383
    %v3959 = vunpack.c.l.b16 %v1384
    %v3960 = vunpack.c.l.b16 %v1385
    %v3961 = vunpack.c.l.b16 %v1386
    %v3962 = vunpack.c.l.b16 %v1387
    %v3963 = vunpack.c.l.b16 %v1388
    %v3964 = vunpack.c.l.b16 %v1389
    %v3965 = vunpack.c.l.b16 %v1390
    %v3966 = vunpack.c.l.b16 %v1391
    %v3967 = vunpack.c.l.b16 %v1392
    %v3968 = vunpack.c.l.b16 %v1393
    %v3969 = vunpack.c.l.b16 %v1394
    %v3970 = vunpack.c.l.b16 %v1395
    %v3971 = vunpack.c.l.b16 %v1396
    %v3972 = vunpack.c.l.b16 %v1397
    %v3973 = vunpack.c.l.b16 %v1398
    %v3974 = vunpack.c.l.b16 %v1399
    %v3975 = vunpack.c.l.b16 %v1400
    %v3976 = vunpack.c.l.b16 %v1401
    %v3977 = vunpack.c.l.b16 %v1402
    %v3978 = vunpack.c.l.b16 %v1403
    %v3979 = vunpack.c.l.b16 %v1404
    %v3980 = vunpack.c.l.b16 %v1405
    %v3981 = vunpack.c.l.b16 %v1406
    %v3982 = vunpack.c.l.b16 %v1407
    %v3983 = vunpack.c.l.b16 %v1408
    %v3984 = vunpack.c.l.b16 %v1409
    %v3985 = vunpack.c.l.b16 %v1410
    %v3986 = vunpack.c.l.b16 %v1411
    %v3987 = vunpack.c.l.b16 %v1412
    %v3988 = vunpack.c.l.b16 %v1413
    %v3989 = vunpack.c.l.b16 %v1414
    %v3990 = vunpack.c.l.b16 %v1415
    %v3991 = vunpack.c.l.b16 %v1416
    %v3992 = vunpack.c.l.b16 %v1417
    %v3993 = vunpack.c.l.b16 %v1418
    %v3994 = vunpack.c.l.b16 %v1419
    %v3995 = vunpack.c.l.b16 %v1420
    %v3996 = vunpack.c.l.b16 %v1421
    %v3997 = vunpack.c.l.b16 %v1422
    %v3998 = vunpack.c.l.b16 %v1423
    %v3999 = vunpack.c.l.b16 %v1424
    %v4000 = vunpack.c.l.b16 %v1425
    %v4001 = vunpack.c.l.b16 %v1426
    %v4002 = vunpack.c.l.b16 %v1427
    %v4003 = vunpack.c.l.b16 %v1428
    %v4004 = vunpack.c.l.b16 %v1429
    %v4005 = vunpack.c.l.b16 %v1430
    %v4006 = vunpack.c.l.b16 %v1431
    %v4007 = vunpack.c.l.b16 %v1432
    %v4008 = vunpack.c.l.b16 %v1433
    %v4009 = vunpack.c.l.b16 %v1434
    %v4010 = vunpack.c.l.b16 %v1435
    %v4011 = vunpack.c.l.b16 %v1436
    %v4012 = vunpack.c.l.b16 %v1437
    %v4013 = vunpack.c.l.b16 %v1438
    %v4014 = vunpack.c.l.b16 %v1439
    %v4015 = vunpack.c.l.b16 %v1440
    %v4016 = vunpack.c.l.b16 %v1441
    %v4017 = vunpack.c.l.b16 %v1442
    %v4018 = vunpack.c.l.b16 %v1443
    %v4019 = vunpack.c.l.b16 %v1444
    %v4020 = vunpack.c.l.b16 %v1445
    %v4021 = vunpack.c.l.b16 %v1446
    %v4022 = vunpack.c.l.b16 %v1447
    %v4023 = vunpack.c.l.b16 %v1448
    %v4024 = vunpack.c.l.b16 %v1449
    %v4025 = vunpack.c.l.b16 %v1450
    %v4026 = vunpack.c.l.b16 %v1451
    %v4027 = vunpack.c.l.b16 %v1452
    %v4028 = vunpack.c.l.b16 %v1453
    %v4029 = vunpack.c.l.b16 %v1454
    %v4030 = vunpack.c.l.b16 %v1455
    %v4031 = vunpack.c.l.b16 %v1456
    %v4032 = vunpack.c.l.b16 %v1457
    %v4033 = vunpack.c.l.b16 %v1458
    %v4034 = vunpack.c.l.b16 %v1459
    %v4035 = vunpack.c.l.b16 %v1460
    %v4036 = vunpack.c.l.b16 %v1461
    %v4037 = vunpack.c.l.b16 %v1462
    %v4038 = vunpack.c.l.b16 %v1463
    %v4039 = vunpack.c.l.b16 %v1464
    %v4040 = vunpack.c.l.b16 %v1465
    %v4041 = vunpack.c.l.b16 %v1466
    %v4042 = vunpack.c.l.b16 %v1467
    %v4043 = vunpack.c.l.b16 %v1468
    %v4044 = vunpack.c.l.b16 %v1469
    %v4045 = vunpack.c.l.b16 %v1470
    %v4046 = vunpack.c.l.b16 %v1471
    %v4047 = vunpack.c.l.b16 %v1472
    %v4048 = vunpack.c.l.b16 %v1473
    %v4049 = vunpack.c.l.b16 %v1474
    %v4050 = vunpack.c.l.b16 %v1475
    %v4051 = vunpack.c.l.b16 %v1476
    %v4052 = vunpack.c.l.b16 %v1477
    %v4053 = vunpack.c.l.b16 %v1478
    %v4054 = vunpack.c.l.b16 %v1479
    %v4055 = vunpack.c.l.b16 %v1480
    %v4056 = vunpack.c.l.b16 %v1481
    %v4057 = vunpack.c.l.b16 %v1482
    %v4058 = vunpack.c.l.b16 %v1483
    %v4059 = vunpack.c.l.b16 %v1484
    %v4060 = vunpack.c.l.b16 %v1485
    %v4061 = vunpack.c.l.b16 %v1486
    %v4062 = vunpack.c.l.b16 %v1487
    %v4063 = vunpack.c.l.b16 %v1488
    %v4064 = vunpack.c.l.b16 %v1489
    %v4065 = vunpack.c.l.b16 %v1490
    %v4066 = vunpack.c.l.b16 %v1491
    %v4067 = vunpack.c.l.b16 %v1492
    %v4068 = vunpack.c.l.b16 %v1493
    %v4069 = vunpack.c.l.b16 %v1494
    %v4070 = vunpack.c.l.b16 %v1495
    %v4071 = vunpack.c.l.b16 %v1496
    %v4072 = vunpack.c.l.b16 %v1497
    %v4073 = vunpack.c.l.b16 %v1498
    %v4074 = vunpack.c.l.b16 %v1499
    %v4075 = vunpack.c.l.b16 %v1500
    %v4076 = vunpack.c.l.b16 %v1501
    %v4077 = vunpack.c.l.b16 %v1502
    %v4078 = vunpack.c.l.b16 %v1503
    %v4079 = vunpack.c.l.b16 %v1504
    %v4080 = vunpack.c.l.b16 %v1505
    %v4081 = vunpack.c.l.b16 %v1506
    %v4082 = vunpack.c.l.b16 %v1507
    %v4083 = vunpack.c.l.b16 %v1508
    %v4084 = vunpack.c.l.b16 %v1509
    %v4085 = vunpack.c.l.b16 %v1510
    %v4086 = vunpack.c.l.b16 %v1511
    %v4087 = vunpack.c.l.b16 %v1512
    %v4088 = vunpack.c.l.b16 %v1513
    %v4089 = vunpack.c.l.b16 %v1514
    %v4090 = vunpack.c.l.b16 %v1515
    %v4091 = vunpack.c.l.b16 %v1516
    %v4092 = vunpack.c.l.b16 %v1517
    %v4093 = vunpack.c.l.b16 %v1518
    %v4094 = vunpack.c.l.b16 %v1519
    %v4095 = vunpack.c.l.b16 %v1520
    %v4096 = vunpack.c.l.b16 %v1521
    %v4097 = vunpack.c.l.b16 %v1522
    %v4098 = vunpack.c.l.b16 %v1523
    %v4099 = vunpack.c.l.b16 %v1524
    %v4100 = vunpack.c.l.b16 %v1525
    %v4101 = vunpack.c.l.b16 %v1526
    %v4102 = vunpack.c.l.b16 %v1527
    %v4103 = vunpack.c.l.b16 %v1528
    %v4104 = vunpack.c.l.b16 %v1529
    %v4105 = vunpack.c.l.b16 %v1530
    %v4106 = vunpack.c.l.b16 %v1531
    %v4107 = vunpack.c.l.b16 %v1532
    %v4108 = vunpack.c.l.b16 %v1533
    %v4109 = vunpack.c.l.b16 %v1534
    %v4110 = vunpack.c.l.b16 %v1535
    %v4111 = vunpack.c.l.b16 %v1536
    %v4112 = vunpack.c.l.b16 %v1537
    %v4113 = vunpack.c.l.b16 %v1538
    %v4114 = vunpack.c.l.b16 %v1539
    %v4115 = vunpack.c.l.b16 %v1540
    %v4116 = vunpack.c.l.b16 %v1541
    %v4117 = vunpack.c.l.b16 %v1542
    %v4118 = vunpack.c.l.b16 %v1543
    %v4119 = vunpack.c.l.b16 %v1544
    %v4120 = vunpack.c.l.b16 %v1545
    %v4121 = vunpack.c.l.b16 %v1546
    %v4122 = vunpack.c.l.b16 %v1547
    %v4123 = vunpack.c.l.b16 %v1548
    %v4124 = vunpack.c.l.b16 %v1549
    %v4125 = vunpack.c.l.b16 %v1550
    %v4126 = vunpack.c.l.b16 %v1551
    %v4127 = vunpack.c.l.b16 %v1552
    %v4128 = vunpack.c.l.b16 %v1553
    %v4129 = vunpack.c.l.b16 %v1554
    %v4130 = vunpack.c.l.b16 %v1555
    %v4131 = vunpack.c.l.b16 %v1556
    %v4132 = vunpack.c.l.b16 %v1557
    %v4133 = vunpack.c.l.b16 %v1558
    %v4134 = vunpack.c.l.b16 %v1559
    %v4135 = vunpack.c.l.b16 %v1560
    %v4136 = vunpack.c.l.b16 %v1561
    %v4137 = vunpack.c.l.b16 %v1562
    %v4138 = vunpack.c.l.b16 %v1563
    %v4139 = vunpack.c.l.b16 %v1564
    %v4140 = vunpack.c.l.b16 %v1565
    %v4141 = vunpack.c.l.b16 %v1566
    %v4142 = vunpack.c.l.b16 %v1567
    %v4143 = vunpack.c.l.b16 %v1568
    %v4144 = vunpack.c.l.b16 %v1569
    %v4145 = vunpack.c.l.b16 %v1570
    %v4146 = vunpack.c.l.b16 %v1571
    %v4147 = vunpack.c.l.b16 %v1572
    %v4148 = vunpack.c.l.b16 %v1573
    %v4149 = vunpack.c.l.b16 %v1574
    %v4150 = vunpack.c.l.b16 %v1575
    %v4151 = vunpack.c.l.b16 %v1576
    %v4152 = vunpack.c.l.b16 %v1577
    %v4153 = vunpack.c.l.b16 %v1578
    %v4154 = vunpack.c.l.b16 %v1579
    %v4155 = vunpack.c.l.b16 %v1580
    %v4156 = vunpack.c.l.b16 %v1581
    %v4157 = vunpack.c.l.b16 %v1582
    %v4158 = vunpack.c.l.b16 %v1583
    %v4159 = vunpack.c.l.b16 %v1584
    %v4160 = vunpack.c.l.b16 %v1585
    %v4161 = vunpack.c.l.b16 %v1586
    %v4162 = vunpack.c.l.b16 %v1587
    %v4163 = vunpack.c.l.b16 %v1588
    %v4164 = vunpack.c.l.b16 %v1589
    %v4165 = vunpack.c.l.b16 %v1590
    %v4166 = vunpack.c.l.b16 %v1591
    %v4167 = vunpack.c.l.b16 %v1592
    %v4168 = vunpack.c.l.b16 %v1593
    %v4169 = vunpack.c.l.b16 %v1594
    %v4170 = vunpack.c.l.b16 %v1595
    %v4171 = vunpack.c.l.b16 %v1596
    %v4172 = vunpack.c.l.b16 %v1597
    %v4173 = vunpack.c.l.b16 %v1598
    %v4174 = vunpack.c.l.b16 %v1599
    %v4175 = vunpack.c.l.b16 %v1600
    %v4176 = vunpack.c.l.b16 %v1601
    %v4177 = vunpack.c.l.b16 %v1602
    %v4178 = vunpack.c.l.b16 %v1603
    %v4179 = vunpack.c.l.b16 %v1604
    %v4180 = vunpack.c.l.b16 %v1605
    %v4181 = vunpack.c.l.b16 %v1606
    %v4182 = vunpack.c.l.b16 %v1607
    %v4183 = vunpack.c.l.b16 %v1608
    %v4184 = vunpack.c.l.b16 %v1609
    %v4185 = vunpack.c.l.b16 %v1610
    %v4186 = vunpack.c.l.b16 %v1611
    %v4187 = vunpack.c.l.b16 %v1612
    %v4188 = vunpack.c.l.b16 %v1613
    %v4189 = vunpack.c.l.b16 %v1614
    %v4190 = vunpack.c.l.b16 %v1615
    %v4191 = vunpack.c.l.b16 %v1616
    %v4192 = vunpack.c.l.b16 %v1617
    %v4193 = vunpack.c.l.b16 %v1618
    %v4194 = vunpack.c.l.b16 %v1619
    %v4195 = vunpack.c.l.b16 %v1620
    %v4196 = vunpack.c.l.b16 %v1621
    %v4197 = vunpack.c.l.b16 %v1622
    %v4198 = vunpack.c.l.b16 %v1623
    %v4199 = vunpack.c.l.b16 %v1624
    %v4200 = vunpack.c.l.b16 %v1625
    %v4201 = vunpack.c.l.b16 %v1626
    %v4202 = vunpack.c.l.b16 %v1627
    %v4203 = vunpack.c.l.b16 %v1628
    %v4204 = vunpack.c.l.b16 %v1629
    %v4205 = vunpack.c.l.b16 %v1630
    %v4206 = vunpack.c.l.b16 %v1631
    %v4207 = vunpack.c.l.b16 %v1632
    %v4208 = vunpack.c.l.b16 %v1633
    %v4209 = vunpack.c.l.b16 %v1634
    %v4210 = vunpack.c.l.b16 %v1635
    %v4211 = vunpack.c.l.b16 %v1636
    %v4212 = vunpack.c.l.b16 %v1637
    %v4213 = vunpack.c.l.b16 %v1638
    %v4214 = vunpack.c.l.b16 %v1639
    %v4215 = vunpack.c.l.b16 %v1640
    %v4216 = vunpack.c.l.b16 %v1641
    %v4217 = vunpack.c.l.b16 %v1642
    %v4218 = vunpack.c.l.b16 %v1643
    %v4219 = vunpack.c.l.b16 %v1644
    %v4220 = vunpack.c.l.b16 %v1645
    %v4221 = vunpack.c.l.b16 %v1646
    %v4222 = vunpack.c.l.b16 %v1647
    %v4223 = vunpack.c.l.b16 %v1648
    %v4224 = vunpack.c.l.b16 %v1649
    %v4225 = vunpack.c.l.b16 %v1650
    %v4226 = vunpack.c.l.b16 %v1651
    %v4227 = vunpack.c.l.b16 %v1652
    %v4228 = vunpack.c.l.b16 %v1653
    %v4229 = vunpack.c.l.b16 %v1654
    %v4230 = vunpack.c.l.b16 %v1655
    %v4231 = vunpack.c.l.b16 %v1656
    %v4232 = vunpack.c.l.b16 %v1657
    %v4233 = vunpack.c.l.b16 %v1658
    %v4234 = vunpack.c.l.b16 %v1659
    %v4235 = vunpack.c.l.b16 %v1660
    %v4236 = vunpack.c.l.b16 %v1661
    %v4237 = vunpack.c.l.b16 %v1662
    %v4238 = vunpack.c.l.b16 %v1663
    %v4239 = vunpack.c.l.b16 %v1664
    %v4240 = vunpack.c.l.b16 %v1665
    %v4241 = vunpack.c.l.b16 %v1666
    %v4242 = vunpack.c.l.b16 %v1667
    %v4243 = vunpack.c.l.b16 %v1668
    %v4244 = vunpack.c.l.b16 %v1669
    %v4245 = vunpack.c.l.b16 %v1670
    %v4246 = vunpack.c.l.b16 %v1671
    %v4247 = vunpack.c.l.b16 %v1672
    %v4248 = vunpack.c.l.b16 %v1673
    %v4249 = vunpack.c.l.b16 %v1674
    %v4250 = vunpack.c.l.b16 %v1675
    %v4251 = vunpack.c.l.b16 %v1676
    %v4252 = vunpack.c.l.b16 %v1677
    %v4253 = vunpack.c.l.b16 %v1678
    %v4254 = vunpack.c.l.b16 %v1679
    %v4255 = vunpack.c.l.b16 %v1680
    %v4256 = vunpack.c.l.b16 %v1681
    %v4257 = vunpack.c.l.b16 %v1682
    %v4258 = vunpack.c.l.b16 %v1683
    %v4259 = vunpack.c.l.b16 %v1684
    %v4260 = vunpack.c.l.b16 %v1685
    %v4261 = vunpack.c.l.b16 %v1686
    %v4262 = vunpack.c.l.b16 %v1687
    %v4263 = vunpack.c.l.b16 %v1688
    %v4264 = vunpack.c.l.b16 %v1689
    %v4265 = vunpack.c.l.b16 %v1690
    %v4266 = vunpack.c.l.b16 %v1691
    %v4267 = vunpack.c.l.b16 %v1692
    %v4268 = vunpack.c.l.b16 %v1693
    %v4269 = vunpack.c.l.b16 %v1694
    %v4270 = vunpack.c.l.b16 %v1695
    %v4271 = vunpack.c.l.b16 %v1696
    %v4272 = vunpack.c.l.b16 %v1697
    %v4273 = vunpack.c.l.b16 %v1698
    %v4274 = vunpack.c.l.b16 %v1699
    %v4275 = vunpack.c.l.b16 %v1700
    %v4276 = vunpack.c.l.b16 %v1701
    %v4277 = vunpack.c.l.b16 %v1702
    %v4278 = vunpack.c.l.b16 %v1703
    %v4279 = vunpack.c.l.b16 %v1704
    %v4280 = vunpack.c.l.b16 %v1705
    %v4281 = vunpack.c.l.b16 %v1706
    %v4282 = vunpack.c.l.b16 %v1707
    %v4283 = vunpack.c.l.b16 %v1708
    %v4284 = vunpack.c.l.b16 %v1709
    %v4285 = vunpack.c.l.b16 %v1710
    %v4286 = vunpack.c.l.b16 %v1711
    %v4287 = vunpack.c.l.b16 %v1712
    %v4288 = vunpack.c.l.b16 %v1713
    %v4289 = vunpack.c.l.b16 %v1714
    %v4290 = vunpack.c.l.b16 %v1715
    %v4291 = vunpack.c.l.b16 %v1716
    %v4292 = vunpack.c.l.b16 %v1717
    %v4293 = vunpack.c.l.b16 %v1718
    %v4294 = vunpack.c.l.b16 %v1719
    %v4295 = vunpack.c.l.b16 %v1720
    %v4296 = vunpack.c.l.b16 %v1721
    %v4297 = vunpack.c.l.b16 %v1722
    %v4298 = vunpack.c.l.b16 %v1723
    %v4299 = vunpack.c.l.b16 %v1724
    %v4300 = vunpack.c.l.b16 %v1725
    %v4301 = vunpack.c.l.b16 %v1726
    %v4302 = vunpack.c.l.b16 %v1727
    %v4303 = vunpack.c.l.b16 %v1728
    %v4304 = vunpack.c.l.b16 %v1729
    %v4305 = vunpack.c.l.b16 %v1730
    %v4306 = vunpack.c.l.b16 %v1731
    %v4307 = vunpack.c.l.b16 %v1732
    %v4308 = vunpack.c.l.b16 %v1733
    %v4309 = vunpack.c.l.b16 %v1734
    %v4310 = vunpack.c.l.b16 %v1735
    %v4311 = vunpack.c.l.b16 %v1736
    %v4312 = vunpack.c.l.b16 %v1737
    %v4313 = vunpack.c.l.b16 %v1738
    %v4314 = vunpack.c.l.b16 %v1739
    %v4315 = vunpack.c.l.b16 %v1740
    %v4316 = vunpack.c.l.b16 %v1741
    %v4317 = vunpack.c.l.b16 %v1742
    %v4318 = vunpack.c.l.b16 %v1743
    %v4319 = vunpack.c.l.b16 %v1744
    %v4320 = vunpack.c.l.b16 %v1745
    %v4321 = vunpack.c.l.b16 %v1746
    %v4322 = vunpack.c.l.b16 %v1747
    %v4323 = vunpack.c.l.b16 %v1748
    %v4324 = vunpack.c.l.b16 %v1749
    %v4325 = vunpack.c.l.b16 %v1750
    %v4326 = vunpack.c.l.b16 %v1751
    %v4327 = vunpack.c.l.b16 %v1752
    %v4328 = vunpack.c.l.b16 %v1753
    %v4329 = vunpack.c.l.b16 %v1754
    %v4330 = vunpack.c.l.b16 %v1755
    %v4331 = vunpack.c.l.b16 %v1756
    %v4332 = vunpack.c.l.b16 %v1757
    %v4333 = vunpack.c.l.b16 %v1758
    %v4334 = vunpack.c.l.b16 %v1759
    %v4335 = vunpack.c.l.b16 %v1760
    %v4336 = vunpack.c.l.b16 %v1761
    %v4337 = vunpack.c.l.b16 %v1762
    %v4338 = vunpack.c.l.b16 %v1763
    %v4339 = vunpack.c.l.b16 %v1764
    %v4340 = vunpack.c.l.b16 %v1765
    %v4341 = vunpack.c.l.b16 %v1766
    %v4342 = vunpack.c.l.b16 %v1767
    %v4343 = vunpack.c.l.b16 %v1768
    %v4344 = vunpack.c.l.b16 %v1769
    %v4345 = vunpack.c.l.b16 %v1770
    %v4346 = vunpack.c.l.b16 %v1771
    %v4347 = vunpack.c.l.b16 %v1772
    %v4348 = vunpack.c.l.b16 %v1773
    %v4349 = vunpack.c.l.b16 %v1774
    %v4350 = vunpack.c.l.b16 %v1775
    %v4351 = vunpack.c.l.b16 %v1776
    %v4352 = vunpack.c.l.b16 %v1777
    %v4353 = vunpack.c.l.b16 %v1778
    %v4354 = vunpack.c.l.b16 %v1779
    %v4355 = vunpack.c.l.b16 %v1780
    %v4356 = vunpack.c.l.b16 %v1781
    %v4357 = vunpack.c.l.b16 %v1782
    %v4358 = vunpack.c.l.b16 %v1783
    %v4359 = vunpack.c.l.b16 %v1784
    %v4360 = vunpack.c.l.b16 %v1785
    %v4361 = vunpack.c.l.b16 %v1786
    %v4362 = vunpack.c.l.b16 %v1787
    %v4363 = vunpack.c.l.b16 %v1788
    %v4364 = vunpack.c.l.b16 %v1789
    %v4365 = vunpack.c.l.b16 %v1790
    %v4366 = vunpack.c.l.b16 %v1791
    %v4367 = vunpack.c.l.b16 %v1792
    %v4368 = vunpack.c.l.b16 %v1793
    %v4369 = vunpack.c.l.b16 %v1794
    %v4370 = vunpack.c.l.b16 %v1795
    %v4371 = vunpack.c.l.b16 %v1796
    %v4372 = vunpack.c.l.b16 %v1797
    %v4373 = vunpack.c.l.b16 %v1798
    %v4374 = vunpack.c.l.b16 %v1799
    %v4375 = vunpack.c.l.b16 %v1800
    %v4376 = vunpack.c.l.b16 %v1801
    %v4377 = vunpack.c.l.b16 %v1802
    %v4378 = vunpack.c.l.b16 %v1803
    %v4379 = vunpack.c.l.b16 %v1804
    %v4380 = vunpack.c.l.b16 %v1805
    %v4381 = vunpack.c.l.b16 %v1806
    %v4382 = vunpack.c.l.b16 %v1807
    %v4383 = vunpack.c.l.b16 %v1808
    %v4384 = vunpack.c.l.b16 %v1809
    %v4385 = vunpack.c.l.b16 %v1810
    %v4386 = vunpack.c.l.b16 %v1811
    %v4387 = vunpack.c.l.b16 %v1812
    %v4388 = vunpack.c.l.b16 %v1813
    %v4389 = vunpack.c.l.b16 %v1814
    %v4390 = vunpack.c.l.b16 %v1815
    %v4391 = vunpack.c.l.b16 %v1816
    %v4392 = vunpack.c.l.b16 %v1817
    %v4393 = vunpack.c.l.b16 %v1818
    %v4394 = vunpack.c.l.b16 %v1819
    %v4395 = vunpack.c.l.b16 %v1820
    %v4396 = vunpack.c.l.b16 %v1821
    %v4397 = vunpack.c.l.b16 %v1822
    %v4398 = vunpack.c.l.b16 %v1823
    %v4399 = vunpack.c.l.b16 %v1824
    %v4400 = vunpack.c.l.b16 %v1825
    %v4401 = vunpack.c.l.b16 %v1826
    %v4402 = vunpack.c.l.b16 %v1827
    %v4403 = vunpack.c.l.b16 %v1828
    %v4404 = vunpack.c.l.b16 %v1829
    %v4405 = vunpack.c.l.b16 %v1830
    %v4406 = vunpack.c.l.b16 %v1831
    %v4407 = vunpack.c.l.b16 %v1832
    %v4408 = vunpack.c.l.b16 %v1833
    %v4409 = vunpack.c.l.b16 %v1834
    %v4410 = vunpack.c.l.b16 %v1835
    %v4411 = vunpack.c.l.b16 %v1836
    %v4412 = vunpack.c.l.b16 %v1837
    %v4413 = vunpack.c.l.b16 %v1838
    %v4414 = vunpack.c.l.b16 %v1839
    %v4415 = vunpack.c.l.b16 %v1840
    %v4416 = vunpack.c.l.b16 %v1841
    %v4417 = vunpack.c.l.b16 %v1842
    %v4418 = vunpack.c.l.b16 %v1843
    %v4419 = vunpack.c.l.b16 %v1844
    %v4420 = vunpack.c.l.b16 %v1845
    %v4421 = vunpack.c.l.b16 %v1846
    %v4422 = vunpack.c.l.b16 %v1847
    %v4423 = vunpack.c.l.b16 %v1848
    %v4424 = vunpack.c.l.b16 %v1849
    %v4425 = vunpack.c.l.b16 %v1850
    %v4426 = vpack.c.b16 %v3143, %v3142
    %v4427 = vpack.c.b16 %v3145, %v3144
    %v4428 = vpack.c.b16 %v3147, %v3146
    %v4429 = vpack.c.b16 %v3149, %v3148
    %v4430 = vpack.c.b16 %v3151, %v3150
    %v4431 = vpack.c.b16 %v3153, %v3152
    %v4432 = vpack.c.b16 %v3155, %v3154
    %v4433 = vpack.c.b16 %v3157, %v3156
    %v4434 = vpack.c.b16 %v3159, %v3158
    %v4435 = vpack.c.b16 %v3161, %v3160
    %v4436 = vpack.c.b16 %v3163, %v3162
    %v4437 = vpack.c.b16 %v3165, %v3164
    %v4438 = vpack.c.b16 %v3167, %v3166
    %v4439 = vpack.c.b16 %v3169, %v3168
    %v4440 = vpack.c.b16 %v3171, %v3170
    %v4441 = vpack.c.b16 %v3173, %v3172
    %v4442 = vpack.c.b16 %v3175, %v3174
    %v4443 = vpack.c.b16 %v3177, %v3176
    %v4444 = vpack.c.b16 %v3179, %v3178
    %v4445 = vpack.c.b16 %v3181, %v3180
    %v4446 = vpack.c.b16 %v3183, %v3182
    %v4447 = vpack.c.b16 %v3185, %v3184
    %v4448 = vpack.c.b16 %v3187, %v3186
    %v4449 = vpack.c.b16 %v3189, %v3188
    %v4450 = vpack.c.b16 %v3191, %v3190
    %v4451 = vpack.c.b16 %v3193, %v3192
    %v4452 = vpack.c.b16 %v3195, %v3194
    %v4453 = vpack.c.b16 %v3197, %v3196
    %v4454 = vpack.c.b16 %v3199, %v3198
    %v4455 = vpack.c.b16 %v3201, %v3200
    %v4456 = vpack.c.b16 %v3203, %v3202
    %v4457 = vpack.c.b16 %v3205, %v3204
    %v4458 = vpack.c.b16 %v3207, %v3206
    %v4459 = vpack.c.b16 %v3209, %v3208
    %v4460 = vpack.c.b16 %v3211, %v3210
    %v4461 = vpack.c.b16 %v3213, %v3212
    %v4462 = vpack.c.b16 %v3215, %v3214
    %v4463 = vpack.c.b16 %v3217, %v3216
    %v4464 = vpack.c.b16 %v3219, %v3218
    %v4465 = vpack.c.b16 %v3221, %v3220
    %v4466 = vpack.c.b16 %v3223, %v3222
    %v4467 = vpack.c.b16 %v3225, %v3224
    %v4468 = vpack.c.b16 %v3227, %v3226
    %v4469 = vpack.c.b16 %v3229, %v3228
    %v4470 = vpack.c.b16 %v3231, %v3230
    %v4471 = vpack.c.b16 %v3233, %v3232
    %v4472 = vpack.c.b16 %v3235, %v3234
    %v4473 = vpack.c.b16 %v3237, %v3236
    %v4474 = vpack.c.b16 %v3239, %v3238
    %v4475 = vpack.c.b16 %v3241, %v3240
    %v4476 = vpack.c.b16 %v3243, %v3242
    %v4477 = vpack.c.b16 %v3245, %v3244
    %v4478 = vpack.c.b16 %v3247, %v3246
    %v4479 = vpack.c.b16 %v3249, %v3248
    %v4480 = vpack.c.b16 %v3251, %v3250
    %v4481 = vpack.c.b16 %v3253, %v3252
    %v4482 = vpack.c.b16 %v3255, %v3254
    %v4483 = vpack.c.b16 %v3257, %v3256
    %v4484 = vpack.c.b16 %v3259, %v3258
    %v4485 = vpack.c.b16 %v3261, %v3260
    %v4486 = vpack.c.b16 %v3263, %v3262
    %v4487 = vpack.c.b16 %v3265, %v3264
    %v4488 = vpack.c.b16 %v3267, %v3266
    %v4489 = vpack.c.b16 %v3269, %v3268
    %v4490 = vpack.c.b16 %v3271, %v3270
    %v4491 = vpack.c.b16 %v3273, %v3272
    %v4492 = vpack.c.b16 %v3275, %v3274
    %v4493 = vpack.c.b16 %v3277, %v3276
    %v4494 = vpack.c.b16 %v3279, %v3278
    %v4495 = vpack.c.b16 %v3281, %v3280
    %v4496 = vpack.c.b16 %v3283, %v3282
    %v4497 = vpack.c.b16 %v3285, %v3284
    %v4498 = vpack.c.b16 %v3287, %v3286
    %v4499 = vpack.c.b16 %v3289, %v3288
    %v4500 = vpack.c.b16 %v3291, %v3290
    %v4501 = vpack.c.b16 %v3293, %v3292
    %v4502 = vpack.c.b16 %v3295, %v3294
    %v4503 = vpack.c.b16 %v3297, %v3296
    %v4504 = vpack.c.b16 %v3299, %v3298
    %v4505 = vpack.c.b16 %v3301, %v3300
    %v4506 = vpack.c.b16 %v3303, %v3302
    %v4507 = vpack.c.b16 %v3305, %v3304
    %v4508 = vpack.c.b16 %v3307, %v3306
    %v4509 = vpack.c.b16 %v3309, %v3308
    %v4510 = vpack.c.b16 %v3311, %v3310
    %v4511 = vpack.c.b16 %v3313, %v3312
    %v4512 = vpack.c.b16 %v3315, %v3314
    %v4513 = vpack.c.b16 %v3317, %v3316
    %v4514 = vpack.c.b16 %v3319, %v3318
    %v4515 = vpack.c.b16 %v3321, %v3320
    %v4516 = vpack.c.b16 %v3323, %v3322
    %v4517 = vpack.c.b16 %v3325, %v3324
    %v4518 = vpack.c.b16 %v3327, %v3326
    %v4519 = vpack.c.b16 %v3329, %v3328
    %v4520 = vpack.c.b16 %v3331, %v3330
    %v4521 = vpack.c.b16 %v3333, %v3332
    %v4522 = vpack.c.b16 %v3335, %v3334
    %v4523 = vpack.c.b16 %v3337, %v3336
    %v4524 = vpack.c.b16 %v3339, %v3338
    %v4525 = vpack.c.b16 %v3341, %v3340
    %v4526 = vpack.c.b16 %v3343, %v3342
    %v4527 = vpack.c.b16 %v3345, %v3344
    %v4528 = vpack.c.b16 %v3347, %v3346
    %v4529 = vpack.c.b16 %v3349, %v3348
    %v4530 = vpack.c.b16 %v3351, %v3350
    %v4531 = vpack.c.b16 %v3353, %v3352
    %v4532 = vpack.c.b16 %v3355, %v3354
    %v4533 = vpack.c.b16 %v3357, %v3356
    %v4534 = vpack.c.b16 %v3359, %v3358
    %v4535 = vpack.c.b16 %v3361, %v3360
    %v4536 = vpack.c.b16 %v3363, %v3362
    %v4537 = vpack.c.b16 %v3365, %v3364
    %v4538 = vpack.c.b16 %v3367, %v3366
    %v4539 = vpack.c.b16 %v3369, %v3368
    %v4540 = vpack.c.b16 %v3371, %v3370
    %v4541 = vpack.c.b16 %v3373, %v3372
    %v4542 = vpack.c.b16 %v3375, %v3374
    %v4543 = vpack.c.b16 %v3377, %v3376
    %v4544 = vpack.c.b16 %v3379, %v3378
    %v4545 = vpack.c.b16 %v3381, %v3380
    %v4546 = vpack.c.b16 %v3383, %v3382
    %v4547 = vpack.c.b16 %v3385, %v3384
    %v4548 = vpack.c.b16 %v3387, %v3386
    %v4549 = vpack.c.b16 %v3389, %v3388
    %v4550 = vpack.c.b16 %v3391, %v3390
    %v4551 = vpack.c.b16 %v3393, %v3392
    %v4552 = vpack.c.b16 %v3395, %v3394
    %v4553 = vpack.c.b16 %v3397, %v3396
    %v4554 = vpack.c.b16 %v3399, %v3398
    %v4555 = vpack.c.b16 %v3401, %v3400
    %v4556 = vpack.c.b16 %v3403, %v3402
    %v4557 = vpack.c.b16 %v3405, %v3404
    %v4558 = vpack.c.b16 %v3407, %v3406
    %v4559 = vpack.c.b16 %v3409, %v3408
    %v4560 = vpack.c.b16 %v3411, %v3410
    %v4561 = vpack.c.b16 %v3413, %v3412
    %v4562 = vpack.c.b16 %v3415, %v3414
    %v4563 = vpack.c.b16 %v3417, %v3416
    %v4564 = vpack.c.b16 %v3419, %v3418
    %v4565 = vpack.c.b16 %v3421, %v3420
    %v4566 = vpack.c.b16 %v3423, %v3422
    %v4567 = vpack.c.b16 %v3425, %v3424
    %v4568 = vpack.c.b16 %v3427, %v3426
    %v4569 = vpack.c.b16 %v3429, %v3428
    %v4570 = vpack.c.b16 %v3431, %v3430
    %v4571 = vpack.c.b16 %v3433, %v3432
    %v4572 = vpack.c.b16 %v3435, %v3434
    %v4573 = vpack.c.b16 %v3437, %v3436
    %v4574 = vpack.c.b16 %v3439, %v3438
    %v4575 = vpack.c.b16 %v3441, %v3440
    %v4576 = vpack.c.b16 %v3443, %v3442
    %v4577 = vpack.c.b16 %v3445, %v3444
    %v4578 = vpack.c.b16 %v3447, %v3446
    %v4579 = vpack.c.b16 %v3449, %v3448
    %v4580 = vpack.c.b16 %v3451, %v3450
    %v4581 = vpack.c.b16 %v3453, %v3452
    %v4582 = vpack.c.b16 %v3455, %v3454
    %v4583 = vpack.c.b16 %v3457, %v3456
    %v4584 = vpack.c.b16 %v3459, %v3458
    %v4585 = vpack.c.b16 %v3461, %v3460
    %v4586 = vpack.c.b16 %v3463, %v3462
    %v4587 = vpack.c.b16 %v3465, %v3464
    %v4588 = vpack.c.b16 %v3467, %v3466
    %v4589 = vpack.c.b16 %v3469, %v3468
    %v4590 = vpack.c.b16 %v3471, %v3470
    %v4591 = vpack.c.b16 %v3473, %v3472
    %v4592 = vpack.c.b16 %v3475, %v3474
    %v4593 = vpack.c.b16 %v3477, %v3476
    %v4594 = vpack.c.b16 %v3479, %v3478
    %v4595 = vpack.c.b16 %v3481, %v3480
    %v4596 = vpack.c.b16 %v3483, %v3482
    %v4597 = vpack.c.b16 %v3485, %v3484
    %v4598 = vpack.c.b16 %v3487, %v3486
    %v4599 = vpack.c.b16 %v3489, %v3488
    %v4600 = vpack.c.b16 %v3491, %v3490
    %v4601 = vpack.c.b16 %v3493, %v3492
    %v4602 = vpack.c.b16 %v3495, %v3494
    %v4603 = vpack.c.b16 %v3497, %v3496
    %v4604 = vpack.c.b16 %v3499, %v3498
    %v4605 = vpack.c.b16 %v3501, %v3500
    %v4606 = vpack.c.b16 %v3503, %v3502
    %v4607 = vpack.c.b16 %v3505, %v3504
    %v4608 = vpack.c.b16 %v3507, %v3506
    %v4609 = vpack.c.b16 %v3509, %v3508
    %v4610 = vpack.c.b16 %v3511, %v3510
    %v4611 = vpack.c.b16 %v3513, %v3512
    %v4612 = vpack.c.b16 %v3515, %v3514
    %v4613 = vpack.c.b16 %v3517, %v3516
    %v4614 = vpack.c.b16 %v3519, %v3518
    %v4615 = vpack.c.b16 %v3521, %v3520
    %v4616 = vpack.c.b16 %v3523, %v3522
    %v4617 = vpack.c.b16 %v3525, %v3524
    %v4618 = vpack.c.b16 %v3527, %v3526
    %v4619 = vpack.c.b16 %v3529, %v3528
    %v4620 = vpack.c.b16 %v3531, %v3530
    %v4621 = vpack.c.b16 %v3533, %v3532
    %v4622 = vpack.c.b16 %v3535, %v3534
    %v4623 = vpack.c.b16 %v3537, %v3536
    %v4624 = vpack.c.b16 %v3539, %v3538
    %v4625 = vpack.c.b16 %v3541, %v3540
    %v4626 = vpack.c.b16 %v3543, %v3542
    %v4627 = vpack.c.b16 %v3545, %v3544
    %v4628 = vpack.c.b16 %v3547, %v3546
    %v4629 = vpack.c.b16 %v3549, %v3548
    %v4630 = vpack.c.b16 %v3551, %v3550
    %v4631 = vpack.c.b16 %v3553, %v3552
    %v4632 = vpack.c.b16 %v3555, %v3554
    %v4633 = vpack.c.b16 %v3557, %v3556
    %v4634 = vpack.c.b16 %v3559, %v3558
    %v4635 = vpack.c.b16 %v3561, %v3560
    %v4636 = vpack.c.b16 %v3563, %v3562
    %v4637 = vpack.c.b16 %v3565, %v3564
    %v4638 = vpack.c.b16 %v3567, %v3566
    %v4639 = vpack.c.b16 %v3569, %v3568
    %v4640 = vpack.c.b16 %v3571, %v3570
    %v4641 = vpack.c.b16 %v3573, %v3572
    %v4642 = vpack.c.b16 %v3575, %v3574
    %v4643 = vpack.c.b16 %v3577, %v3576
    %v4644 = vpack.c.b16 %v3579, %v3578
    %v4645 = vpack.c.b16 %v3581, %v3580
    %v4646 = vpack.c.b16 %v3583, %v3582
    %v4647 = vpack.c.b16 %v3585, %v3584
    %v4648 = vpack.c.b16 %v3587, %v3586
    %v4649 = vpack.c.b16 %v3589, %v3588
    %v4650 = vpack.c.b16 %v3591, %v3590
    %v4651 = vpack.c.b16 %v3593, %v3592
    %v4652 = vpack.c.b16 %v3595, %v3594
    %v4653 = vpack.c.b16 %v3597, %v3596
    %v4654 = vpack.c.b16 %v3599, %v3598
    %v4655 = vpack.c.b16 %v3601, %v3600
    %v4656 = vpack.c.b16 %v3603, %v3602
    %v4657 = vpack.c.b16 %v3605, %v3604
    %v4658 = vpack.c.b16 %v3607, %v3606
    %v4659 = vpack.c.b16 %v3609, %v3608
    %v4660 = vpack.c.b16 %v3611, %v3610
    %v4661 = vpack.c.b16 %v3613, %v3612
    %v4662 = vpack.c.b16 %v3615, %v3614
    %v4663 = vpack.c.b16 %v3617, %v3616
    %v4664 = vpack.c.b16 %v3619, %v3618
    %v4665 = vpack.c.b16 %v3621, %v3620
    %v4666 = vpack.c.b16 %v3623, %v3622
    %v4667 = vpack.c.b16 %v3625, %v3624
    %v4668 = vpack.c.b16 %v3627, %v3626
    %v4669 = vpack.c.b16 %v3629, %v3628
    %v4670 = vpack.c.b16 %v3631, %v3630
    %v4671 = vpack.c.b16 %v3633, %v3632
    %v4672 = vpack.c.b16 %v3635, %v3634
    %v4673 = vpack.c.b16 %v3637, %v3636
    %v4674 = vpack.c.b16 %v3639, %v3638
    %v4675 = vpack.c.b16 %v3641, %v3640
    %v4676 = vpack.c.b16 %v3643, %v3642
    %v4677 = vpack.c.b16 %v3645, %v3644
    %v4678 = vpack.c.b16 %v3647, %v3646
    %v4679 = vpack.c.b16 %v3649, %v3648
    %v4680 = vpack.c.b16 %v3651, %v3650
    %v4681 = vpack.c.b16 %v3653, %v3652
    %v4682 = vpack.c.b16 %v3655, %v3654
    %v4683 = vpack.c.b16 %v3657, %v3656
    %v4684 = vpack.c.b16 %v3659, %v3658
    %v4685 = vpack.c.b16 %v3661, %v3660
    %v4686 = vpack.c.b16 %v3663, %v3662
    %v4687 = vpack.c.b16 %v3665, %v3664
    %v4688 = vpack.c.b16 %v3667, %v3666
    %v4689 = vpack.c.b16 %v3669, %v3668
    %v4690 = vpack.c.b16 %v3671, %v3670
    %v4691 = vpack.c.b16 %v3673, %v3672
    %v4692 = vpack.c.b16 %v3675, %v3674
    %v4693 = vpack.c.b16 %v3677, %v3676
    %v4694 = vpack.c.b16 %v3679, %v3678
    %v4695 = vpack.c.b16 %v3681, %v3680
    %v4696 = vpack.c.b16 %v3683, %v3682
    %v4697 = vpack.c.b16 %v3685, %v3684
    %v4698 = vpack.c.b16 %v3687, %v3686
    %v4699 = vpack.c.b16 %v3689, %v3688
    %v4700 = vpack.c.b16 %v3691, %v3690
    %v4701 = vpack.c.b16 %v3693, %v3692
    %v4702 = vpack.c.b16 %v3695, %v3694
    %v4703 = vpack.c.b16 %v3697, %v3696
    %v4704 = vpack.c.b16 %v3699, %v3698
    %v4705 = vpack.c.b16 %v3701, %v3700
    %v4706 = vpack.c.b16 %v3703, %v3702
    %v4707 = vpack.c.b16 %v3705, %v3704
    %v4708 = vpack.c.b16 %v3707, %v3706
    %v4709 = vpack.c.b16 %v3709, %v3708
    %v4710 = vpack.c.b16 %v3711, %v3710
    %v4711 = vpack.c.b16 %v3713, %v3712
    %v4712 = vpack.c.b16 %v3715, %v3714
    %v4713 = vpack.c.b16 %v3717, %v3716
    %v4714 = vpack.c.b16 %v3719, %v3718
    %v4715 = vpack.c.b16 %v3721, %v3720
    %v4716 = vpack.c.b16 %v3723, %v3722
    %v4717 = vpack.c.b16 %v3725, %v3724
    %v4718 = vpack.c.b16 %v3727, %v3726
    %v4719 = vpack.c.b16 %v3729, %v3728
    %v4720 = vpack.c.b16 %v3731, %v3730
    %v4721 = vpack.c.b16 %v3733, %v3732
    %v4722 = vpack.c.b16 %v3735, %v3734
    %v4723 = vpack.c.b16 %v3737, %v3736
    %v4724 = vpack.c.b16 %v3739, %v3738
    %v4725 = vpack.c.b16 %v3741, %v3740
    %v4726 = vpack.c.b16 %v3743, %v3742
    %v4727 = vpack.c.b16 %v3745, %v3744
    %v4728 = vpack.c.b16 %v3747, %v3746
    %v4729 = vpack.c.b16 %v3749, %v3748
    %v4730 = vpack.c.b16 %v3751, %v3750
    %v4731 = vpack.c.b16 %v3753, %v3752
    %v4732 = vpack.c.b16 %v3755, %v3754
    %v4733 = vpack.c.b16 %v3757, %v3756
    %v4734 = vpack.c.b16 %v3759, %v3758
    %v4735 = vpack.c.b16 %v3761, %v3760
    %v4736 = vpack.c.b16 %v3763, %v3762
    %v4737 = vpack.c.b16 %v3765, %v3764
    %v4738 = vpack.c.b16 %v3767, %v3766
    %v4739 = vpack.c.b16 %v3769, %v3768
    %v4740 = vpack.c.b16 %v3771, %v3770
    %v4741 = vpack.c.b16 %v3773, %v3772
    %v4742 = vpack.c.b16 %v3775, %v3774
    %v4743 = vpack.c.b16 %v3777, %v3776
    %v4744 = vpack.c.b16 %v3779, %v3778
    %v4745 = vpack.c.b16 %v3781, %v3780
    %v4746 = vpack.c.b16 %v3783, %v3782
    %v4747 = vpack.c.b16 %v3785, %v3784
    %v4748 = vpack.c.b16 %v3787, %v3786
    %v4749 = vpack.c.b16 %v3789, %v3788
    %v4750 = vpack.c.b16 %v3791, %v3790
    %v4751 = vpack.c.b16 %v3793, %v3792
    %v4752 = vpack.c.b16 %v3795, %v3794
    %v4753 = vpack.c.b16 %v3797, %v3796
    %v4754 = vpack.c.b16 %v3799, %v3798
    %v4755 = vpack.c.b16 %v3801, %v3800
    %v4756 = vpack.c.b16 %v3803, %v3802
    %v4757 = vpack.c.b16 %v3805, %v3804
    %v4758 = vpack.c.b16 %v3807, %v3806
    %v4759 = vpack.c.b16 %v3809, %v3808
    %v4760 = vpack.c.b16 %v3811, %v3810
    %v4761 = vpack.c.b16 %v3813, %v3812
    %v4762 = vpack.c.b16 %v3815, %v3814
    %v4763 = vpack.c.b16 %v3817, %v3816
    %v4764 = vpack.c.b16 %v3819, %v3818
    %v4765 = vpack.c.b16 %v3821, %v3820
    %v4766 = vpack.c.b16 %v3823, %v3822
    %v4767 = vpack.c.b16 %v3825, %v3824
    %v4768 = vpack.c.b16 %v3827, %v3826
    %v4769 = vpack.c.b16 %v3829, %v3828
    %v4770 = vpack.c.b16 %v3831, %v3830
    %v4771 = vpack.c.b16 %v3833, %v3832
    %v4772 = vpack.c.b16 %v3835, %v3834
    %v4773 = vpack.c.b16 %v3837, %v3836
    %v4774 = vpack.c.b16 %v3839, %v3838
    %v4775 = vpack.c.b16 %v3841, %v3840
    %v4776 = vpack.c.b16 %v3843, %v3842
    %v4777 = vpack.c.b16 %v3845, %v3844
    %v4778 = vpack.c.b16 %v3847, %v3846
    %v4779 = vpack.c.b16 %v3849, %v3848
    %v4780 = vpack.c.b16 %v3851, %v3850
    %v4781 = vpack.c.b16 %v3853, %v3852
    %v4782 = vpack.c.b16 %v3855, %v3854
    %v4783 = vpack.c.b16 %v3857, %v3856
    %v4784 = vpack.c.b16 %v3859, %v3858
    %v4785 = vpack.c.b16 %v3861, %v3860
    %v4786 = vpack.c.b16 %v3863, %v3862
    %v4787 = vpack.c.b16 %v3865, %v3864
    %v4788 = vpack.c.b16 %v3867, %v3866
    %v4789 = vpack.c.b16 %v3869, %v3868
    %v4790 = vpack.c.b16 %v3871, %v3870
    %v4791 = vpack.c.b16 %v3873, %v3872
    %v4792 = vpack.c.b16 %v3875, %v3874
    %v4793 = vpack.c.b16 %v3877, %v3876
    %v4794 = vpack.c.b16 %v3879, %v3878
    %v4795 = vpack.c.b16 %v3881, %v3880
    %v4796 = vpack.c.b16 %v3883, %v3882
    %v4797 = vpack.c.b16 %v3885, %v3884
    %v4798 = vpack.c.b16 %v3887, %v3886
    %v4799 = vpack.c.b16 %v3889, %v3888
    %v4800 = vpack.c.b16 %v3891, %v3890
    %v4801 = vpack.c.b16 %v3893, %v3892
    %v4802 = vpack.c.b16 %v3895, %v3894
    %v4803 = vpack.c.b16 %v3897, %v3896
    %v4804 = vpack.c.b16 %v3899, %v3898
    %v4805 = vpack.c.b16 %v3901, %v3900
    %v4806 = vpack.c.b16 %v3903, %v3902
    %v4807 = vpack.c.b16 %v3905, %v3904
    %v4808 = vpack.c.b16 %v3907, %v3906
    %v4809 = vpack.c.b16 %v3909, %v3908
    %v4810 = vpack.c.b16 %v3911, %v3910
    %v4811 = vpack.c.b16 %v3913, %v3912
    %v4812 = vpack.c.b16 %v3915, %v3914
    %v4813 = vpack.c.b16 %v3917, %v3916
    %v4814 = vpack.c.b16 %v3919, %v3918
    %v4815 = vpack.c.b16 %v3921, %v3920
    %v4816 = vpack.c.b16 %v3923, %v3922
    %v4817 = vpack.c.b16 %v3925, %v3924
    %v4818 = vpack.c.b16 %v3927, %v3926
    %v4819 = vpack.c.b16 %v3929, %v3928
    %v4820 = vpack.c.b16 %v3931, %v3930
    %v4821 = vpack.c.b16 %v3933, %v3932
    %v4822 = vpack.c.b16 %v3935, %v3934
    %v4823 = vpack.c.b16 %v3937, %v3936
    %v4824 = vpack.c.b16 %v3939, %v3938
    %v4825 = vpack.c.b16 %v3941, %v3940
    %v4826 = vpack.c.b16 %v3943, %v3942
    %v4827 = vpack.c.b16 %v3945, %v3944
    %v4828 = vpack.c.b16 %v3947, %v3946
    %v4829 = vpack.c.b16 %v3949, %v3948
    %v4830 = vpack.c.b16 %v3951, %v3950
    %v4831 = vpack.c.b16 %v3953, %v3952
    %v4832 = vpack.c.b16 %v3955, %v3954
    %v4833 = vpack.c.b16 %v3957, %v3956
    %v4834 = vpack.c.b16 %v3959, %v3958
    %v4835 = vpack.c.b16 %v3961, %v3960
    %v4836 = vpack.c.b16 %v3963, %v3962
    %v4837 = vpack.c.b16 %v3965, %v3964
    %v4838 = vpack.c.b16 %v3967, %v3966
    %v4839 = vpack.c.b16 %v3969, %v3968
    %v4840 = vpack.c.b16 %v3971, %v3970
    %v4841 = vpack.c.b16 %v3973, %v3972
    %v4842 = vpack.c.b16 %v3975, %v3974
    %v4843 = vpack.c.b16 %v3977, %v3976
    %v4844 = vpack.c.b16 %v3979, %v3978
    %v4845 = vpack.c.b16 %v3981, %v3980
    %v4846 = vpack.c.b16 %v3983, %v3982
    %v4847 = vpack.c.b16 %v3985, %v3984
    %v4848 = vpack.c.b16 %v3987, %v3986
    %v4849 = vpack.c.b16 %v3989, %v3988
    %v4850 = vpack.c.b16 %v3991, %v3990
    %v4851 = vpack.c.b16 %v3993, %v3992
    %v4852 = vpack.c.b16 %v3995, %v3994
    %v4853 = vpack.c.b16 %v3997, %v3996
    %v4854 = vpack.c.b16 %v3999, %v3998
    %v4855 = vpack.c.b16 %v4001, %v4000
    %v4856 = vpack.c.b16 %v4003, %v4002
    %v4857 = vpack.c.b16 %v4005, %v4004
    %v4858 = vpack.c.b16 %v4007, %v4006
    %v4859 = vpack.c.b16 %v4009, %v4008
    %v4860 = vpack.c.b16 %v4011, %v4010
    %v4861 = vpack.c.b16 %v4013, %v4012
    %v4862 = vpack.c.b16 %v4015, %v4014
    %v4863 = vpack.c.b16 %v4017, %v4016
    %v4864 = vpack.c.b16 %v4019, %v4018
    %v4865 = vpack.c.b16 %v4021, %v4020
    %v4866 = vpack.c.b16 %v4023, %v4022
    %v4867 = vpack.c.b16 %v4025, %v4024
    %v4868 = vpack.c.b16 %v4027, %v4026
    %v4869 = vpack.c.b16 %v4029, %v4028
    %v4870 = vpack.c.b16 %v4031, %v4030
    %v4871 = vpack.c.b16 %v4033, %v4032
    %v4872 = vpack.c.b16 %v4035, %v4034
    %v4873 = vpack.c.b16 %v4037, %v4036
    %v4874 = vpack.c.b16 %v4039, %v4038
    %v4875 = vpack.c.b16 %v4041, %v4040
    %v4876 = vpack.c.b16 %v4043, %v4042
    %v4877 = vpack.c.b16 %v4045, %v4044
    %v4878 = vpack.c.b16 %v4047, %v4046
    %v4879 = vpack.c.b16 %v4049, %v4048
    %v4880 = vpack.c.b16 %v4051, %v4050
    %v4881 = vpack.c.b16 %v4053, %v4052
    %v4882 = vpack.c.b16 %v4055, %v4054
    %v4883 = vpack.c.b16 %v4057, %v4056
    %v4884 = vpack.c.b16 %v4059, %v4058
    %v4885 = vpack.c.b16 %v4061, %v4060
    %v4886 = vpack.c.b16 %v4063, %v4062
    %v4887 = vpack.c.b16 %v4065, %v4064
    %v4888 = vpack.c.b16 %v4067, %v4066
    %v4889 = vpack.c.b16 %v4069, %v4068
    %v4890 = vpack.c.b16 %v4071, %v4070
    %v4891 = vpack.c.b16 %v4073, %v4072
    %v4892 = vpack.c.b16 %v4075, %v4074
    %v4893 = vpack.c.b16 %v4077, %v4076
    %v4894 = vpack.c.b16 %v4079, %v4078
    %v4895 = vpack.c.b16 %v4081, %v4080
    %v4896 = vpack.c.b16 %v4083, %v4082
    %v4897 = vpack.c.b16 %v4085, %v4084
    %v4898 = vpack.c.b16 %v4087, %v4086
    %v4899 = vpack.c.b16 %v4089, %v4088
    %v4900 = vpack.c.b16 %v4091, %v4090
    %v4901 = vpack.c.b16 %v4093, %v4092
    %v4902 = vpack.c.b16 %v4095, %v4094
    %v4903 = vpack.c.b16 %v4097, %v4096
    %v4904 = vpack.c.b16 %v4099, %v4098
    %v4905 = vpack.c.b16 %v4101, %v4100
    %v4906 = vpack.c.b16 %v4103, %v4102
    %v4907 = vpack.c.b16 %v4105, %v4104
    %v4908 = vpack.c.b16 %v4107, %v4106
    %v4909 = vpack.c.b16 %v4109, %v4108
    %v4910 = vpack.c.b16 %v4111, %v4110
    %v4911 = vpack.c.b16 %v4113, %v4112
    %v4912 = vpack.c.b16 %v4115, %v4114
    %v4913 = vpack.c.b16 %v4117, %v4116
    %v4914 = vpack.c.b16 %v4119, %v4118
    %v4915 = vpack.c.b16 %v4121, %v4120
    %v4916 = vpack.c.b16 %v4123, %v4122
    %v4917 = vpack.c.b16 %v4125, %v4124
    %v4918 = vpack.c.b16 %v4127, %v4126
    %v4919 = vpack.c.b16 %v4129, %v4128
    %v4920 = vpack.c.b16 %v4131, %v4130
    %v4921 = vpack.c.b16 %v4133, %v4132
    %v4922 = vpack.c.b16 %v4135, %v4134
    %v4923 = vpack.c.b16 %v4137, %v4136
    %v4924 = vpack.c.b16 %v4139, %v4138
    %v4925 = vpack.c.b16 %v4141, %v4140
    %v4926 = vpack.c.b16 %v4143, %v4142
    %v4927 = vpack.c.b16 %v4145, %v4144
    %v4928 = vpack.c.b16 %v4147, %v4146
    %v4929 = vpack.c.b16 %v4149, %v4148
    %v4930 = vpack.c.b16 %v4151, %v4150
    %v4931 = vpack.c.b16 %v4153, %v4152
    %v4932 = vpack.c.b16 %v4155, %v4154
    %v4933 = vpack.c.b16 %v4157, %v4156
    %v4934 = vpack.c.b16 %v4159, %v4158
    %v4935 = vpack.c.b16 %v4161, %v4160
    %v4936 = vpack.c.b16 %v4163, %v4162
    %v4937 = vpack.c.b16 %v4165, %v4164
    %v4938 = vpack.c.b16 %v4167, %v4166
    %v4939 = vpack.c.b16 %v4169, %v4168
    %v4940 = vpack.c.b16 %v4171, %v4170
    %v4941 = vpack.c.b16 %v4173, %v4172
    %v4942 = vpack.c.b16 %v4175, %v4174
    %v4943 = vpack.c.b16 %v4177, %v4176
    %v4944 = vpack.c.b16 %v4179, %v4178
    %v4945 = vpack.c.b16 %v4181, %v4180
    %v4946 = vpack.c.b16 %v4183, %v4182
    %v4947 = vpack.c.b16 %v4185, %v4184
    %v4948 = vpack.c.b16 %v4187, %v4186
    %v4949 = vpack.c.b16 %v4189, %v4188
    %v4950 = vpack.c.b16 %v4191, %v4190
    %v4951 = vpack.c.b16 %v4193, %v4192
    %v4952 = vpack.c.b16 %v4195, %v4194
    %v4953 = vpack.c.b16 %v4197, %v4196
    %v4954 = vpack.c.b16 %v4199, %v4198
    %v4955 = vpack.c.b16 %v4201, %v4200
    %v4956 = vpack.c.b16 %v4203, %v4202
    %v4957 = vpack.c.b16 %v4205, %v4204
    %v4958 = vpack.c.b16 %v4207, %v4206
    %v4959 = vpack.c.b16 %v4209, %v4208
    %v4960 = vpack.c.b16 %v4211, %v4210
    %v4961 = vpack.c.b16 %v4213, %v4212
    %v4962 = vpack.c.b16 %v4215, %v4214
    %v4963 = vpack.c.b16 %v4217, %v4216
    %v4964 = vpack.c.b16 %v4219, %v4218
    %v4965 = vpack.c.b16 %v4221, %v4220
    %v4966 = vpack.c.b16 %v4223, %v4222
    %v4967 = vpack.c.b16 %v4225, %v4224
    %v4968 = vpack.c.b16 %v4227, %v4226
    %v4969 = vpack.c.b16 %v4229, %v4228
    %v4970 = vpack.c.b16 %v4231, %v4230
    %v4971 = vpack.c.b16 %v4233, %v4232
    %v4972 = vpack.c.b16 %v4235, %v4234
    %v4973 = vpack.c.b16 %v4237, %v4236
    %v4974 = vpack.c.b16 %v4239, %v4238
    %v4975 = vpack.c.b16 %v4241, %v4240
    %v4976 = vpack.c.b16 %v4243, %v4242
    %v4977 = vpack.c.b16 %v4245, %v4244
    %v4978 = vpack.c.b16 %v4247, %v4246
    %v4979 = vpack.c.b16 %v4249, %v4248
    %v4980 = vpack.c.b16 %v4251, %v4250
    %v4981 = vpack.c.b16 %v4253, %v4252
    %v4982 = vpack.c.b16 %v4255, %v4254
    %v4983 = vpack.c.b16 %v4257, %v4256
    %v4984 = vpack.c.b16 %v4259, %v4258
    %v4985 = vpack.c.b16 %v4261, %v4260
    %v4986 = vpack.c.b16 %v4263, %v4262
    %v4987 = vpack.c.b16 %v4265, %v4264
    %v4988 = vpack.c.b16 %v4267, %v4266
    %v4989 = vpack.c.b16 %v4269, %v4268
    %v4990 = vpack.c.b16 %v4271, %v4270
    %v4991 = vpack.c.b16 %v4273, %v4272
    %v4992 = vpack.c.b16 %v4275, %v4274
    %v4993 = vpack.c.b16 %v4277, %v4276
    %v4994 = vpack.c.b16 %v4279, %v4278
    %v4995 = vpack.c.b16 %v4281, %v4280
    %v4996 = vpack.c.b16 %v4283, %v4282
    %v4997 = vpack.c.b16 %v4285, %v4284
    %v4998 = vpack.c.b16 %v4287, %v4286
    %v4999 = vpack.c.b16 %v4289, %v4288
    %v5000 = vpack.c.b16 %v4291, %v4290
    %v5001 = vpack.c.b16 %v4293, %v4292
    %v5002 = vpack.c.b16 %v4295, %v4294
    %v5003 = vpack.c.b16 %v4297, %v4296
    %v5004 = vpack.c.b16 %v4299, %v4298
    %v5005 = vpack.c.b16 %v4301, %v4300
    %v5006 = vpack.c.b16 %v4303, %v4302
    %v5007 = vpack.c.b16 %v4305, %v4304
    %v5008 = vpack.c.b16 %v4307, %v4306
    %v5009 = vpack.c.b16 %v4309, %v4308
    %v5010 = vpack.c.b16 %v4311, %v4310
    %v5011 = vpack.c.b16 %v4313, %v4312
    %v5012 = vpack.c.b16 %v4315, %v4314
    %v5013 = vpack.c.b16 %v4317, %v4316
    %v5014 = vpack.c.b16 %v4319, %v4318
    %v5015 = vpack.c.b16 %v4321, %v4320
    %v5016 = vpack.c.b16 %v4323, %v4322
    %v5017 = vpack.c.b16 %v4325, %v4324
    %v5018 = vpack.c.b16 %v4327, %v4326
    %v5019 = vpack.c.b16 %v4329, %v4328
    %v5020 = vpack.c.b16 %v4331, %v4330
    %v5021 = vpack.c.b16 %v4333, %v4332
    %v5022 = vpack.c.b16 %v4335, %v4334
    %v5023 = vpack.c.b16 %v4337, %v4336
    %v5024 = vpack.c.b16 %v4339, %v4338
    %v5025 = vpack.c.b16 %v4341, %v4340
    %v5026 = vpack.c.b16 %v4343, %v4342
    %v5027 = vpack.c.b16 %v4345, %v4344
    %v5028 = vpack.c.b16 %v4347, %v4346
    %v5029 = vpack.c.b16 %v4349, %v4348
    %v5030 = vpack.c.b16 %v4351, %v4350
    %v5031 = vpack.c.b16 %v4353, %v4352
    %v5032 = vpack.c.b16 %v4355, %v4354
    %v5033 = vpack.c.b16 %v4357, %v4356
    %v5034 = vpack.c.b16 %v4359, %v4358
    %v5035 = vpack.c.b16 %v4361, %v4360
    %v5036 = vpack.c.b16 %v4363, %v4362
    %v5037 = vpack.c.b16 %v4365, %v4364
    %v5038 = vpack.c.b16 %v4367, %v4366
    %v5039 = vpack.c.b16 %v4369, %v4368
    %v5040 = vpack.c.b16 %v4371, %v4370
    %v5041 = vpack.c.b16 %v4373, %v4372
    %v5042 = vpack.c.b16 %v4375, %v4374
    %v5043 = vpack.c.b16 %v4377, %v4376
    %v5044 = vpack.c.b16 %v4379, %v4378
    %v5045 = vpack.c.b16 %v4381, %v4380
    %v5046 = vpack.c.b16 %v4383, %v4382
    %v5047 = vpack.c.b16 %v4385, %v4384
    %v5048 = vpack.c.b16 %v4387, %v4386
    %v5049 = vpack.c.b16 %v4389, %v4388
    %v5050 = vpack.c.b16 %v4391, %v4390
    %v5051 = vpack.c.b16 %v4393, %v4392
    %v5052 = vpack.c.b16 %v4395, %v4394
    %v5053 = vpack.c.b16 %v4397, %v4396
    %v5054 = vpack.c.b16 %v4399, %v4398
    %v5055 = vpack.c.b16 %v4401, %v4400
    %v5056 = vpack.c.b16 %v4403, %v4402
    %v5057 = vpack.c.b16 %v4405, %v4404
    %v5058 = vpack.c.b16 %v4407, %v4406
    %v5059 = vpack.c.b16 %v4409, %v4408
    %v5060 = vpack.c.b16 %v4411, %v4410
    %v5061 = vpack.c.b16 %v4413, %v4412
    %v5062 = vpack.c.b16 %v4415, %v4414
    %v5063 = vpack.c.b16 %v4417, %v4416
    %v5064 = vpack.c.b16 %v4419, %v4418
    %v5065 = vpack.c.b16 %v4421, %v4420
    %v5066 = vpack.c.b16 %v4423, %v4422
    %v5067 = vpack.c.b16 %v4425, %v4424
    %vm5710 = vcmask 261120
    %v5712 = vsel %vm5710, %v566, 0
    %5714 = vmatprep.subr.bf16.mxu0 0
    %5715 = vmatpush1.bf16.msra.mxu0 %v4433
    %5716 = vmatprep.subr.bf16.mxu0 0
    %5717 = vmatpush1.bf16.msra.mxu0 %v4432
    %5718 = vmatprep.subr.bf16.mxu0 0
    %5719 = vmatpush1.bf16.msra.mxu0 %v4431
    %5720 = vmatprep.subr.bf16.mxu0 0
    %5721 = vmatpush1.bf16.msra.mxu0 %v4430
    %5722 = vmatprep.subr.bf16.mxu0 0
    %5723 = vmatpush1.bf16.msra.mxu0 %v4429
    %5724 = vmatprep.subr.bf16.mxu0 0
    %5725 = vmatpush1.bf16.msra.mxu0 %v4428
    %5726 = vmatprep.subr.bf16.mxu0 0
    %5727 = vmatpush1.bf16.msra.mxu0 %v4427
    %5728 = vmatprep.subr.bf16.mxu0 0
    %5729 = vmatpush1.bf16.msra.mxu0 %v4426
    %5730 = vmatprep.subr.bf16.mxu0 0
    %5731 = vmatpush2.bf16.msra.mxu0 %v4441
    %5732 = vmatprep.subr.bf16.mxu0 0
    %5733 = vmatpush2.bf16.msra.mxu0 %v4440
    %5734 = vmatprep.subr.bf16.mxu0 0
    %5735 = vmatpush2.bf16.msra.mxu0 %v4439
    %5736 = vmatprep.subr.bf16.mxu0 0
    %5737 = vmatpush2.bf16.msra.mxu0 %v4438
    %5738 = vmatprep.subr.bf16.mxu0 0
    %5739 = vmatpush2.bf16.msra.mxu0 %v4437
    %5740 = vmatprep.subr.bf16.mxu0 0
    %5741 = vmatpush2.bf16.msra.mxu0 %v4436
    %5742 = vmatprep.subr.bf16.mxu0 0
    %5743 = vmatpush2.bf16.msra.mxu0 %v4435
    %5744 = vmatprep.subr.bf16.mxu0 0
    %5745 = vmatpush2.bf16.msra.mxu0 %v4434
    %5746 = vmatprep.mubr.bf16.mxu0 %v487
    %5747 = vmatmul.mubr.bf16.gmra.mxu0 %v486
    %v5748 = vpop.f32.mrf.mxu0
    %v5749 = vadd.f32 %v1856, %v5748
    %v5750 = vpop.f32.mrf.mxu0
    %v5751 = vpop.f32.mrf.mxu0
    %v5752 = vpop.f32.mrf.mxu0
    %5753 = vdwg.mxu0
    %5754 = vmatprep.subr.bf16.mxu0 0
    %5755 = vmatpush1.bf16.msra.mxu0 %v4449
    %5756 = vmatprep.subr.bf16.mxu0 0
    %5757 = vmatpush1.bf16.msra.mxu0 %v4448
    %5758 = vmatprep.subr.bf16.mxu0 0
    %5759 = vmatpush1.bf16.msra.mxu0 %v4447
    %5760 = vmatprep.subr.bf16.mxu0 0
    %5761 = vmatpush1.bf16.msra.mxu0 %v4446
    %5762 = vmatprep.subr.bf16.mxu0 0
    %5763 = vmatpush1.bf16.msra.mxu0 %v4445
    %5764 = vmatprep.subr.bf16.mxu0 0
    %5765 = vmatpush1.bf16.msra.mxu0 %v4444
    %5766 = vmatprep.subr.bf16.mxu0 0
    %5767 = vmatpush1.bf16.msra.mxu0 %v4443
    %5768 = vmatprep.subr.bf16.mxu0 0
    %5769 = vmatpush1.bf16.msra.mxu0 %v4442
    %5770 = vmatprep.subr.bf16.mxu0 0
    %5771 = vmatpush2.bf16.msra.mxu0 %v4457
    %5772 = vmatprep.subr.bf16.mxu0 0
    %5773 = vmatpush2.bf16.msra.mxu0 %v4456
    %5774 = vmatprep.subr.bf16.mxu0 0
    %5775 = vmatpush2.bf16.msra.mxu0 %v4455
    %5776 = vmatprep.subr.bf16.mxu0 0
    %5777 = vmatpush2.bf16.msra.mxu0 %v4454
    %5778 = vmatprep.subr.bf16.mxu0 0
    %5779 = vmatpush2.bf16.msra.mxu0 %v4453
    %5780 = vmatprep.subr.bf16.mxu0 0
    %5781 = vmatpush2.bf16.msra.mxu0 %v4452
    %5782 = vmatprep.subr.bf16.mxu0 0
    %5783 = vmatpush2.bf16.msra.mxu0 %v4451
    %5784 = vmatprep.subr.bf16.mxu0 0
    %5785 = vmatpush2.bf16.msra.mxu0 %v4450
    %5786 = vmatprep.mubr.bf16.mxu0 %v489
    %5787 = vmatmul.mubr.bf16.gmra.mxu0 %v488
    %v5788 = vpop.f32.mrf.mxu0
    %v5789 = vadd.f32 %v5749, %v5788
    %v5790 = vpop.f32.mrf.mxu0
    %v5791 = vpop.f32.mrf.mxu0
    %v5792 = vpop.f32.mrf.mxu0
    %5793 = vdwg.mxu0
    %5794 = vmatprep.subr.bf16.mxu0 0
    %5795 = vmatpush1.bf16.msra.mxu0 %v4465
    %5796 = vmatprep.subr.bf16.mxu0 0
    %5797 = vmatpush1.bf16.msra.mxu0 %v4464
    %5798 = vmatprep.subr.bf16.mxu0 0
    %5799 = vmatpush1.bf16.msra.mxu0 %v4463
    %5800 = vmatprep.subr.bf16.mxu0 0
    %5801 = vmatpush1.bf16.msra.mxu0 %v4462
    %5802 = vmatprep.subr.bf16.mxu0 0
    %5803 = vmatpush1.bf16.msra.mxu0 %v4461
    %5804 = vmatprep.subr.bf16.mxu0 0
    %5805 = vmatpush1.bf16.msra.mxu0 %v4460
    %5806 = vmatprep.subr.bf16.mxu0 0
    %5807 = vmatpush1.bf16.msra.mxu0 %v4459
    %5808 = vmatprep.subr.bf16.mxu0 0
    %5809 = vmatpush1.bf16.msra.mxu0 %v4458
    %5810 = vmatprep.subr.bf16.mxu0 0
    %5811 = vmatpush2.bf16.msra.mxu0 %v4473
    %5812 = vmatprep.subr.bf16.mxu0 0
    %5813 = vmatpush2.bf16.msra.mxu0 %v4472
    %5814 = vmatprep.subr.bf16.mxu0 0
    %5815 = vmatpush2.bf16.msra.mxu0 %v4471
    %5816 = vmatprep.subr.bf16.mxu0 0
    %5817 = vmatpush2.bf16.msra.mxu0 %v4470
    %5818 = vmatprep.subr.bf16.mxu0 0
    %5819 = vmatpush2.bf16.msra.mxu0 %v4469
    %5820 = vmatprep.subr.bf16.mxu0 0
    %5821 = vmatpush2.bf16.msra.mxu0 %v4468
    %5822 = vmatprep.subr.bf16.mxu0 0
    %5823 = vmatpush2.bf16.msra.mxu0 %v4467
    %5824 = vmatprep.subr.bf16.mxu0 0
    %5825 = vmatpush2.bf16.msra.mxu0 %v4466
    %5826 = vmatprep.mubr.bf16.mxu0 %v491
    %5827 = vmatmul.mubr.bf16.gmra.mxu0 %v490
    %v5828 = vpop.f32.mrf.mxu0
    %v5829 = vadd.f32 %v5789, %v5828
    %v5830 = vpop.f32.mrf.mxu0
    %v5831 = vpop.f32.mrf.mxu0
    %v5832 = vpop.f32.mrf.mxu0
    %5833 = vdwg.mxu0
    %5834 = vmatprep.subr.bf16.mxu0 0
    %5835 = vmatpush1.bf16.msra.mxu0 %v4481
    %5836 = vmatprep.subr.bf16.mxu0 0
    %5837 = vmatpush1.bf16.msra.mxu0 %v4480
    %5838 = vmatprep.subr.bf16.mxu0 0
    %5839 = vmatpush1.bf16.msra.mxu0 %v4479
    %5840 = vmatprep.subr.bf16.mxu0 0
    %5841 = vmatpush1.bf16.msra.mxu0 %v4478
    %5842 = vmatprep.subr.bf16.mxu0 0
    %5843 = vmatpush1.bf16.msra.mxu0 %v4477
    %5844 = vmatprep.subr.bf16.mxu0 0
    %5845 = vmatpush1.bf16.msra.mxu0 %v4476
    %5846 = vmatprep.subr.bf16.mxu0 0
    %5847 = vmatpush1.bf16.msra.mxu0 %v4475
    %5848 = vmatprep.subr.bf16.mxu0 0
    %5849 = vmatpush1.bf16.msra.mxu0 %v4474
    %5850 = vmatprep.subr.bf16.mxu0 0
    %5851 = vmatpush2.bf16.msra.mxu0 %v4489
    %5852 = vmatprep.subr.bf16.mxu0 0
    %5853 = vmatpush2.bf16.msra.mxu0 %v4488
    %5854 = vmatprep.subr.bf16.mxu0 0
    %5855 = vmatpush2.bf16.msra.mxu0 %v4487
    %5856 = vmatprep.subr.bf16.mxu0 0
    %5857 = vmatpush2.bf16.msra.mxu0 %v4486
    %5858 = vmatprep.subr.bf16.mxu0 0
    %5859 = vmatpush2.bf16.msra.mxu0 %v4485
    %5860 = vmatprep.subr.bf16.mxu0 0
    %5861 = vmatpush2.bf16.msra.mxu0 %v4484
    %5862 = vmatprep.subr.bf16.mxu0 0
    %5863 = vmatpush2.bf16.msra.mxu0 %v4483
    %5864 = vmatprep.subr.bf16.mxu0 0
    %5865 = vmatpush2.bf16.msra.mxu0 %v4482
    %5866 = vmatprep.mubr.bf16.mxu0 %v493
    %5867 = vmatmul.mubr.bf16.gmra.mxu0 %v492
    %v5868 = vpop.f32.mrf.mxu0
    %v5869 = vadd.f32 %v5829, %v5868
    %v5870 = vpop.f32.mrf.mxu0
    %v5871 = vpop.f32.mrf.mxu0
    %v5872 = vpop.f32.mrf.mxu0
    %5873 = vdwg.mxu0
    %5874 = vmatprep.subr.bf16.mxu0 0
    %5875 = vmatpush1.bf16.msra.mxu0 %v4497
    %5876 = vmatprep.subr.bf16.mxu0 0
    %5877 = vmatpush1.bf16.msra.mxu0 %v4496
    %5878 = vmatprep.subr.bf16.mxu0 0
    %5879 = vmatpush1.bf16.msra.mxu0 %v4495
    %5880 = vmatprep.subr.bf16.mxu0 0
    %5881 = vmatpush1.bf16.msra.mxu0 %v4494
    %5882 = vmatprep.subr.bf16.mxu0 0
    %5883 = vmatpush1.bf16.msra.mxu0 %v4493
    %5884 = vmatprep.subr.bf16.mxu0 0
    %5885 = vmatpush1.bf16.msra.mxu0 %v4492
    %5886 = vmatprep.subr.bf16.mxu0 0
    %5887 = vmatpush1.bf16.msra.mxu0 %v4491
    %5888 = vmatprep.subr.bf16.mxu0 0
    %5889 = vmatpush1.bf16.msra.mxu0 %v4490
    %5890 = vmatprep.subr.bf16.mxu0 0
    %5891 = vmatpush2.bf16.msra.mxu0 %v4505
    %5892 = vmatprep.subr.bf16.mxu0 0
    %5893 = vmatpush2.bf16.msra.mxu0 %v4504
    %5894 = vmatprep.subr.bf16.mxu0 0
    %5895 = vmatpush2.bf16.msra.mxu0 %v4503
    %5896 = vmatprep.subr.bf16.mxu0 0
    %5897 = vmatpush2.bf16.msra.mxu0 %v4502
    %5898 = vmatprep.subr.bf16.mxu0 0
    %5899 = vmatpush2.bf16.msra.mxu0 %v4501
    %5900 = vmatprep.subr.bf16.mxu0 0
    %5901 = vmatpush2.bf16.msra.mxu0 %v4500
    %5902 = vmatprep.subr.bf16.mxu0 0
    %5903 = vmatpush2.bf16.msra.mxu0 %v4499
    %5904 = vmatprep.subr.bf16.mxu0 0
    %5905 = vmatpush2.bf16.msra.mxu0 %v4498
    %5906 = vmatprep.mubr.bf16.mxu0 %v495
    %5907 = vmatmul.mubr.bf16.gmra.mxu0 %v494
    %v5908 = vpop.f32.mrf.mxu0
    %v5909 = vadd.f32 %v5869, %v5908
    %v5910 = vpop.f32.mrf.mxu0
    %v5911 = vpop.f32.mrf.mxu0
    %v5912 = vpop.f32.mrf.mxu0
    %5913 = vdwg.mxu0
    %5914 = vmatprep.subr.bf16.mxu0 0
    %5915 = vmatpush1.bf16.msra.mxu0 %v4513
    %5916 = vmatprep.subr.bf16.mxu0 0
    %5917 = vmatpush1.bf16.msra.mxu0 %v4512
    %5918 = vmatprep.subr.bf16.mxu0 0
    %5919 = vmatpush1.bf16.msra.mxu0 %v4511
    %5920 = vmatprep.subr.bf16.mxu0 0
    %5921 = vmatpush1.bf16.msra.mxu0 %v4510
    %5922 = vmatprep.subr.bf16.mxu0 0
    %5923 = vmatpush1.bf16.msra.mxu0 %v4509
    %5924 = vmatprep.subr.bf16.mxu0 0
    %5925 = vmatpush1.bf16.msra.mxu0 %v4508
    %5926 = vmatprep.subr.bf16.mxu0 0
    %5927 = vmatpush1.bf16.msra.mxu0 %v4507
    %5928 = vmatprep.subr.bf16.mxu0 0
    %5929 = vmatpush1.bf16.msra.mxu0 %v4506
    %5930 = vmatprep.subr.bf16.mxu0 0
    %5931 = vmatpush2.bf16.msra.mxu0 %v4521
    %5932 = vmatprep.subr.bf16.mxu0 0
    %5933 = vmatpush2.bf16.msra.mxu0 %v4520
    %5934 = vmatprep.subr.bf16.mxu0 0
    %5935 = vmatpush2.bf16.msra.mxu0 %v4519
    %5936 = vmatprep.subr.bf16.mxu0 0
    %5937 = vmatpush2.bf16.msra.mxu0 %v4518
    %5938 = vmatprep.subr.bf16.mxu0 0
    %5939 = vmatpush2.bf16.msra.mxu0 %v4517
    %5940 = vmatprep.subr.bf16.mxu0 0
    %5941 = vmatpush2.bf16.msra.mxu0 %v4516
    %5942 = vmatprep.subr.bf16.mxu0 0
    %5943 = vmatpush2.bf16.msra.mxu0 %v4515
    %5944 = vmatprep.subr.bf16.mxu0 0
    %5945 = vmatpush2.bf16.msra.mxu0 %v4514
    %5946 = vmatprep.mubr.bf16.mxu0 %v497
    %5947 = vmatmul.mubr.bf16.gmra.mxu0 %v496
    %v5948 = vpop.f32.mrf.mxu0
    %v5949 = vadd.f32 %v5909, %v5948
    %v5950 = vpop.f32.mrf.mxu0
    %v5951 = vpop.f32.mrf.mxu0
    %v5952 = vpop.f32.mrf.mxu0
    %5953 = vdwg.mxu0
    %5954 = vmatprep.subr.bf16.mxu0 0
    %5955 = vmatpush1.bf16.msra.mxu0 %v4529
    %5956 = vmatprep.subr.bf16.mxu0 0
    %5957 = vmatpush1.bf16.msra.mxu0 %v4528
    %5958 = vmatprep.subr.bf16.mxu0 0
    %5959 = vmatpush1.bf16.msra.mxu0 %v4527
    %5960 = vmatprep.subr.bf16.mxu0 0
    %5961 = vmatpush1.bf16.msra.mxu0 %v4526
    %5962 = vmatprep.subr.bf16.mxu0 0
    %5963 = vmatpush1.bf16.msra.mxu0 %v4525
    %5964 = vmatprep.subr.bf16.mxu0 0
    %5965 = vmatpush1.bf16.msra.mxu0 %v4524
    %5966 = vmatprep.subr.bf16.mxu0 0
    %5967 = vmatpush1.bf16.msra.mxu0 %v4523
    %5968 = vmatprep.subr.bf16.mxu0 0
    %5969 = vmatpush1.bf16.msra.mxu0 %v4522
    %5970 = vmatprep.subr.bf16.mxu0 0
    %5971 = vmatpush2.bf16.msra.mxu0 %v4537
    %5972 = vmatprep.subr.bf16.mxu0 0
    %5973 = vmatpush2.bf16.msra.mxu0 %v4536
    %5974 = vmatprep.subr.bf16.mxu0 0
    %5975 = vmatpush2.bf16.msra.mxu0 %v4535
    %5976 = vmatprep.subr.bf16.mxu0 0
    %5977 = vmatpush2.bf16.msra.mxu0 %v4534
    %5978 = vmatprep.subr.bf16.mxu0 0
    %5979 = vmatpush2.bf16.msra.mxu0 %v4533
    %5980 = vmatprep.subr.bf16.mxu0 0
    %5981 = vmatpush2.bf16.msra.mxu0 %v4532
    %5982 = vmatprep.subr.bf16.mxu0 0
    %5983 = vmatpush2.bf16.msra.mxu0 %v4531
    %5984 = vmatprep.subr.bf16.mxu0 0
    %5985 = vmatpush2.bf16.msra.mxu0 %v4530
    %5986 = vmatprep.mubr.bf16.mxu0 %v499
    %5987 = vmatmul.mubr.bf16.gmra.mxu0 %v498
    %v5988 = vpop.f32.mrf.mxu0
    %v5989 = vadd.f32 %v5949, %v5988
    %v5990 = vpop.f32.mrf.mxu0
    %v5991 = vpop.f32.mrf.mxu0
    %v5992 = vpop.f32.mrf.mxu0
    %5993 = vdwg.mxu0
    %5994 = vmatprep.subr.bf16.mxu0 0
    %5995 = vmatpush1.bf16.msra.mxu0 %v4545
    %5996 = vmatprep.subr.bf16.mxu0 0
    %5997 = vmatpush1.bf16.msra.mxu0 %v4544
    %5998 = vmatprep.subr.bf16.mxu0 0
    %5999 = vmatpush1.bf16.msra.mxu0 %v4543
    %6000 = vmatprep.subr.bf16.mxu0 0
    %6001 = vmatpush1.bf16.msra.mxu0 %v4542
    %6002 = vmatprep.subr.bf16.mxu0 0
    %6003 = vmatpush1.bf16.msra.mxu0 %v4541
    %6004 = vmatprep.subr.bf16.mxu0 0
    %6005 = vmatpush1.bf16.msra.mxu0 %v4540
    %6006 = vmatprep.subr.bf16.mxu0 0
    %6007 = vmatpush1.bf16.msra.mxu0 %v4539
    %6008 = vmatprep.subr.bf16.mxu0 0
    %6009 = vmatpush1.bf16.msra.mxu0 %v4538
    %6010 = vmatprep.subr.bf16.mxu0 0
    %6011 = vmatpush2.bf16.msra.mxu0 %v4553
    %6012 = vmatprep.subr.bf16.mxu0 0
    %6013 = vmatpush2.bf16.msra.mxu0 %v4552
    %6014 = vmatprep.subr.bf16.mxu0 0
    %6015 = vmatpush2.bf16.msra.mxu0 %v4551
    %6016 = vmatprep.subr.bf16.mxu0 0
    %6017 = vmatpush2.bf16.msra.mxu0 %v4550
    %6018 = vmatprep.subr.bf16.mxu0 0
    %6019 = vmatpush2.bf16.msra.mxu0 %v4549
    %6020 = vmatprep.subr.bf16.mxu0 0
    %6021 = vmatpush2.bf16.msra.mxu0 %v4548
    %6022 = vmatprep.subr.bf16.mxu0 0
    %6023 = vmatpush2.bf16.msra.mxu0 %v4547
    %6024 = vmatprep.subr.bf16.mxu0 0
    %6025 = vmatpush2.bf16.msra.mxu0 %v4546
    %6026 = vmatprep.mubr.bf16.mxu0 %v501
    %6027 = vmatmul.mubr.bf16.gmra.mxu0 %v500
    %v6028 = vpop.f32.mrf.mxu0
    %v6029 = vadd.f32 %v5989, %v6028
    %v6030 = vpop.f32.mrf.mxu0
    %v6031 = vpop.f32.mrf.mxu0
    %v6032 = vpop.f32.mrf.mxu0
    %6033 = vdwg.mxu0
    %6034 = vmatprep.subr.bf16.mxu0 0
    %6035 = vmatpush1.bf16.msra.mxu0 %v4561
    %6036 = vmatprep.subr.bf16.mxu0 0
    %6037 = vmatpush1.bf16.msra.mxu0 %v4560
    %6038 = vmatprep.subr.bf16.mxu0 0
    %6039 = vmatpush1.bf16.msra.mxu0 %v4559
    %6040 = vmatprep.subr.bf16.mxu0 0
    %6041 = vmatpush1.bf16.msra.mxu0 %v4558
    %6042 = vmatprep.subr.bf16.mxu0 0
    %6043 = vmatpush1.bf16.msra.mxu0 %v4557
    %6044 = vmatprep.subr.bf16.mxu0 0
    %6045 = vmatpush1.bf16.msra.mxu0 %v4556
    %6046 = vmatprep.subr.bf16.mxu0 0
    %6047 = vmatpush1.bf16.msra.mxu0 %v4555
    %6048 = vmatprep.subr.bf16.mxu0 0
    %6049 = vmatpush1.bf16.msra.mxu0 %v4554
    %6050 = vmatprep.subr.bf16.mxu0 0
    %6051 = vmatpush2.bf16.msra.mxu0 %v4569
    %6052 = vmatprep.subr.bf16.mxu0 0
    %6053 = vmatpush2.bf16.msra.mxu0 %v4568
    %6054 = vmatprep.subr.bf16.mxu0 0
    %6055 = vmatpush2.bf16.msra.mxu0 %v4567
    %6056 = vmatprep.subr.bf16.mxu0 0
    %6057 = vmatpush2.bf16.msra.mxu0 %v4566
    %6058 = vmatprep.subr.bf16.mxu0 0
    %6059 = vmatpush2.bf16.msra.mxu0 %v4565
    %6060 = vmatprep.subr.bf16.mxu0 0
    %6061 = vmatpush2.bf16.msra.mxu0 %v4564
    %6062 = vmatprep.subr.bf16.mxu0 0
    %6063 = vmatpush2.bf16.msra.mxu0 %v4563
    %6064 = vmatprep.subr.bf16.mxu0 0
    %6065 = vmatpush2.bf16.msra.mxu0 %v4562
    %6066 = vmatprep.mubr.bf16.mxu0 %v503
    %6067 = vmatmul.mubr.bf16.gmra.mxu0 %v502
    %v6068 = vpop.f32.mrf.mxu0
    %v6069 = vadd.f32 %v6029, %v6068
    %v6070 = vpop.f32.mrf.mxu0
    %v6071 = vpop.f32.mrf.mxu0
    %v6072 = vpop.f32.mrf.mxu0
    %6073 = vdwg.mxu0
    %6074 = vmatprep.subr.bf16.mxu0 0
    %6075 = vmatpush1.bf16.msra.mxu0 %v4577
    %6076 = vmatprep.subr.bf16.mxu0 0
    %6077 = vmatpush1.bf16.msra.mxu0 %v4576
    %6078 = vmatprep.subr.bf16.mxu0 0
    %6079 = vmatpush1.bf16.msra.mxu0 %v4575
    %6080 = vmatprep.subr.bf16.mxu0 0
    %6081 = vmatpush1.bf16.msra.mxu0 %v4574
    %6082 = vmatprep.subr.bf16.mxu0 0
    %6083 = vmatpush1.bf16.msra.mxu0 %v4573
    %6084 = vmatprep.subr.bf16.mxu0 0
    %6085 = vmatpush1.bf16.msra.mxu0 %v4572
    %6086 = vmatprep.subr.bf16.mxu0 0
    %6087 = vmatpush1.bf16.msra.mxu0 %v4571
    %6088 = vmatprep.subr.bf16.mxu0 0
    %6089 = vmatpush1.bf16.msra.mxu0 %v4570
    %6090 = vmatprep.subr.bf16.mxu0 0
    %6091 = vmatpush2.bf16.msra.mxu0 %v4585
    %6092 = vmatprep.subr.bf16.mxu0 0
    %6093 = vmatpush2.bf16.msra.mxu0 %v4584
    %6094 = vmatprep.subr.bf16.mxu0 0
    %6095 = vmatpush2.bf16.msra.mxu0 %v4583
    %6096 = vmatprep.subr.bf16.mxu0 0
    %6097 = vmatpush2.bf16.msra.mxu0 %v4582
    %6098 = vmatprep.subr.bf16.mxu0 0
    %6099 = vmatpush2.bf16.msra.mxu0 %v4581
    %6100 = vmatprep.subr.bf16.mxu0 0
    %6101 = vmatpush2.bf16.msra.mxu0 %v4580
    %6102 = vmatprep.subr.bf16.mxu0 0
    %6103 = vmatpush2.bf16.msra.mxu0 %v4579
    %6104 = vmatprep.subr.bf16.mxu0 0
    %6105 = vmatpush2.bf16.msra.mxu0 %v4578
    %6106 = vmatprep.mubr.bf16.mxu0 %v505
    %6107 = vmatmul.mubr.bf16.gmra.mxu0 %v504
    %v6108 = vpop.f32.mrf.mxu0
    %v6109 = vadd.f32 %v6069, %v6108
    %v6110 = vpop.f32.mrf.mxu0
    %v6111 = vpop.f32.mrf.mxu0
    %v6112 = vpop.f32.mrf.mxu0
    %6113 = vdwg.mxu0
    %6114 = vmatprep.subr.bf16.mxu0 0
    %6115 = vmatpush1.bf16.msra.mxu0 %v4593
    %6116 = vmatprep.subr.bf16.mxu0 0
    %6117 = vmatpush1.bf16.msra.mxu0 %v4592
    %6118 = vmatprep.subr.bf16.mxu0 0
    %6119 = vmatpush1.bf16.msra.mxu0 %v4591
    %6120 = vmatprep.subr.bf16.mxu0 0
    %6121 = vmatpush1.bf16.msra.mxu0 %v4590
    %6122 = vmatprep.subr.bf16.mxu0 0
    %6123 = vmatpush1.bf16.msra.mxu0 %v4589
    %6124 = vmatprep.subr.bf16.mxu0 0
    %6125 = vmatpush1.bf16.msra.mxu0 %v4588
    %6126 = vmatprep.subr.bf16.mxu0 0
    %6127 = vmatpush1.bf16.msra.mxu0 %v4587
    %6128 = vmatprep.subr.bf16.mxu0 0
    %6129 = vmatpush1.bf16.msra.mxu0 %v4586
    %6130 = vmatprep.subr.bf16.mxu0 0
    %6131 = vmatpush2.bf16.msra.mxu0 %v4601
    %6132 = vmatprep.subr.bf16.mxu0 0
    %6133 = vmatpush2.bf16.msra.mxu0 %v4600
    %6134 = vmatprep.subr.bf16.mxu0 0
    %6135 = vmatpush2.bf16.msra.mxu0 %v4599
    %6136 = vmatprep.subr.bf16.mxu0 0
    %6137 = vmatpush2.bf16.msra.mxu0 %v4598
    %6138 = vmatprep.subr.bf16.mxu0 0
    %6139 = vmatpush2.bf16.msra.mxu0 %v4597
    %6140 = vmatprep.subr.bf16.mxu0 0
    %6141 = vmatpush2.bf16.msra.mxu0 %v4596
    %6142 = vmatprep.subr.bf16.mxu0 0
    %6143 = vmatpush2.bf16.msra.mxu0 %v4595
    %6144 = vmatprep.subr.bf16.mxu0 0
    %6145 = vmatpush2.bf16.msra.mxu0 %v4594
    %6146 = vmatprep.mubr.bf16.mxu0 %v507
    %6147 = vmatmul.mubr.bf16.gmra.mxu0 %v506
    %v6148 = vpop.f32.mrf.mxu0
    %v6149 = vadd.f32 %v6109, %v6148
    %v6150 = vpop.f32.mrf.mxu0
    %v6151 = vpop.f32.mrf.mxu0
    %v6152 = vpop.f32.mrf.mxu0
    %6153 = vdwg.mxu0
    %6154 = vmatprep.subr.bf16.mxu0 0
    %6155 = vmatpush1.bf16.msra.mxu0 %v4609
    %6156 = vmatprep.subr.bf16.mxu0 0
    %6157 = vmatpush1.bf16.msra.mxu0 %v4608
    %6158 = vmatprep.subr.bf16.mxu0 0
    %6159 = vmatpush1.bf16.msra.mxu0 %v4607
    %6160 = vmatprep.subr.bf16.mxu0 0
    %6161 = vmatpush1.bf16.msra.mxu0 %v4606
    %6162 = vmatprep.subr.bf16.mxu0 0
    %6163 = vmatpush1.bf16.msra.mxu0 %v4605
    %6164 = vmatprep.subr.bf16.mxu0 0
    %6165 = vmatpush1.bf16.msra.mxu0 %v4604
    %6166 = vmatprep.subr.bf16.mxu0 0
    %6167 = vmatpush1.bf16.msra.mxu0 %v4603
    %6168 = vmatprep.subr.bf16.mxu0 0
    %6169 = vmatpush1.bf16.msra.mxu0 %v4602
    %6170 = vmatprep.subr.bf16.mxu0 0
    %6171 = vmatpush2.bf16.msra.mxu0 %v4617
    %6172 = vmatprep.subr.bf16.mxu0 0
    %6173 = vmatpush2.bf16.msra.mxu0 %v4616
    %6174 = vmatprep.subr.bf16.mxu0 0
    %6175 = vmatpush2.bf16.msra.mxu0 %v4615
    %6176 = vmatprep.subr.bf16.mxu0 0
    %6177 = vmatpush2.bf16.msra.mxu0 %v4614
    %6178 = vmatprep.subr.bf16.mxu0 0
    %6179 = vmatpush2.bf16.msra.mxu0 %v4613
    %6180 = vmatprep.subr.bf16.mxu0 0
    %6181 = vmatpush2.bf16.msra.mxu0 %v4612
    %6182 = vmatprep.subr.bf16.mxu0 0
    %6183 = vmatpush2.bf16.msra.mxu0 %v4611
    %6184 = vmatprep.subr.bf16.mxu0 0
    %6185 = vmatpush2.bf16.msra.mxu0 %v4610
    %6186 = vmatprep.mubr.bf16.mxu0 %v509
    %6187 = vmatmul.mubr.bf16.gmra.mxu0 %v508
    %v6188 = vpop.f32.mrf.mxu0
    %v6189 = vadd.f32 %v6149, %v6188
    %v6190 = vpop.f32.mrf.mxu0
    %v6191 = vpop.f32.mrf.mxu0
    %v6192 = vpop.f32.mrf.mxu0
    %6193 = vdwg.mxu0
    %6194 = vmatprep.subr.bf16.mxu0 0
    %6195 = vmatpush1.bf16.msra.mxu0 %v4625
    %6196 = vmatprep.subr.bf16.mxu0 0
    %6197 = vmatpush1.bf16.msra.mxu0 %v4624
    %6198 = vmatprep.subr.bf16.mxu0 0
    %6199 = vmatpush1.bf16.msra.mxu0 %v4623
    %6200 = vmatprep.subr.bf16.mxu0 0
    %6201 = vmatpush1.bf16.msra.mxu0 %v4622
    %6202 = vmatprep.subr.bf16.mxu0 0
    %6203 = vmatpush1.bf16.msra.mxu0 %v4621
    %6204 = vmatprep.subr.bf16.mxu0 0
    %6205 = vmatpush1.bf16.msra.mxu0 %v4620
    %6206 = vmatprep.subr.bf16.mxu0 0
    %6207 = vmatpush1.bf16.msra.mxu0 %v4619
    %6208 = vmatprep.subr.bf16.mxu0 0
    %6209 = vmatpush1.bf16.msra.mxu0 %v4618
    %6210 = vmatprep.subr.bf16.mxu0 0
    %6211 = vmatpush2.bf16.msra.mxu0 %v4633
    %6212 = vmatprep.subr.bf16.mxu0 0
    %6213 = vmatpush2.bf16.msra.mxu0 %v4632
    %6214 = vmatprep.subr.bf16.mxu0 0
    %6215 = vmatpush2.bf16.msra.mxu0 %v4631
    %6216 = vmatprep.subr.bf16.mxu0 0
    %6217 = vmatpush2.bf16.msra.mxu0 %v4630
    %6218 = vmatprep.subr.bf16.mxu0 0
    %6219 = vmatpush2.bf16.msra.mxu0 %v4629
    %6220 = vmatprep.subr.bf16.mxu0 0
    %6221 = vmatpush2.bf16.msra.mxu0 %v4628
    %6222 = vmatprep.subr.bf16.mxu0 0
    %6223 = vmatpush2.bf16.msra.mxu0 %v4627
    %6224 = vmatprep.subr.bf16.mxu0 0
    %6225 = vmatpush2.bf16.msra.mxu0 %v4626
    %6226 = vmatprep.mubr.bf16.mxu0 %v511
    %6227 = vmatmul.mubr.bf16.gmra.mxu0 %v510
    %v6228 = vpop.f32.mrf.mxu0
    %v6229 = vadd.f32 %v6189, %v6228
    %v6230 = vpop.f32.mrf.mxu0
    %v6231 = vpop.f32.mrf.mxu0
    %v6232 = vpop.f32.mrf.mxu0
    %6233 = vdwg.mxu0
    %6234 = vmatprep.subr.bf16.mxu0 0
    %6235 = vmatpush1.bf16.msra.mxu0 %v4641
    %6236 = vmatprep.subr.bf16.mxu0 0
    %6237 = vmatpush1.bf16.msra.mxu0 %v4640
    %6238 = vmatprep.subr.bf16.mxu0 0
    %6239 = vmatpush1.bf16.msra.mxu0 %v4639
    %6240 = vmatprep.subr.bf16.mxu0 0
    %6241 = vmatpush1.bf16.msra.mxu0 %v4638
    %6242 = vmatprep.subr.bf16.mxu0 0
    %6243 = vmatpush1.bf16.msra.mxu0 %v4637
    %6244 = vmatprep.subr.bf16.mxu0 0
    %6245 = vmatpush1.bf16.msra.mxu0 %v4636
    %6246 = vmatprep.subr.bf16.mxu0 0
    %6247 = vmatpush1.bf16.msra.mxu0 %v4635
    %6248 = vmatprep.subr.bf16.mxu0 0
    %6249 = vmatpush1.bf16.msra.mxu0 %v4634
    %6250 = vmatprep.subr.bf16.mxu0 0
    %6251 = vmatpush2.bf16.msra.mxu0 %v4649
    %6252 = vmatprep.subr.bf16.mxu0 0
    %6253 = vmatpush2.bf16.msra.mxu0 %v4648
    %6254 = vmatprep.subr.bf16.mxu0 0
    %6255 = vmatpush2.bf16.msra.mxu0 %v4647
    %6256 = vmatprep.subr.bf16.mxu0 0
    %6257 = vmatpush2.bf16.msra.mxu0 %v4646
    %6258 = vmatprep.subr.bf16.mxu0 0
    %6259 = vmatpush2.bf16.msra.mxu0 %v4645
    %6260 = vmatprep.subr.bf16.mxu0 0
    %6261 = vmatpush2.bf16.msra.mxu0 %v4644
    %6262 = vmatprep.subr.bf16.mxu0 0
    %6263 = vmatpush2.bf16.msra.mxu0 %v4643
    %6264 = vmatprep.subr.bf16.mxu0 0
    %6265 = vmatpush2.bf16.msra.mxu0 %v4642
    %6266 = vmatprep.mubr.bf16.mxu0 %v513
    %6267 = vmatmul.mubr.bf16.gmra.mxu0 %v512
    %v6268 = vpop.f32.mrf.mxu0
    %v6269 = vadd.f32 %v6229, %v6268
    %v6270 = vpop.f32.mrf.mxu0
    %v6271 = vpop.f32.mrf.mxu0
    %v6272 = vpop.f32.mrf.mxu0
    %6273 = vdwg.mxu0
    %6274 = vmatprep.subr.bf16.mxu0 0
    %6275 = vmatpush1.bf16.msra.mxu0 %v4657
    %6276 = vmatprep.subr.bf16.mxu0 0
    %6277 = vmatpush1.bf16.msra.mxu0 %v4656
    %6278 = vmatprep.subr.bf16.mxu0 0
    %6279 = vmatpush1.bf16.msra.mxu0 %v4655
    %6280 = vmatprep.subr.bf16.mxu0 0
    %6281 = vmatpush1.bf16.msra.mxu0 %v4654
    %6282 = vmatprep.subr.bf16.mxu0 0
    %6283 = vmatpush1.bf16.msra.mxu0 %v4653
    %6284 = vmatprep.subr.bf16.mxu0 0
    %6285 = vmatpush1.bf16.msra.mxu0 %v4652
    %6286 = vmatprep.subr.bf16.mxu0 0
    %6287 = vmatpush1.bf16.msra.mxu0 %v4651
    %6288 = vmatprep.subr.bf16.mxu0 0
    %6289 = vmatpush1.bf16.msra.mxu0 %v4650
    %6290 = vmatprep.subr.bf16.mxu0 0
    %6291 = vmatpush2.bf16.msra.mxu0 %v4665
    %6292 = vmatprep.subr.bf16.mxu0 0
    %6293 = vmatpush2.bf16.msra.mxu0 %v4664
    %6294 = vmatprep.subr.bf16.mxu0 0
    %6295 = vmatpush2.bf16.msra.mxu0 %v4663
    %6296 = vmatprep.subr.bf16.mxu0 0
    %6297 = vmatpush2.bf16.msra.mxu0 %v4662
    %6298 = vmatprep.subr.bf16.mxu0 0
    %6299 = vmatpush2.bf16.msra.mxu0 %v4661
    %6300 = vmatprep.subr.bf16.mxu0 0
    %6301 = vmatpush2.bf16.msra.mxu0 %v4660
    %6302 = vmatprep.subr.bf16.mxu0 0
    %6303 = vmatpush2.bf16.msra.mxu0 %v4659
    %6304 = vmatprep.subr.bf16.mxu0 0
    %6305 = vmatpush2.bf16.msra.mxu0 %v4658
    %6306 = vmatprep.mubr.bf16.mxu0 %v515
    %6307 = vmatmul.mubr.bf16.gmra.mxu0 %v514
    %v6308 = vpop.f32.mrf.mxu0
    %v6309 = vadd.f32 %v6269, %v6308
    %v6310 = vpop.f32.mrf.mxu0
    %v6311 = vpop.f32.mrf.mxu0
    %v6312 = vpop.f32.mrf.mxu0
    %6313 = vdwg.mxu0
    %6314 = vmatprep.subr.bf16.mxu0 0
    %6315 = vmatpush1.bf16.msra.mxu0 %v4673
    %6316 = vmatprep.subr.bf16.mxu0 0
    %6317 = vmatpush1.bf16.msra.mxu0 %v4672
    %6318 = vmatprep.subr.bf16.mxu0 0
    %6319 = vmatpush1.bf16.msra.mxu0 %v4671
    %6320 = vmatprep.subr.bf16.mxu0 0
    %6321 = vmatpush1.bf16.msra.mxu0 %v4670
    %6322 = vmatprep.subr.bf16.mxu0 0
    %6323 = vmatpush1.bf16.msra.mxu0 %v4669
    %6324 = vmatprep.subr.bf16.mxu0 0
    %6325 = vmatpush1.bf16.msra.mxu0 %v4668
    %6326 = vmatprep.subr.bf16.mxu0 0
    %6327 = vmatpush1.bf16.msra.mxu0 %v4667
    %6328 = vmatprep.subr.bf16.mxu0 0
    %6329 = vmatpush1.bf16.msra.mxu0 %v4666
    %6330 = vmatprep.subr.bf16.mxu0 0
    %6331 = vmatpush2.bf16.msra.mxu0 %v4681
    %6332 = vmatprep.subr.bf16.mxu0 0
    %6333 = vmatpush2.bf16.msra.mxu0 %v4680
    %6334 = vmatprep.subr.bf16.mxu0 0
    %6335 = vmatpush2.bf16.msra.mxu0 %v4679
    %6336 = vmatprep.subr.bf16.mxu0 0
    %6337 = vmatpush2.bf16.msra.mxu0 %v4678
    %6338 = vmatprep.subr.bf16.mxu0 0
    %6339 = vmatpush2.bf16.msra.mxu0 %v4677
    %6340 = vmatprep.subr.bf16.mxu0 0
    %6341 = vmatpush2.bf16.msra.mxu0 %v4676
    %6342 = vmatprep.subr.bf16.mxu0 0
    %6343 = vmatpush2.bf16.msra.mxu0 %v4675
    %6344 = vmatprep.subr.bf16.mxu0 0
    %6345 = vmatpush2.bf16.msra.mxu0 %v4674
    %6346 = vmatprep.mubr.bf16.mxu0 %v517
    %6347 = vmatmul.mubr.bf16.gmra.mxu0 %v516
    %v6348 = vpop.f32.mrf.mxu0
    %v6349 = vadd.f32 %v6309, %v6348
    %v6350 = vpop.f32.mrf.mxu0
    %v6351 = vpop.f32.mrf.mxu0
    %v6352 = vpop.f32.mrf.mxu0
    %6353 = vdwg.mxu0
    %6354 = vmatprep.subr.bf16.mxu0 0
    %6355 = vmatpush1.bf16.msra.mxu0 %v4689
    %6356 = vmatprep.subr.bf16.mxu0 0
    %6357 = vmatpush1.bf16.msra.mxu0 %v4688
    %6358 = vmatprep.subr.bf16.mxu0 0
    %6359 = vmatpush1.bf16.msra.mxu0 %v4687
    %6360 = vmatprep.subr.bf16.mxu0 0
    %6361 = vmatpush1.bf16.msra.mxu0 %v4686
    %6362 = vmatprep.subr.bf16.mxu0 0
    %6363 = vmatpush1.bf16.msra.mxu0 %v4685
    %6364 = vmatprep.subr.bf16.mxu0 0
    %6365 = vmatpush1.bf16.msra.mxu0 %v4684
    %6366 = vmatprep.subr.bf16.mxu0 0
    %6367 = vmatpush1.bf16.msra.mxu0 %v4683
    %6368 = vmatprep.subr.bf16.mxu0 0
    %6369 = vmatpush1.bf16.msra.mxu0 %v4682
    %6370 = vmatprep.subr.bf16.mxu0 0
    %6371 = vmatpush2.bf16.msra.mxu0 %v4697
    %6372 = vmatprep.subr.bf16.mxu0 0
    %6373 = vmatpush2.bf16.msra.mxu0 %v4696
    %6374 = vmatprep.subr.bf16.mxu0 0
    %6375 = vmatpush2.bf16.msra.mxu0 %v4695
    %6376 = vmatprep.subr.bf16.mxu0 0
    %6377 = vmatpush2.bf16.msra.mxu0 %v4694
    %6378 = vmatprep.subr.bf16.mxu0 0
    %6379 = vmatpush2.bf16.msra.mxu0 %v4693
    %6380 = vmatprep.subr.bf16.mxu0 0
    %6381 = vmatpush2.bf16.msra.mxu0 %v4692
    %6382 = vmatprep.subr.bf16.mxu0 0
    %6383 = vmatpush2.bf16.msra.mxu0 %v4691
    %6384 = vmatprep.subr.bf16.mxu0 0
    %6385 = vmatpush2.bf16.msra.mxu0 %v4690
    %6386 = vmatprep.mubr.bf16.mxu0 %v519
    %6387 = vmatmul.mubr.bf16.gmra.mxu0 %v518
    %v6388 = vpop.f32.mrf.mxu0
    %v6389 = vadd.f32 %v6349, %v6388
    %v6390 = vpop.f32.mrf.mxu0
    %v6391 = vpop.f32.mrf.mxu0
    %v6392 = vpop.f32.mrf.mxu0
    %6393 = vdwg.mxu0
    %6394 = vmatprep.subr.bf16.mxu0 0
    %6395 = vmatpush1.bf16.msra.mxu0 %v4705
    %6396 = vmatprep.subr.bf16.mxu0 0
    %6397 = vmatpush1.bf16.msra.mxu0 %v4704
    %6398 = vmatprep.subr.bf16.mxu0 0
    %6399 = vmatpush1.bf16.msra.mxu0 %v4703
    %6400 = vmatprep.subr.bf16.mxu0 0
    %6401 = vmatpush1.bf16.msra.mxu0 %v4702
    %6402 = vmatprep.subr.bf16.mxu0 0
    %6403 = vmatpush1.bf16.msra.mxu0 %v4701
    %6404 = vmatprep.subr.bf16.mxu0 0
    %6405 = vmatpush1.bf16.msra.mxu0 %v4700
    %6406 = vmatprep.subr.bf16.mxu0 0
    %6407 = vmatpush1.bf16.msra.mxu0 %v4699
    %6408 = vmatprep.subr.bf16.mxu0 0
    %6409 = vmatpush1.bf16.msra.mxu0 %v4698
    %6410 = vmatprep.subr.bf16.mxu0 0
    %6411 = vmatpush2.bf16.msra.mxu0 %v4713
    %6412 = vmatprep.subr.bf16.mxu0 0
    %6413 = vmatpush2.bf16.msra.mxu0 %v4712
    %6414 = vmatprep.subr.bf16.mxu0 0
    %6415 = vmatpush2.bf16.msra.mxu0 %v4711
    %6416 = vmatprep.subr.bf16.mxu0 0
    %6417 = vmatpush2.bf16.msra.mxu0 %v4710
    %6418 = vmatprep.subr.bf16.mxu0 0
    %6419 = vmatpush2.bf16.msra.mxu0 %v4709
    %6420 = vmatprep.subr.bf16.mxu0 0
    %6421 = vmatpush2.bf16.msra.mxu0 %v4708
    %6422 = vmatprep.subr.bf16.mxu0 0
    %6423 = vmatpush2.bf16.msra.mxu0 %v4707
    %6424 = vmatprep.subr.bf16.mxu0 0
    %6425 = vmatpush2.bf16.msra.mxu0 %v4706
    %6426 = vmatprep.mubr.bf16.mxu0 %v521
    %6427 = vmatmul.mubr.bf16.gmra.mxu0 %v520
    %v6428 = vpop.f32.mrf.mxu0
    %v6429 = vadd.f32 %v6389, %v6428
    %v6430 = vpop.f32.mrf.mxu0
    %v6431 = vpop.f32.mrf.mxu0
    %v6432 = vpop.f32.mrf.mxu0
    %6433 = vdwg.mxu0
    %6434 = vmatprep.subr.bf16.mxu0 0
    %6435 = vmatpush1.bf16.msra.mxu0 %v4721
    %6436 = vmatprep.subr.bf16.mxu0 0
    %6437 = vmatpush1.bf16.msra.mxu0 %v4720
    %6438 = vmatprep.subr.bf16.mxu0 0
    %6439 = vmatpush1.bf16.msra.mxu0 %v4719
    %6440 = vmatprep.subr.bf16.mxu0 0
    %6441 = vmatpush1.bf16.msra.mxu0 %v4718
    %6442 = vmatprep.subr.bf16.mxu0 0
    %6443 = vmatpush1.bf16.msra.mxu0 %v4717
    %6444 = vmatprep.subr.bf16.mxu0 0
    %6445 = vmatpush1.bf16.msra.mxu0 %v4716
    %6446 = vmatprep.subr.bf16.mxu0 0
    %6447 = vmatpush1.bf16.msra.mxu0 %v4715
    %6448 = vmatprep.subr.bf16.mxu0 0
    %6449 = vmatpush1.bf16.msra.mxu0 %v4714
    %6450 = vmatprep.subr.bf16.mxu0 0
    %6451 = vmatpush2.bf16.msra.mxu0 %v4729
    %6452 = vmatprep.subr.bf16.mxu0 0
    %6453 = vmatpush2.bf16.msra.mxu0 %v4728
    %6454 = vmatprep.subr.bf16.mxu0 0
    %6455 = vmatpush2.bf16.msra.mxu0 %v4727
    %6456 = vmatprep.subr.bf16.mxu0 0
    %6457 = vmatpush2.bf16.msra.mxu0 %v4726
    %6458 = vmatprep.subr.bf16.mxu0 0
    %6459 = vmatpush2.bf16.msra.mxu0 %v4725
    %6460 = vmatprep.subr.bf16.mxu0 0
    %6461 = vmatpush2.bf16.msra.mxu0 %v4724
    %6462 = vmatprep.subr.bf16.mxu0 0
    %6463 = vmatpush2.bf16.msra.mxu0 %v4723
    %6464 = vmatprep.subr.bf16.mxu0 0
    %6465 = vmatpush2.bf16.msra.mxu0 %v4722
    %6466 = vmatprep.mubr.bf16.mxu0 %v523
    %6467 = vmatmul.mubr.bf16.gmra.mxu0 %v522
    %v6468 = vpop.f32.mrf.mxu0
    %v6469 = vadd.f32 %v6429, %v6468
    %v6470 = vpop.f32.mrf.mxu0
    %v6471 = vpop.f32.mrf.mxu0
    %v6472 = vpop.f32.mrf.mxu0
    %6473 = vdwg.mxu0
    %6474 = vmatprep.subr.bf16.mxu0 0
    %6475 = vmatpush1.bf16.msra.mxu0 %v4737
    %6476 = vmatprep.subr.bf16.mxu0 0
    %6477 = vmatpush1.bf16.msra.mxu0 %v4736
    %6478 = vmatprep.subr.bf16.mxu0 0
    %6479 = vmatpush1.bf16.msra.mxu0 %v4735
    %6480 = vmatprep.subr.bf16.mxu0 0
    %6481 = vmatpush1.bf16.msra.mxu0 %v4734
    %6482 = vmatprep.subr.bf16.mxu0 0
    %6483 = vmatpush1.bf16.msra.mxu0 %v4733
    %6484 = vmatprep.subr.bf16.mxu0 0
    %6485 = vmatpush1.bf16.msra.mxu0 %v4732
    %6486 = vmatprep.subr.bf16.mxu0 0
    %6487 = vmatpush1.bf16.msra.mxu0 %v4731
    %6488 = vmatprep.subr.bf16.mxu0 0
    %6489 = vmatpush1.bf16.msra.mxu0 %v4730
    %6490 = vmatprep.subr.bf16.mxu0 0
    %6491 = vmatpush2.bf16.msra.mxu0 %v4745
    %6492 = vmatprep.subr.bf16.mxu0 0
    %6493 = vmatpush2.bf16.msra.mxu0 %v4744
    %6494 = vmatprep.subr.bf16.mxu0 0
    %6495 = vmatpush2.bf16.msra.mxu0 %v4743
    %6496 = vmatprep.subr.bf16.mxu0 0
    %6497 = vmatpush2.bf16.msra.mxu0 %v4742
    %6498 = vmatprep.subr.bf16.mxu0 0
    %6499 = vmatpush2.bf16.msra.mxu0 %v4741
    %6500 = vmatprep.subr.bf16.mxu0 0
    %6501 = vmatpush2.bf16.msra.mxu0 %v4740
    %6502 = vmatprep.subr.bf16.mxu0 0
    %6503 = vmatpush2.bf16.msra.mxu0 %v4739
    %6504 = vmatprep.subr.bf16.mxu0 0
    %6505 = vmatpush2.bf16.msra.mxu0 %v4738
    %6506 = vmatprep.mubr.bf16.mxu0 %v525
    %6507 = vmatmul.mubr.bf16.gmra.mxu0 %v524
    %v6508 = vpop.f32.mrf.mxu0
    %v6509 = vadd.f32 %v6469, %v6508
    %v6510 = vpop.f32.mrf.mxu0
    %v6511 = vpop.f32.mrf.mxu0
    %v6512 = vpop.f32.mrf.mxu0
    %6513 = vdwg.mxu0
    %6514 = vmatprep.subr.bf16.mxu0 0
    %6515 = vmatpush1.bf16.msra.mxu0 %v4753
    %6516 = vmatprep.subr.bf16.mxu0 0
    %6517 = vmatpush1.bf16.msra.mxu0 %v4752
    %6518 = vmatprep.subr.bf16.mxu0 0
    %6519 = vmatpush1.bf16.msra.mxu0 %v4751
    %6520 = vmatprep.subr.bf16.mxu0 0
    %6521 = vmatpush1.bf16.msra.mxu0 %v4750
    %6522 = vmatprep.subr.bf16.mxu0 0
    %6523 = vmatpush1.bf16.msra.mxu0 %v4749
    %6524 = vmatprep.subr.bf16.mxu0 0
    %6525 = vmatpush1.bf16.msra.mxu0 %v4748
    %6526 = vmatprep.subr.bf16.mxu0 0
    %6527 = vmatpush1.bf16.msra.mxu0 %v4747
    %6528 = vmatprep.subr.bf16.mxu0 0
    %6529 = vmatpush1.bf16.msra.mxu0 %v4746
    %6530 = vmatprep.subr.bf16.mxu0 0
    %6531 = vmatpush2.bf16.msra.mxu0 %v4761
    %6532 = vmatprep.subr.bf16.mxu0 0
    %6533 = vmatpush2.bf16.msra.mxu0 %v4760
    %6534 = vmatprep.subr.bf16.mxu0 0
    %6535 = vmatpush2.bf16.msra.mxu0 %v4759
    %6536 = vmatprep.subr.bf16.mxu0 0
    %6537 = vmatpush2.bf16.msra.mxu0 %v4758
    %6538 = vmatprep.subr.bf16.mxu0 0
    %6539 = vmatpush2.bf16.msra.mxu0 %v4757
    %6540 = vmatprep.subr.bf16.mxu0 0
    %6541 = vmatpush2.bf16.msra.mxu0 %v4756
    %6542 = vmatprep.subr.bf16.mxu0 0
    %6543 = vmatpush2.bf16.msra.mxu0 %v4755
    %6544 = vmatprep.subr.bf16.mxu0 0
    %6545 = vmatpush2.bf16.msra.mxu0 %v4754
    %6546 = vmatprep.mubr.bf16.mxu0 %v527
    %6547 = vmatmul.mubr.bf16.gmra.mxu0 %v526
    %v6548 = vpop.f32.mrf.mxu0
    %v6549 = vadd.f32 %v6509, %v6548
    %v6550 = vpop.f32.mrf.mxu0
    %v6551 = vpop.f32.mrf.mxu0
    %v6552 = vpop.f32.mrf.mxu0
    %6553 = vdwg.mxu0
    %6554 = vmatprep.subr.bf16.mxu0 0
    %6555 = vmatpush1.bf16.msra.mxu0 %v4769
    %6556 = vmatprep.subr.bf16.mxu0 0
    %6557 = vmatpush1.bf16.msra.mxu0 %v4768
    %6558 = vmatprep.subr.bf16.mxu0 0
    %6559 = vmatpush1.bf16.msra.mxu0 %v4767
    %6560 = vmatprep.subr.bf16.mxu0 0
    %6561 = vmatpush1.bf16.msra.mxu0 %v4766
    %6562 = vmatprep.subr.bf16.mxu0 0
    %6563 = vmatpush1.bf16.msra.mxu0 %v4765
    %6564 = vmatprep.subr.bf16.mxu0 0
    %6565 = vmatpush1.bf16.msra.mxu0 %v4764
    %6566 = vmatprep.subr.bf16.mxu0 0
    %6567 = vmatpush1.bf16.msra.mxu0 %v4763
    %6568 = vmatprep.subr.bf16.mxu0 0
    %6569 = vmatpush1.bf16.msra.mxu0 %v4762
    %6570 = vmatprep.subr.bf16.mxu0 0
    %6571 = vmatpush2.bf16.msra.mxu0 %v4777
    %6572 = vmatprep.subr.bf16.mxu0 0
    %6573 = vmatpush2.bf16.msra.mxu0 %v4776
    %6574 = vmatprep.subr.bf16.mxu0 0
    %6575 = vmatpush2.bf16.msra.mxu0 %v4775
    %6576 = vmatprep.subr.bf16.mxu0 0
    %6577 = vmatpush2.bf16.msra.mxu0 %v4774
    %6578 = vmatprep.subr.bf16.mxu0 0
    %6579 = vmatpush2.bf16.msra.mxu0 %v4773
    %6580 = vmatprep.subr.bf16.mxu0 0
    %6581 = vmatpush2.bf16.msra.mxu0 %v4772
    %6582 = vmatprep.subr.bf16.mxu0 0
    %6583 = vmatpush2.bf16.msra.mxu0 %v4771
    %6584 = vmatprep.subr.bf16.mxu0 0
    %6585 = vmatpush2.bf16.msra.mxu0 %v4770
    %6586 = vmatprep.mubr.bf16.mxu0 %v529
    %6587 = vmatmul.mubr.bf16.gmra.mxu0 %v528
    %v6588 = vpop.f32.mrf.mxu0
    %v6589 = vadd.f32 %v6549, %v6588
    %v6590 = vpop.f32.mrf.mxu0
    %v6591 = vpop.f32.mrf.mxu0
    %v6592 = vpop.f32.mrf.mxu0
    %6593 = vdwg.mxu0
    %6594 = vmatprep.subr.bf16.mxu0 0
    %6595 = vmatpush1.bf16.msra.mxu0 %v4785
    %6596 = vmatprep.subr.bf16.mxu0 0
    %6597 = vmatpush1.bf16.msra.mxu0 %v4784
    %6598 = vmatprep.subr.bf16.mxu0 0
    %6599 = vmatpush1.bf16.msra.mxu0 %v4783
    %6600 = vmatprep.subr.bf16.mxu0 0
    %6601 = vmatpush1.bf16.msra.mxu0 %v4782
    %6602 = vmatprep.subr.bf16.mxu0 0
    %6603 = vmatpush1.bf16.msra.mxu0 %v4781
    %6604 = vmatprep.subr.bf16.mxu0 0
    %6605 = vmatpush1.bf16.msra.mxu0 %v4780
    %6606 = vmatprep.subr.bf16.mxu0 0
    %6607 = vmatpush1.bf16.msra.mxu0 %v4779
    %6608 = vmatprep.subr.bf16.mxu0 0
    %6609 = vmatpush1.bf16.msra.mxu0 %v4778
    %6610 = vmatprep.subr.bf16.mxu0 0
    %6611 = vmatpush2.bf16.msra.mxu0 %v4793
    %6612 = vmatprep.subr.bf16.mxu0 0
    %6613 = vmatpush2.bf16.msra.mxu0 %v4792
    %6614 = vmatprep.subr.bf16.mxu0 0
    %6615 = vmatpush2.bf16.msra.mxu0 %v4791
    %6616 = vmatprep.subr.bf16.mxu0 0
    %6617 = vmatpush2.bf16.msra.mxu0 %v4790
    %6618 = vmatprep.subr.bf16.mxu0 0
    %6619 = vmatpush2.bf16.msra.mxu0 %v4789
    %6620 = vmatprep.subr.bf16.mxu0 0
    %6621 = vmatpush2.bf16.msra.mxu0 %v4788
    %6622 = vmatprep.subr.bf16.mxu0 0
    %6623 = vmatpush2.bf16.msra.mxu0 %v4787
    %6624 = vmatprep.subr.bf16.mxu0 0
    %6625 = vmatpush2.bf16.msra.mxu0 %v4786
    %6626 = vmatprep.mubr.bf16.mxu0 %v531
    %6627 = vmatmul.mubr.bf16.gmra.mxu0 %v530
    %v6628 = vpop.f32.mrf.mxu0
    %v6629 = vadd.f32 %v6589, %v6628
    %v6630 = vpop.f32.mrf.mxu0
    %v6631 = vpop.f32.mrf.mxu0
    %v6632 = vpop.f32.mrf.mxu0
    %6633 = vdwg.mxu0
    %6634 = vmatprep.subr.bf16.mxu0 0
    %6635 = vmatpush1.bf16.msra.mxu0 %v4801
    %6636 = vmatprep.subr.bf16.mxu0 0
    %6637 = vmatpush1.bf16.msra.mxu0 %v4800
    %6638 = vmatprep.subr.bf16.mxu0 0
    %6639 = vmatpush1.bf16.msra.mxu0 %v4799
    %6640 = vmatprep.subr.bf16.mxu0 0
    %6641 = vmatpush1.bf16.msra.mxu0 %v4798
    %6642 = vmatprep.subr.bf16.mxu0 0
    %6643 = vmatpush1.bf16.msra.mxu0 %v4797
    %6644 = vmatprep.subr.bf16.mxu0 0
    %6645 = vmatpush1.bf16.msra.mxu0 %v4796
    %6646 = vmatprep.subr.bf16.mxu0 0
    %6647 = vmatpush1.bf16.msra.mxu0 %v4795
    %6648 = vmatprep.subr.bf16.mxu0 0
    %6649 = vmatpush1.bf16.msra.mxu0 %v4794
    %6650 = vmatprep.subr.bf16.mxu0 0
    %6651 = vmatpush2.bf16.msra.mxu0 %v4809
    %6652 = vmatprep.subr.bf16.mxu0 0
    %6653 = vmatpush2.bf16.msra.mxu0 %v4808
    %6654 = vmatprep.subr.bf16.mxu0 0
    %6655 = vmatpush2.bf16.msra.mxu0 %v4807
    %6656 = vmatprep.subr.bf16.mxu0 0
    %6657 = vmatpush2.bf16.msra.mxu0 %v4806
    %6658 = vmatprep.subr.bf16.mxu0 0
    %6659 = vmatpush2.bf16.msra.mxu0 %v4805
    %6660 = vmatprep.subr.bf16.mxu0 0
    %6661 = vmatpush2.bf16.msra.mxu0 %v4804
    %6662 = vmatprep.subr.bf16.mxu0 0
    %6663 = vmatpush2.bf16.msra.mxu0 %v4803
    %6664 = vmatprep.subr.bf16.mxu0 0
    %6665 = vmatpush2.bf16.msra.mxu0 %v4802
    %6666 = vmatprep.mubr.bf16.mxu0 %v533
    %6667 = vmatmul.mubr.bf16.gmra.mxu0 %v532
    %v6668 = vpop.f32.mrf.mxu0
    %v6669 = vadd.f32 %v6629, %v6668
    %v6670 = vpop.f32.mrf.mxu0
    %v6671 = vpop.f32.mrf.mxu0
    %v6672 = vpop.f32.mrf.mxu0
    %6673 = vdwg.mxu0
    %6674 = vmatprep.subr.bf16.mxu0 0
    %6675 = vmatpush1.bf16.msra.mxu0 %v4817
    %6676 = vmatprep.subr.bf16.mxu0 0
    %6677 = vmatpush1.bf16.msra.mxu0 %v4816
    %6678 = vmatprep.subr.bf16.mxu0 0
    %6679 = vmatpush1.bf16.msra.mxu0 %v4815
    %6680 = vmatprep.subr.bf16.mxu0 0
    %6681 = vmatpush1.bf16.msra.mxu0 %v4814
    %6682 = vmatprep.subr.bf16.mxu0 0
    %6683 = vmatpush1.bf16.msra.mxu0 %v4813
    %6684 = vmatprep.subr.bf16.mxu0 0
    %6685 = vmatpush1.bf16.msra.mxu0 %v4812
    %6686 = vmatprep.subr.bf16.mxu0 0
    %6687 = vmatpush1.bf16.msra.mxu0 %v4811
    %6688 = vmatprep.subr.bf16.mxu0 0
    %6689 = vmatpush1.bf16.msra.mxu0 %v4810
    %6690 = vmatprep.subr.bf16.mxu0 0
    %6691 = vmatpush2.bf16.msra.mxu0 %v4825
    %6692 = vmatprep.subr.bf16.mxu0 0
    %6693 = vmatpush2.bf16.msra.mxu0 %v4824
    %6694 = vmatprep.subr.bf16.mxu0 0
    %6695 = vmatpush2.bf16.msra.mxu0 %v4823
    %6696 = vmatprep.subr.bf16.mxu0 0
    %6697 = vmatpush2.bf16.msra.mxu0 %v4822
    %6698 = vmatprep.subr.bf16.mxu0 0
    %6699 = vmatpush2.bf16.msra.mxu0 %v4821
    %6700 = vmatprep.subr.bf16.mxu0 0
    %6701 = vmatpush2.bf16.msra.mxu0 %v4820
    %6702 = vmatprep.subr.bf16.mxu0 0
    %6703 = vmatpush2.bf16.msra.mxu0 %v4819
    %6704 = vmatprep.subr.bf16.mxu0 0
    %6705 = vmatpush2.bf16.msra.mxu0 %v4818
    %6706 = vmatprep.mubr.bf16.mxu0 %v535
    %6707 = vmatmul.mubr.bf16.gmra.mxu0 %v534
    %v6708 = vpop.f32.mrf.mxu0
    %v6709 = vadd.f32 %v6669, %v6708
    %v6710 = vpop.f32.mrf.mxu0
    %v6711 = vpop.f32.mrf.mxu0
    %v6712 = vpop.f32.mrf.mxu0
    %6713 = vdwg.mxu0
    %6714 = vmatprep.subr.bf16.mxu0 0
    %6715 = vmatpush1.bf16.msra.mxu0 %v4833
    %6716 = vmatprep.subr.bf16.mxu0 0
    %6717 = vmatpush1.bf16.msra.mxu0 %v4832
    %6718 = vmatprep.subr.bf16.mxu0 0
    %6719 = vmatpush1.bf16.msra.mxu0 %v4831
    %6720 = vmatprep.subr.bf16.mxu0 0
    %6721 = vmatpush1.bf16.msra.mxu0 %v4830
    %6722 = vmatprep.subr.bf16.mxu0 0
    %6723 = vmatpush1.bf16.msra.mxu0 %v4829
    %6724 = vmatprep.subr.bf16.mxu0 0
    %6725 = vmatpush1.bf16.msra.mxu0 %v4828
    %6726 = vmatprep.subr.bf16.mxu0 0
    %6727 = vmatpush1.bf16.msra.mxu0 %v4827
    %6728 = vmatprep.subr.bf16.mxu0 0
    %6729 = vmatpush1.bf16.msra.mxu0 %v4826
    %6730 = vmatprep.subr.bf16.mxu0 0
    %6731 = vmatpush2.bf16.msra.mxu0 %v4841
    %6732 = vmatprep.subr.bf16.mxu0 0
    %6733 = vmatpush2.bf16.msra.mxu0 %v4840
    %6734 = vmatprep.subr.bf16.mxu0 0
    %6735 = vmatpush2.bf16.msra.mxu0 %v4839
    %6736 = vmatprep.subr.bf16.mxu0 0
    %6737 = vmatpush2.bf16.msra.mxu0 %v4838
    %6738 = vmatprep.subr.bf16.mxu0 0
    %6739 = vmatpush2.bf16.msra.mxu0 %v4837
    %6740 = vmatprep.subr.bf16.mxu0 0
    %6741 = vmatpush2.bf16.msra.mxu0 %v4836
    %6742 = vmatprep.subr.bf16.mxu0 0
    %6743 = vmatpush2.bf16.msra.mxu0 %v4835
    %6744 = vmatprep.subr.bf16.mxu0 0
    %6745 = vmatpush2.bf16.msra.mxu0 %v4834
    %6746 = vmatprep.mubr.bf16.mxu0 %v537
    %6747 = vmatmul.mubr.bf16.gmra.mxu0 %v536
    %v6748 = vpop.f32.mrf.mxu0
    %v6749 = vadd.f32 %v6709, %v6748
    %v6750 = vpop.f32.mrf.mxu0
    %v6751 = vpop.f32.mrf.mxu0
    %v6752 = vpop.f32.mrf.mxu0
    %6753 = vdwg.mxu0
    %6754 = vmatprep.subr.bf16.mxu0 0
    %6755 = vmatpush1.bf16.msra.mxu0 %v4849
    %6756 = vmatprep.subr.bf16.mxu0 0
    %6757 = vmatpush1.bf16.msra.mxu0 %v4848
    %6758 = vmatprep.subr.bf16.mxu0 0
    %6759 = vmatpush1.bf16.msra.mxu0 %v4847
    %6760 = vmatprep.subr.bf16.mxu0 0
    %6761 = vmatpush1.bf16.msra.mxu0 %v4846
    %6762 = vmatprep.subr.bf16.mxu0 0
    %6763 = vmatpush1.bf16.msra.mxu0 %v4845
    %6764 = vmatprep.subr.bf16.mxu0 0
    %6765 = vmatpush1.bf16.msra.mxu0 %v4844
    %6766 = vmatprep.subr.bf16.mxu0 0
    %6767 = vmatpush1.bf16.msra.mxu0 %v4843
    %6768 = vmatprep.subr.bf16.mxu0 0
    %6769 = vmatpush1.bf16.msra.mxu0 %v4842
    %6770 = vmatprep.subr.bf16.mxu0 0
    %6771 = vmatpush2.bf16.msra.mxu0 %v4857
    %6772 = vmatprep.subr.bf16.mxu0 0
    %6773 = vmatpush2.bf16.msra.mxu0 %v4856
    %6774 = vmatprep.subr.bf16.mxu0 0
    %6775 = vmatpush2.bf16.msra.mxu0 %v4855
    %6776 = vmatprep.subr.bf16.mxu0 0
    %6777 = vmatpush2.bf16.msra.mxu0 %v4854
    %6778 = vmatprep.subr.bf16.mxu0 0
    %6779 = vmatpush2.bf16.msra.mxu0 %v4853
    %6780 = vmatprep.subr.bf16.mxu0 0
    %6781 = vmatpush2.bf16.msra.mxu0 %v4852
    %6782 = vmatprep.subr.bf16.mxu0 0
    %6783 = vmatpush2.bf16.msra.mxu0 %v4851
    %6784 = vmatprep.subr.bf16.mxu0 0
    %6785 = vmatpush2.bf16.msra.mxu0 %v4850
    %6786 = vmatprep.mubr.bf16.mxu0 %v539
    %6787 = vmatmul.mubr.bf16.gmra.mxu0 %v538
    %v6788 = vpop.f32.mrf.mxu0
    %v6789 = vadd.f32 %v6749, %v6788
    %v6790 = vpop.f32.mrf.mxu0
    %v6791 = vpop.f32.mrf.mxu0
    %v6792 = vpop.f32.mrf.mxu0
    %6793 = vdwg.mxu0
    %6794 = vmatprep.subr.bf16.mxu0 0
    %6795 = vmatpush1.bf16.msra.mxu0 %v4865
    %6796 = vmatprep.subr.bf16.mxu0 0
    %6797 = vmatpush1.bf16.msra.mxu0 %v4864
    %6798 = vmatprep.subr.bf16.mxu0 0
    %6799 = vmatpush1.bf16.msra.mxu0 %v4863
    %6800 = vmatprep.subr.bf16.mxu0 0
    %6801 = vmatpush1.bf16.msra.mxu0 %v4862
    %6802 = vmatprep.subr.bf16.mxu0 0
    %6803 = vmatpush1.bf16.msra.mxu0 %v4861
    %6804 = vmatprep.subr.bf16.mxu0 0
    %6805 = vmatpush1.bf16.msra.mxu0 %v4860
    %6806 = vmatprep.subr.bf16.mxu0 0
    %6807 = vmatpush1.bf16.msra.mxu0 %v4859
    %6808 = vmatprep.subr.bf16.mxu0 0
    %6809 = vmatpush1.bf16.msra.mxu0 %v4858
    %6810 = vmatprep.subr.bf16.mxu0 0
    %6811 = vmatpush2.bf16.msra.mxu0 %v4873
    %6812 = vmatprep.subr.bf16.mxu0 0
    %6813 = vmatpush2.bf16.msra.mxu0 %v4872
    %6814 = vmatprep.subr.bf16.mxu0 0
    %6815 = vmatpush2.bf16.msra.mxu0 %v4871
    %6816 = vmatprep.subr.bf16.mxu0 0
    %6817 = vmatpush2.bf16.msra.mxu0 %v4870
    %6818 = vmatprep.subr.bf16.mxu0 0
    %6819 = vmatpush2.bf16.msra.mxu0 %v4869
    %6820 = vmatprep.subr.bf16.mxu0 0
    %6821 = vmatpush2.bf16.msra.mxu0 %v4868
    %6822 = vmatprep.subr.bf16.mxu0 0
    %6823 = vmatpush2.bf16.msra.mxu0 %v4867
    %6824 = vmatprep.subr.bf16.mxu0 0
    %6825 = vmatpush2.bf16.msra.mxu0 %v4866
    %6826 = vmatprep.mubr.bf16.mxu0 %v541
    %6827 = vmatmul.mubr.bf16.gmra.mxu0 %v540
    %v6828 = vpop.f32.mrf.mxu0
    %v6829 = vadd.f32 %v6789, %v6828
    %v6830 = vpop.f32.mrf.mxu0
    %v6831 = vpop.f32.mrf.mxu0
    %v6832 = vpop.f32.mrf.mxu0
    %6833 = vdwg.mxu0
    %6834 = vmatprep.subr.bf16.mxu0 0
    %6835 = vmatpush1.bf16.msra.mxu0 %v4881
    %6836 = vmatprep.subr.bf16.mxu0 0
    %6837 = vmatpush1.bf16.msra.mxu0 %v4880
    %6838 = vmatprep.subr.bf16.mxu0 0
    %6839 = vmatpush1.bf16.msra.mxu0 %v4879
    %6840 = vmatprep.subr.bf16.mxu0 0
    %6841 = vmatpush1.bf16.msra.mxu0 %v4878
    %6842 = vmatprep.subr.bf16.mxu0 0
    %6843 = vmatpush1.bf16.msra.mxu0 %v4877
    %6844 = vmatprep.subr.bf16.mxu0 0
    %6845 = vmatpush1.bf16.msra.mxu0 %v4876
    %6846 = vmatprep.subr.bf16.mxu0 0
    %6847 = vmatpush1.bf16.msra.mxu0 %v4875
    %6848 = vmatprep.subr.bf16.mxu0 0
    %6849 = vmatpush1.bf16.msra.mxu0 %v4874
    %6850 = vmatprep.subr.bf16.mxu0 0
    %6851 = vmatpush2.bf16.msra.mxu0 %v4889
    %6852 = vmatprep.subr.bf16.mxu0 0
    %6853 = vmatpush2.bf16.msra.mxu0 %v4888
    %6854 = vmatprep.subr.bf16.mxu0 0
    %6855 = vmatpush2.bf16.msra.mxu0 %v4887
    %6856 = vmatprep.subr.bf16.mxu0 0
    %6857 = vmatpush2.bf16.msra.mxu0 %v4886
    %6858 = vmatprep.subr.bf16.mxu0 0
    %6859 = vmatpush2.bf16.msra.mxu0 %v4885
    %6860 = vmatprep.subr.bf16.mxu0 0
    %6861 = vmatpush2.bf16.msra.mxu0 %v4884
    %6862 = vmatprep.subr.bf16.mxu0 0
    %6863 = vmatpush2.bf16.msra.mxu0 %v4883
    %6864 = vmatprep.subr.bf16.mxu0 0
    %6865 = vmatpush2.bf16.msra.mxu0 %v4882
    %6866 = vmatprep.mubr.bf16.mxu0 %v543
    %6867 = vmatmul.mubr.bf16.gmra.mxu0 %v542
    %v6868 = vpop.f32.mrf.mxu0
    %v6869 = vadd.f32 %v6829, %v6868
    %v6870 = vpop.f32.mrf.mxu0
    %v6871 = vpop.f32.mrf.mxu0
    %v6872 = vpop.f32.mrf.mxu0
    %6873 = vdwg.mxu0
    %6874 = vmatprep.subr.bf16.mxu0 0
    %6875 = vmatpush1.bf16.msra.mxu0 %v4897
    %6876 = vmatprep.subr.bf16.mxu0 0
    %6877 = vmatpush1.bf16.msra.mxu0 %v4896
    %6878 = vmatprep.subr.bf16.mxu0 0
    %6879 = vmatpush1.bf16.msra.mxu0 %v4895
    %6880 = vmatprep.subr.bf16.mxu0 0
    %6881 = vmatpush1.bf16.msra.mxu0 %v4894
    %6882 = vmatprep.subr.bf16.mxu0 0
    %6883 = vmatpush1.bf16.msra.mxu0 %v4893
    %6884 = vmatprep.subr.bf16.mxu0 0
    %6885 = vmatpush1.bf16.msra.mxu0 %v4892
    %6886 = vmatprep.subr.bf16.mxu0 0
    %6887 = vmatpush1.bf16.msra.mxu0 %v4891
    %6888 = vmatprep.subr.bf16.mxu0 0
    %6889 = vmatpush1.bf16.msra.mxu0 %v4890
    %6890 = vmatprep.subr.bf16.mxu0 0
    %6891 = vmatpush2.bf16.msra.mxu0 %v4905
    %6892 = vmatprep.subr.bf16.mxu0 0
    %6893 = vmatpush2.bf16.msra.mxu0 %v4904
    %6894 = vmatprep.subr.bf16.mxu0 0
    %6895 = vmatpush2.bf16.msra.mxu0 %v4903
    %6896 = vmatprep.subr.bf16.mxu0 0
    %6897 = vmatpush2.bf16.msra.mxu0 %v4902
    %6898 = vmatprep.subr.bf16.mxu0 0
    %6899 = vmatpush2.bf16.msra.mxu0 %v4901
    %6900 = vmatprep.subr.bf16.mxu0 0
    %6901 = vmatpush2.bf16.msra.mxu0 %v4900
    %6902 = vmatprep.subr.bf16.mxu0 0
    %6903 = vmatpush2.bf16.msra.mxu0 %v4899
    %6904 = vmatprep.subr.bf16.mxu0 0
    %6905 = vmatpush2.bf16.msra.mxu0 %v4898
    %6906 = vmatprep.mubr.bf16.mxu0 %v545
    %6907 = vmatmul.mubr.bf16.gmra.mxu0 %v544
    %v6908 = vpop.f32.mrf.mxu0
    %v6909 = vadd.f32 %v6869, %v6908
    %v6910 = vpop.f32.mrf.mxu0
    %v6911 = vpop.f32.mrf.mxu0
    %v6912 = vpop.f32.mrf.mxu0
    %6913 = vdwg.mxu0
    %6914 = vmatprep.subr.bf16.mxu0 0
    %6915 = vmatpush1.bf16.msra.mxu0 %v4913
    %6916 = vmatprep.subr.bf16.mxu0 0
    %6917 = vmatpush1.bf16.msra.mxu0 %v4912
    %6918 = vmatprep.subr.bf16.mxu0 0
    %6919 = vmatpush1.bf16.msra.mxu0 %v4911
    %6920 = vmatprep.subr.bf16.mxu0 0
    %6921 = vmatpush1.bf16.msra.mxu0 %v4910
    %6922 = vmatprep.subr.bf16.mxu0 0
    %6923 = vmatpush1.bf16.msra.mxu0 %v4909
    %6924 = vmatprep.subr.bf16.mxu0 0
    %6925 = vmatpush1.bf16.msra.mxu0 %v4908
    %6926 = vmatprep.subr.bf16.mxu0 0
    %6927 = vmatpush1.bf16.msra.mxu0 %v4907
    %6928 = vmatprep.subr.bf16.mxu0 0
    %6929 = vmatpush1.bf16.msra.mxu0 %v4906
    %6930 = vmatprep.subr.bf16.mxu0 0
    %6931 = vmatpush2.bf16.msra.mxu0 %v4921
    %6932 = vmatprep.subr.bf16.mxu0 0
    %6933 = vmatpush2.bf16.msra.mxu0 %v4920
    %6934 = vmatprep.subr.bf16.mxu0 0
    %6935 = vmatpush2.bf16.msra.mxu0 %v4919
    %6936 = vmatprep.subr.bf16.mxu0 0
    %6937 = vmatpush2.bf16.msra.mxu0 %v4918
    %6938 = vmatprep.subr.bf16.mxu0 0
    %6939 = vmatpush2.bf16.msra.mxu0 %v4917
    %6940 = vmatprep.subr.bf16.mxu0 0
    %6941 = vmatpush2.bf16.msra.mxu0 %v4916
    %6942 = vmatprep.subr.bf16.mxu0 0
    %6943 = vmatpush2.bf16.msra.mxu0 %v4915
    %6944 = vmatprep.subr.bf16.mxu0 0
    %6945 = vmatpush2.bf16.msra.mxu0 %v4914
    %6946 = vmatprep.mubr.bf16.mxu0 %v547
    %6947 = vmatmul.mubr.bf16.gmra.mxu0 %v546
    %v6948 = vpop.f32.mrf.mxu0
    %v6949 = vadd.f32 %v6909, %v6948
    %v6950 = vpop.f32.mrf.mxu0
    %v6951 = vpop.f32.mrf.mxu0
    %v6952 = vpop.f32.mrf.mxu0
    %6953 = vdwg.mxu0
    %6954 = vmatprep.subr.bf16.mxu0 0
    %6955 = vmatpush1.bf16.msra.mxu0 %v4929
    %6956 = vmatprep.subr.bf16.mxu0 0
    %6957 = vmatpush1.bf16.msra.mxu0 %v4928
    %6958 = vmatprep.subr.bf16.mxu0 0
    %6959 = vmatpush1.bf16.msra.mxu0 %v4927
    %6960 = vmatprep.subr.bf16.mxu0 0
    %6961 = vmatpush1.bf16.msra.mxu0 %v4926
    %6962 = vmatprep.subr.bf16.mxu0 0
    %6963 = vmatpush1.bf16.msra.mxu0 %v4925
    %6964 = vmatprep.subr.bf16.mxu0 0
    %6965 = vmatpush1.bf16.msra.mxu0 %v4924
    %6966 = vmatprep.subr.bf16.mxu0 0
    %6967 = vmatpush1.bf16.msra.mxu0 %v4923
    %6968 = vmatprep.subr.bf16.mxu0 0
    %6969 = vmatpush1.bf16.msra.mxu0 %v4922
    %6970 = vmatprep.subr.bf16.mxu0 0
    %6971 = vmatpush2.bf16.msra.mxu0 %v4937
    %6972 = vmatprep.subr.bf16.mxu0 0
    %6973 = vmatpush2.bf16.msra.mxu0 %v4936
    %6974 = vmatprep.subr.bf16.mxu0 0
    %6975 = vmatpush2.bf16.msra.mxu0 %v4935
    %6976 = vmatprep.subr.bf16.mxu0 0
    %6977 = vmatpush2.bf16.msra.mxu0 %v4934
    %6978 = vmatprep.subr.bf16.mxu0 0
    %6979 = vmatpush2.bf16.msra.mxu0 %v4933
    %6980 = vmatprep.subr.bf16.mxu0 0
    %6981 = vmatpush2.bf16.msra.mxu0 %v4932
    %6982 = vmatprep.subr.bf16.mxu0 0
    %6983 = vmatpush2.bf16.msra.mxu0 %v4931
    %6984 = vmatprep.subr.bf16.mxu0 0
    %6985 = vmatpush2.bf16.msra.mxu0 %v4930
    %6986 = vmatprep.mubr.bf16.mxu0 %v549
    %6987 = vmatmul.mubr.bf16.gmra.mxu0 %v548
    %v6988 = vpop.f32.mrf.mxu0
    %v6989 = vadd.f32 %v6949, %v6988
    %v6990 = vpop.f32.mrf.mxu0
    %v6991 = vpop.f32.mrf.mxu0
    %v6992 = vpop.f32.mrf.mxu0
    %6993 = vdwg.mxu0
    %6994 = vmatprep.subr.bf16.mxu0 0
    %6995 = vmatpush1.bf16.msra.mxu0 %v4945
    %6996 = vmatprep.subr.bf16.mxu0 0
    %6997 = vmatpush1.bf16.msra.mxu0 %v4944
    %6998 = vmatprep.subr.bf16.mxu0 0
    %6999 = vmatpush1.bf16.msra.mxu0 %v4943
    %7000 = vmatprep.subr.bf16.mxu0 0
    %7001 = vmatpush1.bf16.msra.mxu0 %v4942
    %7002 = vmatprep.subr.bf16.mxu0 0
    %7003 = vmatpush1.bf16.msra.mxu0 %v4941
    %7004 = vmatprep.subr.bf16.mxu0 0
    %7005 = vmatpush1.bf16.msra.mxu0 %v4940
    %7006 = vmatprep.subr.bf16.mxu0 0
    %7007 = vmatpush1.bf16.msra.mxu0 %v4939
    %7008 = vmatprep.subr.bf16.mxu0 0
    %7009 = vmatpush1.bf16.msra.mxu0 %v4938
    %7010 = vmatprep.subr.bf16.mxu0 0
    %7011 = vmatpush2.bf16.msra.mxu0 %v4953
    %7012 = vmatprep.subr.bf16.mxu0 0
    %7013 = vmatpush2.bf16.msra.mxu0 %v4952
    %7014 = vmatprep.subr.bf16.mxu0 0
    %7015 = vmatpush2.bf16.msra.mxu0 %v4951
    %7016 = vmatprep.subr.bf16.mxu0 0
    %7017 = vmatpush2.bf16.msra.mxu0 %v4950
    %7018 = vmatprep.subr.bf16.mxu0 0
    %7019 = vmatpush2.bf16.msra.mxu0 %v4949
    %7020 = vmatprep.subr.bf16.mxu0 0
    %7021 = vmatpush2.bf16.msra.mxu0 %v4948
    %7022 = vmatprep.subr.bf16.mxu0 0
    %7023 = vmatpush2.bf16.msra.mxu0 %v4947
    %7024 = vmatprep.subr.bf16.mxu0 0
    %7025 = vmatpush2.bf16.msra.mxu0 %v4946
    %7026 = vmatprep.mubr.bf16.mxu0 %v551
    %7027 = vmatmul.mubr.bf16.gmra.mxu0 %v550
    %v7028 = vpop.f32.mrf.mxu0
    %v7029 = vadd.f32 %v6989, %v7028
    %v7030 = vpop.f32.mrf.mxu0
    %v7031 = vpop.f32.mrf.mxu0
    %v7032 = vpop.f32.mrf.mxu0
    %7033 = vdwg.mxu0
    %7034 = vmatprep.subr.bf16.mxu0 0
    %7035 = vmatpush1.bf16.msra.mxu0 %v4961
    %7036 = vmatprep.subr.bf16.mxu0 0
    %7037 = vmatpush1.bf16.msra.mxu0 %v4960
    %7038 = vmatprep.subr.bf16.mxu0 0
    %7039 = vmatpush1.bf16.msra.mxu0 %v4959
    %7040 = vmatprep.subr.bf16.mxu0 0
    %7041 = vmatpush1.bf16.msra.mxu0 %v4958
    %7042 = vmatprep.subr.bf16.mxu0 0
    %7043 = vmatpush1.bf16.msra.mxu0 %v4957
    %7044 = vmatprep.subr.bf16.mxu0 0
    %7045 = vmatpush1.bf16.msra.mxu0 %v4956
    %7046 = vmatprep.subr.bf16.mxu0 0
    %7047 = vmatpush1.bf16.msra.mxu0 %v4955
    %7048 = vmatprep.subr.bf16.mxu0 0
    %7049 = vmatpush1.bf16.msra.mxu0 %v4954
    %7050 = vmatprep.subr.bf16.mxu0 0
    %7051 = vmatpush2.bf16.msra.mxu0 %v4969
    %7052 = vmatprep.subr.bf16.mxu0 0
    %7053 = vmatpush2.bf16.msra.mxu0 %v4968
    %7054 = vmatprep.subr.bf16.mxu0 0
    %7055 = vmatpush2.bf16.msra.mxu0 %v4967
    %7056 = vmatprep.subr.bf16.mxu0 0
    %7057 = vmatpush2.bf16.msra.mxu0 %v4966
    %7058 = vmatprep.subr.bf16.mxu0 0
    %7059 = vmatpush2.bf16.msra.mxu0 %v4965
    %7060 = vmatprep.subr.bf16.mxu0 0
    %7061 = vmatpush2.bf16.msra.mxu0 %v4964
    %7062 = vmatprep.subr.bf16.mxu0 0
    %7063 = vmatpush2.bf16.msra.mxu0 %v4963
    %7064 = vmatprep.subr.bf16.mxu0 0
    %7065 = vmatpush2.bf16.msra.mxu0 %v4962
    %7066 = vmatprep.mubr.bf16.mxu0 %v553
    %7067 = vmatmul.mubr.bf16.gmra.mxu0 %v552
    %v7068 = vpop.f32.mrf.mxu0
    %v7069 = vadd.f32 %v7029, %v7068
    %v7070 = vpop.f32.mrf.mxu0
    %v7071 = vpop.f32.mrf.mxu0
    %v7072 = vpop.f32.mrf.mxu0
    %7073 = vdwg.mxu0
    %7074 = vmatprep.subr.bf16.mxu0 0
    %7075 = vmatpush1.bf16.msra.mxu0 %v4977
    %7076 = vmatprep.subr.bf16.mxu0 0
    %7077 = vmatpush1.bf16.msra.mxu0 %v4976
    %7078 = vmatprep.subr.bf16.mxu0 0
    %7079 = vmatpush1.bf16.msra.mxu0 %v4975
    %7080 = vmatprep.subr.bf16.mxu0 0
    %7081 = vmatpush1.bf16.msra.mxu0 %v4974
    %7082 = vmatprep.subr.bf16.mxu0 0
    %7083 = vmatpush1.bf16.msra.mxu0 %v4973
    %7084 = vmatprep.subr.bf16.mxu0 0
    %7085 = vmatpush1.bf16.msra.mxu0 %v4972
    %7086 = vmatprep.subr.bf16.mxu0 0
    %7087 = vmatpush1.bf16.msra.mxu0 %v4971
    %7088 = vmatprep.subr.bf16.mxu0 0
    %7089 = vmatpush1.bf16.msra.mxu0 %v4970
    %7090 = vmatprep.subr.bf16.mxu0 0
    %7091 = vmatpush2.bf16.msra.mxu0 %v4985
    %7092 = vmatprep.subr.bf16.mxu0 0
    %7093 = vmatpush2.bf16.msra.mxu0 %v4984
    %7094 = vmatprep.subr.bf16.mxu0 0
    %7095 = vmatpush2.bf16.msra.mxu0 %v4983
    %7096 = vmatprep.subr.bf16.mxu0 0
    %7097 = vmatpush2.bf16.msra.mxu0 %v4982
    %7098 = vmatprep.subr.bf16.mxu0 0
    %7099 = vmatpush2.bf16.msra.mxu0 %v4981
    %7100 = vmatprep.subr.bf16.mxu0 0
    %7101 = vmatpush2.bf16.msra.mxu0 %v4980
    %7102 = vmatprep.subr.bf16.mxu0 0
    %7103 = vmatpush2.bf16.msra.mxu0 %v4979
    %7104 = vmatprep.subr.bf16.mxu0 0
    %7105 = vmatpush2.bf16.msra.mxu0 %v4978
    %7106 = vmatprep.mubr.bf16.mxu0 %v555
    %7107 = vmatmul.mubr.bf16.gmra.mxu0 %v554
    %v7108 = vpop.f32.mrf.mxu0
    %v7109 = vadd.f32 %v7069, %v7108
    %v7110 = vpop.f32.mrf.mxu0
    %v7111 = vpop.f32.mrf.mxu0
    %v7112 = vpop.f32.mrf.mxu0
    %7113 = vdwg.mxu0
    %7114 = vmatprep.subr.bf16.mxu0 0
    %7115 = vmatpush1.bf16.msra.mxu0 %v4993
    %7116 = vmatprep.subr.bf16.mxu0 0
    %7117 = vmatpush1.bf16.msra.mxu0 %v4992
    %7118 = vmatprep.subr.bf16.mxu0 0
    %7119 = vmatpush1.bf16.msra.mxu0 %v4991
    %7120 = vmatprep.subr.bf16.mxu0 0
    %7121 = vmatpush1.bf16.msra.mxu0 %v4990
    %7122 = vmatprep.subr.bf16.mxu0 0
    %7123 = vmatpush1.bf16.msra.mxu0 %v4989
    %7124 = vmatprep.subr.bf16.mxu0 0
    %7125 = vmatpush1.bf16.msra.mxu0 %v4988
    %7126 = vmatprep.subr.bf16.mxu0 0
    %7127 = vmatpush1.bf16.msra.mxu0 %v4987
    %7128 = vmatprep.subr.bf16.mxu0 0
    %7129 = vmatpush1.bf16.msra.mxu0 %v4986
    %7130 = vmatprep.subr.bf16.mxu0 0
    %7131 = vmatpush2.bf16.msra.mxu0 %v5001
    %7132 = vmatprep.subr.bf16.mxu0 0
    %7133 = vmatpush2.bf16.msra.mxu0 %v5000
    %7134 = vmatprep.subr.bf16.mxu0 0
    %7135 = vmatpush2.bf16.msra.mxu0 %v4999
    %7136 = vmatprep.subr.bf16.mxu0 0
    %7137 = vmatpush2.bf16.msra.mxu0 %v4998
    %7138 = vmatprep.subr.bf16.mxu0 0
    %7139 = vmatpush2.bf16.msra.mxu0 %v4997
    %7140 = vmatprep.subr.bf16.mxu0 0
    %7141 = vmatpush2.bf16.msra.mxu0 %v4996
    %7142 = vmatprep.subr.bf16.mxu0 0
    %7143 = vmatpush2.bf16.msra.mxu0 %v4995
    %7144 = vmatprep.subr.bf16.mxu0 0
    %7145 = vmatpush2.bf16.msra.mxu0 %v4994
    %7146 = vmatprep.mubr.bf16.mxu0 %v557
    %7147 = vmatmul.mubr.bf16.gmra.mxu0 %v556
    %v7148 = vpop.f32.mrf.mxu0
    %v7149 = vadd.f32 %v7109, %v7148
    %v7150 = vpop.f32.mrf.mxu0
    %v7151 = vpop.f32.mrf.mxu0
    %v7152 = vpop.f32.mrf.mxu0
    %7153 = vdwg.mxu0
    %7154 = vmatprep.subr.bf16.mxu0 0
    %7155 = vmatpush1.bf16.msra.mxu0 %v5009
    %7156 = vmatprep.subr.bf16.mxu0 0
    %7157 = vmatpush1.bf16.msra.mxu0 %v5008
    %7158 = vmatprep.subr.bf16.mxu0 0
    %7159 = vmatpush1.bf16.msra.mxu0 %v5007
    %7160 = vmatprep.subr.bf16.mxu0 0
    %7161 = vmatpush1.bf16.msra.mxu0 %v5006
    %7162 = vmatprep.subr.bf16.mxu0 0
    %7163 = vmatpush1.bf16.msra.mxu0 %v5005
    %7164 = vmatprep.subr.bf16.mxu0 0
    %7165 = vmatpush1.bf16.msra.mxu0 %v5004
    %7166 = vmatprep.subr.bf16.mxu0 0
    %7167 = vmatpush1.bf16.msra.mxu0 %v5003
    %7168 = vmatprep.subr.bf16.mxu0 0
    %7169 = vmatpush1.bf16.msra.mxu0 %v5002
    %7170 = vmatprep.subr.bf16.mxu0 0
    %7171 = vmatpush2.bf16.msra.mxu0 %v5017
    %7172 = vmatprep.subr.bf16.mxu0 0
    %7173 = vmatpush2.bf16.msra.mxu0 %v5016
    %7174 = vmatprep.subr.bf16.mxu0 0
    %7175 = vmatpush2.bf16.msra.mxu0 %v5015
    %7176 = vmatprep.subr.bf16.mxu0 0
    %7177 = vmatpush2.bf16.msra.mxu0 %v5014
    %7178 = vmatprep.subr.bf16.mxu0 0
    %7179 = vmatpush2.bf16.msra.mxu0 %v5013
    %7180 = vmatprep.subr.bf16.mxu0 0
    %7181 = vmatpush2.bf16.msra.mxu0 %v5012
    %7182 = vmatprep.subr.bf16.mxu0 0
    %7183 = vmatpush2.bf16.msra.mxu0 %v5011
    %7184 = vmatprep.subr.bf16.mxu0 0
    %7185 = vmatpush2.bf16.msra.mxu0 %v5010
    %7186 = vmatprep.mubr.bf16.mxu0 %v559
    %7187 = vmatmul.mubr.bf16.gmra.mxu0 %v558
    %v7188 = vpop.f32.mrf.mxu0
    %v7189 = vadd.f32 %v7149, %v7188
    %v7190 = vpop.f32.mrf.mxu0
    %v7191 = vpop.f32.mrf.mxu0
    %v7192 = vpop.f32.mrf.mxu0
    %7193 = vdwg.mxu0
    %7194 = vmatprep.subr.bf16.mxu0 0
    %7195 = vmatpush1.bf16.msra.mxu0 %v5025
    %7196 = vmatprep.subr.bf16.mxu0 0
    %7197 = vmatpush1.bf16.msra.mxu0 %v5024
    %7198 = vmatprep.subr.bf16.mxu0 0
    %7199 = vmatpush1.bf16.msra.mxu0 %v5023
    %7200 = vmatprep.subr.bf16.mxu0 0
    %7201 = vmatpush1.bf16.msra.mxu0 %v5022
    %7202 = vmatprep.subr.bf16.mxu0 0
    %7203 = vmatpush1.bf16.msra.mxu0 %v5021
    %7204 = vmatprep.subr.bf16.mxu0 0
    %7205 = vmatpush1.bf16.msra.mxu0 %v5020
    %7206 = vmatprep.subr.bf16.mxu0 0
    %7207 = vmatpush1.bf16.msra.mxu0 %v5019
    %7208 = vmatprep.subr.bf16.mxu0 0
    %7209 = vmatpush1.bf16.msra.mxu0 %v5018
    %7210 = vmatprep.subr.bf16.mxu0 0
    %7211 = vmatpush2.bf16.msra.mxu0 %v5033
    %7212 = vmatprep.subr.bf16.mxu0 0
    %7213 = vmatpush2.bf16.msra.mxu0 %v5032
    %7214 = vmatprep.subr.bf16.mxu0 0
    %7215 = vmatpush2.bf16.msra.mxu0 %v5031
    %7216 = vmatprep.subr.bf16.mxu0 0
    %7217 = vmatpush2.bf16.msra.mxu0 %v5030
    %7218 = vmatprep.subr.bf16.mxu0 0
    %7219 = vmatpush2.bf16.msra.mxu0 %v5029
    %7220 = vmatprep.subr.bf16.mxu0 0
    %7221 = vmatpush2.bf16.msra.mxu0 %v5028
    %7222 = vmatprep.subr.bf16.mxu0 0
    %7223 = vmatpush2.bf16.msra.mxu0 %v5027
    %7224 = vmatprep.subr.bf16.mxu0 0
    %7225 = vmatpush2.bf16.msra.mxu0 %v5026
    %7226 = vmatprep.mubr.bf16.mxu0 %v561
    %7227 = vmatmul.mubr.bf16.gmra.mxu0 %v560
    %v7228 = vpop.f32.mrf.mxu0
    %v7229 = vadd.f32 %v7189, %v7228
    %v7230 = vpop.f32.mrf.mxu0
    %v7231 = vpop.f32.mrf.mxu0
    %v7232 = vpop.f32.mrf.mxu0
    %7233 = vdwg.mxu0
    %7234 = vmatprep.subr.bf16.mxu0 0
    %7235 = vmatpush1.bf16.msra.mxu0 %v5041
    %7236 = vmatprep.subr.bf16.mxu0 0
    %7237 = vmatpush1.bf16.msra.mxu0 %v5040
    %7238 = vmatprep.subr.bf16.mxu0 0
    %7239 = vmatpush1.bf16.msra.mxu0 %v5039
    %7240 = vmatprep.subr.bf16.mxu0 0
    %7241 = vmatpush1.bf16.msra.mxu0 %v5038
    %7242 = vmatprep.subr.bf16.mxu0 0
    %7243 = vmatpush1.bf16.msra.mxu0 %v5037
    %7244 = vmatprep.subr.bf16.mxu0 0
    %7245 = vmatpush1.bf16.msra.mxu0 %v5036
    %7246 = vmatprep.subr.bf16.mxu0 0
    %7247 = vmatpush1.bf16.msra.mxu0 %v5035
    %7248 = vmatprep.subr.bf16.mxu0 0
    %7249 = vmatpush1.bf16.msra.mxu0 %v5034
    %7250 = vmatprep.subr.bf16.mxu0 0
    %7251 = vmatpush2.bf16.msra.mxu0 %v5049
    %7252 = vmatprep.subr.bf16.mxu0 0
    %7253 = vmatpush2.bf16.msra.mxu0 %v5048
    %7254 = vmatprep.subr.bf16.mxu0 0
    %7255 = vmatpush2.bf16.msra.mxu0 %v5047
    %7256 = vmatprep.subr.bf16.mxu0 0
    %7257 = vmatpush2.bf16.msra.mxu0 %v5046
    %7258 = vmatprep.subr.bf16.mxu0 0
    %7259 = vmatpush2.bf16.msra.mxu0 %v5045
    %7260 = vmatprep.subr.bf16.mxu0 0
    %7261 = vmatpush2.bf16.msra.mxu0 %v5044
    %7262 = vmatprep.subr.bf16.mxu0 0
    %7263 = vmatpush2.bf16.msra.mxu0 %v5043
    %7264 = vmatprep.subr.bf16.mxu0 0
    %7265 = vmatpush2.bf16.msra.mxu0 %v5042
    %7266 = vmatprep.mubr.bf16.mxu0 %v563
    %7267 = vmatmul.mubr.bf16.gmra.mxu0 %v562
    %v7268 = vpop.f32.mrf.mxu0
    %v7269 = vadd.f32 %v7229, %v7268
    %v7270 = vpop.f32.mrf.mxu0
    %v7271 = vpop.f32.mrf.mxu0
    %v7272 = vpop.f32.mrf.mxu0
    %7273 = vdwg.mxu0
    %7274 = vmatprep.subr.bf16.mxu0 0
    %7275 = vmatpush1.bf16.msra.mxu0 %v5057
    %7276 = vmatprep.subr.bf16.mxu0 0
    %7277 = vmatpush1.bf16.msra.mxu0 %v5056
    %7278 = vmatprep.subr.bf16.mxu0 0
    %7279 = vmatpush1.bf16.msra.mxu0 %v5055
    %7280 = vmatprep.subr.bf16.mxu0 0
    %7281 = vmatpush1.bf16.msra.mxu0 %v5054
    %7282 = vmatprep.subr.bf16.mxu0 0
    %7283 = vmatpush1.bf16.msra.mxu0 %v5053
    %7284 = vmatprep.subr.bf16.mxu0 0
    %7285 = vmatpush1.bf16.msra.mxu0 %v5052
    %7286 = vmatprep.subr.bf16.mxu0 0
    %7287 = vmatpush1.bf16.msra.mxu0 %v5051
    %7288 = vmatprep.subr.bf16.mxu0 0
    %7289 = vmatpush1.bf16.msra.mxu0 %v5050
    %7290 = vmatprep.subr.bf16.mxu0 0
    %7291 = vmatpush2.bf16.msra.mxu0 %v5065
    %7292 = vmatprep.subr.bf16.mxu0 0
    %7293 = vmatpush2.bf16.msra.mxu0 %v5064
    %7294 = vmatprep.subr.bf16.mxu0 0
    %7295 = vmatpush2.bf16.msra.mxu0 %v5063
    %7296 = vmatprep.subr.bf16.mxu0 0
    %7297 = vmatpush2.bf16.msra.mxu0 %v5062
    %7298 = vmatprep.subr.bf16.mxu0 0
    %7299 = vmatpush2.bf16.msra.mxu0 %v5061
    %7300 = vmatprep.subr.bf16.mxu0 0
    %7301 = vmatpush2.bf16.msra.mxu0 %v5060
    %7302 = vmatprep.subr.bf16.mxu0 0
    %7303 = vmatpush2.bf16.msra.mxu0 %v5059
    %7304 = vmatprep.subr.bf16.mxu0 0
    %7305 = vmatpush2.bf16.msra.mxu0 %v5058
    %7306 = vmatprep.mubr.bf16.mxu0 %v565
    %7307 = vmatmul.mubr.bf16.gmra.mxu0 %v564
    %v7308 = vpop.f32.mrf.mxu0
    %v7309 = vadd.f32 %v7269, %v7308
    %v7310 = vpop.f32.mrf.mxu0
    %v7311 = vpop.f32.mrf.mxu0
    %v7312 = vpop.f32.mrf.mxu0
    %7313 = vdwg.mxu0
    %7314 = vmatprep.subr.bf16.mxu0 0
    %7315 = vmatpush1.bf16.msra.mxu0 0
    %7316 = vmatprep.subr.bf16.mxu0 0
    %7317 = vmatpush1.bf16.msra.mxu0 0
    %7318 = vmatprep.subr.bf16.mxu0 0
    %7319 = vmatpush1.bf16.msra.mxu0 0
    %7320 = vmatprep.subr.bf16.mxu0 0
    %7321 = vmatpush1.bf16.msra.mxu0 0
    %7322 = vmatprep.subr.bf16.mxu0 0
    %7323 = vmatpush1.bf16.msra.mxu0 0
    %7324 = vmatprep.subr.bf16.mxu0 0
    %7325 = vmatpush1.bf16.msra.mxu0 0
    %7326 = vmatprep.subr.bf16.mxu0 0
    %7327 = vmatpush1.bf16.msra.mxu0 %v5067
    %7328 = vmatprep.subr.bf16.mxu0 0
    %7329 = vmatpush1.bf16.msra.mxu0 %v5066
    %7330 = vmatprep.subr.bf16.mxu0 0
    %7331 = vmatpush2.bf16.msra.mxu0 0
    %7332 = vmatprep.subr.bf16.mxu0 0
    %7333 = vmatpush2.bf16.msra.mxu0 0
    %7334 = vmatprep.subr.bf16.mxu0 0
    %7335 = vmatpush2.bf16.msra.mxu0 0
    %7336 = vmatprep.subr.bf16.mxu0 0
    %7337 = vmatpush2.bf16.msra.mxu0 0
    %7338 = vmatprep.subr.bf16.mxu0 0
    %7339 = vmatpush2.bf16.msra.mxu0 0
    %7340 = vmatprep.subr.bf16.mxu0 0
    %7341 = vmatpush2.bf16.msra.mxu0 0
    %7342 = vmatprep.subr.bf16.mxu0 0
    %7343 = vmatpush2.bf16.msra.mxu0 0
    %7344 = vmatprep.subr.bf16.mxu0 0
    %7345 = vmatpush2.bf16.msra.mxu0 0
    %7346 = vmatprep.mubr.bf16.mxu0 0
    %7347 = vmatmul.mubr.bf16.gmra.mxu0 %v5712
    %v7348 = vpop.f32.mrf.mxu0
    %v7349 = vadd.f32 %v7309, %v7348
    %v7350 = vpop.f32.mrf.mxu0
    %v7351 = vpop.f32.mrf.mxu0
    %v7352 = vpop.f32.mrf.mxu0
    %7353 = vdwg.mxu0
    %7354 = vst [vmem:[#allocation2] sm:$0x3] %v7349
    // Predicated region
    $region14: #{gated_cnn_forward.3} parent=1 // pred_check
      _
    $region15: #{gated_cnn_forward.3} parent=1 // pred_check_branch
      %7356 = sbr.rel (0) target = $region17
    $region16: #{gated_cnn_forward.3} parent=1 // pred_region
      %s7358 = ssub.s32 32, 32
      %7359 = vsyncadd [#allocation3], %s7358
      %s7361 = sshll.u32 [#allocation2], 4
      %s7362 = int_to_ptr.vmem [resolvable:$true] %s7361
      %7364 = dma.vmem_to_hbm [thread:$0]  %s7362, 32, %s3, [#allocation3]
    $region17: #{gated_cnn_forward.3} parent=1 // pred_fallthru
      _
    // Predicated region
    $region18: #{gated_cnn_forward.3} parent=1 // pred_check
      _
    $region19: #{gated_cnn_forward.3} parent=1 // pred_check_branch
      %7366 = sbr.rel (0) target = $region21
    $region20: #{gated_cnn_forward.3} parent=1 // pred_region
      %7367 = dma.done [#allocation3], 32
    $region21: #{gated_cnn_forward.3} parent=1 // pred_fallthru
      _
    %7368 = vsyncpa [#allocation3], 1

</llo_original>
